<compile_context>
chip_gen: v5e
topology: v5e:2x2
jax: 0.10.0
libtpu: 0.0.40
codegen_flags: <defaults>
</compile_context>

<pallas_src>
import jax
import jax.numpy as jnp
from jax.experimental import pallas as pl
from jax.experimental.pallas import tpu as pltpu


def _ceil_to(x, m):
    return -(-x // m) * m


# ----------------------------------------------------------------------------
# Fused forward kernel factory.
# Kernel args (all 2D, VMEM resident, in order):
#   x      : (Cpad0, N*P)   zero-padded, channel-padded, flattened input
#   mask   : (1,     N*P)   1.0 at interior (valid) centers, 0.0 at padding
#   for each 3x3x3 conv layer i:
#       w_i : (CoutPad, 27*CinPad)    b_i : (CoutPad, 1)
#   w_last : (1, CmidPad)   1x1x1 conv weights
#   b_last : (1, 1)
#   wlin_T : (P, n_sectors) Linear weights scattered onto padded-flat rows
#   blin   : (1, n_sectors)
#   out    : (N, n_sectors)
# ----------------------------------------------------------------------------
def _make_fused_kernel(n_conv3, offsets, maxoff, P, n_batch):
    def kernel(*refs):
        x_ref, mask_ref = refs[0], refs[1]
        conv_refs = refs[2:2 + 2 * n_conv3]
        w_last_ref, b_last_ref, wlin_ref, blin_ref, o_ref = refs[2 + 2 * n_conv3:]

        a = x_ref[...]                      # (C, L) padded-flat activation
        mask = mask_ref[...]                # (1, L)
        L = a.shape[1]

        # ---- n_conv3 x [3x3x3 conv + bias + ReLU], one im2col matmul each ----
        for li in range(n_conv3):
            w = conv_refs[2 * li][...]      # (Cout, 27*C)
            b = conv_refs[2 * li + 1][...]  # (Cout, 1)
            c = a.shape[0]
            zext = jnp.zeros((c, maxoff), jnp.float32)
            a_ext = jnp.concatenate([zext, a, zext], axis=1)   # (C, L + 2*maxoff)
            # 27 lane-shifted views -> im2col patch matrix (27*C, L)
            patches = jnp.concatenate(
                [a_ext[:, maxoff + off: maxoff + off + L] for off in offsets],
                axis=0)
            out = jnp.dot(w, patches, preferred_element_type=jnp.float32)
            # bias + ReLU; mask zeroes padding centers (restores zero padding)
            a = jnp.maximum(out + b, 0.0) * mask

        # ---- 1x1x1 conv (Cmid -> 1) + ReLU ----
        w4 = w_last_ref[...]                # (1, Cmid)
        b4 = b_last_ref[...]                # (1, 1)
        y = jnp.maximum(
            jnp.dot(w4, a, preferred_element_type=jnp.float32) + b4, 0.0)  # (1, L)

        # ---- Flatten + Linear (flatten folded into the padded linear weights;
        #      zero weight rows at pad positions kill the padding garbage) ----
        wlin_t = wlin_ref[...]              # (P, n_sectors)
        blin = blin_ref[...]                # (1, n_sectors)
        rows = []
        for n in range(n_batch):            # static unroll; N is tiny
            chunk = y[:, n * P:(n + 1) * P]                       # (1, P)
            rows.append(jnp.dot(chunk, wlin_t,
                                preferred_element_type=jnp.float32) + blin)
        o_ref[...] = jnp.concatenate(rows, axis=0).astype(o_ref.dtype)

    return kernel


# ----------------------------------------------------------------------------
# Forward wrapper: one-time layout prep in JAX, then a single pallas_call.
# ----------------------------------------------------------------------------
@jax.jit
def forward(params, x):
    """x: (N, Cin, D, H, W) -> (N, n_sectors)."""
    x = x.astype(jnp.float32)
    N, Cin, D, H, W = x.shape
    Dp, Hp, Wp = D + 2, H + 2, W + 2
    P = Dp * Hp * Wp
    n_sectors = params["lin_b"].shape[0]
    SUB = 8  # f32 sublane tile

    # final conv must have a single output channel for the flatten->linear map
    assert params["conv_last"][0].shape[-1] == 1

    # Zero-pad the input ONCE and fold batch into the lane dim: (Cpad0, N*P).
    # (Per-layer padding is handled in-kernel via the interior mask.)
    xp = jnp.pad(x, ((0, 0), (0, 0), (1, 1), (1, 1), (1, 1)))
    xflat = jnp.transpose(xp, (1, 0, 2, 3, 4)).reshape(Cin, N * P)
    c_prev_pad = _ceil_to(Cin, SUB)
    xflat = jnp.pad(xflat, ((0, c_prev_pad - Cin), (0, 0)))

    # Interior mask (1 at valid output centers), tiled over batch.
    m = jnp.zeros((Dp, Hp, Wp), jnp.float32)
    m = m.at[1:D + 1, 1:H + 1, 1:W + 1].set(1.0)
    mask = jnp.tile(m.reshape(1, P), (1, N))

    # Conv3 weights: DHWIO (3,3,3,Cin,Cout) -> (CoutPad, 27*CinPad), bias (CoutPad,1).
    conv_args = []
    for (w, b) in params["convs3"]:
        ci, co = w.shape[3], w.shape[4]
        co_pad = _ceil_to(co, SUB)
        w_p = jnp.pad(w, ((0, 0), (0, 0), (0, 0),
                          (0, c_prev_pad - ci), (0, co_pad - co)))
        b_p = jnp.pad(b, ((0, co_pad - co),))
        conv_args += [w_p.reshape(-1, co_pad).T, b_p.reshape(co_pad, 1)]
        c_prev_pad = co_pad

    # 1x1x1 conv weights: (1,1,1,Cmid,1) -> (1, CmidPad).
    w4, b4 = params["conv_last"]
    cmid = w4.shape[3]
    w4_p = jnp.pad(w4, ((0, 0), (0, 0), (0, 0), (0, c_prev_pad - cmid), (0, 0)))
    w4m = w4_p.reshape(-1, 1).T
    b4m = b4.reshape(1, 1)

    # Linear weights (n_sectors, D*H*W) scattered onto padded-flat rows
    # -> (P, n_sectors), preserving torch's (d, h, w) row-major flatten order.
    dd, hh, ww = jnp.meshgrid(jnp.arange(D), jnp.arange(H), jnp.arange(W),
                              indexing="ij")
    pad_idx = ((dd + 1) * Hp * Wp + (hh + 1) * Wp + (ww + 1)).reshape(-1)
    wlin_t = jnp.zeros((P, n_sectors), jnp.float32).at[pad_idx].set(
        params["lin_w"].T)
    blin = params["lin_b"].reshape(1, n_sectors)

    # Tap offsets in padded-flat index space, (kd, kh, kw) row-major
    # (matches the DHWIO weight reshape above).
    offsets = [(kd - 1) * Hp * Wp + (kh - 1) * Wp + (kw - 1)
               for kd in range(3) for kh in range(3) for kw in range(3)]
    maxoff = Hp * Wp + Wp + 1

    kernel = _make_fused_kernel(len(params["convs3"]), offsets, maxoff, P, N)
    return pl.pallas_call(
        kernel,
        out_shape=jax.ShapeDtypeStruct((N, n_sectors), jnp.float32),
        compiler_params=pltpu.CompilerParams(
            vmem_limit_bytes=32 * 1024 * 1024),
    )(xflat, mask, *conv_args, w4m, b4m, wlin_t, blin)


# ----------------------------------------------------------------------------
# Parameter init (deterministic, synthetic).  Conv weights stored DHWIO.
# TODO(synk): the n_conv_layers == 1 config branch (single Conv3d(in->1,3x3x3))
#             of the module is not wired up; only the default n_conv_layers>=2
#             path is implemented.
# ----------------------------------------------------------------------------
def init_params(key, n_input_channels=2, n_sectors=18, n_conv_layers=4,
                n_conv_channels=8, D=4, H=8, W=16):
    convs3 = []
    cin = n_input_channels
    for i in range(n_conv_layers - 1):
        cout = n_conv_channels
        kw_ = jax.random.fold_in(key, 2 * i)
        kb_ = jax.random.fold_in(key, 2 * i + 1)
        scale = 1.0 / jnp.sqrt(jnp.float32(cin * 27))
        w = jax.random.normal(kw_, (3, 3, 3, cin, cout), jnp.float32) * scale
        b = jax.random.normal(kb_, (cout,), jnp.float32) * 0.1
        convs3.append((w, b))
        cin = cout
    kw_ = jax.random.fold_in(key, 100)
    kb_ = jax.random.fold_in(key, 101)
    w4 = jax.random.normal(kw_, (1, 1, 1, cin, 1), jnp.float32) / jnp.sqrt(
        jnp.float32(cin))
    b4 = jax.random.normal(kb_, (1,), jnp.float32) * 0.1
    S = D * H * W
    kw_ = jax.random.fold_in(key, 200)
    kb_ = jax.random.fold_in(key, 201)
    lin_w = jax.random.normal(kw_, (n_sectors, S), jnp.float32) / jnp.sqrt(
        jnp.float32(S))
    lin_b = jax.random.normal(kb_, (n_sectors,), jnp.float32) * 0.1
    return {"convs3": convs3, "conv_last": (w4, b4),
            "lin_w": lin_w, "lin_b": lin_b}


# Pure-JAX reference (self-check only).
def ref_forward(params, x):
    y = x.astype(jnp.float32)
    for (w, b) in params["convs3"]:
        y = jax.lax.conv_general_dilated(
            y, w, window_strides=(1, 1, 1),
            padding=((1, 1), (1, 1), (1, 1)),
            dimension_numbers=("NCDHW", "DHWIO", "NCDHW"))
        y = jnp.maximum(y + b.reshape(1, -1, 1, 1, 1), 0.0)
    w4, b4 = params["conv_last"]
    y = jax.lax.conv_general_dilated(
        y, w4, window_strides=(1, 1, 1), padding=((0, 0),) * 3,
        dimension_numbers=("NCDHW", "DHWIO", "NCDHW"))
    y = jnp.maximum(y + b4.reshape(1, 1, 1, 1, 1), 0.0)
    y = y.reshape(y.shape[0], -1)
    return y @ params["lin_w"].T + params["lin_b"]


if __name__ == "__main__":
    key = jax.random.PRNGKey(0)
    N, C_IN = 2, 2
    D, H, W = 4, 8, 16            # small T(depth) x H x W; Linear in-dim = 512
    N_SECTORS = 18
    params = init_params(jax.random.fold_in(key, 7),
                         n_input_channels=C_IN, n_sectors=N_SECTORS,
                         n_conv_layers=4, n_conv_channels=8, D=D, H=H, W=W)
    x = jax.random.normal(jax.random.fold_in(key, 42),
                          (N, C_IN, D, H, W), jnp.float32)

    out = jax.block_until_ready(forward(params, x))
    ref = jax.block_until_ready(ref_forward(params, x))
    assert out.shape == (N, N_SECTORS), out.shape
    max_diff = float(jnp.max(jnp.abs(out - ref)))
    assert jnp.allclose(out, ref, atol=5e-3, rtol=5e-3), (
        f"mismatch vs reference, max abs diff = {max_diff}")
    print("KERNEL_OK")
</pallas_src>

<mosaic_0001>
module attributes {stable_mosaic.version = 11 : i64} {
  func.func @kernel(%arg0: memref<8x2160xf32, #tpu.memory_space<vmem>>, %arg1: memref<1x2160xf32, #tpu.memory_space<vmem>>, %arg2: memref<8x216xf32, #tpu.memory_space<vmem>>, %arg3: memref<8x1xf32, #tpu.memory_space<vmem>>, %arg4: memref<8x216xf32, #tpu.memory_space<vmem>>, %arg5: memref<8x1xf32, #tpu.memory_space<vmem>>, %arg6: memref<8x216xf32, #tpu.memory_space<vmem>>, %arg7: memref<8x1xf32, #tpu.memory_space<vmem>>, %arg8: memref<1x8xf32, #tpu.memory_space<vmem>>, %arg9: memref<1x1xf32, #tpu.memory_space<vmem>>, %arg10: memref<1080x18xf32, #tpu.memory_space<vmem>>, %arg11: memref<1x18xf32, #tpu.memory_space<vmem>>, %arg12: memref<2x18xf32, #tpu.memory_space<vmem>>) attributes {dimension_semantics = [], scalar_prefetch = 0 : i64, scratch_operands = 0 : i64, tpu.core_type = #tpu.core_type<tc>} {
    %c0 = arith.constant 0 : index
    %c0_0 = arith.constant 0 : index
    %0 = vector.load %arg0[%c0, %c0_0] : memref<8x2160xf32, #tpu.memory_space<vmem>>, vector<8x2160xf32>
    %c0_1 = arith.constant 0 : index
    %c0_2 = arith.constant 0 : index
    %1 = vector.load %arg1[%c0_1, %c0_2] : memref<1x2160xf32, #tpu.memory_space<vmem>>, vector<1x2160xf32>
    %c0_3 = arith.constant 0 : index
    %c0_4 = arith.constant 0 : index
    %2 = vector.load %arg2[%c0_3, %c0_4] : memref<8x216xf32, #tpu.memory_space<vmem>>, vector<8x216xf32>
    %c0_5 = arith.constant 0 : index
    %c0_6 = arith.constant 0 : index
    %3 = vector.load %arg3[%c0_5, %c0_6] : memref<8x1xf32, #tpu.memory_space<vmem>>, vector<8x1xf32>
    %cst = arith.constant 0.000000e+00 : f32
    %4 = vector.broadcast %cst : f32 to vector<8x199xf32>
    %5 = tpu.concatenate %4, %0, %4 in 1 : vector<8x199xf32>, vector<8x2160xf32>, vector<8x199xf32> -> vector<8x2558xf32>
    %6 = vector.extract_strided_slice %5 {offsets = [0, 0], sizes = [8, 2160], strides = [1, 1]} : vector<8x2558xf32> to vector<8x2160xf32>
    %7 = vector.extract_strided_slice %5 {offsets = [0, 1], sizes = [8, 2160], strides = [1, 1]} : vector<8x2558xf32> to vector<8x2160xf32>
    %8 = vector.extract_strided_slice %5 {offsets = [0, 2], sizes = [8, 2160], strides = [1, 1]} : vector<8x2558xf32> to vector<8x2160xf32>
    %9 = vector.extract_strided_slice %5 {offsets = [0, 18], sizes = [8, 2160], strides = [1, 1]} : vector<8x2558xf32> to vector<8x2160xf32>
    %10 = vector.extract_strided_slice %5 {offsets = [0, 19], sizes = [8, 2160], strides = [1, 1]} : vector<8x2558xf32> to vector<8x2160xf32>
    %11 = vector.extract_strided_slice %5 {offsets = [0, 20], sizes = [8, 2160], strides = [1, 1]} : vector<8x2558xf32> to vector<8x2160xf32>
    %12 = vector.extract_strided_slice %5 {offsets = [0, 36], sizes = [8, 2160], strides = [1, 1]} : vector<8x2558xf32> to vector<8x2160xf32>
    %13 = vector.extract_strided_slice %5 {offsets = [0, 37], sizes = [8, 2160], strides = [1, 1]} : vector<8x2558xf32> to vector<8x2160xf32>
    %14 = vector.extract_strided_slice %5 {offsets = [0, 38], sizes = [8, 2160], strides = [1, 1]} : vector<8x2558xf32> to vector<8x2160xf32>
    %15 = vector.extract_strided_slice %5 {offsets = [0, 180], sizes = [8, 2160], strides = [1, 1]} : vector<8x2558xf32> to vector<8x2160xf32>
    %16 = vector.extract_strided_slice %5 {offsets = [0, 181], sizes = [8, 2160], strides = [1, 1]} : vector<8x2558xf32> to vector<8x2160xf32>
    %17 = vector.extract_strided_slice %5 {offsets = [0, 182], sizes = [8, 2160], strides = [1, 1]} : vector<8x2558xf32> to vector<8x2160xf32>
    %18 = vector.extract_strided_slice %5 {offsets = [0, 198], sizes = [8, 2160], strides = [1, 1]} : vector<8x2558xf32> to vector<8x2160xf32>
    %19 = vector.extract_strided_slice %5 {offsets = [0, 199], sizes = [8, 2160], strides = [1, 1]} : vector<8x2558xf32> to vector<8x2160xf32>
    %20 = vector.extract_strided_slice %5 {offsets = [0, 200], sizes = [8, 2160], strides = [1, 1]} : vector<8x2558xf32> to vector<8x2160xf32>
    %21 = vector.extract_strided_slice %5 {offsets = [0, 216], sizes = [8, 2160], strides = [1, 1]} : vector<8x2558xf32> to vector<8x2160xf32>
    %22 = vector.extract_strided_slice %5 {offsets = [0, 217], sizes = [8, 2160], strides = [1, 1]} : vector<8x2558xf32> to vector<8x2160xf32>
    %23 = vector.extract_strided_slice %5 {offsets = [0, 218], sizes = [8, 2160], strides = [1, 1]} : vector<8x2558xf32> to vector<8x2160xf32>
    %24 = vector.extract_strided_slice %5 {offsets = [0, 360], sizes = [8, 2160], strides = [1, 1]} : vector<8x2558xf32> to vector<8x2160xf32>
    %25 = vector.extract_strided_slice %5 {offsets = [0, 361], sizes = [8, 2160], strides = [1, 1]} : vector<8x2558xf32> to vector<8x2160xf32>
    %26 = vector.extract_strided_slice %5 {offsets = [0, 362], sizes = [8, 2160], strides = [1, 1]} : vector<8x2558xf32> to vector<8x2160xf32>
    %27 = vector.extract_strided_slice %5 {offsets = [0, 378], sizes = [8, 2160], strides = [1, 1]} : vector<8x2558xf32> to vector<8x2160xf32>
    %28 = vector.extract_strided_slice %5 {offsets = [0, 379], sizes = [8, 2160], strides = [1, 1]} : vector<8x2558xf32> to vector<8x2160xf32>
    %29 = vector.extract_strided_slice %5 {offsets = [0, 380], sizes = [8, 2160], strides = [1, 1]} : vector<8x2558xf32> to vector<8x2160xf32>
    %30 = vector.extract_strided_slice %5 {offsets = [0, 396], sizes = [8, 2160], strides = [1, 1]} : vector<8x2558xf32> to vector<8x2160xf32>
    %31 = vector.extract_strided_slice %5 {offsets = [0, 397], sizes = [8, 2160], strides = [1, 1]} : vector<8x2558xf32> to vector<8x2160xf32>
    %32 = vector.extract_strided_slice %5 {offsets = [0, 398], sizes = [8, 2160], strides = [1, 1]} : vector<8x2558xf32> to vector<8x2160xf32>
    %33 = tpu.concatenate %6, %7, %8, %9, %10, %11, %12, %13, %14, %15, %16, %17, %18, %19, %20, %21 in 0 : vector<8x2160xf32>, vector<8x2160xf32>, vector<8x2160xf32>, vector<8x2160xf32>, vector<8x2160xf32>, vector<8x2160xf32>, vector<8x2160xf32>, vector<8x2160xf32>, vector<8x2160xf32>, vector<8x2160xf32>, vector<8x2160xf32>, vector<8x2160xf32>, vector<8x2160xf32>, vector<8x2160xf32>, vector<8x2160xf32>, vector<8x2160xf32> -> vector<128x2160xf32>
    %34 = tpu.concatenate %22, %23, %24, %25, %26, %27, %28, %29, %30, %31, %32 in 0 : vector<8x2160xf32>, vector<8x2160xf32>, vector<8x2160xf32>, vector<8x2160xf32>, vector<8x2160xf32>, vector<8x2160xf32>, vector<8x2160xf32>, vector<8x2160xf32>, vector<8x2160xf32>, vector<8x2160xf32>, vector<8x2160xf32> -> vector<88x2160xf32>
    %35 = tpu.concatenate %33, %34 in 0 : vector<128x2160xf32>, vector<88x2160xf32> -> vector<216x2160xf32>
    %cst_7 = arith.constant dense<0.000000e+00> : vector<8x2160xf32>
    %36 = tpu.matmul %2, %35, %cst_7 {dimension_numbers = #tpu.dot_dimension_numbers<[1], [0], [0], [1], [0, 0, 1, 1], [], []>} : vector<8x216xf32>, vector<216x2160xf32>, vector<8x2160xf32> -> vector<8x2160xf32>
    %37 = vector.broadcast %3 : vector<8x1xf32> to vector<8x2160xf32>
    %38 = arith.addf %36, %37 : vector<8x2160xf32>
    %cst_8 = arith.constant 0.000000e+00 : f32
    %39 = vector.broadcast %cst_8 : f32 to vector<8x2160xf32>
    %40 = arith.maximumf %38, %39 : vector<8x2160xf32>
    %41 = vector.broadcast %1 : vector<1x2160xf32> to vector<8x2160xf32>
    %42 = arith.mulf %40, %41 : vector<8x2160xf32>
    %c0_9 = arith.constant 0 : index
    %c0_10 = arith.constant 0 : index
    %43 = vector.load %arg4[%c0_9, %c0_10] : memref<8x216xf32, #tpu.memory_space<vmem>>, vector<8x216xf32>
    %c0_11 = arith.constant 0 : index
    %c0_12 = arith.constant 0 : index
    %44 = vector.load %arg5[%c0_11, %c0_12] : memref<8x1xf32, #tpu.memory_space<vmem>>, vector<8x1xf32>
    %cst_13 = arith.constant 0.000000e+00 : f32
    %45 = vector.broadcast %cst_13 : f32 to vector<8x199xf32>
    %46 = tpu.concatenate %45, %42, %45 in 1 : vector<8x199xf32>, vector<8x2160xf32>, vector<8x199xf32> -> vector<8x2558xf32>
    %47 = vector.extract_strided_slice %46 {offsets = [0, 0], sizes = [8, 2160], strides = [1, 1]} : vector<8x2558xf32> to vector<8x2160xf32>
    %48 = vector.extract_strided_slice %46 {offsets = [0, 1], sizes = [8, 2160], strides = [1, 1]} : vector<8x2558xf32> to vector<8x2160xf32>
    %49 = vector.extract_strided_slice %46 {offsets = [0, 2], sizes = [8, 2160], strides = [1, 1]} : vector<8x2558xf32> to vector<8x2160xf32>
    %50 = vector.extract_strided_slice %46 {offsets = [0, 18], sizes = [8, 2160], strides = [1, 1]} : vector<8x2558xf32> to vector<8x2160xf32>
    %51 = vector.extract_strided_slice %46 {offsets = [0, 19], sizes = [8, 2160], strides = [1, 1]} : vector<8x2558xf32> to vector<8x2160xf32>
    %52 = vector.extract_strided_slice %46 {offsets = [0, 20], sizes = [8, 2160], strides = [1, 1]} : vector<8x2558xf32> to vector<8x2160xf32>
    %53 = vector.extract_strided_slice %46 {offsets = [0, 36], sizes = [8, 2160], strides = [1, 1]} : vector<8x2558xf32> to vector<8x2160xf32>
    %54 = vector.extract_strided_slice %46 {offsets = [0, 37], sizes = [8, 2160], strides = [1, 1]} : vector<8x2558xf32> to vector<8x2160xf32>
    %55 = vector.extract_strided_slice %46 {offsets = [0, 38], sizes = [8, 2160], strides = [1, 1]} : vector<8x2558xf32> to vector<8x2160xf32>
    %56 = vector.extract_strided_slice %46 {offsets = [0, 180], sizes = [8, 2160], strides = [1, 1]} : vector<8x2558xf32> to vector<8x2160xf32>
    %57 = vector.extract_strided_slice %46 {offsets = [0, 181], sizes = [8, 2160], strides = [1, 1]} : vector<8x2558xf32> to vector<8x2160xf32>
    %58 = vector.extract_strided_slice %46 {offsets = [0, 182], sizes = [8, 2160], strides = [1, 1]} : vector<8x2558xf32> to vector<8x2160xf32>
    %59 = vector.extract_strided_slice %46 {offsets = [0, 198], sizes = [8, 2160], strides = [1, 1]} : vector<8x2558xf32> to vector<8x2160xf32>
    %60 = vector.extract_strided_slice %46 {offsets = [0, 199], sizes = [8, 2160], strides = [1, 1]} : vector<8x2558xf32> to vector<8x2160xf32>
    %61 = vector.extract_strided_slice %46 {offsets = [0, 200], sizes = [8, 2160], strides = [1, 1]} : vector<8x2558xf32> to vector<8x2160xf32>
    %62 = vector.extract_strided_slice %46 {offsets = [0, 216], sizes = [8, 2160], strides = [1, 1]} : vector<8x2558xf32> to vector<8x2160xf32>
    %63 = vector.extract_strided_slice %46 {offsets = [0, 217], sizes = [8, 2160], strides = [1, 1]} : vector<8x2558xf32> to vector<8x2160xf32>
    %64 = vector.extract_strided_slice %46 {offsets = [0, 218], sizes = [8, 2160], strides = [1, 1]} : vector<8x2558xf32> to vector<8x2160xf32>
    %65 = vector.extract_strided_slice %46 {offsets = [0, 360], sizes = [8, 2160], strides = [1, 1]} : vector<8x2558xf32> to vector<8x2160xf32>
    %66 = vector.extract_strided_slice %46 {offsets = [0, 361], sizes = [8, 2160], strides = [1, 1]} : vector<8x2558xf32> to vector<8x2160xf32>
    %67 = vector.extract_strided_slice %46 {offsets = [0, 362], sizes = [8, 2160], strides = [1, 1]} : vector<8x2558xf32> to vector<8x2160xf32>
    %68 = vector.extract_strided_slice %46 {offsets = [0, 378], sizes = [8, 2160], strides = [1, 1]} : vector<8x2558xf32> to vector<8x2160xf32>
    %69 = vector.extract_strided_slice %46 {offsets = [0, 379], sizes = [8, 2160], strides = [1, 1]} : vector<8x2558xf32> to vector<8x2160xf32>
    %70 = vector.extract_strided_slice %46 {offsets = [0, 380], sizes = [8, 2160], strides = [1, 1]} : vector<8x2558xf32> to vector<8x2160xf32>
    %71 = vector.extract_strided_slice %46 {offsets = [0, 396], sizes = [8, 2160], strides = [1, 1]} : vector<8x2558xf32> to vector<8x2160xf32>
    %72 = vector.extract_strided_slice %46 {offsets = [0, 397], sizes = [8, 2160], strides = [1, 1]} : vector<8x2558xf32> to vector<8x2160xf32>
    %73 = vector.extract_strided_slice %46 {offsets = [0, 398], sizes = [8, 2160], strides = [1, 1]} : vector<8x2558xf32> to vector<8x2160xf32>
    %74 = tpu.concatenate %47, %48, %49, %50, %51, %52, %53, %54, %55, %56, %57, %58, %59, %60, %61, %62 in 0 : vector<8x2160xf32>, vector<8x2160xf32>, vector<8x2160xf32>, vector<8x2160xf32>, vector<8x2160xf32>, vector<8x2160xf32>, vector<8x2160xf32>, vector<8x2160xf32>, vector<8x2160xf32>, vector<8x2160xf32>, vector<8x2160xf32>, vector<8x2160xf32>, vector<8x2160xf32>, vector<8x2160xf32>, vector<8x2160xf32>, vector<8x2160xf32> -> vector<128x2160xf32>
    %75 = tpu.concatenate %63, %64, %65, %66, %67, %68, %69, %70, %71, %72, %73 in 0 : vector<8x2160xf32>, vector<8x2160xf32>, vector<8x2160xf32>, vector<8x2160xf32>, vector<8x2160xf32>, vector<8x2160xf32>, vector<8x2160xf32>, vector<8x2160xf32>, vector<8x2160xf32>, vector<8x2160xf32>, vector<8x2160xf32> -> vector<88x2160xf32>
    %76 = tpu.concatenate %74, %75 in 0 : vector<128x2160xf32>, vector<88x2160xf32> -> vector<216x2160xf32>
    %cst_14 = arith.constant dense<0.000000e+00> : vector<8x2160xf32>
    %77 = tpu.matmul %43, %76, %cst_14 {dimension_numbers = #tpu.dot_dimension_numbers<[1], [0], [0], [1], [0, 0, 1, 1], [], []>} : vector<8x216xf32>, vector<216x2160xf32>, vector<8x2160xf32> -> vector<8x2160xf32>
    %78 = vector.broadcast %44 : vector<8x1xf32> to vector<8x2160xf32>
    %79 = arith.addf %77, %78 : vector<8x2160xf32>
    %cst_15 = arith.constant 0.000000e+00 : f32
    %80 = vector.broadcast %cst_15 : f32 to vector<8x2160xf32>
    %81 = arith.maximumf %79, %80 : vector<8x2160xf32>
    %82 = vector.broadcast %1 : vector<1x2160xf32> to vector<8x2160xf32>
    %83 = arith.mulf %81, %82 : vector<8x2160xf32>
    %c0_16 = arith.constant 0 : index
    %c0_17 = arith.constant 0 : index
    %84 = vector.load %arg6[%c0_16, %c0_17] : memref<8x216xf32, #tpu.memory_space<vmem>>, vector<8x216xf32>
    %c0_18 = arith.constant 0 : index
    %c0_19 = arith.constant 0 : index
    %85 = vector.load %arg7[%c0_18, %c0_19] : memref<8x1xf32, #tpu.memory_space<vmem>>, vector<8x1xf32>
    %cst_20 = arith.constant 0.000000e+00 : f32
    %86 = vector.broadcast %cst_20 : f32 to vector<8x199xf32>
    %87 = tpu.concatenate %86, %83, %86 in 1 : vector<8x199xf32>, vector<8x2160xf32>, vector<8x199xf32> -> vector<8x2558xf32>
    %88 = vector.extract_strided_slice %87 {offsets = [0, 0], sizes = [8, 2160], strides = [1, 1]} : vector<8x2558xf32> to vector<8x2160xf32>
    %89 = vector.extract_strided_slice %87 {offsets = [0, 1], sizes = [8, 2160], strides = [1, 1]} : vector<8x2558xf32> to vector<8x2160xf32>
    %90 = vector.extract_strided_slice %87 {offsets = [0, 2], sizes = [8, 2160], strides = [1, 1]} : vector<8x2558xf32> to vector<8x2160xf32>
    %91 = vector.extract_strided_slice %87 {offsets = [0, 18], sizes = [8, 2160], strides = [1, 1]} : vector<8x2558xf32> to vector<8x2160xf32>
    %92 = vector.extract_strided_slice %87 {offsets = [0, 19], sizes = [8, 2160], strides = [1, 1]} : vector<8x2558xf32> to vector<8x2160xf32>
    %93 = vector.extract_strided_slice %87 {offsets = [0, 20], sizes = [8, 2160], strides = [1, 1]} : vector<8x2558xf32> to vector<8x2160xf32>
    %94 = vector.extract_strided_slice %87 {offsets = [0, 36], sizes = [8, 2160], strides = [1, 1]} : vector<8x2558xf32> to vector<8x2160xf32>
    %95 = vector.extract_strided_slice %87 {offsets = [0, 37], sizes = [8, 2160], strides = [1, 1]} : vector<8x2558xf32> to vector<8x2160xf32>
    %96 = vector.extract_strided_slice %87 {offsets = [0, 38], sizes = [8, 2160], strides = [1, 1]} : vector<8x2558xf32> to vector<8x2160xf32>
    %97 = vector.extract_strided_slice %87 {offsets = [0, 180], sizes = [8, 2160], strides = [1, 1]} : vector<8x2558xf32> to vector<8x2160xf32>
    %98 = vector.extract_strided_slice %87 {offsets = [0, 181], sizes = [8, 2160], strides = [1, 1]} : vector<8x2558xf32> to vector<8x2160xf32>
    %99 = vector.extract_strided_slice %87 {offsets = [0, 182], sizes = [8, 2160], strides = [1, 1]} : vector<8x2558xf32> to vector<8x2160xf32>
    %100 = vector.extract_strided_slice %87 {offsets = [0, 198], sizes = [8, 2160], strides = [1, 1]} : vector<8x2558xf32> to vector<8x2160xf32>
    %101 = vector.extract_strided_slice %87 {offsets = [0, 199], sizes = [8, 2160], strides = [1, 1]} : vector<8x2558xf32> to vector<8x2160xf32>
    %102 = vector.extract_strided_slice %87 {offsets = [0, 200], sizes = [8, 2160], strides = [1, 1]} : vector<8x2558xf32> to vector<8x2160xf32>
    %103 = vector.extract_strided_slice %87 {offsets = [0, 216], sizes = [8, 2160], strides = [1, 1]} : vector<8x2558xf32> to vector<8x2160xf32>
    %104 = vector.extract_strided_slice %87 {offsets = [0, 217], sizes = [8, 2160], strides = [1, 1]} : vector<8x2558xf32> to vector<8x2160xf32>
    %105 = vector.extract_strided_slice %87 {offsets = [0, 218], sizes = [8, 2160], strides = [1, 1]} : vector<8x2558xf32> to vector<8x2160xf32>
    %106 = vector.extract_strided_slice %87 {offsets = [0, 360], sizes = [8, 2160], strides = [1, 1]} : vector<8x2558xf32> to vector<8x2160xf32>
    %107 = vector.extract_strided_slice %87 {offsets = [0, 361], sizes = [8, 2160], strides = [1, 1]} : vector<8x2558xf32> to vector<8x2160xf32>
    %108 = vector.extract_strided_slice %87 {offsets = [0, 362], sizes = [8, 2160], strides = [1, 1]} : vector<8x2558xf32> to vector<8x2160xf32>
    %109 = vector.extract_strided_slice %87 {offsets = [0, 378], sizes = [8, 2160], strides = [1, 1]} : vector<8x2558xf32> to vector<8x2160xf32>
    %110 = vector.extract_strided_slice %87 {offsets = [0, 379], sizes = [8, 2160], strides = [1, 1]} : vector<8x2558xf32> to vector<8x2160xf32>
    %111 = vector.extract_strided_slice %87 {offsets = [0, 380], sizes = [8, 2160], strides = [1, 1]} : vector<8x2558xf32> to vector<8x2160xf32>
    %112 = vector.extract_strided_slice %87 {offsets = [0, 396], sizes = [8, 2160], strides = [1, 1]} : vector<8x2558xf32> to vector<8x2160xf32>
    %113 = vector.extract_strided_slice %87 {offsets = [0, 397], sizes = [8, 2160], strides = [1, 1]} : vector<8x2558xf32> to vector<8x2160xf32>
    %114 = vector.extract_strided_slice %87 {offsets = [0, 398], sizes = [8, 2160], strides = [1, 1]} : vector<8x2558xf32> to vector<8x2160xf32>
    %115 = tpu.concatenate %88, %89, %90, %91, %92, %93, %94, %95, %96, %97, %98, %99, %100, %101, %102, %103 in 0 : vector<8x2160xf32>, vector<8x2160xf32>, vector<8x2160xf32>, vector<8x2160xf32>, vector<8x2160xf32>, vector<8x2160xf32>, vector<8x2160xf32>, vector<8x2160xf32>, vector<8x2160xf32>, vector<8x2160xf32>, vector<8x2160xf32>, vector<8x2160xf32>, vector<8x2160xf32>, vector<8x2160xf32>, vector<8x2160xf32>, vector<8x2160xf32> -> vector<128x2160xf32>
    %116 = tpu.concatenate %104, %105, %106, %107, %108, %109, %110, %111, %112, %113, %114 in 0 : vector<8x2160xf32>, vector<8x2160xf32>, vector<8x2160xf32>, vector<8x2160xf32>, vector<8x2160xf32>, vector<8x2160xf32>, vector<8x2160xf32>, vector<8x2160xf32>, vector<8x2160xf32>, vector<8x2160xf32>, vector<8x2160xf32> -> vector<88x2160xf32>
    %117 = tpu.concatenate %115, %116 in 0 : vector<128x2160xf32>, vector<88x2160xf32> -> vector<216x2160xf32>
    %cst_21 = arith.constant dense<0.000000e+00> : vector<8x2160xf32>
    %118 = tpu.matmul %84, %117, %cst_21 {dimension_numbers = #tpu.dot_dimension_numbers<[1], [0], [0], [1], [0, 0, 1, 1], [], []>} : vector<8x216xf32>, vector<216x2160xf32>, vector<8x2160xf32> -> vector<8x2160xf32>
    %119 = vector.broadcast %85 : vector<8x1xf32> to vector<8x2160xf32>
    %120 = arith.addf %118, %119 : vector<8x2160xf32>
    %cst_22 = arith.constant 0.000000e+00 : f32
    %121 = vector.broadcast %cst_22 : f32 to vector<8x2160xf32>
    %122 = arith.maximumf %120, %121 : vector<8x2160xf32>
    %123 = vector.broadcast %1 : vector<1x2160xf32> to vector<8x2160xf32>
    %124 = arith.mulf %122, %123 : vector<8x2160xf32>
    %c0_23 = arith.constant 0 : index
    %c0_24 = arith.constant 0 : index
    %125 = vector.load %arg8[%c0_23, %c0_24] : memref<1x8xf32, #tpu.memory_space<vmem>>, vector<1x8xf32>
    %c0_25 = arith.constant 0 : index
    %c0_26 = arith.constant 0 : index
    %126 = vector.load %arg9[%c0_25, %c0_26] : memref<1x1xf32, #tpu.memory_space<vmem>>, vector<1x1xf32>
    %cst_27 = arith.constant dense<0.000000e+00> : vector<1x2160xf32>
    %127 = tpu.matmul %125, %124, %cst_27 {dimension_numbers = #tpu.dot_dimension_numbers<[1], [0], [0], [1], [0, 0, 1, 1], [], []>} : vector<1x8xf32>, vector<8x2160xf32>, vector<1x2160xf32> -> vector<1x2160xf32>
    %128 = vector.broadcast %126 : vector<1x1xf32> to vector<1x2160xf32>
    %129 = arith.addf %127, %128 : vector<1x2160xf32>
    %cst_28 = arith.constant 0.000000e+00 : f32
    %130 = vector.broadcast %cst_28 : f32 to vector<1x2160xf32>
    %131 = arith.maximumf %129, %130 : vector<1x2160xf32>
    %c0_29 = arith.constant 0 : index
    %c0_30 = arith.constant 0 : index
    %132 = vector.load %arg10[%c0_29, %c0_30] : memref<1080x18xf32, #tpu.memory_space<vmem>>, vector<1080x18xf32>
    %c0_31 = arith.constant 0 : index
    %c0_32 = arith.constant 0 : index
    %133 = vector.load %arg11[%c0_31, %c0_32] : memref<1x18xf32, #tpu.memory_space<vmem>>, vector<1x18xf32>
    %134 = vector.extract_strided_slice %131 {offsets = [0, 0], sizes = [1, 1080], strides = [1, 1]} : vector<1x2160xf32> to vector<1x1080xf32>
    %cst_33 = arith.constant dense<0.000000e+00> : vector<1x18xf32>
    %135 = tpu.matmul %134, %132, %cst_33 {dimension_numbers = #tpu.dot_dimension_numbers<[1], [0], [0], [1], [0, 0, 1, 1], [], []>} : vector<1x1080xf32>, vector<1080x18xf32>, vector<1x18xf32> -> vector<1x18xf32>
    %136 = arith.addf %135, %133 : vector<1x18xf32>
    %137 = vector.extract_strided_slice %131 {offsets = [0, 1080], sizes = [1, 1080], strides = [1, 1]} : vector<1x2160xf32> to vector<1x1080xf32>
    %cst_34 = arith.constant dense<0.000000e+00> : vector<1x18xf32>
    %138 = tpu.matmul %137, %132, %cst_34 {dimension_numbers = #tpu.dot_dimension_numbers<[1], [0], [0], [1], [0, 0, 1, 1], [], []>} : vector<1x1080xf32>, vector<1080x18xf32>, vector<1x18xf32> -> vector<1x18xf32>
    %139 = arith.addf %138, %133 : vector<1x18xf32>
    %140 = tpu.concatenate %136, %139 in 0 : vector<1x18xf32>, vector<1x18xf32> -> vector<2x18xf32>
    %c0_35 = arith.constant 0 : index
    %c0_36 = arith.constant 0 : index
    %141 = vector.load %arg12[%c0_35, %c0_36] : memref<2x18xf32, #tpu.memory_space<vmem>>, vector<2x18xf32>
    tpu.vector_store %arg12[%c0_35, %c0_36], %140 {strides = array<i32>} : memref<2x18xf32, #tpu.memory_space<vmem>>, vector<2x18xf32>,
    return
  }
}

</mosaic_0001>

<llo_original>
// kernel: forward.1
$region0: #{forward.1}
  #allocation0 [shape = 'u32[]', space=smem, size = 0x4, offset = 0x4, fixed_abs, tag = 'smem constant byte address 0x4 - core index']
  #allocation1 [shape = 'u32[72,128]{1,0:T(1,128)}', space=vmem, size = 0x9000, scoped, tag = 'internal scratch']
  #allocation2 [shape = 'f32[1,1]{1,0:T(1,128)S(1)}', space=vmem, size = 0x200, scoped, tag = 'scoped memory for forward.1']
  %s0 = inlined_call_operand.vmem [shape: f32[8,2160], index: 0, kind: input, shape index: {}]
  %s1 = inlined_call_operand.vmem [shape: f32[1,2160], index: 1, kind: input, shape index: {}]
  %s2 = inlined_call_operand.vmem [shape: f32[8,216], index: 2, kind: input, shape index: {}]
  %s3 = inlined_call_operand.vmem [shape: f32[8,1], index: 3, kind: input, shape index: {}]
  %s4 = inlined_call_operand.vmem [shape: f32[8,216], index: 4, kind: input, shape index: {}]
  %s5 = inlined_call_operand.vmem [shape: f32[8,1], index: 5, kind: input, shape index: {}]
  %s6 = inlined_call_operand.vmem [shape: f32[8,216], index: 6, kind: input, shape index: {}]
  %s7 = inlined_call_operand.vmem [shape: f32[8,1], index: 7, kind: input, shape index: {}]
  %s8 = inlined_call_operand.vmem [shape: f32[1,8], index: 8, kind: input, shape index: {}]
  %s9 = inlined_call_operand.<no memory space> [shape: f32[1,1], index: 9, kind: input, shape index: {}]
  %s10 = inlined_call_operand.vmem [shape: f32[1080,18], index: 10, kind: input, shape index: {}]
  %s11 = inlined_call_operand.vmem [shape: f32[1,18], index: 11, kind: input, shape index: {}]
  %s12 = inlined_call_operand.hbm [shape: f32[2,18], index: 12, kind: output, shape index: {}]
  %s13 = sld [smem:[#allocation0]]
  $region58: #{forward.1} parent=0
    _
  %s15 = ssub.s32 1, %s13
  %s16 = scalar_select 0, %s15, %s13
  %v17 = vstv %s9
  %18 = vst [vmem:[#allocation2] sm:$0x1] %v17
  $region1: #{forward.1} parent=0
    #allocation3 [shape = 'u8[1024]{0}', space=vmem, size = 0x400, scoped, tag = 'output window, operand 0, single buffered']
    #allocation4 [shape = 's32[1]{0}', space=sflag, size = 0x4, scoped, tag = 'scoped memory for forward.1']
    %19 = vsyncpa [#allocation4], 0
    // Predicated region
    $region2: #{forward.1} parent=1 // pred_check
      _
    $region3: #{forward.1} parent=1 // pred_check_branch
      %21 = sbr.rel (0) target = $region5
    $region4: #{forward.1} parent=1 // pred_region
      _
    $region5: #{forward.1} parent=1 // pred_fallthru
      _
    // Predicated region
    $region6: #{forward.1} parent=1 // pred_check
      _
    $region7: #{forward.1} parent=1 // pred_check_branch
      %23 = sbr.rel (0) target = $region9
    $region8: #{forward.1} parent=1 // pred_region
      _
    $region9: #{forward.1} parent=1 // pred_fallthru
      _
    // Predicated region
    $region10: #{forward.1} parent=1 // pred_check
      _
    $region11: #{forward.1} parent=1 // pred_check_branch
      %25 = sbr.rel (0) target = $region13
    $region12: #{forward.1} parent=1 // pred_region
      _
    $region13: #{forward.1} parent=1 // pred_fallthru
      _
    // Predicated region
    $region14: #{forward.1} parent=1 // pred_check
      _
    $region15: #{forward.1} parent=1 // pred_check_branch
      %27 = sbr.rel (0) target = $region17
    $region16: #{forward.1} parent=1 // pred_region
      _
    $region17: #{forward.1} parent=1 // pred_fallthru
      _
    // Predicated region
    $region18: #{forward.1} parent=1 // pred_check
      _
    $region19: #{forward.1} parent=1 // pred_check_branch
      %29 = sbr.rel (0) target = $region21
    $region20: #{forward.1} parent=1 // pred_region
      _
    $region21: #{forward.1} parent=1 // pred_fallthru
      _
    // Predicated region
    $region22: #{forward.1} parent=1 // pred_check
      _
    $region23: #{forward.1} parent=1 // pred_check_branch
      %31 = sbr.rel (0) target = $region25
    $region24: #{forward.1} parent=1 // pred_region
      _
    $region25: #{forward.1} parent=1 // pred_fallthru
      _
    // Predicated region
    $region26: #{forward.1} parent=1 // pred_check
      _
    $region27: #{forward.1} parent=1 // pred_check_branch
      %33 = sbr.rel (0) target = $region29
    $region28: #{forward.1} parent=1 // pred_region
      _
    $region29: #{forward.1} parent=1 // pred_fallthru
      _
    // Predicated region
    $region30: #{forward.1} parent=1 // pred_check
      _
    $region31: #{forward.1} parent=1 // pred_check_branch
      %35 = sbr.rel (0) target = $region33
    $region32: #{forward.1} parent=1 // pred_region
      _
    $region33: #{forward.1} parent=1 // pred_fallthru
      _
    // Predicated region
    $region34: #{forward.1} parent=1 // pred_check
      _
    $region35: #{forward.1} parent=1 // pred_check_branch
      %37 = sbr.rel (0) target = $region37
    $region36: #{forward.1} parent=1 // pred_region
      _
    $region37: #{forward.1} parent=1 // pred_fallthru
      _
    // Predicated region
    $region38: #{forward.1} parent=1 // pred_check
      _
    $region39: #{forward.1} parent=1 // pred_check_branch
      %39 = sbr.rel (0) target = $region41
    $region40: #{forward.1} parent=1 // pred_region
      _
    $region41: #{forward.1} parent=1 // pred_fallthru
      _
    // Predicated region
    $region42: #{forward.1} parent=1 // pred_check
      _
    $region43: #{forward.1} parent=1 // pred_check_branch
      %41 = sbr.rel (0) target = $region45
    $region44: #{forward.1} parent=1 // pred_region
      _
    $region45: #{forward.1} parent=1 // pred_fallthru
      _
    // Predicated region
    $region46: #{forward.1} parent=1 // pred_check
      _
    $region47: #{forward.1} parent=1 // pred_check_branch
      %43 = sbr.rel (0) target = $region49
    $region48: #{forward.1} parent=1 // pred_region
      _
    $region49: #{forward.1} parent=1 // pred_fallthru
      _
    %v44 = vld [vmem:[%s0] sm:$0xff]
    %v45 = vld [vmem:[%s0 + $0x8] sm:$0xff]
    %v46 = vld [vmem:[%s0 + $0x10] sm:$0xff]
    %v47 = vld [vmem:[%s0 + $0x18] sm:$0xff]
    %v48 = vld [vmem:[%s0 + $0x20] sm:$0xff]
    %v49 = vld [vmem:[%s0 + $0x28] sm:$0xff]
    %v50 = vld [vmem:[%s0 + $0x30] sm:$0xff]
    %v51 = vld [vmem:[%s0 + $0x38] sm:$0xff]
    %v52 = vld [vmem:[%s0 + $0x40] sm:$0xff]
    %v53 = vld [vmem:[%s0 + $0x48] sm:$0xff]
    %v54 = vld [vmem:[%s0 + $0x50] sm:$0xff]
    %v55 = vld [vmem:[%s0 + $0x58] sm:$0xff]
    %v56 = vld [vmem:[%s0 + $0x60] sm:$0xff]
    %v57 = vld [vmem:[%s0 + $0x68] sm:$0xff]
    %v58 = vld [vmem:[%s0 + $0x70] sm:$0xff]
    %v59 = vld [vmem:[%s0 + $0x78] sm:$0xff]
    %v60 = vld [vmem:[%s0 + $0x80] sm:$0xff]
    %v61 = vld [vmem:[%s1] sm:$0xff]
    %v62 = vld [vmem:[%s1 + $0x8] sm:$0xff]
    %v63 = vld [vmem:[%s1 + $0x10] sm:$0x1]
    %v64 = vld [vmem:[%s2] sm:$0xff]
    %v65 = vld [vmem:[%s2 + $0x8] sm:$0xff]
    %v66 = vld [vmem:[%s3] sm:$0xff]
    %84 = vrot.lane.b32.xlu0 %v44, 71
    %v85 = vpop.permute.xlu0 %84
    %86 = vrot.lane.b32.xlu0 %v45, 71
    %v87 = vpop.permute.xlu0 %86
    %88 = vrot.lane.b32.xlu0 %v46, 71
    %v89 = vpop.permute.xlu0 %88
    %90 = vrot.lane.b32.xlu0 %v47, 71
    %v91 = vpop.permute.xlu0 %90
    %92 = vrot.lane.b32.xlu0 %v48, 71
    %v93 = vpop.permute.xlu0 %92
    %94 = vrot.lane.b32.xlu0 %v49, 71
    %v95 = vpop.permute.xlu0 %94
    %96 = vrot.lane.b32.xlu0 %v50, 71
    %v97 = vpop.permute.xlu0 %96
    %98 = vrot.lane.b32.xlu0 %v51, 71
    %v99 = vpop.permute.xlu0 %98
    %100 = vrot.lane.b32.xlu0 %v52, 71
    %v101 = vpop.permute.xlu0 %100
    %102 = vrot.lane.b32.xlu0 %v53, 71
    %v103 = vpop.permute.xlu0 %102
    %104 = vrot.lane.b32.xlu0 %v54, 71
    %v105 = vpop.permute.xlu0 %104
    %106 = vrot.lane.b32.xlu0 %v55, 71
    %v107 = vpop.permute.xlu0 %106
    %108 = vrot.lane.b32.xlu0 %v56, 71
    %v109 = vpop.permute.xlu0 %108
    %110 = vrot.lane.b32.xlu0 %v57, 71
    %v111 = vpop.permute.xlu0 %110
    %112 = vrot.lane.b32.xlu0 %v58, 71
    %v113 = vpop.permute.xlu0 %112
    %114 = vrot.lane.b32.xlu0 %v59, 71
    %v115 = vpop.permute.xlu0 %114
    %116 = vrot.lane.b32.xlu0 %v60, 71
    %v117 = vpop.permute.xlu0 %116
    %vm118 = vcmask 580608
    %v119 = vsel %vm118, %v85, %v87
    %v120 = vsel %vm118, %v87, %v89
    %v121 = vsel %vm118, %v89, %v91
    %v122 = vsel %vm118, %v91, %v93
    %v123 = vsel %vm118, %v93, %v95
    %v124 = vsel %vm118, %v95, %v97
    %v125 = vsel %vm118, %v97, %v99
    %v126 = vsel %vm118, %v99, %v101
    %v127 = vsel %vm118, %v101, %v103
    %v128 = vsel %vm118, %v103, %v105
    %v129 = vsel %vm118, %v105, %v107
    %v130 = vsel %vm118, %v107, %v109
    %v131 = vsel %vm118, %v109, %v111
    %v132 = vsel %vm118, %v111, %v113
    %v133 = vsel %vm118, %v113, %v115
    %v134 = vsel %vm118, %v115, %v117
    %v152 = vsel %vm118, 0.0, %v85
    %vm153 = vcmask 449536
    %v154 = vsel %vm153, %v117, 0.0
    %157 = vrot.lane.b32.xlu0 0.0, 127
    %v158 = vpop.permute.xlu0 %157
    %159 = vrot.lane.b32.xlu0 %v152, 127
    %v160 = vpop.permute.xlu0 %159
    %161 = vrot.lane.b32.xlu0 %v119, 127
    %v162 = vpop.permute.xlu0 %161
    %163 = vrot.lane.b32.xlu0 %v120, 127
    %v164 = vpop.permute.xlu0 %163
    %165 = vrot.lane.b32.xlu0 %v121, 127
    %v166 = vpop.permute.xlu0 %165
    %167 = vrot.lane.b32.xlu0 %v122, 127
    %v168 = vpop.permute.xlu0 %167
    %169 = vrot.lane.b32.xlu0 %v123, 127
    %v170 = vpop.permute.xlu0 %169
    %171 = vrot.lane.b32.xlu0 %v124, 127
    %v172 = vpop.permute.xlu0 %171
    %173 = vrot.lane.b32.xlu0 %v125, 127
    %v174 = vpop.permute.xlu0 %173
    %175 = vrot.lane.b32.xlu0 %v126, 127
    %v176 = vpop.permute.xlu0 %175
    %177 = vrot.lane.b32.xlu0 %v127, 127
    %v178 = vpop.permute.xlu0 %177
    %179 = vrot.lane.b32.xlu0 %v128, 127
    %v180 = vpop.permute.xlu0 %179
    %181 = vrot.lane.b32.xlu0 %v129, 127
    %v182 = vpop.permute.xlu0 %181
    %183 = vrot.lane.b32.xlu0 %v130, 127
    %v184 = vpop.permute.xlu0 %183
    %185 = vrot.lane.b32.xlu0 %v131, 127
    %v186 = vpop.permute.xlu0 %185
    %187 = vrot.lane.b32.xlu0 %v132, 127
    %v188 = vpop.permute.xlu0 %187
    %189 = vrot.lane.b32.xlu0 %v133, 127
    %v190 = vpop.permute.xlu0 %189
    %vm191 = vcmask 1039360
    %v192 = vsel %vm191, %v158, %v160
    %v193 = vsel %vm191, %v160, %v162
    %v194 = vsel %vm191, %v162, %v164
    %v195 = vsel %vm191, %v164, %v166
    %v196 = vsel %vm191, %v166, %v168
    %v197 = vsel %vm191, %v168, %v170
    %v198 = vsel %vm191, %v170, %v172
    %v199 = vsel %vm191, %v172, %v174
    %v200 = vsel %vm191, %v174, %v176
    %v201 = vsel %vm191, %v176, %v178
    %v202 = vsel %vm191, %v178, %v180
    %v203 = vsel %vm191, %v180, %v182
    %v204 = vsel %vm191, %v182, %v184
    %v205 = vsel %vm191, %v184, %v186
    %v206 = vsel %vm191, %v186, %v188
    %v207 = vsel %vm191, %v188, %v190
    %225 = vrot.lane.b32.xlu0 0.0, 126
    %v226 = vpop.permute.xlu0 %225
    %227 = vrot.lane.b32.xlu0 %v152, 126
    %v228 = vpop.permute.xlu0 %227
    %229 = vrot.lane.b32.xlu0 %v119, 126
    %v230 = vpop.permute.xlu0 %229
    %231 = vrot.lane.b32.xlu0 %v120, 126
    %v232 = vpop.permute.xlu0 %231
    %233 = vrot.lane.b32.xlu0 %v121, 126
    %v234 = vpop.permute.xlu0 %233
    %235 = vrot.lane.b32.xlu0 %v122, 126
    %v236 = vpop.permute.xlu0 %235
    %237 = vrot.lane.b32.xlu0 %v123, 126
    %v238 = vpop.permute.xlu0 %237
    %239 = vrot.lane.b32.xlu0 %v124, 126
    %v240 = vpop.permute.xlu0 %239
    %241 = vrot.lane.b32.xlu0 %v125, 126
    %v242 = vpop.permute.xlu0 %241
    %243 = vrot.lane.b32.xlu0 %v126, 126
    %v244 = vpop.permute.xlu0 %243
    %245 = vrot.lane.b32.xlu0 %v127, 126
    %v246 = vpop.permute.xlu0 %245
    %247 = vrot.lane.b32.xlu0 %v128, 126
    %v248 = vpop.permute.xlu0 %247
    %249 = vrot.lane.b32.xlu0 %v129, 126
    %v250 = vpop.permute.xlu0 %249
    %251 = vrot.lane.b32.xlu0 %v130, 126
    %v252 = vpop.permute.xlu0 %251
    %253 = vrot.lane.b32.xlu0 %v131, 126
    %v254 = vpop.permute.xlu0 %253
    %255 = vrot.lane.b32.xlu0 %v132, 126
    %v256 = vpop.permute.xlu0 %255
    %257 = vrot.lane.b32.xlu0 %v133, 126
    %v258 = vpop.permute.xlu0 %257
    %vm259 = vcmask 1031168
    %v260 = vsel %vm259, %v226, %v228
    %v261 = vsel %vm259, %v228, %v230
    %v262 = vsel %vm259, %v230, %v232
    %v263 = vsel %vm259, %v232, %v234
    %v264 = vsel %vm259, %v234, %v236
    %v265 = vsel %vm259, %v236, %v238
    %v266 = vsel %vm259, %v238, %v240
    %v267 = vsel %vm259, %v240, %v242
    %v268 = vsel %vm259, %v242, %v244
    %v269 = vsel %vm259, %v244, %v246
    %v270 = vsel %vm259, %v246, %v248
    %v271 = vsel %vm259, %v248, %v250
    %v272 = vsel %vm259, %v250, %v252
    %v273 = vsel %vm259, %v252, %v254
    %v274 = vsel %vm259, %v254, %v256
    %v275 = vsel %vm259, %v256, %v258
    %293 = vrot.lane.b32.xlu0 0.0, 110
    %v294 = vpop.permute.xlu0 %293
    %295 = vrot.lane.b32.xlu0 %v152, 110
    %v296 = vpop.permute.xlu0 %295
    %297 = vrot.lane.b32.xlu0 %v119, 110
    %v298 = vpop.permute.xlu0 %297
    %299 = vrot.lane.b32.xlu0 %v120, 110
    %v300 = vpop.permute.xlu0 %299
    %301 = vrot.lane.b32.xlu0 %v121, 110
    %v302 = vpop.permute.xlu0 %301
    %303 = vrot.lane.b32.xlu0 %v122, 110
    %v304 = vpop.permute.xlu0 %303
    %305 = vrot.lane.b32.xlu0 %v123, 110
    %v306 = vpop.permute.xlu0 %305
    %307 = vrot.lane.b32.xlu0 %v124, 110
    %v308 = vpop.permute.xlu0 %307
    %309 = vrot.lane.b32.xlu0 %v125, 110
    %v310 = vpop.permute.xlu0 %309
    %311 = vrot.lane.b32.xlu0 %v126, 110
    %v312 = vpop.permute.xlu0 %311
    %313 = vrot.lane.b32.xlu0 %v127, 110
    %v314 = vpop.permute.xlu0 %313
    %315 = vrot.lane.b32.xlu0 %v128, 110
    %v316 = vpop.permute.xlu0 %315
    %317 = vrot.lane.b32.xlu0 %v129, 110
    %v318 = vpop.permute.xlu0 %317
    %319 = vrot.lane.b32.xlu0 %v130, 110
    %v320 = vpop.permute.xlu0 %319
    %321 = vrot.lane.b32.xlu0 %v131, 110
    %v322 = vpop.permute.xlu0 %321
    %323 = vrot.lane.b32.xlu0 %v132, 110
    %v324 = vpop.permute.xlu0 %323
    %325 = vrot.lane.b32.xlu0 %v133, 110
    %v326 = vpop.permute.xlu0 %325
    %327 = vrot.lane.b32.xlu0 %v134, 110
    %v328 = vpop.permute.xlu0 %327
    %vm329 = vcmask 900096
    %v330 = vsel %vm329, %v294, %v296
    %v331 = vsel %vm329, %v296, %v298
    %v332 = vsel %vm329, %v298, %v300
    %v333 = vsel %vm329, %v300, %v302
    %v334 = vsel %vm329, %v302, %v304
    %v335 = vsel %vm329, %v304, %v306
    %v336 = vsel %vm329, %v306, %v308
    %v337 = vsel %vm329, %v308, %v310
    %v338 = vsel %vm329, %v310, %v312
    %v339 = vsel %vm329, %v312, %v314
    %v340 = vsel %vm329, %v314, %v316
    %v341 = vsel %vm329, %v316, %v318
    %v342 = vsel %vm329, %v318, %v320
    %v343 = vsel %vm329, %v320, %v322
    %v344 = vsel %vm329, %v322, %v324
    %v345 = vsel %vm329, %v324, %v326
    %v346 = vsel %vm329, %v326, %v328
    %364 = vrot.lane.b32.xlu0 0.0, 109
    %v365 = vpop.permute.xlu0 %364
    %366 = vrot.lane.b32.xlu0 %v152, 109
    %v367 = vpop.permute.xlu0 %366
    %368 = vrot.lane.b32.xlu0 %v119, 109
    %v369 = vpop.permute.xlu0 %368
    %370 = vrot.lane.b32.xlu0 %v120, 109
    %v371 = vpop.permute.xlu0 %370
    %372 = vrot.lane.b32.xlu0 %v121, 109
    %v373 = vpop.permute.xlu0 %372
    %374 = vrot.lane.b32.xlu0 %v122, 109
    %v375 = vpop.permute.xlu0 %374
    %376 = vrot.lane.b32.xlu0 %v123, 109
    %v377 = vpop.permute.xlu0 %376
    %378 = vrot.lane.b32.xlu0 %v124, 109
    %v379 = vpop.permute.xlu0 %378
    %380 = vrot.lane.b32.xlu0 %v125, 109
    %v381 = vpop.permute.xlu0 %380
    %382 = vrot.lane.b32.xlu0 %v126, 109
    %v383 = vpop.permute.xlu0 %382
    %384 = vrot.lane.b32.xlu0 %v127, 109
    %v385 = vpop.permute.xlu0 %384
    %386 = vrot.lane.b32.xlu0 %v128, 109
    %v387 = vpop.permute.xlu0 %386
    %388 = vrot.lane.b32.xlu0 %v129, 109
    %v389 = vpop.permute.xlu0 %388
    %390 = vrot.lane.b32.xlu0 %v130, 109
    %v391 = vpop.permute.xlu0 %390
    %392 = vrot.lane.b32.xlu0 %v131, 109
    %v393 = vpop.permute.xlu0 %392
    %394 = vrot.lane.b32.xlu0 %v132, 109
    %v395 = vpop.permute.xlu0 %394
    %396 = vrot.lane.b32.xlu0 %v133, 109
    %v397 = vpop.permute.xlu0 %396
    %398 = vrot.lane.b32.xlu0 %v134, 109
    %v399 = vpop.permute.xlu0 %398
    %vm400 = vcmask 891904
    %v401 = vsel %vm400, %v365, %v367
    %v402 = vsel %vm400, %v367, %v369
    %v403 = vsel %vm400, %v369, %v371
    %v404 = vsel %vm400, %v371, %v373
    %v405 = vsel %vm400, %v373, %v375
    %v406 = vsel %vm400, %v375, %v377
    %v407 = vsel %vm400, %v377, %v379
    %v408 = vsel %vm400, %v379, %v381
    %v409 = vsel %vm400, %v381, %v383
    %v410 = vsel %vm400, %v383, %v385
    %v411 = vsel %vm400, %v385, %v387
    %v412 = vsel %vm400, %v387, %v389
    %v413 = vsel %vm400, %v389, %v391
    %v414 = vsel %vm400, %v391, %v393
    %v415 = vsel %vm400, %v393, %v395
    %v416 = vsel %vm400, %v395, %v397
    %v417 = vsel %vm400, %v397, %v399
    %435 = vrot.lane.b32.xlu0 0.0, 108
    %v436 = vpop.permute.xlu0 %435
    %437 = vrot.lane.b32.xlu0 %v152, 108
    %v438 = vpop.permute.xlu0 %437
    %439 = vrot.lane.b32.xlu0 %v119, 108
    %v440 = vpop.permute.xlu0 %439
    %441 = vrot.lane.b32.xlu0 %v120, 108
    %v442 = vpop.permute.xlu0 %441
    %443 = vrot.lane.b32.xlu0 %v121, 108
    %v444 = vpop.permute.xlu0 %443
    %445 = vrot.lane.b32.xlu0 %v122, 108
    %v446 = vpop.permute.xlu0 %445
    %447 = vrot.lane.b32.xlu0 %v123, 108
    %v448 = vpop.permute.xlu0 %447
    %449 = vrot.lane.b32.xlu0 %v124, 108
    %v450 = vpop.permute.xlu0 %449
    %451 = vrot.lane.b32.xlu0 %v125, 108
    %v452 = vpop.permute.xlu0 %451
    %453 = vrot.lane.b32.xlu0 %v126, 108
    %v454 = vpop.permute.xlu0 %453
    %455 = vrot.lane.b32.xlu0 %v127, 108
    %v456 = vpop.permute.xlu0 %455
    %457 = vrot.lane.b32.xlu0 %v128, 108
    %v458 = vpop.permute.xlu0 %457
    %459 = vrot.lane.b32.xlu0 %v129, 108
    %v460 = vpop.permute.xlu0 %459
    %461 = vrot.lane.b32.xlu0 %v130, 108
    %v462 = vpop.permute.xlu0 %461
    %463 = vrot.lane.b32.xlu0 %v131, 108
    %v464 = vpop.permute.xlu0 %463
    %465 = vrot.lane.b32.xlu0 %v132, 108
    %v466 = vpop.permute.xlu0 %465
    %467 = vrot.lane.b32.xlu0 %v133, 108
    %v468 = vpop.permute.xlu0 %467
    %469 = vrot.lane.b32.xlu0 %v134, 108
    %v470 = vpop.permute.xlu0 %469
    %vm471 = vcmask 883712
    %v472 = vsel %vm471, %v436, %v438
    %v473 = vsel %vm471, %v438, %v440
    %v474 = vsel %vm471, %v440, %v442
    %v475 = vsel %vm471, %v442, %v444
    %v476 = vsel %vm471, %v444, %v446
    %v477 = vsel %vm471, %v446, %v448
    %v478 = vsel %vm471, %v448, %v450
    %v479 = vsel %vm471, %v450, %v452
    %v480 = vsel %vm471, %v452, %v454
    %v481 = vsel %vm471, %v454, %v456
    %v482 = vsel %vm471, %v456, %v458
    %v483 = vsel %vm471, %v458, %v460
    %v484 = vsel %vm471, %v460, %v462
    %v485 = vsel %vm471, %v462, %v464
    %v486 = vsel %vm471, %v464, %v466
    %v487 = vsel %vm471, %v466, %v468
    %v488 = vsel %vm471, %v468, %v470
    %506 = vrot.lane.b32.xlu0 0.0, 92
    %v507 = vpop.permute.xlu0 %506
    %508 = vrot.lane.b32.xlu0 %v152, 92
    %v509 = vpop.permute.xlu0 %508
    %510 = vrot.lane.b32.xlu0 %v119, 92
    %v511 = vpop.permute.xlu0 %510
    %512 = vrot.lane.b32.xlu0 %v120, 92
    %v513 = vpop.permute.xlu0 %512
    %514 = vrot.lane.b32.xlu0 %v121, 92
    %v515 = vpop.permute.xlu0 %514
    %516 = vrot.lane.b32.xlu0 %v122, 92
    %v517 = vpop.permute.xlu0 %516
    %518 = vrot.lane.b32.xlu0 %v123, 92
    %v519 = vpop.permute.xlu0 %518
    %520 = vrot.lane.b32.xlu0 %v124, 92
    %v521 = vpop.permute.xlu0 %520
    %522 = vrot.lane.b32.xlu0 %v125, 92
    %v523 = vpop.permute.xlu0 %522
    %524 = vrot.lane.b32.xlu0 %v126, 92
    %v525 = vpop.permute.xlu0 %524
    %526 = vrot.lane.b32.xlu0 %v127, 92
    %v527 = vpop.permute.xlu0 %526
    %528 = vrot.lane.b32.xlu0 %v128, 92
    %v529 = vpop.permute.xlu0 %528
    %530 = vrot.lane.b32.xlu0 %v129, 92
    %v531 = vpop.permute.xlu0 %530
    %532 = vrot.lane.b32.xlu0 %v130, 92
    %v533 = vpop.permute.xlu0 %532
    %534 = vrot.lane.b32.xlu0 %v131, 92
    %v535 = vpop.permute.xlu0 %534
    %536 = vrot.lane.b32.xlu0 %v132, 92
    %v537 = vpop.permute.xlu0 %536
    %538 = vrot.lane.b32.xlu0 %v133, 92
    %v539 = vpop.permute.xlu0 %538
    %540 = vrot.lane.b32.xlu0 %v134, 92
    %v541 = vpop.permute.xlu0 %540
    %vm542 = vcmask 752640
    %v543 = vsel %vm542, %v507, %v509
    %v544 = vsel %vm542, %v509, %v511
    %v545 = vsel %vm542, %v511, %v513
    %v546 = vsel %vm542, %v513, %v515
    %v547 = vsel %vm542, %v515, %v517
    %v548 = vsel %vm542, %v517, %v519
    %v549 = vsel %vm542, %v519, %v521
    %v550 = vsel %vm542, %v521, %v523
    %v551 = vsel %vm542, %v523, %v525
    %v552 = vsel %vm542, %v525, %v527
    %v553 = vsel %vm542, %v527, %v529
    %v554 = vsel %vm542, %v529, %v531
    %v555 = vsel %vm542, %v531, %v533
    %v556 = vsel %vm542, %v533, %v535
    %v557 = vsel %vm542, %v535, %v537
    %v558 = vsel %vm542, %v537, %v539
    %v559 = vsel %vm542, %v539, %v541
    %577 = vrot.lane.b32.xlu0 0.0, 91
    %v578 = vpop.permute.xlu0 %577
    %579 = vrot.lane.b32.xlu0 %v152, 91
    %v580 = vpop.permute.xlu0 %579
    %581 = vrot.lane.b32.xlu0 %v119, 91
    %v582 = vpop.permute.xlu0 %581
    %583 = vrot.lane.b32.xlu0 %v120, 91
    %v584 = vpop.permute.xlu0 %583
    %585 = vrot.lane.b32.xlu0 %v121, 91
    %v586 = vpop.permute.xlu0 %585
    %587 = vrot.lane.b32.xlu0 %v122, 91
    %v588 = vpop.permute.xlu0 %587
    %589 = vrot.lane.b32.xlu0 %v123, 91
    %v590 = vpop.permute.xlu0 %589
    %591 = vrot.lane.b32.xlu0 %v124, 91
    %v592 = vpop.permute.xlu0 %591
    %593 = vrot.lane.b32.xlu0 %v125, 91
    %v594 = vpop.permute.xlu0 %593
    %595 = vrot.lane.b32.xlu0 %v126, 91
    %v596 = vpop.permute.xlu0 %595
    %597 = vrot.lane.b32.xlu0 %v127, 91
    %v598 = vpop.permute.xlu0 %597
    %599 = vrot.lane.b32.xlu0 %v128, 91
    %v600 = vpop.permute.xlu0 %599
    %601 = vrot.lane.b32.xlu0 %v129, 91
    %v602 = vpop.permute.xlu0 %601
    %603 = vrot.lane.b32.xlu0 %v130, 91
    %v604 = vpop.permute.xlu0 %603
    %605 = vrot.lane.b32.xlu0 %v131, 91
    %v606 = vpop.permute.xlu0 %605
    %607 = vrot.lane.b32.xlu0 %v132, 91
    %v608 = vpop.permute.xlu0 %607
    %609 = vrot.lane.b32.xlu0 %v133, 91
    %v610 = vpop.permute.xlu0 %609
    %611 = vrot.lane.b32.xlu0 %v134, 91
    %v612 = vpop.permute.xlu0 %611
    %vm613 = vcmask 744448
    %v614 = vsel %vm613, %v578, %v580
    %v615 = vsel %vm613, %v580, %v582
    %v616 = vsel %vm613, %v582, %v584
    %v617 = vsel %vm613, %v584, %v586
    %v618 = vsel %vm613, %v586, %v588
    %v619 = vsel %vm613, %v588, %v590
    %v620 = vsel %vm613, %v590, %v592
    %v621 = vsel %vm613, %v592, %v594
    %v622 = vsel %vm613, %v594, %v596
    %v623 = vsel %vm613, %v596, %v598
    %v624 = vsel %vm613, %v598, %v600
    %v625 = vsel %vm613, %v600, %v602
    %v626 = vsel %vm613, %v602, %v604
    %v627 = vsel %vm613, %v604, %v606
    %v628 = vsel %vm613, %v606, %v608
    %v629 = vsel %vm613, %v608, %v610
    %v630 = vsel %vm613, %v610, %v612
    %648 = vrot.lane.b32.xlu0 0.0, 90
    %v649 = vpop.permute.xlu0 %648
    %650 = vrot.lane.b32.xlu0 %v152, 90
    %v651 = vpop.permute.xlu0 %650
    %652 = vrot.lane.b32.xlu0 %v119, 90
    %v653 = vpop.permute.xlu0 %652
    %654 = vrot.lane.b32.xlu0 %v120, 90
    %v655 = vpop.permute.xlu0 %654
    %656 = vrot.lane.b32.xlu0 %v121, 90
    %v657 = vpop.permute.xlu0 %656
    %658 = vrot.lane.b32.xlu0 %v122, 90
    %v659 = vpop.permute.xlu0 %658
    %660 = vrot.lane.b32.xlu0 %v123, 90
    %v661 = vpop.permute.xlu0 %660
    %662 = vrot.lane.b32.xlu0 %v124, 90
    %v663 = vpop.permute.xlu0 %662
    %664 = vrot.lane.b32.xlu0 %v125, 90
    %v665 = vpop.permute.xlu0 %664
    %666 = vrot.lane.b32.xlu0 %v126, 90
    %v667 = vpop.permute.xlu0 %666
    %668 = vrot.lane.b32.xlu0 %v127, 90
    %v669 = vpop.permute.xlu0 %668
    %670 = vrot.lane.b32.xlu0 %v128, 90
    %v671 = vpop.permute.xlu0 %670
    %672 = vrot.lane.b32.xlu0 %v129, 90
    %v673 = vpop.permute.xlu0 %672
    %674 = vrot.lane.b32.xlu0 %v130, 90
    %v675 = vpop.permute.xlu0 %674
    %676 = vrot.lane.b32.xlu0 %v131, 90
    %v677 = vpop.permute.xlu0 %676
    %678 = vrot.lane.b32.xlu0 %v132, 90
    %v679 = vpop.permute.xlu0 %678
    %680 = vrot.lane.b32.xlu0 %v133, 90
    %v681 = vpop.permute.xlu0 %680
    %682 = vrot.lane.b32.xlu0 %v134, 90
    %v683 = vpop.permute.xlu0 %682
    %vm684 = vcmask 736256
    %v685 = vsel %vm684, %v649, %v651
    %v686 = vsel %vm684, %v651, %v653
    %v687 = vsel %vm684, %v653, %v655
    %v688 = vsel %vm684, %v655, %v657
    %v689 = vsel %vm684, %v657, %v659
    %v690 = vsel %vm684, %v659, %v661
    %v691 = vsel %vm684, %v661, %v663
    %v692 = vsel %vm684, %v663, %v665
    %v693 = vsel %vm684, %v665, %v667
    %v694 = vsel %vm684, %v667, %v669
    %v695 = vsel %vm684, %v669, %v671
    %v696 = vsel %vm684, %v671, %v673
    %v697 = vsel %vm684, %v673, %v675
    %v698 = vsel %vm684, %v675, %v677
    %v699 = vsel %vm684, %v677, %v679
    %v700 = vsel %vm684, %v679, %v681
    %v701 = vsel %vm684, %v681, %v683
    %720 = vrot.lane.b32.xlu0 %v152, 76
    %v721 = vpop.permute.xlu0 %720
    %722 = vrot.lane.b32.xlu0 %v119, 76
    %v723 = vpop.permute.xlu0 %722
    %724 = vrot.lane.b32.xlu0 %v120, 76
    %v725 = vpop.permute.xlu0 %724
    %726 = vrot.lane.b32.xlu0 %v121, 76
    %v727 = vpop.permute.xlu0 %726
    %728 = vrot.lane.b32.xlu0 %v122, 76
    %v729 = vpop.permute.xlu0 %728
    %730 = vrot.lane.b32.xlu0 %v123, 76
    %v731 = vpop.permute.xlu0 %730
    %732 = vrot.lane.b32.xlu0 %v124, 76
    %v733 = vpop.permute.xlu0 %732
    %734 = vrot.lane.b32.xlu0 %v125, 76
    %v735 = vpop.permute.xlu0 %734
    %736 = vrot.lane.b32.xlu0 %v126, 76
    %v737 = vpop.permute.xlu0 %736
    %738 = vrot.lane.b32.xlu0 %v127, 76
    %v739 = vpop.permute.xlu0 %738
    %740 = vrot.lane.b32.xlu0 %v128, 76
    %v741 = vpop.permute.xlu0 %740
    %742 = vrot.lane.b32.xlu0 %v129, 76
    %v743 = vpop.permute.xlu0 %742
    %744 = vrot.lane.b32.xlu0 %v130, 76
    %v745 = vpop.permute.xlu0 %744
    %746 = vrot.lane.b32.xlu0 %v131, 76
    %v747 = vpop.permute.xlu0 %746
    %748 = vrot.lane.b32.xlu0 %v132, 76
    %v749 = vpop.permute.xlu0 %748
    %750 = vrot.lane.b32.xlu0 %v133, 76
    %v751 = vpop.permute.xlu0 %750
    %752 = vrot.lane.b32.xlu0 %v134, 76
    %v753 = vpop.permute.xlu0 %752
    %754 = vrot.lane.b32.xlu0 %v154, 76
    %v755 = vpop.permute.xlu0 %754
    %vm756 = vcmask 621568
    %v757 = vsel %vm756, %v721, %v723
    %v758 = vsel %vm756, %v723, %v725
    %v759 = vsel %vm756, %v725, %v727
    %v760 = vsel %vm756, %v727, %v729
    %v761 = vsel %vm756, %v729, %v731
    %v762 = vsel %vm756, %v731, %v733
    %v763 = vsel %vm756, %v733, %v735
    %v764 = vsel %vm756, %v735, %v737
    %v765 = vsel %vm756, %v737, %v739
    %v766 = vsel %vm756, %v739, %v741
    %v767 = vsel %vm756, %v741, %v743
    %v768 = vsel %vm756, %v743, %v745
    %v769 = vsel %vm756, %v745, %v747
    %v770 = vsel %vm756, %v747, %v749
    %v771 = vsel %vm756, %v749, %v751
    %v772 = vsel %vm756, %v751, %v753
    %v773 = vsel %vm756, %v753, %v755
    %791 = vrot.lane.b32.xlu0 %v152, 75
    %v792 = vpop.permute.xlu0 %791
    %793 = vrot.lane.b32.xlu0 %v119, 75
    %v794 = vpop.permute.xlu0 %793
    %795 = vrot.lane.b32.xlu0 %v120, 75
    %v796 = vpop.permute.xlu0 %795
    %797 = vrot.lane.b32.xlu0 %v121, 75
    %v798 = vpop.permute.xlu0 %797
    %799 = vrot.lane.b32.xlu0 %v122, 75
    %v800 = vpop.permute.xlu0 %799
    %801 = vrot.lane.b32.xlu0 %v123, 75
    %v802 = vpop.permute.xlu0 %801
    %803 = vrot.lane.b32.xlu0 %v124, 75
    %v804 = vpop.permute.xlu0 %803
    %805 = vrot.lane.b32.xlu0 %v125, 75
    %v806 = vpop.permute.xlu0 %805
    %807 = vrot.lane.b32.xlu0 %v126, 75
    %v808 = vpop.permute.xlu0 %807
    %809 = vrot.lane.b32.xlu0 %v127, 75
    %v810 = vpop.permute.xlu0 %809
    %811 = vrot.lane.b32.xlu0 %v128, 75
    %v812 = vpop.permute.xlu0 %811
    %813 = vrot.lane.b32.xlu0 %v129, 75
    %v814 = vpop.permute.xlu0 %813
    %815 = vrot.lane.b32.xlu0 %v130, 75
    %v816 = vpop.permute.xlu0 %815
    %817 = vrot.lane.b32.xlu0 %v131, 75
    %v818 = vpop.permute.xlu0 %817
    %819 = vrot.lane.b32.xlu0 %v132, 75
    %v820 = vpop.permute.xlu0 %819
    %821 = vrot.lane.b32.xlu0 %v133, 75
    %v822 = vpop.permute.xlu0 %821
    %823 = vrot.lane.b32.xlu0 %v134, 75
    %v824 = vpop.permute.xlu0 %823
    %825 = vrot.lane.b32.xlu0 %v154, 75
    %v826 = vpop.permute.xlu0 %825
    %vm827 = vcmask 613376
    %v828 = vsel %vm827, %v792, %v794
    %v829 = vsel %vm827, %v794, %v796
    %v830 = vsel %vm827, %v796, %v798
    %v831 = vsel %vm827, %v798, %v800
    %v832 = vsel %vm827, %v800, %v802
    %v833 = vsel %vm827, %v802, %v804
    %v834 = vsel %vm827, %v804, %v806
    %v835 = vsel %vm827, %v806, %v808
    %v836 = vsel %vm827, %v808, %v810
    %v837 = vsel %vm827, %v810, %v812
    %v838 = vsel %vm827, %v812, %v814
    %v839 = vsel %vm827, %v814, %v816
    %v840 = vsel %vm827, %v816, %v818
    %v841 = vsel %vm827, %v818, %v820
    %v842 = vsel %vm827, %v820, %v822
    %v843 = vsel %vm827, %v822, %v824
    %v844 = vsel %vm827, %v824, %v826
    %862 = vrot.lane.b32.xlu0 %v152, 74
    %v863 = vpop.permute.xlu0 %862
    %864 = vrot.lane.b32.xlu0 %v119, 74
    %v865 = vpop.permute.xlu0 %864
    %866 = vrot.lane.b32.xlu0 %v120, 74
    %v867 = vpop.permute.xlu0 %866
    %868 = vrot.lane.b32.xlu0 %v121, 74
    %v869 = vpop.permute.xlu0 %868
    %870 = vrot.lane.b32.xlu0 %v122, 74
    %v871 = vpop.permute.xlu0 %870
    %872 = vrot.lane.b32.xlu0 %v123, 74
    %v873 = vpop.permute.xlu0 %872
    %874 = vrot.lane.b32.xlu0 %v124, 74
    %v875 = vpop.permute.xlu0 %874
    %876 = vrot.lane.b32.xlu0 %v125, 74
    %v877 = vpop.permute.xlu0 %876
    %878 = vrot.lane.b32.xlu0 %v126, 74
    %v879 = vpop.permute.xlu0 %878
    %880 = vrot.lane.b32.xlu0 %v127, 74
    %v881 = vpop.permute.xlu0 %880
    %882 = vrot.lane.b32.xlu0 %v128, 74
    %v883 = vpop.permute.xlu0 %882
    %884 = vrot.lane.b32.xlu0 %v129, 74
    %v885 = vpop.permute.xlu0 %884
    %886 = vrot.lane.b32.xlu0 %v130, 74
    %v887 = vpop.permute.xlu0 %886
    %888 = vrot.lane.b32.xlu0 %v131, 74
    %v889 = vpop.permute.xlu0 %888
    %890 = vrot.lane.b32.xlu0 %v132, 74
    %v891 = vpop.permute.xlu0 %890
    %892 = vrot.lane.b32.xlu0 %v133, 74
    %v893 = vpop.permute.xlu0 %892
    %894 = vrot.lane.b32.xlu0 %v134, 74
    %v895 = vpop.permute.xlu0 %894
    %896 = vrot.lane.b32.xlu0 %v154, 74
    %v897 = vpop.permute.xlu0 %896
    %vm898 = vcmask 605184
    %v899 = vsel %vm898, %v863, %v865
    %v900 = vsel %vm898, %v865, %v867
    %v901 = vsel %vm898, %v867, %v869
    %v902 = vsel %vm898, %v869, %v871
    %v903 = vsel %vm898, %v871, %v873
    %v904 = vsel %vm898, %v873, %v875
    %v905 = vsel %vm898, %v875, %v877
    %v906 = vsel %vm898, %v877, %v879
    %v907 = vsel %vm898, %v879, %v881
    %v908 = vsel %vm898, %v881, %v883
    %v909 = vsel %vm898, %v883, %v885
    %v910 = vsel %vm898, %v885, %v887
    %v911 = vsel %vm898, %v887, %v889
    %v912 = vsel %vm898, %v889, %v891
    %v913 = vsel %vm898, %v891, %v893
    %v914 = vsel %vm898, %v893, %v895
    %v915 = vsel %vm898, %v895, %v897
    %933 = vrot.lane.b32.xlu0 %v152, 58
    %v934 = vpop.permute.xlu0 %933
    %935 = vrot.lane.b32.xlu0 %v119, 58
    %v936 = vpop.permute.xlu0 %935
    %937 = vrot.lane.b32.xlu0 %v120, 58
    %v938 = vpop.permute.xlu0 %937
    %939 = vrot.lane.b32.xlu0 %v121, 58
    %v940 = vpop.permute.xlu0 %939
    %941 = vrot.lane.b32.xlu0 %v122, 58
    %v942 = vpop.permute.xlu0 %941
    %943 = vrot.lane.b32.xlu0 %v123, 58
    %v944 = vpop.permute.xlu0 %943
    %945 = vrot.lane.b32.xlu0 %v124, 58
    %v946 = vpop.permute.xlu0 %945
    %947 = vrot.lane.b32.xlu0 %v125, 58
    %v948 = vpop.permute.xlu0 %947
    %949 = vrot.lane.b32.xlu0 %v126, 58
    %v950 = vpop.permute.xlu0 %949
    %951 = vrot.lane.b32.xlu0 %v127, 58
    %v952 = vpop.permute.xlu0 %951
    %953 = vrot.lane.b32.xlu0 %v128, 58
    %v954 = vpop.permute.xlu0 %953
    %955 = vrot.lane.b32.xlu0 %v129, 58
    %v956 = vpop.permute.xlu0 %955
    %957 = vrot.lane.b32.xlu0 %v130, 58
    %v958 = vpop.permute.xlu0 %957
    %959 = vrot.lane.b32.xlu0 %v131, 58
    %v960 = vpop.permute.xlu0 %959
    %961 = vrot.lane.b32.xlu0 %v132, 58
    %v962 = vpop.permute.xlu0 %961
    %963 = vrot.lane.b32.xlu0 %v133, 58
    %v964 = vpop.permute.xlu0 %963
    %965 = vrot.lane.b32.xlu0 %v134, 58
    %v966 = vpop.permute.xlu0 %965
    %967 = vrot.lane.b32.xlu0 %v154, 58
    %v968 = vpop.permute.xlu0 %967
    %vm969 = vcmask 474112
    %v970 = vsel %vm969, %v934, %v936
    %v971 = vsel %vm969, %v936, %v938
    %v972 = vsel %vm969, %v938, %v940
    %v973 = vsel %vm969, %v940, %v942
    %v974 = vsel %vm969, %v942, %v944
    %v975 = vsel %vm969, %v944, %v946
    %v976 = vsel %vm969, %v946, %v948
    %v977 = vsel %vm969, %v948, %v950
    %v978 = vsel %vm969, %v950, %v952
    %v979 = vsel %vm969, %v952, %v954
    %v980 = vsel %vm969, %v954, %v956
    %v981 = vsel %vm969, %v956, %v958
    %v982 = vsel %vm969, %v958, %v960
    %v983 = vsel %vm969, %v960, %v962
    %v984 = vsel %vm969, %v962, %v964
    %v985 = vsel %vm969, %v964, %v966
    %v986 = vsel %vm969, %v966, %v968
    %1004 = vrot.lane.b32.xlu0 %v152, 57
    %v1005 = vpop.permute.xlu0 %1004
    %1006 = vrot.lane.b32.xlu0 %v119, 57
    %v1007 = vpop.permute.xlu0 %1006
    %1008 = vrot.lane.b32.xlu0 %v120, 57
    %v1009 = vpop.permute.xlu0 %1008
    %1010 = vrot.lane.b32.xlu0 %v121, 57
    %v1011 = vpop.permute.xlu0 %1010
    %1012 = vrot.lane.b32.xlu0 %v122, 57
    %v1013 = vpop.permute.xlu0 %1012
    %1014 = vrot.lane.b32.xlu0 %v123, 57
    %v1015 = vpop.permute.xlu0 %1014
    %1016 = vrot.lane.b32.xlu0 %v124, 57
    %v1017 = vpop.permute.xlu0 %1016
    %1018 = vrot.lane.b32.xlu0 %v125, 57
    %v1019 = vpop.permute.xlu0 %1018
    %1020 = vrot.lane.b32.xlu0 %v126, 57
    %v1021 = vpop.permute.xlu0 %1020
    %1022 = vrot.lane.b32.xlu0 %v127, 57
    %v1023 = vpop.permute.xlu0 %1022
    %1024 = vrot.lane.b32.xlu0 %v128, 57
    %v1025 = vpop.permute.xlu0 %1024
    %1026 = vrot.lane.b32.xlu0 %v129, 57
    %v1027 = vpop.permute.xlu0 %1026
    %1028 = vrot.lane.b32.xlu0 %v130, 57
    %v1029 = vpop.permute.xlu0 %1028
    %1030 = vrot.lane.b32.xlu0 %v131, 57
    %v1031 = vpop.permute.xlu0 %1030
    %1032 = vrot.lane.b32.xlu0 %v132, 57
    %v1033 = vpop.permute.xlu0 %1032
    %1034 = vrot.lane.b32.xlu0 %v133, 57
    %v1035 = vpop.permute.xlu0 %1034
    %1036 = vrot.lane.b32.xlu0 %v134, 57
    %v1037 = vpop.permute.xlu0 %1036
    %1038 = vrot.lane.b32.xlu0 %v154, 57
    %v1039 = vpop.permute.xlu0 %1038
    %vm1040 = vcmask 465920
    %v1041 = vsel %vm1040, %v1005, %v1007
    %v1042 = vsel %vm1040, %v1007, %v1009
    %v1043 = vsel %vm1040, %v1009, %v1011
    %v1044 = vsel %vm1040, %v1011, %v1013
    %v1045 = vsel %vm1040, %v1013, %v1015
    %v1046 = vsel %vm1040, %v1015, %v1017
    %v1047 = vsel %vm1040, %v1017, %v1019
    %v1048 = vsel %vm1040, %v1019, %v1021
    %v1049 = vsel %vm1040, %v1021, %v1023
    %v1050 = vsel %vm1040, %v1023, %v1025
    %v1051 = vsel %vm1040, %v1025, %v1027
    %v1052 = vsel %vm1040, %v1027, %v1029
    %v1053 = vsel %vm1040, %v1029, %v1031
    %v1054 = vsel %vm1040, %v1031, %v1033
    %v1055 = vsel %vm1040, %v1033, %v1035
    %v1056 = vsel %vm1040, %v1035, %v1037
    %v1057 = vsel %vm1040, %v1037, %v1039
    %1075 = vrot.lane.b32.xlu0 %v152, 56
    %v1076 = vpop.permute.xlu0 %1075
    %1077 = vrot.lane.b32.xlu0 %v119, 56
    %v1078 = vpop.permute.xlu0 %1077
    %1079 = vrot.lane.b32.xlu0 %v120, 56
    %v1080 = vpop.permute.xlu0 %1079
    %1081 = vrot.lane.b32.xlu0 %v121, 56
    %v1082 = vpop.permute.xlu0 %1081
    %1083 = vrot.lane.b32.xlu0 %v122, 56
    %v1084 = vpop.permute.xlu0 %1083
    %1085 = vrot.lane.b32.xlu0 %v123, 56
    %v1086 = vpop.permute.xlu0 %1085
    %1087 = vrot.lane.b32.xlu0 %v124, 56
    %v1088 = vpop.permute.xlu0 %1087
    %1089 = vrot.lane.b32.xlu0 %v125, 56
    %v1090 = vpop.permute.xlu0 %1089
    %1091 = vrot.lane.b32.xlu0 %v126, 56
    %v1092 = vpop.permute.xlu0 %1091
    %1093 = vrot.lane.b32.xlu0 %v127, 56
    %v1094 = vpop.permute.xlu0 %1093
    %1095 = vrot.lane.b32.xlu0 %v128, 56
    %v1096 = vpop.permute.xlu0 %1095
    %1097 = vrot.lane.b32.xlu0 %v129, 56
    %v1098 = vpop.permute.xlu0 %1097
    %1099 = vrot.lane.b32.xlu0 %v130, 56
    %v1100 = vpop.permute.xlu0 %1099
    %1101 = vrot.lane.b32.xlu0 %v131, 56
    %v1102 = vpop.permute.xlu0 %1101
    %1103 = vrot.lane.b32.xlu0 %v132, 56
    %v1104 = vpop.permute.xlu0 %1103
    %1105 = vrot.lane.b32.xlu0 %v133, 56
    %v1106 = vpop.permute.xlu0 %1105
    %1107 = vrot.lane.b32.xlu0 %v134, 56
    %v1108 = vpop.permute.xlu0 %1107
    %1109 = vrot.lane.b32.xlu0 %v154, 56
    %v1110 = vpop.permute.xlu0 %1109
    %vm1111 = vcmask 457728
    %v1112 = vsel %vm1111, %v1076, %v1078
    %v1113 = vsel %vm1111, %v1078, %v1080
    %v1114 = vsel %vm1111, %v1080, %v1082
    %v1115 = vsel %vm1111, %v1082, %v1084
    %v1116 = vsel %vm1111, %v1084, %v1086
    %v1117 = vsel %vm1111, %v1086, %v1088
    %v1118 = vsel %vm1111, %v1088, %v1090
    %v1119 = vsel %vm1111, %v1090, %v1092
    %v1120 = vsel %vm1111, %v1092, %v1094
    %v1121 = vsel %vm1111, %v1094, %v1096
    %v1122 = vsel %vm1111, %v1096, %v1098
    %v1123 = vsel %vm1111, %v1098, %v1100
    %v1124 = vsel %vm1111, %v1100, %v1102
    %v1125 = vsel %vm1111, %v1102, %v1104
    %v1126 = vsel %vm1111, %v1104, %v1106
    %v1127 = vsel %vm1111, %v1106, %v1108
    %v1128 = vsel %vm1111, %v1108, %v1110
    %1146 = vrot.lane.b32.xlu0 %v152, 40
    %v1147 = vpop.permute.xlu0 %1146
    %1148 = vrot.lane.b32.xlu0 %v119, 40
    %v1149 = vpop.permute.xlu0 %1148
    %1150 = vrot.lane.b32.xlu0 %v120, 40
    %v1151 = vpop.permute.xlu0 %1150
    %1152 = vrot.lane.b32.xlu0 %v121, 40
    %v1153 = vpop.permute.xlu0 %1152
    %1154 = vrot.lane.b32.xlu0 %v122, 40
    %v1155 = vpop.permute.xlu0 %1154
    %1156 = vrot.lane.b32.xlu0 %v123, 40
    %v1157 = vpop.permute.xlu0 %1156
    %1158 = vrot.lane.b32.xlu0 %v124, 40
    %v1159 = vpop.permute.xlu0 %1158
    %1160 = vrot.lane.b32.xlu0 %v125, 40
    %v1161 = vpop.permute.xlu0 %1160
    %1162 = vrot.lane.b32.xlu0 %v126, 40
    %v1163 = vpop.permute.xlu0 %1162
    %1164 = vrot.lane.b32.xlu0 %v127, 40
    %v1165 = vpop.permute.xlu0 %1164
    %1166 = vrot.lane.b32.xlu0 %v128, 40
    %v1167 = vpop.permute.xlu0 %1166
    %1168 = vrot.lane.b32.xlu0 %v129, 40
    %v1169 = vpop.permute.xlu0 %1168
    %1170 = vrot.lane.b32.xlu0 %v130, 40
    %v1171 = vpop.permute.xlu0 %1170
    %1172 = vrot.lane.b32.xlu0 %v131, 40
    %v1173 = vpop.permute.xlu0 %1172
    %1174 = vrot.lane.b32.xlu0 %v132, 40
    %v1175 = vpop.permute.xlu0 %1174
    %1176 = vrot.lane.b32.xlu0 %v133, 40
    %v1177 = vpop.permute.xlu0 %1176
    %1178 = vrot.lane.b32.xlu0 %v134, 40
    %v1179 = vpop.permute.xlu0 %1178
    %1180 = vrot.lane.b32.xlu0 %v154, 40
    %v1181 = vpop.permute.xlu0 %1180
    %vm1182 = vcmask 326656
    %v1183 = vsel %vm1182, %v1147, %v1149
    %v1184 = vsel %vm1182, %v1149, %v1151
    %v1185 = vsel %vm1182, %v1151, %v1153
    %v1186 = vsel %vm1182, %v1153, %v1155
    %v1187 = vsel %vm1182, %v1155, %v1157
    %v1188 = vsel %vm1182, %v1157, %v1159
    %v1189 = vsel %vm1182, %v1159, %v1161
    %v1190 = vsel %vm1182, %v1161, %v1163
    %v1191 = vsel %vm1182, %v1163, %v1165
    %v1192 = vsel %vm1182, %v1165, %v1167
    %v1193 = vsel %vm1182, %v1167, %v1169
    %v1194 = vsel %vm1182, %v1169, %v1171
    %v1195 = vsel %vm1182, %v1171, %v1173
    %v1196 = vsel %vm1182, %v1173, %v1175
    %v1197 = vsel %vm1182, %v1175, %v1177
    %v1198 = vsel %vm1182, %v1177, %v1179
    %v1199 = vsel %vm1182, %v1179, %v1181
    %1217 = vrot.lane.b32.xlu0 %v134, 127
    %v1218 = vpop.permute.xlu0 %1217
    %1219 = vrot.lane.b32.xlu0 %v154, 127
    %v1220 = vpop.permute.xlu0 %1219
    %v1221 = vsel %vm191, %v190, %v1218
    %v1222 = vsel %vm191, %v1218, %v1220
    %1223 = vrot.lane.b32.xlu0 %v119, 113
    %v1224 = vpop.permute.xlu0 %1223
    %1225 = vrot.lane.b32.xlu0 %v120, 113
    %v1226 = vpop.permute.xlu0 %1225
    %1227 = vrot.lane.b32.xlu0 %v121, 113
    %v1228 = vpop.permute.xlu0 %1227
    %1229 = vrot.lane.b32.xlu0 %v122, 113
    %v1230 = vpop.permute.xlu0 %1229
    %1231 = vrot.lane.b32.xlu0 %v123, 113
    %v1232 = vpop.permute.xlu0 %1231
    %1233 = vrot.lane.b32.xlu0 %v124, 113
    %v1234 = vpop.permute.xlu0 %1233
    %1235 = vrot.lane.b32.xlu0 %v125, 113
    %v1236 = vpop.permute.xlu0 %1235
    %1237 = vrot.lane.b32.xlu0 %v126, 113
    %v1238 = vpop.permute.xlu0 %1237
    %1239 = vrot.lane.b32.xlu0 %v127, 113
    %v1240 = vpop.permute.xlu0 %1239
    %1241 = vrot.lane.b32.xlu0 %v128, 113
    %v1242 = vpop.permute.xlu0 %1241
    %1243 = vrot.lane.b32.xlu0 %v129, 113
    %v1244 = vpop.permute.xlu0 %1243
    %1245 = vrot.lane.b32.xlu0 %v130, 113
    %v1246 = vpop.permute.xlu0 %1245
    %1247 = vrot.lane.b32.xlu0 %v131, 113
    %v1248 = vpop.permute.xlu0 %1247
    %1249 = vrot.lane.b32.xlu0 %v132, 113
    %v1250 = vpop.permute.xlu0 %1249
    %1251 = vrot.lane.b32.xlu0 %v133, 113
    %v1252 = vpop.permute.xlu0 %1251
    %1253 = vrot.lane.b32.xlu0 %v134, 113
    %v1254 = vpop.permute.xlu0 %1253
    %1255 = vrot.lane.b32.xlu0 %v154, 113
    %v1256 = vpop.permute.xlu0 %1255
    %1257 = vrot.lane.b32.xlu0 0.0, 113
    %v1258 = vpop.permute.xlu0 %1257
    %vm1259 = vcmask 924672
    %v1260 = vsel %vm1259, %v1224, %v1226
    %v1261 = vsel %vm1259, %v1226, %v1228
    %v1262 = vsel %vm1259, %v1228, %v1230
    %v1263 = vsel %vm1259, %v1230, %v1232
    %v1264 = vsel %vm1259, %v1232, %v1234
    %v1265 = vsel %vm1259, %v1234, %v1236
    %v1266 = vsel %vm1259, %v1236, %v1238
    %v1267 = vsel %vm1259, %v1238, %v1240
    %v1268 = vsel %vm1259, %v1240, %v1242
    %v1269 = vsel %vm1259, %v1242, %v1244
    %v1270 = vsel %vm1259, %v1244, %v1246
    %v1271 = vsel %vm1259, %v1246, %v1248
    %v1272 = vsel %vm1259, %v1248, %v1250
    %v1273 = vsel %vm1259, %v1250, %v1252
    %v1274 = vsel %vm1259, %v1252, %v1254
    %v1275 = vsel %vm1259, %v1254, %v1256
    %v1276 = vsel %vm1259, %v1256, %v1258
    %1277 = vrot.lane.b32.xlu0 %v119, 112
    %v1278 = vpop.permute.xlu0 %1277
    %1279 = vrot.lane.b32.xlu0 %v120, 112
    %v1280 = vpop.permute.xlu0 %1279
    %1281 = vrot.lane.b32.xlu0 %v121, 112
    %v1282 = vpop.permute.xlu0 %1281
    %1283 = vrot.lane.b32.xlu0 %v122, 112
    %v1284 = vpop.permute.xlu0 %1283
    %1285 = vrot.lane.b32.xlu0 %v123, 112
    %v1286 = vpop.permute.xlu0 %1285
    %1287 = vrot.lane.b32.xlu0 %v124, 112
    %v1288 = vpop.permute.xlu0 %1287
    %1289 = vrot.lane.b32.xlu0 %v125, 112
    %v1290 = vpop.permute.xlu0 %1289
    %1291 = vrot.lane.b32.xlu0 %v126, 112
    %v1292 = vpop.permute.xlu0 %1291
    %1293 = vrot.lane.b32.xlu0 %v127, 112
    %v1294 = vpop.permute.xlu0 %1293
    %1295 = vrot.lane.b32.xlu0 %v128, 112
    %v1296 = vpop.permute.xlu0 %1295
    %1297 = vrot.lane.b32.xlu0 %v129, 112
    %v1298 = vpop.permute.xlu0 %1297
    %1299 = vrot.lane.b32.xlu0 %v130, 112
    %v1300 = vpop.permute.xlu0 %1299
    %1301 = vrot.lane.b32.xlu0 %v131, 112
    %v1302 = vpop.permute.xlu0 %1301
    %1303 = vrot.lane.b32.xlu0 %v132, 112
    %v1304 = vpop.permute.xlu0 %1303
    %1305 = vrot.lane.b32.xlu0 %v133, 112
    %v1306 = vpop.permute.xlu0 %1305
    %1307 = vrot.lane.b32.xlu0 %v134, 112
    %v1308 = vpop.permute.xlu0 %1307
    %1309 = vrot.lane.b32.xlu0 %v154, 112
    %v1310 = vpop.permute.xlu0 %1309
    %1311 = vrot.lane.b32.xlu0 0.0, 112
    %v1312 = vpop.permute.xlu0 %1311
    %vm1313 = vcmask 916480
    %v1314 = vsel %vm1313, %v1278, %v1280
    %v1315 = vsel %vm1313, %v1280, %v1282
    %v1316 = vsel %vm1313, %v1282, %v1284
    %v1317 = vsel %vm1313, %v1284, %v1286
    %v1318 = vsel %vm1313, %v1286, %v1288
    %v1319 = vsel %vm1313, %v1288, %v1290
    %v1320 = vsel %vm1313, %v1290, %v1292
    %v1321 = vsel %vm1313, %v1292, %v1294
    %v1322 = vsel %vm1313, %v1294, %v1296
    %v1323 = vsel %vm1313, %v1296, %v1298
    %v1324 = vsel %vm1313, %v1298, %v1300
    %v1325 = vsel %vm1313, %v1300, %v1302
    %v1326 = vsel %vm1313, %v1302, %v1304
    %v1327 = vsel %vm1313, %v1304, %v1306
    %v1328 = vsel %vm1313, %v1306, %v1308
    %v1329 = vsel %vm1313, %v1308, %v1310
    %v1330 = vsel %vm1313, %v1310, %v1312
    %1331 = vrot.lane.b32.xlu0 %v119, 111
    %v1332 = vpop.permute.xlu0 %1331
    %1333 = vrot.lane.b32.xlu0 %v120, 111
    %v1334 = vpop.permute.xlu0 %1333
    %1335 = vrot.lane.b32.xlu0 %v121, 111
    %v1336 = vpop.permute.xlu0 %1335
    %1337 = vrot.lane.b32.xlu0 %v122, 111
    %v1338 = vpop.permute.xlu0 %1337
    %1339 = vrot.lane.b32.xlu0 %v123, 111
    %v1340 = vpop.permute.xlu0 %1339
    %1341 = vrot.lane.b32.xlu0 %v124, 111
    %v1342 = vpop.permute.xlu0 %1341
    %1343 = vrot.lane.b32.xlu0 %v125, 111
    %v1344 = vpop.permute.xlu0 %1343
    %1345 = vrot.lane.b32.xlu0 %v126, 111
    %v1346 = vpop.permute.xlu0 %1345
    %1347 = vrot.lane.b32.xlu0 %v127, 111
    %v1348 = vpop.permute.xlu0 %1347
    %1349 = vrot.lane.b32.xlu0 %v128, 111
    %v1350 = vpop.permute.xlu0 %1349
    %1351 = vrot.lane.b32.xlu0 %v129, 111
    %v1352 = vpop.permute.xlu0 %1351
    %1353 = vrot.lane.b32.xlu0 %v130, 111
    %v1354 = vpop.permute.xlu0 %1353
    %1355 = vrot.lane.b32.xlu0 %v131, 111
    %v1356 = vpop.permute.xlu0 %1355
    %1357 = vrot.lane.b32.xlu0 %v132, 111
    %v1358 = vpop.permute.xlu0 %1357
    %1359 = vrot.lane.b32.xlu0 %v133, 111
    %v1360 = vpop.permute.xlu0 %1359
    %1361 = vrot.lane.b32.xlu0 %v134, 111
    %v1362 = vpop.permute.xlu0 %1361
    %1363 = vrot.lane.b32.xlu0 %v154, 111
    %v1364 = vpop.permute.xlu0 %1363
    %1365 = vrot.lane.b32.xlu0 0.0, 111
    %v1366 = vpop.permute.xlu0 %1365
    %vm1367 = vcmask 908288
    %v1368 = vsel %vm1367, %v1332, %v1334
    %v1369 = vsel %vm1367, %v1334, %v1336
    %v1370 = vsel %vm1367, %v1336, %v1338
    %v1371 = vsel %vm1367, %v1338, %v1340
    %v1372 = vsel %vm1367, %v1340, %v1342
    %v1373 = vsel %vm1367, %v1342, %v1344
    %v1374 = vsel %vm1367, %v1344, %v1346
    %v1375 = vsel %vm1367, %v1346, %v1348
    %v1376 = vsel %vm1367, %v1348, %v1350
    %v1377 = vsel %vm1367, %v1350, %v1352
    %v1378 = vsel %vm1367, %v1352, %v1354
    %v1379 = vsel %vm1367, %v1354, %v1356
    %v1380 = vsel %vm1367, %v1356, %v1358
    %v1381 = vsel %vm1367, %v1358, %v1360
    %v1382 = vsel %vm1367, %v1360, %v1362
    %v1383 = vsel %vm1367, %v1362, %v1364
    %v1384 = vsel %vm1367, %v1364, %v1366
    %1385 = vrot.lane.b32.xlu0 %v119, 95
    %v1386 = vpop.permute.xlu0 %1385
    %1387 = vrot.lane.b32.xlu0 %v120, 95
    %v1388 = vpop.permute.xlu0 %1387
    %1389 = vrot.lane.b32.xlu0 %v121, 95
    %v1390 = vpop.permute.xlu0 %1389
    %1391 = vrot.lane.b32.xlu0 %v122, 95
    %v1392 = vpop.permute.xlu0 %1391
    %1393 = vrot.lane.b32.xlu0 %v123, 95
    %v1394 = vpop.permute.xlu0 %1393
    %1395 = vrot.lane.b32.xlu0 %v124, 95
    %v1396 = vpop.permute.xlu0 %1395
    %1397 = vrot.lane.b32.xlu0 %v125, 95
    %v1398 = vpop.permute.xlu0 %1397
    %1399 = vrot.lane.b32.xlu0 %v126, 95
    %v1400 = vpop.permute.xlu0 %1399
    %1401 = vrot.lane.b32.xlu0 %v127, 95
    %v1402 = vpop.permute.xlu0 %1401
    %1403 = vrot.lane.b32.xlu0 %v128, 95
    %v1404 = vpop.permute.xlu0 %1403
    %1405 = vrot.lane.b32.xlu0 %v129, 95
    %v1406 = vpop.permute.xlu0 %1405
    %1407 = vrot.lane.b32.xlu0 %v130, 95
    %v1408 = vpop.permute.xlu0 %1407
    %1409 = vrot.lane.b32.xlu0 %v131, 95
    %v1410 = vpop.permute.xlu0 %1409
    %1411 = vrot.lane.b32.xlu0 %v132, 95
    %v1412 = vpop.permute.xlu0 %1411
    %1413 = vrot.lane.b32.xlu0 %v133, 95
    %v1414 = vpop.permute.xlu0 %1413
    %1415 = vrot.lane.b32.xlu0 %v134, 95
    %v1416 = vpop.permute.xlu0 %1415
    %1417 = vrot.lane.b32.xlu0 %v154, 95
    %v1418 = vpop.permute.xlu0 %1417
    %1419 = vrot.lane.b32.xlu0 0.0, 95
    %v1420 = vpop.permute.xlu0 %1419
    %vm1421 = vcmask 777216
    %v1422 = vsel %vm1421, %v1386, %v1388
    %v1423 = vsel %vm1421, %v1388, %v1390
    %v1424 = vsel %vm1421, %v1390, %v1392
    %v1425 = vsel %vm1421, %v1392, %v1394
    %v1426 = vsel %vm1421, %v1394, %v1396
    %v1427 = vsel %vm1421, %v1396, %v1398
    %v1428 = vsel %vm1421, %v1398, %v1400
    %v1429 = vsel %vm1421, %v1400, %v1402
    %v1430 = vsel %vm1421, %v1402, %v1404
    %v1431 = vsel %vm1421, %v1404, %v1406
    %v1432 = vsel %vm1421, %v1406, %v1408
    %v1433 = vsel %vm1421, %v1408, %v1410
    %v1434 = vsel %vm1421, %v1410, %v1412
    %v1435 = vsel %vm1421, %v1412, %v1414
    %v1436 = vsel %vm1421, %v1414, %v1416
    %v1437 = vsel %vm1421, %v1416, %v1418
    %v1438 = vsel %vm1421, %v1418, %v1420
    %1439 = vrot.lane.b32.xlu0 %v119, 94
    %v1440 = vpop.permute.xlu0 %1439
    %1441 = vrot.lane.b32.xlu0 %v120, 94
    %v1442 = vpop.permute.xlu0 %1441
    %1443 = vrot.lane.b32.xlu0 %v121, 94
    %v1444 = vpop.permute.xlu0 %1443
    %1445 = vrot.lane.b32.xlu0 %v122, 94
    %v1446 = vpop.permute.xlu0 %1445
    %1447 = vrot.lane.b32.xlu0 %v123, 94
    %v1448 = vpop.permute.xlu0 %1447
    %1449 = vrot.lane.b32.xlu0 %v124, 94
    %v1450 = vpop.permute.xlu0 %1449
    %1451 = vrot.lane.b32.xlu0 %v125, 94
    %v1452 = vpop.permute.xlu0 %1451
    %1453 = vrot.lane.b32.xlu0 %v126, 94
    %v1454 = vpop.permute.xlu0 %1453
    %1455 = vrot.lane.b32.xlu0 %v127, 94
    %v1456 = vpop.permute.xlu0 %1455
    %1457 = vrot.lane.b32.xlu0 %v128, 94
    %v1458 = vpop.permute.xlu0 %1457
    %1459 = vrot.lane.b32.xlu0 %v129, 94
    %v1460 = vpop.permute.xlu0 %1459
    %1461 = vrot.lane.b32.xlu0 %v130, 94
    %v1462 = vpop.permute.xlu0 %1461
    %1463 = vrot.lane.b32.xlu0 %v131, 94
    %v1464 = vpop.permute.xlu0 %1463
    %1465 = vrot.lane.b32.xlu0 %v132, 94
    %v1466 = vpop.permute.xlu0 %1465
    %1467 = vrot.lane.b32.xlu0 %v133, 94
    %v1468 = vpop.permute.xlu0 %1467
    %1469 = vrot.lane.b32.xlu0 %v134, 94
    %v1470 = vpop.permute.xlu0 %1469
    %1471 = vrot.lane.b32.xlu0 %v154, 94
    %v1472 = vpop.permute.xlu0 %1471
    %1473 = vrot.lane.b32.xlu0 0.0, 94
    %v1474 = vpop.permute.xlu0 %1473
    %vm1475 = vcmask 769024
    %v1476 = vsel %vm1475, %v1440, %v1442
    %v1477 = vsel %vm1475, %v1442, %v1444
    %v1478 = vsel %vm1475, %v1444, %v1446
    %v1479 = vsel %vm1475, %v1446, %v1448
    %v1480 = vsel %vm1475, %v1448, %v1450
    %v1481 = vsel %vm1475, %v1450, %v1452
    %v1482 = vsel %vm1475, %v1452, %v1454
    %v1483 = vsel %vm1475, %v1454, %v1456
    %v1484 = vsel %vm1475, %v1456, %v1458
    %v1485 = vsel %vm1475, %v1458, %v1460
    %v1486 = vsel %vm1475, %v1460, %v1462
    %v1487 = vsel %vm1475, %v1462, %v1464
    %v1488 = vsel %vm1475, %v1464, %v1466
    %v1489 = vsel %vm1475, %v1466, %v1468
    %v1490 = vsel %vm1475, %v1468, %v1470
    %v1491 = vsel %vm1475, %v1470, %v1472
    %v1492 = vsel %vm1475, %v1472, %v1474
    %1493 = vrot.lane.b32.xlu0 %v119, 93
    %v1494 = vpop.permute.xlu0 %1493
    %1495 = vrot.lane.b32.xlu0 %v120, 93
    %v1496 = vpop.permute.xlu0 %1495
    %1497 = vrot.lane.b32.xlu0 %v121, 93
    %v1498 = vpop.permute.xlu0 %1497
    %1499 = vrot.lane.b32.xlu0 %v122, 93
    %v1500 = vpop.permute.xlu0 %1499
    %1501 = vrot.lane.b32.xlu0 %v123, 93
    %v1502 = vpop.permute.xlu0 %1501
    %1503 = vrot.lane.b32.xlu0 %v124, 93
    %v1504 = vpop.permute.xlu0 %1503
    %1505 = vrot.lane.b32.xlu0 %v125, 93
    %v1506 = vpop.permute.xlu0 %1505
    %1507 = vrot.lane.b32.xlu0 %v126, 93
    %v1508 = vpop.permute.xlu0 %1507
    %1509 = vrot.lane.b32.xlu0 %v127, 93
    %v1510 = vpop.permute.xlu0 %1509
    %1511 = vrot.lane.b32.xlu0 %v128, 93
    %v1512 = vpop.permute.xlu0 %1511
    %1513 = vrot.lane.b32.xlu0 %v129, 93
    %v1514 = vpop.permute.xlu0 %1513
    %1515 = vrot.lane.b32.xlu0 %v130, 93
    %v1516 = vpop.permute.xlu0 %1515
    %1517 = vrot.lane.b32.xlu0 %v131, 93
    %v1518 = vpop.permute.xlu0 %1517
    %1519 = vrot.lane.b32.xlu0 %v132, 93
    %v1520 = vpop.permute.xlu0 %1519
    %1521 = vrot.lane.b32.xlu0 %v133, 93
    %v1522 = vpop.permute.xlu0 %1521
    %1523 = vrot.lane.b32.xlu0 %v134, 93
    %v1524 = vpop.permute.xlu0 %1523
    %1525 = vrot.lane.b32.xlu0 %v154, 93
    %v1526 = vpop.permute.xlu0 %1525
    %1527 = vrot.lane.b32.xlu0 0.0, 93
    %v1528 = vpop.permute.xlu0 %1527
    %vm1529 = vcmask 760832
    %v1530 = vsel %vm1529, %v1494, %v1496
    %v1531 = vsel %vm1529, %v1496, %v1498
    %v1532 = vsel %vm1529, %v1498, %v1500
    %v1533 = vsel %vm1529, %v1500, %v1502
    %v1534 = vsel %vm1529, %v1502, %v1504
    %v1535 = vsel %vm1529, %v1504, %v1506
    %v1536 = vsel %vm1529, %v1506, %v1508
    %v1537 = vsel %vm1529, %v1508, %v1510
    %v1538 = vsel %vm1529, %v1510, %v1512
    %v1539 = vsel %vm1529, %v1512, %v1514
    %v1540 = vsel %vm1529, %v1514, %v1516
    %v1541 = vsel %vm1529, %v1516, %v1518
    %v1542 = vsel %vm1529, %v1518, %v1520
    %v1543 = vsel %vm1529, %v1520, %v1522
    %v1544 = vsel %vm1529, %v1522, %v1524
    %v1545 = vsel %vm1529, %v1524, %v1526
    %v1546 = vsel %vm1529, %v1526, %v1528
    %1547 = vrot.lane.b32.xlu0 %v120, 77
    %v1548 = vpop.permute.xlu0 %1547
    %1549 = vrot.lane.b32.xlu0 %v121, 77
    %v1550 = vpop.permute.xlu0 %1549
    %1551 = vrot.lane.b32.xlu0 %v122, 77
    %v1552 = vpop.permute.xlu0 %1551
    %1553 = vrot.lane.b32.xlu0 %v123, 77
    %v1554 = vpop.permute.xlu0 %1553
    %1555 = vrot.lane.b32.xlu0 %v124, 77
    %v1556 = vpop.permute.xlu0 %1555
    %1557 = vrot.lane.b32.xlu0 %v125, 77
    %v1558 = vpop.permute.xlu0 %1557
    %1559 = vrot.lane.b32.xlu0 %v126, 77
    %v1560 = vpop.permute.xlu0 %1559
    %1561 = vrot.lane.b32.xlu0 %v127, 77
    %v1562 = vpop.permute.xlu0 %1561
    %1563 = vrot.lane.b32.xlu0 %v128, 77
    %v1564 = vpop.permute.xlu0 %1563
    %1565 = vrot.lane.b32.xlu0 %v129, 77
    %v1566 = vpop.permute.xlu0 %1565
    %1567 = vrot.lane.b32.xlu0 %v130, 77
    %v1568 = vpop.permute.xlu0 %1567
    %1569 = vrot.lane.b32.xlu0 %v131, 77
    %v1570 = vpop.permute.xlu0 %1569
    %1571 = vrot.lane.b32.xlu0 %v132, 77
    %v1572 = vpop.permute.xlu0 %1571
    %1573 = vrot.lane.b32.xlu0 %v133, 77
    %v1574 = vpop.permute.xlu0 %1573
    %1575 = vrot.lane.b32.xlu0 %v134, 77
    %v1576 = vpop.permute.xlu0 %1575
    %1577 = vrot.lane.b32.xlu0 %v154, 77
    %v1578 = vpop.permute.xlu0 %1577
    %1579 = vrot.lane.b32.xlu0 0.0, 77
    %v1580 = vpop.permute.xlu0 %1579
    %vm1581 = vcmask 629760
    %v1582 = vsel %vm1581, %v1548, %v1550
    %v1583 = vsel %vm1581, %v1550, %v1552
    %v1584 = vsel %vm1581, %v1552, %v1554
    %v1585 = vsel %vm1581, %v1554, %v1556
    %v1586 = vsel %vm1581, %v1556, %v1558
    %v1587 = vsel %vm1581, %v1558, %v1560
    %v1588 = vsel %vm1581, %v1560, %v1562
    %v1589 = vsel %vm1581, %v1562, %v1564
    %v1590 = vsel %vm1581, %v1564, %v1566
    %v1591 = vsel %vm1581, %v1566, %v1568
    %v1592 = vsel %vm1581, %v1568, %v1570
    %v1593 = vsel %vm1581, %v1570, %v1572
    %v1594 = vsel %vm1581, %v1572, %v1574
    %v1595 = vsel %vm1581, %v1574, %v1576
    %v1596 = vsel %vm1581, %v1576, %v1578
    %v1597 = vsel %vm1581, %v1578, %v1580
    %1598 = vrot.lane.b32.xlu0 0.0, 76
    %v1599 = vpop.permute.xlu0 %1598
    %v1600 = vsel %vm756, %v755, %v1599
    %1601 = vrot.lane.b32.xlu0 0.0, 75
    %v1602 = vpop.permute.xlu0 %1601
    %v1603 = vsel %vm827, %v826, %v1602
    %1604 = vrot.lane.b32.xlu0 %v152, 39
    %v1605 = vpop.permute.xlu0 %1604
    %1606 = vrot.lane.b32.xlu0 %v119, 39
    %v1607 = vpop.permute.xlu0 %1606
    %1608 = vrot.lane.b32.xlu0 %v120, 39
    %v1609 = vpop.permute.xlu0 %1608
    %1610 = vrot.lane.b32.xlu0 %v121, 39
    %v1611 = vpop.permute.xlu0 %1610
    %1612 = vrot.lane.b32.xlu0 %v122, 39
    %v1613 = vpop.permute.xlu0 %1612
    %1614 = vrot.lane.b32.xlu0 %v123, 39
    %v1615 = vpop.permute.xlu0 %1614
    %1616 = vrot.lane.b32.xlu0 %v124, 39
    %v1617 = vpop.permute.xlu0 %1616
    %1618 = vrot.lane.b32.xlu0 %v125, 39
    %v1619 = vpop.permute.xlu0 %1618
    %1620 = vrot.lane.b32.xlu0 %v126, 39
    %v1621 = vpop.permute.xlu0 %1620
    %1622 = vrot.lane.b32.xlu0 %v127, 39
    %v1623 = vpop.permute.xlu0 %1622
    %1624 = vrot.lane.b32.xlu0 %v128, 39
    %v1625 = vpop.permute.xlu0 %1624
    %1626 = vrot.lane.b32.xlu0 %v129, 39
    %v1627 = vpop.permute.xlu0 %1626
    %1628 = vrot.lane.b32.xlu0 %v130, 39
    %v1629 = vpop.permute.xlu0 %1628
    %1630 = vrot.lane.b32.xlu0 %v131, 39
    %v1631 = vpop.permute.xlu0 %1630
    %1632 = vrot.lane.b32.xlu0 %v132, 39
    %v1633 = vpop.permute.xlu0 %1632
    %1634 = vrot.lane.b32.xlu0 %v133, 39
    %v1635 = vpop.permute.xlu0 %1634
    %1636 = vrot.lane.b32.xlu0 %v134, 39
    %v1637 = vpop.permute.xlu0 %1636
    %1638 = vrot.lane.b32.xlu0 %v154, 39
    %v1639 = vpop.permute.xlu0 %1638
    %1640 = vrot.lane.b32.xlu0 %v193, 39
    %v1641 = vpop.permute.xlu0 %1640
    %1642 = vrot.lane.b32.xlu0 %v194, 39
    %v1643 = vpop.permute.xlu0 %1642
    %1644 = vrot.lane.b32.xlu0 %v195, 39
    %v1645 = vpop.permute.xlu0 %1644
    %1646 = vrot.lane.b32.xlu0 %v196, 39
    %v1647 = vpop.permute.xlu0 %1646
    %1648 = vrot.lane.b32.xlu0 %v197, 39
    %v1649 = vpop.permute.xlu0 %1648
    %1650 = vrot.lane.b32.xlu0 %v198, 39
    %v1651 = vpop.permute.xlu0 %1650
    %1652 = vrot.lane.b32.xlu0 %v199, 39
    %v1653 = vpop.permute.xlu0 %1652
    %1654 = vrot.lane.b32.xlu0 %v200, 39
    %v1655 = vpop.permute.xlu0 %1654
    %1656 = vrot.lane.b32.xlu0 %v201, 39
    %v1657 = vpop.permute.xlu0 %1656
    %1658 = vrot.lane.b32.xlu0 %v202, 39
    %v1659 = vpop.permute.xlu0 %1658
    %1660 = vrot.lane.b32.xlu0 %v203, 39
    %v1661 = vpop.permute.xlu0 %1660
    %1662 = vrot.lane.b32.xlu0 %v204, 39
    %v1663 = vpop.permute.xlu0 %1662
    %1664 = vrot.lane.b32.xlu0 %v205, 39
    %v1665 = vpop.permute.xlu0 %1664
    %1666 = vrot.lane.b32.xlu0 %v206, 39
    %v1667 = vpop.permute.xlu0 %1666
    %1668 = vrot.lane.b32.xlu0 %v207, 39
    %v1669 = vpop.permute.xlu0 %1668
    %1670 = vrot.lane.b32.xlu0 %v1221, 39
    %v1671 = vpop.permute.xlu0 %1670
    %1672 = vrot.lane.b32.xlu0 %v1222, 39
    %v1673 = vpop.permute.xlu0 %1672
    %1674 = vrot.lane.b32.xlu0 %v1220, 39
    %v1675 = vpop.permute.xlu0 %1674
    %1676 = vrot.lane.b32.xlu0 %v1260, 39
    %v1677 = vpop.permute.xlu0 %1676
    %1678 = vrot.lane.b32.xlu0 %v1261, 39
    %v1679 = vpop.permute.xlu0 %1678
    %1680 = vrot.lane.b32.xlu0 %v1262, 39
    %v1681 = vpop.permute.xlu0 %1680
    %1682 = vrot.lane.b32.xlu0 %v1263, 39
    %v1683 = vpop.permute.xlu0 %1682
    %1684 = vrot.lane.b32.xlu0 %v1264, 39
    %v1685 = vpop.permute.xlu0 %1684
    %1686 = vrot.lane.b32.xlu0 %v1265, 39
    %v1687 = vpop.permute.xlu0 %1686
    %1688 = vrot.lane.b32.xlu0 %v1266, 39
    %v1689 = vpop.permute.xlu0 %1688
    %1690 = vrot.lane.b32.xlu0 %v1267, 39
    %v1691 = vpop.permute.xlu0 %1690
    %1692 = vrot.lane.b32.xlu0 %v1268, 39
    %v1693 = vpop.permute.xlu0 %1692
    %1694 = vrot.lane.b32.xlu0 %v1269, 39
    %v1695 = vpop.permute.xlu0 %1694
    %1696 = vrot.lane.b32.xlu0 %v1270, 39
    %v1697 = vpop.permute.xlu0 %1696
    %1698 = vrot.lane.b32.xlu0 %v1271, 39
    %v1699 = vpop.permute.xlu0 %1698
    %1700 = vrot.lane.b32.xlu0 %v1272, 39
    %v1701 = vpop.permute.xlu0 %1700
    %1702 = vrot.lane.b32.xlu0 %v1273, 39
    %v1703 = vpop.permute.xlu0 %1702
    %1704 = vrot.lane.b32.xlu0 %v1274, 39
    %v1705 = vpop.permute.xlu0 %1704
    %1706 = vrot.lane.b32.xlu0 %v1275, 39
    %v1707 = vpop.permute.xlu0 %1706
    %1708 = vrot.lane.b32.xlu0 %v1276, 39
    %v1709 = vpop.permute.xlu0 %1708
    %1710 = vrot.lane.b32.xlu0 %v1258, 39
    %v1711 = vpop.permute.xlu0 %1710
    %1712 = vrot.lane.b32.xlu0 %v1314, 39
    %v1713 = vpop.permute.xlu0 %1712
    %1714 = vrot.lane.b32.xlu0 %v1315, 39
    %v1715 = vpop.permute.xlu0 %1714
    %1716 = vrot.lane.b32.xlu0 %v1316, 39
    %v1717 = vpop.permute.xlu0 %1716
    %1718 = vrot.lane.b32.xlu0 %v1317, 39
    %v1719 = vpop.permute.xlu0 %1718
    %1720 = vrot.lane.b32.xlu0 %v1318, 39
    %v1721 = vpop.permute.xlu0 %1720
    %1722 = vrot.lane.b32.xlu0 %v1319, 39
    %v1723 = vpop.permute.xlu0 %1722
    %1724 = vrot.lane.b32.xlu0 %v1320, 39
    %v1725 = vpop.permute.xlu0 %1724
    %1726 = vrot.lane.b32.xlu0 %v1321, 39
    %v1727 = vpop.permute.xlu0 %1726
    %1728 = vrot.lane.b32.xlu0 %v1322, 39
    %v1729 = vpop.permute.xlu0 %1728
    %1730 = vrot.lane.b32.xlu0 %v1323, 39
    %v1731 = vpop.permute.xlu0 %1730
    %1732 = vrot.lane.b32.xlu0 %v1324, 39
    %v1733 = vpop.permute.xlu0 %1732
    %1734 = vrot.lane.b32.xlu0 %v1325, 39
    %v1735 = vpop.permute.xlu0 %1734
    %1736 = vrot.lane.b32.xlu0 %v1326, 39
    %v1737 = vpop.permute.xlu0 %1736
    %1738 = vrot.lane.b32.xlu0 %v1327, 39
    %v1739 = vpop.permute.xlu0 %1738
    %1740 = vrot.lane.b32.xlu0 %v1328, 39
    %v1741 = vpop.permute.xlu0 %1740
    %1742 = vrot.lane.b32.xlu0 %v1329, 39
    %v1743 = vpop.permute.xlu0 %1742
    %1744 = vrot.lane.b32.xlu0 %v1330, 39
    %v1745 = vpop.permute.xlu0 %1744
    %1746 = vrot.lane.b32.xlu0 %v1312, 39
    %v1747 = vpop.permute.xlu0 %1746
    %1748 = vrot.lane.b32.xlu0 %v1368, 39
    %v1749 = vpop.permute.xlu0 %1748
    %1750 = vrot.lane.b32.xlu0 %v1369, 39
    %v1751 = vpop.permute.xlu0 %1750
    %1752 = vrot.lane.b32.xlu0 %v1370, 39
    %v1753 = vpop.permute.xlu0 %1752
    %1754 = vrot.lane.b32.xlu0 %v1371, 39
    %v1755 = vpop.permute.xlu0 %1754
    %1756 = vrot.lane.b32.xlu0 %v1372, 39
    %v1757 = vpop.permute.xlu0 %1756
    %1758 = vrot.lane.b32.xlu0 %v1373, 39
    %v1759 = vpop.permute.xlu0 %1758
    %1760 = vrot.lane.b32.xlu0 %v1374, 39
    %v1761 = vpop.permute.xlu0 %1760
    %1762 = vrot.lane.b32.xlu0 %v1375, 39
    %v1763 = vpop.permute.xlu0 %1762
    %1764 = vrot.lane.b32.xlu0 %v1376, 39
    %v1765 = vpop.permute.xlu0 %1764
    %1766 = vrot.lane.b32.xlu0 %v1377, 39
    %v1767 = vpop.permute.xlu0 %1766
    %1768 = vrot.lane.b32.xlu0 %v1378, 39
    %v1769 = vpop.permute.xlu0 %1768
    %1770 = vrot.lane.b32.xlu0 %v1379, 39
    %v1771 = vpop.permute.xlu0 %1770
    %1772 = vrot.lane.b32.xlu0 %v1380, 39
    %v1773 = vpop.permute.xlu0 %1772
    %1774 = vrot.lane.b32.xlu0 %v1381, 39
    %v1775 = vpop.permute.xlu0 %1774
    %1776 = vrot.lane.b32.xlu0 %v1382, 39
    %v1777 = vpop.permute.xlu0 %1776
    %1778 = vrot.lane.b32.xlu0 %v1383, 39
    %v1779 = vpop.permute.xlu0 %1778
    %1780 = vrot.lane.b32.xlu0 %v1384, 39
    %v1781 = vpop.permute.xlu0 %1780
    %1782 = vrot.lane.b32.xlu0 %v1366, 39
    %v1783 = vpop.permute.xlu0 %1782
    %1784 = vrot.lane.b32.xlu0 %v1422, 39
    %v1785 = vpop.permute.xlu0 %1784
    %1786 = vrot.lane.b32.xlu0 %v1423, 39
    %v1787 = vpop.permute.xlu0 %1786
    %1788 = vrot.lane.b32.xlu0 %v1424, 39
    %v1789 = vpop.permute.xlu0 %1788
    %1790 = vrot.lane.b32.xlu0 %v1425, 39
    %v1791 = vpop.permute.xlu0 %1790
    %1792 = vrot.lane.b32.xlu0 %v1426, 39
    %v1793 = vpop.permute.xlu0 %1792
    %1794 = vrot.lane.b32.xlu0 %v1427, 39
    %v1795 = vpop.permute.xlu0 %1794
    %1796 = vrot.lane.b32.xlu0 %v1428, 39
    %v1797 = vpop.permute.xlu0 %1796
    %1798 = vrot.lane.b32.xlu0 %v1429, 39
    %v1799 = vpop.permute.xlu0 %1798
    %1800 = vrot.lane.b32.xlu0 %v1430, 39
    %v1801 = vpop.permute.xlu0 %1800
    %1802 = vrot.lane.b32.xlu0 %v1431, 39
    %v1803 = vpop.permute.xlu0 %1802
    %1804 = vrot.lane.b32.xlu0 %v1432, 39
    %v1805 = vpop.permute.xlu0 %1804
    %1806 = vrot.lane.b32.xlu0 %v1433, 39
    %v1807 = vpop.permute.xlu0 %1806
    %1808 = vrot.lane.b32.xlu0 %v1434, 39
    %v1809 = vpop.permute.xlu0 %1808
    %1810 = vrot.lane.b32.xlu0 %v1435, 39
    %v1811 = vpop.permute.xlu0 %1810
    %1812 = vrot.lane.b32.xlu0 %v1436, 39
    %v1813 = vpop.permute.xlu0 %1812
    %1814 = vrot.lane.b32.xlu0 %v1437, 39
    %v1815 = vpop.permute.xlu0 %1814
    %1816 = vrot.lane.b32.xlu0 %v1438, 39
    %v1817 = vpop.permute.xlu0 %1816
    %1818 = vrot.lane.b32.xlu0 %v1420, 39
    %v1819 = vpop.permute.xlu0 %1818
    %1820 = vrot.lane.b32.xlu0 %v1476, 39
    %v1821 = vpop.permute.xlu0 %1820
    %1822 = vrot.lane.b32.xlu0 %v1477, 39
    %v1823 = vpop.permute.xlu0 %1822
    %1824 = vrot.lane.b32.xlu0 %v1478, 39
    %v1825 = vpop.permute.xlu0 %1824
    %1826 = vrot.lane.b32.xlu0 %v1479, 39
    %v1827 = vpop.permute.xlu0 %1826
    %1828 = vrot.lane.b32.xlu0 %v1480, 39
    %v1829 = vpop.permute.xlu0 %1828
    %1830 = vrot.lane.b32.xlu0 %v1481, 39
    %v1831 = vpop.permute.xlu0 %1830
    %1832 = vrot.lane.b32.xlu0 %v1482, 39
    %v1833 = vpop.permute.xlu0 %1832
    %1834 = vrot.lane.b32.xlu0 %v1483, 39
    %v1835 = vpop.permute.xlu0 %1834
    %1836 = vrot.lane.b32.xlu0 %v1484, 39
    %v1837 = vpop.permute.xlu0 %1836
    %1838 = vrot.lane.b32.xlu0 %v1485, 39
    %v1839 = vpop.permute.xlu0 %1838
    %1840 = vrot.lane.b32.xlu0 %v1486, 39
    %v1841 = vpop.permute.xlu0 %1840
    %1842 = vrot.lane.b32.xlu0 %v1487, 39
    %v1843 = vpop.permute.xlu0 %1842
    %1844 = vrot.lane.b32.xlu0 %v1488, 39
    %v1845 = vpop.permute.xlu0 %1844
    %1846 = vrot.lane.b32.xlu0 %v1489, 39
    %v1847 = vpop.permute.xlu0 %1846
    %1848 = vrot.lane.b32.xlu0 %v1490, 39
    %v1849 = vpop.permute.xlu0 %1848
    %1850 = vrot.lane.b32.xlu0 %v1491, 39
    %v1851 = vpop.permute.xlu0 %1850
    %1852 = vrot.lane.b32.xlu0 %v1492, 39
    %v1853 = vpop.permute.xlu0 %1852
    %1854 = vrot.lane.b32.xlu0 %v1474, 39
    %v1855 = vpop.permute.xlu0 %1854
    %1856 = vrot.lane.b32.xlu0 %v1530, 39
    %v1857 = vpop.permute.xlu0 %1856
    %1858 = vrot.lane.b32.xlu0 %v1531, 39
    %v1859 = vpop.permute.xlu0 %1858
    %1860 = vrot.lane.b32.xlu0 %v1532, 39
    %v1861 = vpop.permute.xlu0 %1860
    %1862 = vrot.lane.b32.xlu0 %v1533, 39
    %v1863 = vpop.permute.xlu0 %1862
    %1864 = vrot.lane.b32.xlu0 %v1534, 39
    %v1865 = vpop.permute.xlu0 %1864
    %1866 = vrot.lane.b32.xlu0 %v1535, 39
    %v1867 = vpop.permute.xlu0 %1866
    %1868 = vrot.lane.b32.xlu0 %v1536, 39
    %v1869 = vpop.permute.xlu0 %1868
    %1870 = vrot.lane.b32.xlu0 %v1537, 39
    %v1871 = vpop.permute.xlu0 %1870
    %1872 = vrot.lane.b32.xlu0 %v1538, 39
    %v1873 = vpop.permute.xlu0 %1872
    %1874 = vrot.lane.b32.xlu0 %v1539, 39
    %v1875 = vpop.permute.xlu0 %1874
    %1876 = vrot.lane.b32.xlu0 %v1540, 39
    %v1877 = vpop.permute.xlu0 %1876
    %1878 = vrot.lane.b32.xlu0 %v1541, 39
    %v1879 = vpop.permute.xlu0 %1878
    %1880 = vrot.lane.b32.xlu0 %v1542, 39
    %v1881 = vpop.permute.xlu0 %1880
    %1882 = vrot.lane.b32.xlu0 %v1543, 39
    %v1883 = vpop.permute.xlu0 %1882
    %1884 = vrot.lane.b32.xlu0 %v1544, 39
    %v1885 = vpop.permute.xlu0 %1884
    %1886 = vrot.lane.b32.xlu0 %v1545, 39
    %v1887 = vpop.permute.xlu0 %1886
    %1888 = vrot.lane.b32.xlu0 %v1546, 39
    %v1889 = vpop.permute.xlu0 %1888
    %1890 = vrot.lane.b32.xlu0 %v1528, 39
    %v1891 = vpop.permute.xlu0 %1890
    %1892 = vrot.lane.b32.xlu0 %v1548, 39
    %v1893 = vpop.permute.xlu0 %1892
    %1894 = vrot.lane.b32.xlu0 %v1582, 39
    %v1895 = vpop.permute.xlu0 %1894
    %1896 = vrot.lane.b32.xlu0 %v1583, 39
    %v1897 = vpop.permute.xlu0 %1896
    %1898 = vrot.lane.b32.xlu0 %v1584, 39
    %v1899 = vpop.permute.xlu0 %1898
    %1900 = vrot.lane.b32.xlu0 %v1585, 39
    %v1901 = vpop.permute.xlu0 %1900
    %1902 = vrot.lane.b32.xlu0 %v1586, 39
    %v1903 = vpop.permute.xlu0 %1902
    %1904 = vrot.lane.b32.xlu0 %v1587, 39
    %v1905 = vpop.permute.xlu0 %1904
    %1906 = vrot.lane.b32.xlu0 %v1588, 39
    %v1907 = vpop.permute.xlu0 %1906
    %1908 = vrot.lane.b32.xlu0 %v1589, 39
    %v1909 = vpop.permute.xlu0 %1908
    %1910 = vrot.lane.b32.xlu0 %v1590, 39
    %v1911 = vpop.permute.xlu0 %1910
    %1912 = vrot.lane.b32.xlu0 %v1591, 39
    %v1913 = vpop.permute.xlu0 %1912
    %1914 = vrot.lane.b32.xlu0 %v1592, 39
    %v1915 = vpop.permute.xlu0 %1914
    %1916 = vrot.lane.b32.xlu0 %v1593, 39
    %v1917 = vpop.permute.xlu0 %1916
    %1918 = vrot.lane.b32.xlu0 %v1594, 39
    %v1919 = vpop.permute.xlu0 %1918
    %1920 = vrot.lane.b32.xlu0 %v1595, 39
    %v1921 = vpop.permute.xlu0 %1920
    %1922 = vrot.lane.b32.xlu0 %v1596, 39
    %v1923 = vpop.permute.xlu0 %1922
    %1924 = vrot.lane.b32.xlu0 %v1597, 39
    %v1925 = vpop.permute.xlu0 %1924
    %1926 = vrot.lane.b32.xlu0 %v1580, 39
    %v1927 = vpop.permute.xlu0 %1926
    %1928 = vrot.lane.b32.xlu0 %v725, 39
    %v1929 = vpop.permute.xlu0 %1928
    %1930 = vrot.lane.b32.xlu0 %v759, 39
    %v1931 = vpop.permute.xlu0 %1930
    %1932 = vrot.lane.b32.xlu0 %v760, 39
    %v1933 = vpop.permute.xlu0 %1932
    %1934 = vrot.lane.b32.xlu0 %v761, 39
    %v1935 = vpop.permute.xlu0 %1934
    %1936 = vrot.lane.b32.xlu0 %v762, 39
    %v1937 = vpop.permute.xlu0 %1936
    %1938 = vrot.lane.b32.xlu0 %v763, 39
    %v1939 = vpop.permute.xlu0 %1938
    %1940 = vrot.lane.b32.xlu0 %v764, 39
    %v1941 = vpop.permute.xlu0 %1940
    %1942 = vrot.lane.b32.xlu0 %v765, 39
    %v1943 = vpop.permute.xlu0 %1942
    %1944 = vrot.lane.b32.xlu0 %v766, 39
    %v1945 = vpop.permute.xlu0 %1944
    %1946 = vrot.lane.b32.xlu0 %v767, 39
    %v1947 = vpop.permute.xlu0 %1946
    %1948 = vrot.lane.b32.xlu0 %v768, 39
    %v1949 = vpop.permute.xlu0 %1948
    %1950 = vrot.lane.b32.xlu0 %v769, 39
    %v1951 = vpop.permute.xlu0 %1950
    %1952 = vrot.lane.b32.xlu0 %v770, 39
    %v1953 = vpop.permute.xlu0 %1952
    %1954 = vrot.lane.b32.xlu0 %v771, 39
    %v1955 = vpop.permute.xlu0 %1954
    %1956 = vrot.lane.b32.xlu0 %v772, 39
    %v1957 = vpop.permute.xlu0 %1956
    %1958 = vrot.lane.b32.xlu0 %v773, 39
    %v1959 = vpop.permute.xlu0 %1958
    %1960 = vrot.lane.b32.xlu0 %v1600, 39
    %v1961 = vpop.permute.xlu0 %1960
    %1962 = vrot.lane.b32.xlu0 %v1599, 39
    %v1963 = vpop.permute.xlu0 %1962
    %1964 = vrot.lane.b32.xlu0 %v796, 39
    %v1965 = vpop.permute.xlu0 %1964
    %1966 = vrot.lane.b32.xlu0 %v830, 39
    %v1967 = vpop.permute.xlu0 %1966
    %1968 = vrot.lane.b32.xlu0 %v831, 39
    %v1969 = vpop.permute.xlu0 %1968
    %1970 = vrot.lane.b32.xlu0 %v832, 39
    %v1971 = vpop.permute.xlu0 %1970
    %1972 = vrot.lane.b32.xlu0 %v833, 39
    %v1973 = vpop.permute.xlu0 %1972
    %1974 = vrot.lane.b32.xlu0 %v834, 39
    %v1975 = vpop.permute.xlu0 %1974
    %1976 = vrot.lane.b32.xlu0 %v835, 39
    %v1977 = vpop.permute.xlu0 %1976
    %1978 = vrot.lane.b32.xlu0 %v836, 39
    %v1979 = vpop.permute.xlu0 %1978
    %1980 = vrot.lane.b32.xlu0 %v837, 39
    %v1981 = vpop.permute.xlu0 %1980
    %1982 = vrot.lane.b32.xlu0 %v838, 39
    %v1983 = vpop.permute.xlu0 %1982
    %1984 = vrot.lane.b32.xlu0 %v839, 39
    %v1985 = vpop.permute.xlu0 %1984
    %1986 = vrot.lane.b32.xlu0 %v840, 39
    %v1987 = vpop.permute.xlu0 %1986
    %1988 = vrot.lane.b32.xlu0 %v841, 39
    %v1989 = vpop.permute.xlu0 %1988
    %1990 = vrot.lane.b32.xlu0 %v842, 39
    %v1991 = vpop.permute.xlu0 %1990
    %1992 = vrot.lane.b32.xlu0 %v843, 39
    %v1993 = vpop.permute.xlu0 %1992
    %1994 = vrot.lane.b32.xlu0 %v844, 39
    %v1995 = vpop.permute.xlu0 %1994
    %1996 = vrot.lane.b32.xlu0 %v1603, 39
    %v1997 = vpop.permute.xlu0 %1996
    %1998 = vrot.lane.b32.xlu0 %v1602, 39
    %v1999 = vpop.permute.xlu0 %1998
    %vm2000 = vcmask 318464
    %v2001 = vsel %vm2000, %v1605, %v1607
    %v2002 = vsel %vm2000, %v1607, %v1609
    %v2003 = vsel %vm2000, %v1609, %v1611
    %v2004 = vsel %vm2000, %v1611, %v1613
    %v2005 = vsel %vm2000, %v1613, %v1615
    %v2006 = vsel %vm2000, %v1615, %v1617
    %v2007 = vsel %vm2000, %v1617, %v1619
    %v2008 = vsel %vm2000, %v1619, %v1621
    %v2009 = vsel %vm2000, %v1621, %v1623
    %v2010 = vsel %vm2000, %v1623, %v1625
    %v2011 = vsel %vm2000, %v1625, %v1627
    %v2012 = vsel %vm2000, %v1627, %v1629
    %v2013 = vsel %vm2000, %v1629, %v1631
    %v2014 = vsel %vm2000, %v1631, %v1633
    %v2015 = vsel %vm2000, %v1633, %v1635
    %v2016 = vsel %vm2000, %v1635, %v1637
    %v2017 = vsel %vm2000, %v1637, %v1639
    %v2018 = vsel %vm2000, %v1641, %v1643
    %v2019 = vsel %vm2000, %v1643, %v1645
    %v2020 = vsel %vm2000, %v1645, %v1647
    %v2021 = vsel %vm2000, %v1647, %v1649
    %v2022 = vsel %vm2000, %v1649, %v1651
    %v2023 = vsel %vm2000, %v1651, %v1653
    %v2024 = vsel %vm2000, %v1653, %v1655
    %v2025 = vsel %vm2000, %v1655, %v1657
    %v2026 = vsel %vm2000, %v1657, %v1659
    %v2027 = vsel %vm2000, %v1659, %v1661
    %v2028 = vsel %vm2000, %v1661, %v1663
    %v2029 = vsel %vm2000, %v1663, %v1665
    %v2030 = vsel %vm2000, %v1665, %v1667
    %v2031 = vsel %vm2000, %v1667, %v1669
    %v2032 = vsel %vm2000, %v1669, %v1671
    %v2033 = vsel %vm2000, %v1671, %v1673
    %v2034 = vsel %vm2000, %v1673, %v1675
    %v2035 = vsel %vm2000, %v1677, %v1679
    %v2036 = vsel %vm2000, %v1679, %v1681
    %v2037 = vsel %vm2000, %v1681, %v1683
    %v2038 = vsel %vm2000, %v1683, %v1685
    %v2039 = vsel %vm2000, %v1685, %v1687
    %v2040 = vsel %vm2000, %v1687, %v1689
    %v2041 = vsel %vm2000, %v1689, %v1691
    %v2042 = vsel %vm2000, %v1691, %v1693
    %v2043 = vsel %vm2000, %v1693, %v1695
    %v2044 = vsel %vm2000, %v1695, %v1697
    %v2045 = vsel %vm2000, %v1697, %v1699
    %v2046 = vsel %vm2000, %v1699, %v1701
    %v2047 = vsel %vm2000, %v1701, %v1703
    %v2048 = vsel %vm2000, %v1703, %v1705
    %v2049 = vsel %vm2000, %v1705, %v1707
    %v2050 = vsel %vm2000, %v1707, %v1709
    %v2051 = vsel %vm2000, %v1709, %v1711
    %v2052 = vsel %vm2000, %v1713, %v1715
    %v2053 = vsel %vm2000, %v1715, %v1717
    %v2054 = vsel %vm2000, %v1717, %v1719
    %v2055 = vsel %vm2000, %v1719, %v1721
    %v2056 = vsel %vm2000, %v1721, %v1723
    %v2057 = vsel %vm2000, %v1723, %v1725
    %v2058 = vsel %vm2000, %v1725, %v1727
    %v2059 = vsel %vm2000, %v1727, %v1729
    %v2060 = vsel %vm2000, %v1729, %v1731
    %v2061 = vsel %vm2000, %v1731, %v1733
    %v2062 = vsel %vm2000, %v1733, %v1735
    %v2063 = vsel %vm2000, %v1735, %v1737
    %v2064 = vsel %vm2000, %v1737, %v1739
    %v2065 = vsel %vm2000, %v1739, %v1741
    %v2066 = vsel %vm2000, %v1741, %v1743
    %v2067 = vsel %vm2000, %v1743, %v1745
    %v2068 = vsel %vm2000, %v1745, %v1747
    %v2069 = vsel %vm2000, %v1749, %v1751
    %v2070 = vsel %vm2000, %v1751, %v1753
    %v2071 = vsel %vm2000, %v1753, %v1755
    %v2072 = vsel %vm2000, %v1755, %v1757
    %v2073 = vsel %vm2000, %v1757, %v1759
    %v2074 = vsel %vm2000, %v1759, %v1761
    %v2075 = vsel %vm2000, %v1761, %v1763
    %v2076 = vsel %vm2000, %v1763, %v1765
    %v2077 = vsel %vm2000, %v1765, %v1767
    %v2078 = vsel %vm2000, %v1767, %v1769
    %v2079 = vsel %vm2000, %v1769, %v1771
    %v2080 = vsel %vm2000, %v1771, %v1773
    %v2081 = vsel %vm2000, %v1773, %v1775
    %v2082 = vsel %vm2000, %v1775, %v1777
    %v2083 = vsel %vm2000, %v1777, %v1779
    %v2084 = vsel %vm2000, %v1779, %v1781
    %v2085 = vsel %vm2000, %v1781, %v1783
    %v2086 = vsel %vm2000, %v1785, %v1787
    %v2087 = vsel %vm2000, %v1787, %v1789
    %v2088 = vsel %vm2000, %v1789, %v1791
    %v2089 = vsel %vm2000, %v1791, %v1793
    %v2090 = vsel %vm2000, %v1793, %v1795
    %v2091 = vsel %vm2000, %v1795, %v1797
    %v2092 = vsel %vm2000, %v1797, %v1799
    %v2093 = vsel %vm2000, %v1799, %v1801
    %v2094 = vsel %vm2000, %v1801, %v1803
    %v2095 = vsel %vm2000, %v1803, %v1805
    %v2096 = vsel %vm2000, %v1805, %v1807
    %v2097 = vsel %vm2000, %v1807, %v1809
    %v2098 = vsel %vm2000, %v1809, %v1811
    %v2099 = vsel %vm2000, %v1811, %v1813
    %v2100 = vsel %vm2000, %v1813, %v1815
    %v2101 = vsel %vm2000, %v1815, %v1817
    %v2102 = vsel %vm2000, %v1817, %v1819
    %v2103 = vsel %vm2000, %v1821, %v1823
    %v2104 = vsel %vm2000, %v1823, %v1825
    %v2105 = vsel %vm2000, %v1825, %v1827
    %v2106 = vsel %vm2000, %v1827, %v1829
    %v2107 = vsel %vm2000, %v1829, %v1831
    %v2108 = vsel %vm2000, %v1831, %v1833
    %v2109 = vsel %vm2000, %v1833, %v1835
    %v2110 = vsel %vm2000, %v1835, %v1837
    %v2111 = vsel %vm2000, %v1837, %v1839
    %v2112 = vsel %vm2000, %v1839, %v1841
    %v2113 = vsel %vm2000, %v1841, %v1843
    %v2114 = vsel %vm2000, %v1843, %v1845
    %v2115 = vsel %vm2000, %v1845, %v1847
    %v2116 = vsel %vm2000, %v1847, %v1849
    %v2117 = vsel %vm2000, %v1849, %v1851
    %v2118 = vsel %vm2000, %v1851, %v1853
    %v2119 = vsel %vm2000, %v1853, %v1855
    %v2120 = vsel %vm2000, %v1857, %v1859
    %v2121 = vsel %vm2000, %v1859, %v1861
    %v2122 = vsel %vm2000, %v1861, %v1863
    %v2123 = vsel %vm2000, %v1863, %v1865
    %v2124 = vsel %vm2000, %v1865, %v1867
    %v2125 = vsel %vm2000, %v1867, %v1869
    %v2126 = vsel %vm2000, %v1869, %v1871
    %v2127 = vsel %vm2000, %v1871, %v1873
    %v2128 = vsel %vm2000, %v1873, %v1875
    %v2129 = vsel %vm2000, %v1875, %v1877
    %v2130 = vsel %vm2000, %v1877, %v1879
    %v2131 = vsel %vm2000, %v1879, %v1881
    %v2132 = vsel %vm2000, %v1881, %v1883
    %v2133 = vsel %vm2000, %v1883, %v1885
    %v2134 = vsel %vm2000, %v1885, %v1887
    %v2135 = vsel %vm2000, %v1887, %v1889
    %v2136 = vsel %vm2000, %v1889, %v1891
    %v2137 = vsel %vm2000, %v1893, %v1895
    %v2138 = vsel %vm2000, %v1895, %v1897
    %v2139 = vsel %vm2000, %v1897, %v1899
    %v2140 = vsel %vm2000, %v1899, %v1901
    %v2141 = vsel %vm2000, %v1901, %v1903
    %v2142 = vsel %vm2000, %v1903, %v1905
    %v2143 = vsel %vm2000, %v1905, %v1907
    %v2144 = vsel %vm2000, %v1907, %v1909
    %v2145 = vsel %vm2000, %v1909, %v1911
    %v2146 = vsel %vm2000, %v1911, %v1913
    %v2147 = vsel %vm2000, %v1913, %v1915
    %v2148 = vsel %vm2000, %v1915, %v1917
    %v2149 = vsel %vm2000, %v1917, %v1919
    %v2150 = vsel %vm2000, %v1919, %v1921
    %v2151 = vsel %vm2000, %v1921, %v1923
    %v2152 = vsel %vm2000, %v1923, %v1925
    %v2153 = vsel %vm2000, %v1925, %v1927
    %v2154 = vsel %vm2000, %v1929, %v1931
    %v2155 = vsel %vm2000, %v1931, %v1933
    %v2156 = vsel %vm2000, %v1933, %v1935
    %v2157 = vsel %vm2000, %v1935, %v1937
    %v2158 = vsel %vm2000, %v1937, %v1939
    %v2159 = vsel %vm2000, %v1939, %v1941
    %v2160 = vsel %vm2000, %v1941, %v1943
    %v2161 = vsel %vm2000, %v1943, %v1945
    %v2162 = vsel %vm2000, %v1945, %v1947
    %v2163 = vsel %vm2000, %v1947, %v1949
    %v2164 = vsel %vm2000, %v1949, %v1951
    %v2165 = vsel %vm2000, %v1951, %v1953
    %v2166 = vsel %vm2000, %v1953, %v1955
    %v2167 = vsel %vm2000, %v1955, %v1957
    %v2168 = vsel %vm2000, %v1957, %v1959
    %v2169 = vsel %vm2000, %v1959, %v1961
    %v2170 = vsel %vm2000, %v1961, %v1963
    %v2171 = vsel %vm2000, %v1965, %v1967
    %v2172 = vsel %vm2000, %v1967, %v1969
    %v2173 = vsel %vm2000, %v1969, %v1971
    %v2174 = vsel %vm2000, %v1971, %v1973
    %v2175 = vsel %vm2000, %v1973, %v1975
    %v2176 = vsel %vm2000, %v1975, %v1977
    %v2177 = vsel %vm2000, %v1977, %v1979
    %v2178 = vsel %vm2000, %v1979, %v1981
    %v2179 = vsel %vm2000, %v1981, %v1983
    %v2180 = vsel %vm2000, %v1983, %v1985
    %v2181 = vsel %vm2000, %v1985, %v1987
    %v2182 = vsel %vm2000, %v1987, %v1989
    %v2183 = vsel %vm2000, %v1989, %v1991
    %v2184 = vsel %vm2000, %v1991, %v1993
    %v2185 = vsel %vm2000, %v1993, %v1995
    %v2186 = vsel %vm2000, %v1995, %v1997
    %v2187 = vsel %vm2000, %v1997, %v1999
    %2376 = vset.pattern.permute.xlu0 0
    %2377 = vperm.xlu0 %2376, %v66
    %v2378 = vpop.permute.xlu0 %2377
    %vm2380 = vcmask 719872
    %v2382 = vsel %vm2380, %v65, 0
    %2384 = vmatpush.msra.mxu0 %v1183
    %2385 = vmatpush.msra.mxu0 %v1112
    %2386 = vmatpush.msra.mxu0 %v1041
    %2387 = vmatpush.msra.mxu0 %v970
    %2388 = vmatpush.msra.mxu0 %v899
    %2389 = vmatpush.msra.mxu0 %v828
    %2390 = vmatpush.msra.mxu0 %v757
    %2391 = vmatpush.msra.mxu0 %v685
    %2392 = vmatpush.msra.mxu0 %v614
    %2393 = vmatpush.msra.mxu0 %v543
    %2394 = vmatpush.msra.mxu0 %v472
    %2395 = vmatpush.msra.mxu0 %v401
    %2396 = vmatpush.msra.mxu0 %v330
    %2397 = vmatpush.msra.mxu0 %v260
    %2398 = vmatpush.msra.mxu0 %v192
    %2399 = vmatpush.msra.mxu0 0.0
    %2400 = vmatmul.f32.gmra.mxu0 %v64
    %v2401 = vpop.f32.mrf.mxu0
    %v2402 = vadd.f32 %v2378, %v2401
    %2403 = vdwg.mxu0
    %2404 = vmatpush.msra.mxu0 0.0
    %2405 = vmatpush.msra.mxu0 0.0
    %2406 = vmatpush.msra.mxu0 0.0
    %2407 = vmatpush.msra.mxu0 0.0
    %2408 = vmatpush.msra.mxu0 0.0
    %2409 = vmatpush.msra.mxu0 %v2171
    %2410 = vmatpush.msra.mxu0 %v2154
    %2411 = vmatpush.msra.mxu0 %v2137
    %2412 = vmatpush.msra.mxu0 %v2120
    %2413 = vmatpush.msra.mxu0 %v2103
    %2414 = vmatpush.msra.mxu0 %v2086
    %2415 = vmatpush.msra.mxu0 %v2069
    %2416 = vmatpush.msra.mxu0 %v2052
    %2417 = vmatpush.msra.mxu0 %v2035
    %2418 = vmatpush.msra.mxu0 %v2018
    %2419 = vmatpush.msra.mxu0 %v2001
    %2420 = vmatmul.f32.gmra.mxu0 %v2382
    %v2421 = vpop.f32.mrf.mxu0
    %v2422 = vadd.f32 %v2402, %v2421
    %2423 = vdwg.mxu0
    %2424 = vmatpush.msra.mxu0 %v1184
    %2425 = vmatpush.msra.mxu0 %v1113
    %2426 = vmatpush.msra.mxu0 %v1042
    %2427 = vmatpush.msra.mxu0 %v971
    %2428 = vmatpush.msra.mxu0 %v900
    %2429 = vmatpush.msra.mxu0 %v829
    %2430 = vmatpush.msra.mxu0 %v758
    %2431 = vmatpush.msra.mxu0 %v686
    %2432 = vmatpush.msra.mxu0 %v615
    %2433 = vmatpush.msra.mxu0 %v544
    %2434 = vmatpush.msra.mxu0 %v473
    %2435 = vmatpush.msra.mxu0 %v402
    %2436 = vmatpush.msra.mxu0 %v331
    %2437 = vmatpush.msra.mxu0 %v261
    %2438 = vmatpush.msra.mxu0 %v193
    %2439 = vmatpush.msra.mxu0 %v152
    %2440 = vmatmul.f32.gmra.mxu0 %v64
    %v2441 = vpop.f32.mrf.mxu0
    %v2442 = vadd.f32 %v2378, %v2441
    %2443 = vdwg.mxu0
    %2444 = vmatpush.msra.mxu0 0.0
    %2445 = vmatpush.msra.mxu0 0.0
    %2446 = vmatpush.msra.mxu0 0.0
    %2447 = vmatpush.msra.mxu0 0.0
    %2448 = vmatpush.msra.mxu0 0.0
    %2449 = vmatpush.msra.mxu0 %v2172
    %2450 = vmatpush.msra.mxu0 %v2155
    %2451 = vmatpush.msra.mxu0 %v2138
    %2452 = vmatpush.msra.mxu0 %v2121
    %2453 = vmatpush.msra.mxu0 %v2104
    %2454 = vmatpush.msra.mxu0 %v2087
    %2455 = vmatpush.msra.mxu0 %v2070
    %2456 = vmatpush.msra.mxu0 %v2053
    %2457 = vmatpush.msra.mxu0 %v2036
    %2458 = vmatpush.msra.mxu0 %v2019
    %2459 = vmatpush.msra.mxu0 %v2002
    %2460 = vmatmul.f32.gmra.mxu0 %v2382
    %v2461 = vpop.f32.mrf.mxu0
    %v2462 = vadd.f32 %v2442, %v2461
    %2463 = vdwg.mxu0
    %2464 = vmatpush.msra.mxu0 %v1185
    %2465 = vmatpush.msra.mxu0 %v1114
    %2466 = vmatpush.msra.mxu0 %v1043
    %2467 = vmatpush.msra.mxu0 %v972
    %2468 = vmatpush.msra.mxu0 %v901
    %2469 = vmatpush.msra.mxu0 %v830
    %2470 = vmatpush.msra.mxu0 %v759
    %2471 = vmatpush.msra.mxu0 %v687
    %2472 = vmatpush.msra.mxu0 %v616
    %2473 = vmatpush.msra.mxu0 %v545
    %2474 = vmatpush.msra.mxu0 %v474
    %2475 = vmatpush.msra.mxu0 %v403
    %2476 = vmatpush.msra.mxu0 %v332
    %2477 = vmatpush.msra.mxu0 %v262
    %2478 = vmatpush.msra.mxu0 %v194
    %2479 = vmatpush.msra.mxu0 %v119
    %2480 = vmatmul.f32.gmra.mxu0 %v64
    %v2481 = vpop.f32.mrf.mxu0
    %v2482 = vadd.f32 %v2378, %v2481
    %2483 = vdwg.mxu0
    %2484 = vmatpush.msra.mxu0 0.0
    %2485 = vmatpush.msra.mxu0 0.0
    %2486 = vmatpush.msra.mxu0 0.0
    %2487 = vmatpush.msra.mxu0 0.0
    %2488 = vmatpush.msra.mxu0 0.0
    %2489 = vmatpush.msra.mxu0 %v2173
    %2490 = vmatpush.msra.mxu0 %v2156
    %2491 = vmatpush.msra.mxu0 %v2139
    %2492 = vmatpush.msra.mxu0 %v2122
    %2493 = vmatpush.msra.mxu0 %v2105
    %2494 = vmatpush.msra.mxu0 %v2088
    %2495 = vmatpush.msra.mxu0 %v2071
    %2496 = vmatpush.msra.mxu0 %v2054
    %2497 = vmatpush.msra.mxu0 %v2037
    %2498 = vmatpush.msra.mxu0 %v2020
    %2499 = vmatpush.msra.mxu0 %v2003
    %2500 = vmatmul.f32.gmra.mxu0 %v2382
    %v2501 = vpop.f32.mrf.mxu0
    %v2502 = vadd.f32 %v2482, %v2501
    %2503 = vdwg.mxu0
    %2504 = vmatpush.msra.mxu0 %v1186
    %2505 = vmatpush.msra.mxu0 %v1115
    %2506 = vmatpush.msra.mxu0 %v1044
    %2507 = vmatpush.msra.mxu0 %v973
    %2508 = vmatpush.msra.mxu0 %v902
    %2509 = vmatpush.msra.mxu0 %v831
    %2510 = vmatpush.msra.mxu0 %v760
    %2511 = vmatpush.msra.mxu0 %v688
    %2512 = vmatpush.msra.mxu0 %v617
    %2513 = vmatpush.msra.mxu0 %v546
    %2514 = vmatpush.msra.mxu0 %v475
    %2515 = vmatpush.msra.mxu0 %v404
    %2516 = vmatpush.msra.mxu0 %v333
    %2517 = vmatpush.msra.mxu0 %v263
    %2518 = vmatpush.msra.mxu0 %v195
    %2519 = vmatpush.msra.mxu0 %v120
    %2520 = vmatmul.f32.gmra.mxu0 %v64
    %v2521 = vpop.f32.mrf.mxu0
    %v2522 = vadd.f32 %v2378, %v2521
    %2523 = vdwg.mxu0
    %2524 = vmatpush.msra.mxu0 0.0
    %2525 = vmatpush.msra.mxu0 0.0
    %2526 = vmatpush.msra.mxu0 0.0
    %2527 = vmatpush.msra.mxu0 0.0
    %2528 = vmatpush.msra.mxu0 0.0
    %2529 = vmatpush.msra.mxu0 %v2174
    %2530 = vmatpush.msra.mxu0 %v2157
    %2531 = vmatpush.msra.mxu0 %v2140
    %2532 = vmatpush.msra.mxu0 %v2123
    %2533 = vmatpush.msra.mxu0 %v2106
    %2534 = vmatpush.msra.mxu0 %v2089
    %2535 = vmatpush.msra.mxu0 %v2072
    %2536 = vmatpush.msra.mxu0 %v2055
    %2537 = vmatpush.msra.mxu0 %v2038
    %2538 = vmatpush.msra.mxu0 %v2021
    %2539 = vmatpush.msra.mxu0 %v2004
    %2540 = vmatmul.f32.gmra.mxu0 %v2382
    %v2541 = vpop.f32.mrf.mxu0
    %v2542 = vadd.f32 %v2522, %v2541
    %2543 = vdwg.mxu0
    %2544 = vmatpush.msra.mxu0 %v1187
    %2545 = vmatpush.msra.mxu0 %v1116
    %2546 = vmatpush.msra.mxu0 %v1045
    %2547 = vmatpush.msra.mxu0 %v974
    %2548 = vmatpush.msra.mxu0 %v903
    %2549 = vmatpush.msra.mxu0 %v832
    %2550 = vmatpush.msra.mxu0 %v761
    %2551 = vmatpush.msra.mxu0 %v689
    %2552 = vmatpush.msra.mxu0 %v618
    %2553 = vmatpush.msra.mxu0 %v547
    %2554 = vmatpush.msra.mxu0 %v476
    %2555 = vmatpush.msra.mxu0 %v405
    %2556 = vmatpush.msra.mxu0 %v334
    %2557 = vmatpush.msra.mxu0 %v264
    %2558 = vmatpush.msra.mxu0 %v196
    %2559 = vmatpush.msra.mxu0 %v121
    %2560 = vmatmul.f32.gmra.mxu0 %v64
    %v2561 = vpop.f32.mrf.mxu0
    %v2562 = vadd.f32 %v2378, %v2561
    %2563 = vdwg.mxu0
    %2564 = vmatpush.msra.mxu0 0.0
    %2565 = vmatpush.msra.mxu0 0.0
    %2566 = vmatpush.msra.mxu0 0.0
    %2567 = vmatpush.msra.mxu0 0.0
    %2568 = vmatpush.msra.mxu0 0.0
    %2569 = vmatpush.msra.mxu0 %v2175
    %2570 = vmatpush.msra.mxu0 %v2158
    %2571 = vmatpush.msra.mxu0 %v2141
    %2572 = vmatpush.msra.mxu0 %v2124
    %2573 = vmatpush.msra.mxu0 %v2107
    %2574 = vmatpush.msra.mxu0 %v2090
    %2575 = vmatpush.msra.mxu0 %v2073
    %2576 = vmatpush.msra.mxu0 %v2056
    %2577 = vmatpush.msra.mxu0 %v2039
    %2578 = vmatpush.msra.mxu0 %v2022
    %2579 = vmatpush.msra.mxu0 %v2005
    %2580 = vmatmul.f32.gmra.mxu0 %v2382
    %v2581 = vpop.f32.mrf.mxu0
    %v2582 = vadd.f32 %v2562, %v2581
    %2583 = vdwg.mxu0
    %2584 = vmatpush.msra.mxu0 %v1188
    %2585 = vmatpush.msra.mxu0 %v1117
    %2586 = vmatpush.msra.mxu0 %v1046
    %2587 = vmatpush.msra.mxu0 %v975
    %2588 = vmatpush.msra.mxu0 %v904
    %2589 = vmatpush.msra.mxu0 %v833
    %2590 = vmatpush.msra.mxu0 %v762
    %2591 = vmatpush.msra.mxu0 %v690
    %2592 = vmatpush.msra.mxu0 %v619
    %2593 = vmatpush.msra.mxu0 %v548
    %2594 = vmatpush.msra.mxu0 %v477
    %2595 = vmatpush.msra.mxu0 %v406
    %2596 = vmatpush.msra.mxu0 %v335
    %2597 = vmatpush.msra.mxu0 %v265
    %2598 = vmatpush.msra.mxu0 %v197
    %2599 = vmatpush.msra.mxu0 %v122
    %2600 = vmatmul.f32.gmra.mxu0 %v64
    %v2601 = vpop.f32.mrf.mxu0
    %v2602 = vadd.f32 %v2378, %v2601
    %2603 = vdwg.mxu0
    %2604 = vmatpush.msra.mxu0 0.0
    %2605 = vmatpush.msra.mxu0 0.0
    %2606 = vmatpush.msra.mxu0 0.0
    %2607 = vmatpush.msra.mxu0 0.0
    %2608 = vmatpush.msra.mxu0 0.0
    %2609 = vmatpush.msra.mxu0 %v2176
    %2610 = vmatpush.msra.mxu0 %v2159
    %2611 = vmatpush.msra.mxu0 %v2142
    %2612 = vmatpush.msra.mxu0 %v2125
    %2613 = vmatpush.msra.mxu0 %v2108
    %2614 = vmatpush.msra.mxu0 %v2091
    %2615 = vmatpush.msra.mxu0 %v2074
    %2616 = vmatpush.msra.mxu0 %v2057
    %2617 = vmatpush.msra.mxu0 %v2040
    %2618 = vmatpush.msra.mxu0 %v2023
    %2619 = vmatpush.msra.mxu0 %v2006
    %2620 = vmatmul.f32.gmra.mxu0 %v2382
    %v2621 = vpop.f32.mrf.mxu0
    %v2622 = vadd.f32 %v2602, %v2621
    %2623 = vdwg.mxu0
    %2624 = vmatpush.msra.mxu0 %v1189
    %2625 = vmatpush.msra.mxu0 %v1118
    %2626 = vmatpush.msra.mxu0 %v1047
    %2627 = vmatpush.msra.mxu0 %v976
    %2628 = vmatpush.msra.mxu0 %v905
    %2629 = vmatpush.msra.mxu0 %v834
    %2630 = vmatpush.msra.mxu0 %v763
    %2631 = vmatpush.msra.mxu0 %v691
    %2632 = vmatpush.msra.mxu0 %v620
    %2633 = vmatpush.msra.mxu0 %v549
    %2634 = vmatpush.msra.mxu0 %v478
    %2635 = vmatpush.msra.mxu0 %v407
    %2636 = vmatpush.msra.mxu0 %v336
    %2637 = vmatpush.msra.mxu0 %v266
    %2638 = vmatpush.msra.mxu0 %v198
    %2639 = vmatpush.msra.mxu0 %v123
    %2640 = vmatmul.f32.gmra.mxu0 %v64
    %v2641 = vpop.f32.mrf.mxu0
    %v2642 = vadd.f32 %v2378, %v2641
    %2643 = vdwg.mxu0
    %2644 = vmatpush.msra.mxu0 0.0
    %2645 = vmatpush.msra.mxu0 0.0
    %2646 = vmatpush.msra.mxu0 0.0
    %2647 = vmatpush.msra.mxu0 0.0
    %2648 = vmatpush.msra.mxu0 0.0
    %2649 = vmatpush.msra.mxu0 %v2177
    %2650 = vmatpush.msra.mxu0 %v2160
    %2651 = vmatpush.msra.mxu0 %v2143
    %2652 = vmatpush.msra.mxu0 %v2126
    %2653 = vmatpush.msra.mxu0 %v2109
    %2654 = vmatpush.msra.mxu0 %v2092
    %2655 = vmatpush.msra.mxu0 %v2075
    %2656 = vmatpush.msra.mxu0 %v2058
    %2657 = vmatpush.msra.mxu0 %v2041
    %2658 = vmatpush.msra.mxu0 %v2024
    %2659 = vmatpush.msra.mxu0 %v2007
    %2660 = vmatmul.f32.gmra.mxu0 %v2382
    %v2661 = vpop.f32.mrf.mxu0
    %v2662 = vadd.f32 %v2642, %v2661
    %2663 = vdwg.mxu0
    %2664 = vmatpush.msra.mxu0 %v1190
    %2665 = vmatpush.msra.mxu0 %v1119
    %2666 = vmatpush.msra.mxu0 %v1048
    %2667 = vmatpush.msra.mxu0 %v977
    %2668 = vmatpush.msra.mxu0 %v906
    %2669 = vmatpush.msra.mxu0 %v835
    %2670 = vmatpush.msra.mxu0 %v764
    %2671 = vmatpush.msra.mxu0 %v692
    %2672 = vmatpush.msra.mxu0 %v621
    %2673 = vmatpush.msra.mxu0 %v550
    %2674 = vmatpush.msra.mxu0 %v479
    %2675 = vmatpush.msra.mxu0 %v408
    %2676 = vmatpush.msra.mxu0 %v337
    %2677 = vmatpush.msra.mxu0 %v267
    %2678 = vmatpush.msra.mxu0 %v199
    %2679 = vmatpush.msra.mxu0 %v124
    %2680 = vmatmul.f32.gmra.mxu0 %v64
    %v2681 = vpop.f32.mrf.mxu0
    %v2682 = vadd.f32 %v2378, %v2681
    %2683 = vdwg.mxu0
    %2684 = vmatpush.msra.mxu0 0.0
    %2685 = vmatpush.msra.mxu0 0.0
    %2686 = vmatpush.msra.mxu0 0.0
    %2687 = vmatpush.msra.mxu0 0.0
    %2688 = vmatpush.msra.mxu0 0.0
    %2689 = vmatpush.msra.mxu0 %v2178
    %2690 = vmatpush.msra.mxu0 %v2161
    %2691 = vmatpush.msra.mxu0 %v2144
    %2692 = vmatpush.msra.mxu0 %v2127
    %2693 = vmatpush.msra.mxu0 %v2110
    %2694 = vmatpush.msra.mxu0 %v2093
    %2695 = vmatpush.msra.mxu0 %v2076
    %2696 = vmatpush.msra.mxu0 %v2059
    %2697 = vmatpush.msra.mxu0 %v2042
    %2698 = vmatpush.msra.mxu0 %v2025
    %2699 = vmatpush.msra.mxu0 %v2008
    %2700 = vmatmul.f32.gmra.mxu0 %v2382
    %v2701 = vpop.f32.mrf.mxu0
    %v2702 = vadd.f32 %v2682, %v2701
    %2703 = vdwg.mxu0
    %2704 = vmatpush.msra.mxu0 %v1191
    %2705 = vmatpush.msra.mxu0 %v1120
    %2706 = vmatpush.msra.mxu0 %v1049
    %2707 = vmatpush.msra.mxu0 %v978
    %2708 = vmatpush.msra.mxu0 %v907
    %2709 = vmatpush.msra.mxu0 %v836
    %2710 = vmatpush.msra.mxu0 %v765
    %2711 = vmatpush.msra.mxu0 %v693
    %2712 = vmatpush.msra.mxu0 %v622
    %2713 = vmatpush.msra.mxu0 %v551
    %2714 = vmatpush.msra.mxu0 %v480
    %2715 = vmatpush.msra.mxu0 %v409
    %2716 = vmatpush.msra.mxu0 %v338
    %2717 = vmatpush.msra.mxu0 %v268
    %2718 = vmatpush.msra.mxu0 %v200
    %2719 = vmatpush.msra.mxu0 %v125
    %2720 = vmatmul.f32.gmra.mxu0 %v64
    %v2721 = vpop.f32.mrf.mxu0
    %v2722 = vadd.f32 %v2378, %v2721
    %2723 = vdwg.mxu0
    %2724 = vmatpush.msra.mxu0 0.0
    %2725 = vmatpush.msra.mxu0 0.0
    %2726 = vmatpush.msra.mxu0 0.0
    %2727 = vmatpush.msra.mxu0 0.0
    %2728 = vmatpush.msra.mxu0 0.0
    %2729 = vmatpush.msra.mxu0 %v2179
    %2730 = vmatpush.msra.mxu0 %v2162
    %2731 = vmatpush.msra.mxu0 %v2145
    %2732 = vmatpush.msra.mxu0 %v2128
    %2733 = vmatpush.msra.mxu0 %v2111
    %2734 = vmatpush.msra.mxu0 %v2094
    %2735 = vmatpush.msra.mxu0 %v2077
    %2736 = vmatpush.msra.mxu0 %v2060
    %2737 = vmatpush.msra.mxu0 %v2043
    %2738 = vmatpush.msra.mxu0 %v2026
    %2739 = vmatpush.msra.mxu0 %v2009
    %2740 = vmatmul.f32.gmra.mxu0 %v2382
    %v2741 = vpop.f32.mrf.mxu0
    %v2742 = vadd.f32 %v2722, %v2741
    %2743 = vdwg.mxu0
    %2744 = vmatpush.msra.mxu0 %v1192
    %2745 = vmatpush.msra.mxu0 %v1121
    %2746 = vmatpush.msra.mxu0 %v1050
    %2747 = vmatpush.msra.mxu0 %v979
    %2748 = vmatpush.msra.mxu0 %v908
    %2749 = vmatpush.msra.mxu0 %v837
    %2750 = vmatpush.msra.mxu0 %v766
    %2751 = vmatpush.msra.mxu0 %v694
    %2752 = vmatpush.msra.mxu0 %v623
    %2753 = vmatpush.msra.mxu0 %v552
    %2754 = vmatpush.msra.mxu0 %v481
    %2755 = vmatpush.msra.mxu0 %v410
    %2756 = vmatpush.msra.mxu0 %v339
    %2757 = vmatpush.msra.mxu0 %v269
    %2758 = vmatpush.msra.mxu0 %v201
    %2759 = vmatpush.msra.mxu0 %v126
    %2760 = vmatmul.f32.gmra.mxu0 %v64
    %v2761 = vpop.f32.mrf.mxu0
    %v2762 = vadd.f32 %v2378, %v2761
    %2763 = vdwg.mxu0
    %2764 = vmatpush.msra.mxu0 0.0
    %2765 = vmatpush.msra.mxu0 0.0
    %2766 = vmatpush.msra.mxu0 0.0
    %2767 = vmatpush.msra.mxu0 0.0
    %2768 = vmatpush.msra.mxu0 0.0
    %2769 = vmatpush.msra.mxu0 %v2180
    %2770 = vmatpush.msra.mxu0 %v2163
    %2771 = vmatpush.msra.mxu0 %v2146
    %2772 = vmatpush.msra.mxu0 %v2129
    %2773 = vmatpush.msra.mxu0 %v2112
    %2774 = vmatpush.msra.mxu0 %v2095
    %2775 = vmatpush.msra.mxu0 %v2078
    %2776 = vmatpush.msra.mxu0 %v2061
    %2777 = vmatpush.msra.mxu0 %v2044
    %2778 = vmatpush.msra.mxu0 %v2027
    %2779 = vmatpush.msra.mxu0 %v2010
    %2780 = vmatmul.f32.gmra.mxu0 %v2382
    %v2781 = vpop.f32.mrf.mxu0
    %v2782 = vadd.f32 %v2762, %v2781
    %2783 = vdwg.mxu0
    %2784 = vmatpush.msra.mxu0 %v1193
    %2785 = vmatpush.msra.mxu0 %v1122
    %2786 = vmatpush.msra.mxu0 %v1051
    %2787 = vmatpush.msra.mxu0 %v980
    %2788 = vmatpush.msra.mxu0 %v909
    %2789 = vmatpush.msra.mxu0 %v838
    %2790 = vmatpush.msra.mxu0 %v767
    %2791 = vmatpush.msra.mxu0 %v695
    %2792 = vmatpush.msra.mxu0 %v624
    %2793 = vmatpush.msra.mxu0 %v553
    %2794 = vmatpush.msra.mxu0 %v482
    %2795 = vmatpush.msra.mxu0 %v411
    %2796 = vmatpush.msra.mxu0 %v340
    %2797 = vmatpush.msra.mxu0 %v270
    %2798 = vmatpush.msra.mxu0 %v202
    %2799 = vmatpush.msra.mxu0 %v127
    %2800 = vmatmul.f32.gmra.mxu0 %v64
    %v2801 = vpop.f32.mrf.mxu0
    %v2802 = vadd.f32 %v2378, %v2801
    %2803 = vdwg.mxu0
    %2804 = vmatpush.msra.mxu0 0.0
    %2805 = vmatpush.msra.mxu0 0.0
    %2806 = vmatpush.msra.mxu0 0.0
    %2807 = vmatpush.msra.mxu0 0.0
    %2808 = vmatpush.msra.mxu0 0.0
    %2809 = vmatpush.msra.mxu0 %v2181
    %2810 = vmatpush.msra.mxu0 %v2164
    %2811 = vmatpush.msra.mxu0 %v2147
    %2812 = vmatpush.msra.mxu0 %v2130
    %2813 = vmatpush.msra.mxu0 %v2113
    %2814 = vmatpush.msra.mxu0 %v2096
    %2815 = vmatpush.msra.mxu0 %v2079
    %2816 = vmatpush.msra.mxu0 %v2062
    %2817 = vmatpush.msra.mxu0 %v2045
    %2818 = vmatpush.msra.mxu0 %v2028
    %2819 = vmatpush.msra.mxu0 %v2011
    %2820 = vmatmul.f32.gmra.mxu0 %v2382
    %v2821 = vpop.f32.mrf.mxu0
    %v2822 = vadd.f32 %v2802, %v2821
    %2823 = vdwg.mxu0
    %2824 = vmatpush.msra.mxu0 %v1194
    %2825 = vmatpush.msra.mxu0 %v1123
    %2826 = vmatpush.msra.mxu0 %v1052
    %2827 = vmatpush.msra.mxu0 %v981
    %2828 = vmatpush.msra.mxu0 %v910
    %2829 = vmatpush.msra.mxu0 %v839
    %2830 = vmatpush.msra.mxu0 %v768
    %2831 = vmatpush.msra.mxu0 %v696
    %2832 = vmatpush.msra.mxu0 %v625
    %2833 = vmatpush.msra.mxu0 %v554
    %2834 = vmatpush.msra.mxu0 %v483
    %2835 = vmatpush.msra.mxu0 %v412
    %2836 = vmatpush.msra.mxu0 %v341
    %2837 = vmatpush.msra.mxu0 %v271
    %2838 = vmatpush.msra.mxu0 %v203
    %2839 = vmatpush.msra.mxu0 %v128
    %2840 = vmatmul.f32.gmra.mxu0 %v64
    %v2841 = vpop.f32.mrf.mxu0
    %v2842 = vadd.f32 %v2378, %v2841
    %2843 = vdwg.mxu0
    %2844 = vmatpush.msra.mxu0 0.0
    %2845 = vmatpush.msra.mxu0 0.0
    %2846 = vmatpush.msra.mxu0 0.0
    %2847 = vmatpush.msra.mxu0 0.0
    %2848 = vmatpush.msra.mxu0 0.0
    %2849 = vmatpush.msra.mxu0 %v2182
    %2850 = vmatpush.msra.mxu0 %v2165
    %2851 = vmatpush.msra.mxu0 %v2148
    %2852 = vmatpush.msra.mxu0 %v2131
    %2853 = vmatpush.msra.mxu0 %v2114
    %2854 = vmatpush.msra.mxu0 %v2097
    %2855 = vmatpush.msra.mxu0 %v2080
    %2856 = vmatpush.msra.mxu0 %v2063
    %2857 = vmatpush.msra.mxu0 %v2046
    %2858 = vmatpush.msra.mxu0 %v2029
    %2859 = vmatpush.msra.mxu0 %v2012
    %2860 = vmatmul.f32.gmra.mxu0 %v2382
    %v2861 = vpop.f32.mrf.mxu0
    %v2862 = vadd.f32 %v2842, %v2861
    %2863 = vdwg.mxu0
    %2864 = vmatpush.msra.mxu0 %v1195
    %2865 = vmatpush.msra.mxu0 %v1124
    %2866 = vmatpush.msra.mxu0 %v1053
    %2867 = vmatpush.msra.mxu0 %v982
    %2868 = vmatpush.msra.mxu0 %v911
    %2869 = vmatpush.msra.mxu0 %v840
    %2870 = vmatpush.msra.mxu0 %v769
    %2871 = vmatpush.msra.mxu0 %v697
    %2872 = vmatpush.msra.mxu0 %v626
    %2873 = vmatpush.msra.mxu0 %v555
    %2874 = vmatpush.msra.mxu0 %v484
    %2875 = vmatpush.msra.mxu0 %v413
    %2876 = vmatpush.msra.mxu0 %v342
    %2877 = vmatpush.msra.mxu0 %v272
    %2878 = vmatpush.msra.mxu0 %v204
    %2879 = vmatpush.msra.mxu0 %v129
    %2880 = vmatmul.f32.gmra.mxu0 %v64
    %v2881 = vpop.f32.mrf.mxu0
    %v2882 = vadd.f32 %v2378, %v2881
    %2883 = vdwg.mxu0
    %2884 = vmatpush.msra.mxu0 0.0
    %2885 = vmatpush.msra.mxu0 0.0
    %2886 = vmatpush.msra.mxu0 0.0
    %2887 = vmatpush.msra.mxu0 0.0
    %2888 = vmatpush.msra.mxu0 0.0
    %2889 = vmatpush.msra.mxu0 %v2183
    %2890 = vmatpush.msra.mxu0 %v2166
    %2891 = vmatpush.msra.mxu0 %v2149
    %2892 = vmatpush.msra.mxu0 %v2132
    %2893 = vmatpush.msra.mxu0 %v2115
    %2894 = vmatpush.msra.mxu0 %v2098
    %2895 = vmatpush.msra.mxu0 %v2081
    %2896 = vmatpush.msra.mxu0 %v2064
    %2897 = vmatpush.msra.mxu0 %v2047
    %2898 = vmatpush.msra.mxu0 %v2030
    %2899 = vmatpush.msra.mxu0 %v2013
    %2900 = vmatmul.f32.gmra.mxu0 %v2382
    %v2901 = vpop.f32.mrf.mxu0
    %v2902 = vadd.f32 %v2882, %v2901
    %2903 = vdwg.mxu0
    %2904 = vmatpush.msra.mxu0 %v1196
    %2905 = vmatpush.msra.mxu0 %v1125
    %2906 = vmatpush.msra.mxu0 %v1054
    %2907 = vmatpush.msra.mxu0 %v983
    %2908 = vmatpush.msra.mxu0 %v912
    %2909 = vmatpush.msra.mxu0 %v841
    %2910 = vmatpush.msra.mxu0 %v770
    %2911 = vmatpush.msra.mxu0 %v698
    %2912 = vmatpush.msra.mxu0 %v627
    %2913 = vmatpush.msra.mxu0 %v556
    %2914 = vmatpush.msra.mxu0 %v485
    %2915 = vmatpush.msra.mxu0 %v414
    %2916 = vmatpush.msra.mxu0 %v343
    %2917 = vmatpush.msra.mxu0 %v273
    %2918 = vmatpush.msra.mxu0 %v205
    %2919 = vmatpush.msra.mxu0 %v130
    %2920 = vmatmul.f32.gmra.mxu0 %v64
    %v2921 = vpop.f32.mrf.mxu0
    %v2922 = vadd.f32 %v2378, %v2921
    %2923 = vdwg.mxu0
    %2924 = vmatpush.msra.mxu0 0.0
    %2925 = vmatpush.msra.mxu0 0.0
    %2926 = vmatpush.msra.mxu0 0.0
    %2927 = vmatpush.msra.mxu0 0.0
    %2928 = vmatpush.msra.mxu0 0.0
    %2929 = vmatpush.msra.mxu0 %v2184
    %2930 = vmatpush.msra.mxu0 %v2167
    %2931 = vmatpush.msra.mxu0 %v2150
    %2932 = vmatpush.msra.mxu0 %v2133
    %2933 = vmatpush.msra.mxu0 %v2116
    %2934 = vmatpush.msra.mxu0 %v2099
    %2935 = vmatpush.msra.mxu0 %v2082
    %2936 = vmatpush.msra.mxu0 %v2065
    %2937 = vmatpush.msra.mxu0 %v2048
    %2938 = vmatpush.msra.mxu0 %v2031
    %2939 = vmatpush.msra.mxu0 %v2014
    %2940 = vmatmul.f32.gmra.mxu0 %v2382
    %v2941 = vpop.f32.mrf.mxu0
    %v2942 = vadd.f32 %v2922, %v2941
    %2943 = vdwg.mxu0
    %2944 = vmatpush.msra.mxu0 %v1197
    %2945 = vmatpush.msra.mxu0 %v1126
    %2946 = vmatpush.msra.mxu0 %v1055
    %2947 = vmatpush.msra.mxu0 %v984
    %2948 = vmatpush.msra.mxu0 %v913
    %2949 = vmatpush.msra.mxu0 %v842
    %2950 = vmatpush.msra.mxu0 %v771
    %2951 = vmatpush.msra.mxu0 %v699
    %2952 = vmatpush.msra.mxu0 %v628
    %2953 = vmatpush.msra.mxu0 %v557
    %2954 = vmatpush.msra.mxu0 %v486
    %2955 = vmatpush.msra.mxu0 %v415
    %2956 = vmatpush.msra.mxu0 %v344
    %2957 = vmatpush.msra.mxu0 %v274
    %2958 = vmatpush.msra.mxu0 %v206
    %2959 = vmatpush.msra.mxu0 %v131
    %2960 = vmatmul.f32.gmra.mxu0 %v64
    %v2961 = vpop.f32.mrf.mxu0
    %v2962 = vadd.f32 %v2378, %v2961
    %2963 = vdwg.mxu0
    %2964 = vmatpush.msra.mxu0 0.0
    %2965 = vmatpush.msra.mxu0 0.0
    %2966 = vmatpush.msra.mxu0 0.0
    %2967 = vmatpush.msra.mxu0 0.0
    %2968 = vmatpush.msra.mxu0 0.0
    %2969 = vmatpush.msra.mxu0 %v2185
    %2970 = vmatpush.msra.mxu0 %v2168
    %2971 = vmatpush.msra.mxu0 %v2151
    %2972 = vmatpush.msra.mxu0 %v2134
    %2973 = vmatpush.msra.mxu0 %v2117
    %2974 = vmatpush.msra.mxu0 %v2100
    %2975 = vmatpush.msra.mxu0 %v2083
    %2976 = vmatpush.msra.mxu0 %v2066
    %2977 = vmatpush.msra.mxu0 %v2049
    %2978 = vmatpush.msra.mxu0 %v2032
    %2979 = vmatpush.msra.mxu0 %v2015
    %2980 = vmatmul.f32.gmra.mxu0 %v2382
    %v2981 = vpop.f32.mrf.mxu0
    %v2982 = vadd.f32 %v2962, %v2981
    %2983 = vdwg.mxu0
    %2984 = vmatpush.msra.mxu0 %v1198
    %2985 = vmatpush.msra.mxu0 %v1127
    %2986 = vmatpush.msra.mxu0 %v1056
    %2987 = vmatpush.msra.mxu0 %v985
    %2988 = vmatpush.msra.mxu0 %v914
    %2989 = vmatpush.msra.mxu0 %v843
    %2990 = vmatpush.msra.mxu0 %v772
    %2991 = vmatpush.msra.mxu0 %v700
    %2992 = vmatpush.msra.mxu0 %v629
    %2993 = vmatpush.msra.mxu0 %v558
    %2994 = vmatpush.msra.mxu0 %v487
    %2995 = vmatpush.msra.mxu0 %v416
    %2996 = vmatpush.msra.mxu0 %v345
    %2997 = vmatpush.msra.mxu0 %v275
    %2998 = vmatpush.msra.mxu0 %v207
    %2999 = vmatpush.msra.mxu0 %v132
    %3000 = vmatmul.f32.gmra.mxu0 %v64
    %v3001 = vpop.f32.mrf.mxu0
    %v3002 = vadd.f32 %v2378, %v3001
    %3003 = vdwg.mxu0
    %3004 = vmatpush.msra.mxu0 0.0
    %3005 = vmatpush.msra.mxu0 0.0
    %3006 = vmatpush.msra.mxu0 0.0
    %3007 = vmatpush.msra.mxu0 0.0
    %3008 = vmatpush.msra.mxu0 0.0
    %3009 = vmatpush.msra.mxu0 %v2186
    %3010 = vmatpush.msra.mxu0 %v2169
    %3011 = vmatpush.msra.mxu0 %v2152
    %3012 = vmatpush.msra.mxu0 %v2135
    %3013 = vmatpush.msra.mxu0 %v2118
    %3014 = vmatpush.msra.mxu0 %v2101
    %3015 = vmatpush.msra.mxu0 %v2084
    %3016 = vmatpush.msra.mxu0 %v2067
    %3017 = vmatpush.msra.mxu0 %v2050
    %3018 = vmatpush.msra.mxu0 %v2033
    %3019 = vmatpush.msra.mxu0 %v2016
    %3020 = vmatmul.f32.gmra.mxu0 %v2382
    %v3021 = vpop.f32.mrf.mxu0
    %v3022 = vadd.f32 %v3002, %v3021
    %3023 = vdwg.mxu0
    %3024 = vmatpush.msra.mxu0 %v1199
    %3025 = vmatpush.msra.mxu0 %v1128
    %3026 = vmatpush.msra.mxu0 %v1057
    %3027 = vmatpush.msra.mxu0 %v986
    %3028 = vmatpush.msra.mxu0 %v915
    %3029 = vmatpush.msra.mxu0 %v844
    %3030 = vmatpush.msra.mxu0 %v773
    %3031 = vmatpush.msra.mxu0 %v701
    %3032 = vmatpush.msra.mxu0 %v630
    %3033 = vmatpush.msra.mxu0 %v559
    %3034 = vmatpush.msra.mxu0 %v488
    %3035 = vmatpush.msra.mxu0 %v417
    %3036 = vmatpush.msra.mxu0 %v346
    %3037 = vmatpush.msra.mxu0 %v258
    %3038 = vmatpush.msra.mxu0 %v190
    %3039 = vmatpush.msra.mxu0 %v133
    %3040 = vmatmul.f32.gmra.mxu0 %v64
    %v3041 = vpop.f32.mrf.mxu0
    %v3042 = vadd.f32 %v2378, %v3041
    %3043 = vdwg.mxu0
    %3044 = vmatpush.msra.mxu0 0.0
    %3045 = vmatpush.msra.mxu0 0.0
    %3046 = vmatpush.msra.mxu0 0.0
    %3047 = vmatpush.msra.mxu0 0.0
    %3048 = vmatpush.msra.mxu0 0.0
    %3049 = vmatpush.msra.mxu0 %v2187
    %3050 = vmatpush.msra.mxu0 %v2170
    %3051 = vmatpush.msra.mxu0 %v2153
    %3052 = vmatpush.msra.mxu0 %v2136
    %3053 = vmatpush.msra.mxu0 %v2119
    %3054 = vmatpush.msra.mxu0 %v2102
    %3055 = vmatpush.msra.mxu0 %v2085
    %3056 = vmatpush.msra.mxu0 %v2068
    %3057 = vmatpush.msra.mxu0 %v2051
    %3058 = vmatpush.msra.mxu0 %v2034
    %3059 = vmatpush.msra.mxu0 %v2017
    %3060 = vmatmul.f32.gmra.mxu0 %v2382
    %v3061 = vpop.f32.mrf.mxu0
    %v3062 = vadd.f32 %v3042, %v3061
    %3063 = vdwg.mxu0
    %v3064 = vmax.f32 %v2422, 0.0
    %v3065 = vmax.f32 %v2462, 0.0
    %v3066 = vmax.f32 %v2502, 0.0
    %v3067 = vmax.f32 %v2542, 0.0
    %v3068 = vmax.f32 %v2582, 0.0
    %v3069 = vmax.f32 %v2622, 0.0
    %v3070 = vmax.f32 %v2662, 0.0
    %v3071 = vmax.f32 %v2702, 0.0
    %v3072 = vmax.f32 %v2742, 0.0
    %v3073 = vmax.f32 %v2782, 0.0
    %v3074 = vmax.f32 %v2822, 0.0
    %v3075 = vmax.f32 %v2862, 0.0
    %v3076 = vmax.f32 %v2902, 0.0
    %v3077 = vmax.f32 %v2942, 0.0
    %v3078 = vmax.f32 %v2982, 0.0
    %v3079 = vmax.f32 %v3022, 0.0
    %v3080 = vmax.f32 %v3062, 0.0
    %v3084 = vperm.slane %v61, 0
    %v3085 = vperm.slane %v61, 1
    %v3086 = vperm.slane %v61, 2
    %v3087 = vperm.slane %v61, 3
    %v3088 = vperm.slane %v61, 4
    %v3089 = vperm.slane %v61, 5
    %v3090 = vperm.slane %v61, 6
    %v3091 = vperm.slane %v61, 7
    %v3092 = vperm.slane %v62, 0
    %v3093 = vperm.slane %v62, 1
    %v3094 = vperm.slane %v62, 2
    %v3095 = vperm.slane %v62, 3
    %v3096 = vperm.slane %v62, 4
    %v3097 = vperm.slane %v62, 5
    %v3098 = vperm.slane %v62, 6
    %v3099 = vperm.slane %v62, 7
    %v3100 = vperm.slane %v63, 0
    %v3118 = vmul.f32 %v3064, %v3084
    %v3119 = vmul.f32 %v3065, %v3085
    %v3120 = vmul.f32 %v3066, %v3086
    %v3121 = vmul.f32 %v3067, %v3087
    %v3122 = vmul.f32 %v3068, %v3088
    %v3123 = vmul.f32 %v3069, %v3089
    %v3124 = vmul.f32 %v3070, %v3090
    %v3125 = vmul.f32 %v3071, %v3091
    %v3126 = vmul.f32 %v3072, %v3092
    %v3127 = vmul.f32 %v3073, %v3093
    %v3128 = vmul.f32 %v3074, %v3094
    %v3129 = vmul.f32 %v3075, %v3095
    %v3130 = vmul.f32 %v3076, %v3096
    %v3131 = vmul.f32 %v3077, %v3097
    %v3132 = vmul.f32 %v3078, %v3098
    %v3133 = vmul.f32 %v3079, %v3099
    %v3134 = vmul.f32 %v3080, %v3100
    %v3135 = vld [vmem:[%s4] sm:$0xff]
    %v3136 = vld [vmem:[%s4 + $0x8] sm:$0xff]
    %v3137 = vld [vmem:[%s5] sm:$0xff]
    %3155 = vrot.lane.b32.xlu0 %v3118, 71
    %v3156 = vpop.permute.xlu0 %3155
    %3157 = vrot.lane.b32.xlu0 %v3119, 71
    %v3158 = vpop.permute.xlu0 %3157
    %3159 = vrot.lane.b32.xlu0 %v3120, 71
    %v3160 = vpop.permute.xlu0 %3159
    %3161 = vrot.lane.b32.xlu0 %v3121, 71
    %v3162 = vpop.permute.xlu0 %3161
    %3163 = vrot.lane.b32.xlu0 %v3122, 71
    %v3164 = vpop.permute.xlu0 %3163
    %3165 = vrot.lane.b32.xlu0 %v3123, 71
    %v3166 = vpop.permute.xlu0 %3165
    %3167 = vrot.lane.b32.xlu0 %v3124, 71
    %v3168 = vpop.permute.xlu0 %3167
    %3169 = vrot.lane.b32.xlu0 %v3125, 71
    %v3170 = vpop.permute.xlu0 %3169
    %3171 = vrot.lane.b32.xlu0 %v3126, 71
    %v3172 = vpop.permute.xlu0 %3171
    %3173 = vrot.lane.b32.xlu0 %v3127, 71
    %v3174 = vpop.permute.xlu0 %3173
    %3175 = vrot.lane.b32.xlu0 %v3128, 71
    %v3176 = vpop.permute.xlu0 %3175
    %3177 = vrot.lane.b32.xlu0 %v3129, 71
    %v3178 = vpop.permute.xlu0 %3177
    %3179 = vrot.lane.b32.xlu0 %v3130, 71
    %v3180 = vpop.permute.xlu0 %3179
    %3181 = vrot.lane.b32.xlu0 %v3131, 71
    %v3182 = vpop.permute.xlu0 %3181
    %3183 = vrot.lane.b32.xlu0 %v3132, 71
    %v3184 = vpop.permute.xlu0 %3183
    %3185 = vrot.lane.b32.xlu0 %v3133, 71
    %v3186 = vpop.permute.xlu0 %3185
    %3187 = vrot.lane.b32.xlu0 %v3134, 71
    %v3188 = vpop.permute.xlu0 %3187
    %v3189 = vsel %vm118, %v3156, %v3158
    %v3190 = vsel %vm118, %v3158, %v3160
    %v3191 = vsel %vm118, %v3160, %v3162
    %v3192 = vsel %vm118, %v3162, %v3164
    %v3193 = vsel %vm118, %v3164, %v3166
    %v3194 = vsel %vm118, %v3166, %v3168
    %v3195 = vsel %vm118, %v3168, %v3170
    %v3196 = vsel %vm118, %v3170, %v3172
    %v3197 = vsel %vm118, %v3172, %v3174
    %v3198 = vsel %vm118, %v3174, %v3176
    %v3199 = vsel %vm118, %v3176, %v3178
    %v3200 = vsel %vm118, %v3178, %v3180
    %v3201 = vsel %vm118, %v3180, %v3182
    %v3202 = vsel %vm118, %v3182, %v3184
    %v3203 = vsel %vm118, %v3184, %v3186
    %v3204 = vsel %vm118, %v3186, %v3188
    %v3222 = vsel %vm118, 0.0, %v3156
    %v3223 = vsel %vm153, %v3188, 0.0
    %3225 = vrot.lane.b32.xlu0 %v3222, 127
    %v3226 = vpop.permute.xlu0 %3225
    %3227 = vrot.lane.b32.xlu0 %v3189, 127
    %v3228 = vpop.permute.xlu0 %3227
    %3229 = vrot.lane.b32.xlu0 %v3190, 127
    %v3230 = vpop.permute.xlu0 %3229
    %3231 = vrot.lane.b32.xlu0 %v3191, 127
    %v3232 = vpop.permute.xlu0 %3231
    %3233 = vrot.lane.b32.xlu0 %v3192, 127
    %v3234 = vpop.permute.xlu0 %3233
    %3235 = vrot.lane.b32.xlu0 %v3193, 127
    %v3236 = vpop.permute.xlu0 %3235
    %3237 = vrot.lane.b32.xlu0 %v3194, 127
    %v3238 = vpop.permute.xlu0 %3237
    %3239 = vrot.lane.b32.xlu0 %v3195, 127
    %v3240 = vpop.permute.xlu0 %3239
    %3241 = vrot.lane.b32.xlu0 %v3196, 127
    %v3242 = vpop.permute.xlu0 %3241
    %3243 = vrot.lane.b32.xlu0 %v3197, 127
    %v3244 = vpop.permute.xlu0 %3243
    %3245 = vrot.lane.b32.xlu0 %v3198, 127
    %v3246 = vpop.permute.xlu0 %3245
    %3247 = vrot.lane.b32.xlu0 %v3199, 127
    %v3248 = vpop.permute.xlu0 %3247
    %3249 = vrot.lane.b32.xlu0 %v3200, 127
    %v3250 = vpop.permute.xlu0 %3249
    %3251 = vrot.lane.b32.xlu0 %v3201, 127
    %v3252 = vpop.permute.xlu0 %3251
    %3253 = vrot.lane.b32.xlu0 %v3202, 127
    %v3254 = vpop.permute.xlu0 %3253
    %3255 = vrot.lane.b32.xlu0 %v3203, 127
    %v3256 = vpop.permute.xlu0 %3255
    %v3257 = vsel %vm191, %v158, %v3226
    %v3258 = vsel %vm191, %v3226, %v3228
    %v3259 = vsel %vm191, %v3228, %v3230
    %v3260 = vsel %vm191, %v3230, %v3232
    %v3261 = vsel %vm191, %v3232, %v3234
    %v3262 = vsel %vm191, %v3234, %v3236
    %v3263 = vsel %vm191, %v3236, %v3238
    %v3264 = vsel %vm191, %v3238, %v3240
    %v3265 = vsel %vm191, %v3240, %v3242
    %v3266 = vsel %vm191, %v3242, %v3244
    %v3267 = vsel %vm191, %v3244, %v3246
    %v3268 = vsel %vm191, %v3246, %v3248
    %v3269 = vsel %vm191, %v3248, %v3250
    %v3270 = vsel %vm191, %v3250, %v3252
    %v3271 = vsel %vm191, %v3252, %v3254
    %v3272 = vsel %vm191, %v3254, %v3256
    %3290 = vrot.lane.b32.xlu0 %v3222, 126
    %v3291 = vpop.permute.xlu0 %3290
    %3292 = vrot.lane.b32.xlu0 %v3189, 126
    %v3293 = vpop.permute.xlu0 %3292
    %3294 = vrot.lane.b32.xlu0 %v3190, 126
    %v3295 = vpop.permute.xlu0 %3294
    %3296 = vrot.lane.b32.xlu0 %v3191, 126
    %v3297 = vpop.permute.xlu0 %3296
    %3298 = vrot.lane.b32.xlu0 %v3192, 126
    %v3299 = vpop.permute.xlu0 %3298
    %3300 = vrot.lane.b32.xlu0 %v3193, 126
    %v3301 = vpop.permute.xlu0 %3300
    %3302 = vrot.lane.b32.xlu0 %v3194, 126
    %v3303 = vpop.permute.xlu0 %3302
    %3304 = vrot.lane.b32.xlu0 %v3195, 126
    %v3305 = vpop.permute.xlu0 %3304
    %3306 = vrot.lane.b32.xlu0 %v3196, 126
    %v3307 = vpop.permute.xlu0 %3306
    %3308 = vrot.lane.b32.xlu0 %v3197, 126
    %v3309 = vpop.permute.xlu0 %3308
    %3310 = vrot.lane.b32.xlu0 %v3198, 126
    %v3311 = vpop.permute.xlu0 %3310
    %3312 = vrot.lane.b32.xlu0 %v3199, 126
    %v3313 = vpop.permute.xlu0 %3312
    %3314 = vrot.lane.b32.xlu0 %v3200, 126
    %v3315 = vpop.permute.xlu0 %3314
    %3316 = vrot.lane.b32.xlu0 %v3201, 126
    %v3317 = vpop.permute.xlu0 %3316
    %3318 = vrot.lane.b32.xlu0 %v3202, 126
    %v3319 = vpop.permute.xlu0 %3318
    %3320 = vrot.lane.b32.xlu0 %v3203, 126
    %v3321 = vpop.permute.xlu0 %3320
    %v3322 = vsel %vm259, %v226, %v3291
    %v3323 = vsel %vm259, %v3291, %v3293
    %v3324 = vsel %vm259, %v3293, %v3295
    %v3325 = vsel %vm259, %v3295, %v3297
    %v3326 = vsel %vm259, %v3297, %v3299
    %v3327 = vsel %vm259, %v3299, %v3301
    %v3328 = vsel %vm259, %v3301, %v3303
    %v3329 = vsel %vm259, %v3303, %v3305
    %v3330 = vsel %vm259, %v3305, %v3307
    %v3331 = vsel %vm259, %v3307, %v3309
    %v3332 = vsel %vm259, %v3309, %v3311
    %v3333 = vsel %vm259, %v3311, %v3313
    %v3334 = vsel %vm259, %v3313, %v3315
    %v3335 = vsel %vm259, %v3315, %v3317
    %v3336 = vsel %vm259, %v3317, %v3319
    %v3337 = vsel %vm259, %v3319, %v3321
    %3355 = vrot.lane.b32.xlu0 %v3222, 110
    %v3356 = vpop.permute.xlu0 %3355
    %3357 = vrot.lane.b32.xlu0 %v3189, 110
    %v3358 = vpop.permute.xlu0 %3357
    %3359 = vrot.lane.b32.xlu0 %v3190, 110
    %v3360 = vpop.permute.xlu0 %3359
    %3361 = vrot.lane.b32.xlu0 %v3191, 110
    %v3362 = vpop.permute.xlu0 %3361
    %3363 = vrot.lane.b32.xlu0 %v3192, 110
    %v3364 = vpop.permute.xlu0 %3363
    %3365 = vrot.lane.b32.xlu0 %v3193, 110
    %v3366 = vpop.permute.xlu0 %3365
    %3367 = vrot.lane.b32.xlu0 %v3194, 110
    %v3368 = vpop.permute.xlu0 %3367
    %3369 = vrot.lane.b32.xlu0 %v3195, 110
    %v3370 = vpop.permute.xlu0 %3369
    %3371 = vrot.lane.b32.xlu0 %v3196, 110
    %v3372 = vpop.permute.xlu0 %3371
    %3373 = vrot.lane.b32.xlu0 %v3197, 110
    %v3374 = vpop.permute.xlu0 %3373
    %3375 = vrot.lane.b32.xlu0 %v3198, 110
    %v3376 = vpop.permute.xlu0 %3375
    %3377 = vrot.lane.b32.xlu0 %v3199, 110
    %v3378 = vpop.permute.xlu0 %3377
    %3379 = vrot.lane.b32.xlu0 %v3200, 110
    %v3380 = vpop.permute.xlu0 %3379
    %3381 = vrot.lane.b32.xlu0 %v3201, 110
    %v3382 = vpop.permute.xlu0 %3381
    %3383 = vrot.lane.b32.xlu0 %v3202, 110
    %v3384 = vpop.permute.xlu0 %3383
    %3385 = vrot.lane.b32.xlu0 %v3203, 110
    %v3386 = vpop.permute.xlu0 %3385
    %3387 = vrot.lane.b32.xlu0 %v3204, 110
    %v3388 = vpop.permute.xlu0 %3387
    %v3389 = vsel %vm329, %v294, %v3356
    %v3390 = vsel %vm329, %v3356, %v3358
    %v3391 = vsel %vm329, %v3358, %v3360
    %v3392 = vsel %vm329, %v3360, %v3362
    %v3393 = vsel %vm329, %v3362, %v3364
    %v3394 = vsel %vm329, %v3364, %v3366
    %v3395 = vsel %vm329, %v3366, %v3368
    %v3396 = vsel %vm329, %v3368, %v3370
    %v3397 = vsel %vm329, %v3370, %v3372
    %v3398 = vsel %vm329, %v3372, %v3374
    %v3399 = vsel %vm329, %v3374, %v3376
    %v3400 = vsel %vm329, %v3376, %v3378
    %v3401 = vsel %vm329, %v3378, %v3380
    %v3402 = vsel %vm329, %v3380, %v3382
    %v3403 = vsel %vm329, %v3382, %v3384
    %v3404 = vsel %vm329, %v3384, %v3386
    %v3405 = vsel %vm329, %v3386, %v3388
    %3423 = vrot.lane.b32.xlu0 %v3222, 109
    %v3424 = vpop.permute.xlu0 %3423
    %3425 = vrot.lane.b32.xlu0 %v3189, 109
    %v3426 = vpop.permute.xlu0 %3425
    %3427 = vrot.lane.b32.xlu0 %v3190, 109
    %v3428 = vpop.permute.xlu0 %3427
    %3429 = vrot.lane.b32.xlu0 %v3191, 109
    %v3430 = vpop.permute.xlu0 %3429
    %3431 = vrot.lane.b32.xlu0 %v3192, 109
    %v3432 = vpop.permute.xlu0 %3431
    %3433 = vrot.lane.b32.xlu0 %v3193, 109
    %v3434 = vpop.permute.xlu0 %3433
    %3435 = vrot.lane.b32.xlu0 %v3194, 109
    %v3436 = vpop.permute.xlu0 %3435
    %3437 = vrot.lane.b32.xlu0 %v3195, 109
    %v3438 = vpop.permute.xlu0 %3437
    %3439 = vrot.lane.b32.xlu0 %v3196, 109
    %v3440 = vpop.permute.xlu0 %3439
    %3441 = vrot.lane.b32.xlu0 %v3197, 109
    %v3442 = vpop.permute.xlu0 %3441
    %3443 = vrot.lane.b32.xlu0 %v3198, 109
    %v3444 = vpop.permute.xlu0 %3443
    %3445 = vrot.lane.b32.xlu0 %v3199, 109
    %v3446 = vpop.permute.xlu0 %3445
    %3447 = vrot.lane.b32.xlu0 %v3200, 109
    %v3448 = vpop.permute.xlu0 %3447
    %3449 = vrot.lane.b32.xlu0 %v3201, 109
    %v3450 = vpop.permute.xlu0 %3449
    %3451 = vrot.lane.b32.xlu0 %v3202, 109
    %v3452 = vpop.permute.xlu0 %3451
    %3453 = vrot.lane.b32.xlu0 %v3203, 109
    %v3454 = vpop.permute.xlu0 %3453
    %3455 = vrot.lane.b32.xlu0 %v3204, 109
    %v3456 = vpop.permute.xlu0 %3455
    %v3457 = vsel %vm400, %v365, %v3424
    %v3458 = vsel %vm400, %v3424, %v3426
    %v3459 = vsel %vm400, %v3426, %v3428
    %v3460 = vsel %vm400, %v3428, %v3430
    %v3461 = vsel %vm400, %v3430, %v3432
    %v3462 = vsel %vm400, %v3432, %v3434
    %v3463 = vsel %vm400, %v3434, %v3436
    %v3464 = vsel %vm400, %v3436, %v3438
    %v3465 = vsel %vm400, %v3438, %v3440
    %v3466 = vsel %vm400, %v3440, %v3442
    %v3467 = vsel %vm400, %v3442, %v3444
    %v3468 = vsel %vm400, %v3444, %v3446
    %v3469 = vsel %vm400, %v3446, %v3448
    %v3470 = vsel %vm400, %v3448, %v3450
    %v3471 = vsel %vm400, %v3450, %v3452
    %v3472 = vsel %vm400, %v3452, %v3454
    %v3473 = vsel %vm400, %v3454, %v3456
    %3491 = vrot.lane.b32.xlu0 %v3222, 108
    %v3492 = vpop.permute.xlu0 %3491
    %3493 = vrot.lane.b32.xlu0 %v3189, 108
    %v3494 = vpop.permute.xlu0 %3493
    %3495 = vrot.lane.b32.xlu0 %v3190, 108
    %v3496 = vpop.permute.xlu0 %3495
    %3497 = vrot.lane.b32.xlu0 %v3191, 108
    %v3498 = vpop.permute.xlu0 %3497
    %3499 = vrot.lane.b32.xlu0 %v3192, 108
    %v3500 = vpop.permute.xlu0 %3499
    %3501 = vrot.lane.b32.xlu0 %v3193, 108
    %v3502 = vpop.permute.xlu0 %3501
    %3503 = vrot.lane.b32.xlu0 %v3194, 108
    %v3504 = vpop.permute.xlu0 %3503
    %3505 = vrot.lane.b32.xlu0 %v3195, 108
    %v3506 = vpop.permute.xlu0 %3505
    %3507 = vrot.lane.b32.xlu0 %v3196, 108
    %v3508 = vpop.permute.xlu0 %3507
    %3509 = vrot.lane.b32.xlu0 %v3197, 108
    %v3510 = vpop.permute.xlu0 %3509
    %3511 = vrot.lane.b32.xlu0 %v3198, 108
    %v3512 = vpop.permute.xlu0 %3511
    %3513 = vrot.lane.b32.xlu0 %v3199, 108
    %v3514 = vpop.permute.xlu0 %3513
    %3515 = vrot.lane.b32.xlu0 %v3200, 108
    %v3516 = vpop.permute.xlu0 %3515
    %3517 = vrot.lane.b32.xlu0 %v3201, 108
    %v3518 = vpop.permute.xlu0 %3517
    %3519 = vrot.lane.b32.xlu0 %v3202, 108
    %v3520 = vpop.permute.xlu0 %3519
    %3521 = vrot.lane.b32.xlu0 %v3203, 108
    %v3522 = vpop.permute.xlu0 %3521
    %3523 = vrot.lane.b32.xlu0 %v3204, 108
    %v3524 = vpop.permute.xlu0 %3523
    %v3525 = vsel %vm471, %v436, %v3492
    %v3526 = vsel %vm471, %v3492, %v3494
    %v3527 = vsel %vm471, %v3494, %v3496
    %v3528 = vsel %vm471, %v3496, %v3498
    %v3529 = vsel %vm471, %v3498, %v3500
    %v3530 = vsel %vm471, %v3500, %v3502
    %v3531 = vsel %vm471, %v3502, %v3504
    %v3532 = vsel %vm471, %v3504, %v3506
    %v3533 = vsel %vm471, %v3506, %v3508
    %v3534 = vsel %vm471, %v3508, %v3510
    %v3535 = vsel %vm471, %v3510, %v3512
    %v3536 = vsel %vm471, %v3512, %v3514
    %v3537 = vsel %vm471, %v3514, %v3516
    %v3538 = vsel %vm471, %v3516, %v3518
    %v3539 = vsel %vm471, %v3518, %v3520
    %v3540 = vsel %vm471, %v3520, %v3522
    %v3541 = vsel %vm471, %v3522, %v3524
    %3559 = vrot.lane.b32.xlu0 %v3222, 92
    %v3560 = vpop.permute.xlu0 %3559
    %3561 = vrot.lane.b32.xlu0 %v3189, 92
    %v3562 = vpop.permute.xlu0 %3561
    %3563 = vrot.lane.b32.xlu0 %v3190, 92
    %v3564 = vpop.permute.xlu0 %3563
    %3565 = vrot.lane.b32.xlu0 %v3191, 92
    %v3566 = vpop.permute.xlu0 %3565
    %3567 = vrot.lane.b32.xlu0 %v3192, 92
    %v3568 = vpop.permute.xlu0 %3567
    %3569 = vrot.lane.b32.xlu0 %v3193, 92
    %v3570 = vpop.permute.xlu0 %3569
    %3571 = vrot.lane.b32.xlu0 %v3194, 92
    %v3572 = vpop.permute.xlu0 %3571
    %3573 = vrot.lane.b32.xlu0 %v3195, 92
    %v3574 = vpop.permute.xlu0 %3573
    %3575 = vrot.lane.b32.xlu0 %v3196, 92
    %v3576 = vpop.permute.xlu0 %3575
    %3577 = vrot.lane.b32.xlu0 %v3197, 92
    %v3578 = vpop.permute.xlu0 %3577
    %3579 = vrot.lane.b32.xlu0 %v3198, 92
    %v3580 = vpop.permute.xlu0 %3579
    %3581 = vrot.lane.b32.xlu0 %v3199, 92
    %v3582 = vpop.permute.xlu0 %3581
    %3583 = vrot.lane.b32.xlu0 %v3200, 92
    %v3584 = vpop.permute.xlu0 %3583
    %3585 = vrot.lane.b32.xlu0 %v3201, 92
    %v3586 = vpop.permute.xlu0 %3585
    %3587 = vrot.lane.b32.xlu0 %v3202, 92
    %v3588 = vpop.permute.xlu0 %3587
    %3589 = vrot.lane.b32.xlu0 %v3203, 92
    %v3590 = vpop.permute.xlu0 %3589
    %3591 = vrot.lane.b32.xlu0 %v3204, 92
    %v3592 = vpop.permute.xlu0 %3591
    %v3593 = vsel %vm542, %v507, %v3560
    %v3594 = vsel %vm542, %v3560, %v3562
    %v3595 = vsel %vm542, %v3562, %v3564
    %v3596 = vsel %vm542, %v3564, %v3566
    %v3597 = vsel %vm542, %v3566, %v3568
    %v3598 = vsel %vm542, %v3568, %v3570
    %v3599 = vsel %vm542, %v3570, %v3572
    %v3600 = vsel %vm542, %v3572, %v3574
    %v3601 = vsel %vm542, %v3574, %v3576
    %v3602 = vsel %vm542, %v3576, %v3578
    %v3603 = vsel %vm542, %v3578, %v3580
    %v3604 = vsel %vm542, %v3580, %v3582
    %v3605 = vsel %vm542, %v3582, %v3584
    %v3606 = vsel %vm542, %v3584, %v3586
    %v3607 = vsel %vm542, %v3586, %v3588
    %v3608 = vsel %vm542, %v3588, %v3590
    %v3609 = vsel %vm542, %v3590, %v3592
    %3627 = vrot.lane.b32.xlu0 %v3222, 91
    %v3628 = vpop.permute.xlu0 %3627
    %3629 = vrot.lane.b32.xlu0 %v3189, 91
    %v3630 = vpop.permute.xlu0 %3629
    %3631 = vrot.lane.b32.xlu0 %v3190, 91
    %v3632 = vpop.permute.xlu0 %3631
    %3633 = vrot.lane.b32.xlu0 %v3191, 91
    %v3634 = vpop.permute.xlu0 %3633
    %3635 = vrot.lane.b32.xlu0 %v3192, 91
    %v3636 = vpop.permute.xlu0 %3635
    %3637 = vrot.lane.b32.xlu0 %v3193, 91
    %v3638 = vpop.permute.xlu0 %3637
    %3639 = vrot.lane.b32.xlu0 %v3194, 91
    %v3640 = vpop.permute.xlu0 %3639
    %3641 = vrot.lane.b32.xlu0 %v3195, 91
    %v3642 = vpop.permute.xlu0 %3641
    %3643 = vrot.lane.b32.xlu0 %v3196, 91
    %v3644 = vpop.permute.xlu0 %3643
    %3645 = vrot.lane.b32.xlu0 %v3197, 91
    %v3646 = vpop.permute.xlu0 %3645
    %3647 = vrot.lane.b32.xlu0 %v3198, 91
    %v3648 = vpop.permute.xlu0 %3647
    %3649 = vrot.lane.b32.xlu0 %v3199, 91
    %v3650 = vpop.permute.xlu0 %3649
    %3651 = vrot.lane.b32.xlu0 %v3200, 91
    %v3652 = vpop.permute.xlu0 %3651
    %3653 = vrot.lane.b32.xlu0 %v3201, 91
    %v3654 = vpop.permute.xlu0 %3653
    %3655 = vrot.lane.b32.xlu0 %v3202, 91
    %v3656 = vpop.permute.xlu0 %3655
    %3657 = vrot.lane.b32.xlu0 %v3203, 91
    %v3658 = vpop.permute.xlu0 %3657
    %3659 = vrot.lane.b32.xlu0 %v3204, 91
    %v3660 = vpop.permute.xlu0 %3659
    %v3661 = vsel %vm613, %v578, %v3628
    %v3662 = vsel %vm613, %v3628, %v3630
    %v3663 = vsel %vm613, %v3630, %v3632
    %v3664 = vsel %vm613, %v3632, %v3634
    %v3665 = vsel %vm613, %v3634, %v3636
    %v3666 = vsel %vm613, %v3636, %v3638
    %v3667 = vsel %vm613, %v3638, %v3640
    %v3668 = vsel %vm613, %v3640, %v3642
    %v3669 = vsel %vm613, %v3642, %v3644
    %v3670 = vsel %vm613, %v3644, %v3646
    %v3671 = vsel %vm613, %v3646, %v3648
    %v3672 = vsel %vm613, %v3648, %v3650
    %v3673 = vsel %vm613, %v3650, %v3652
    %v3674 = vsel %vm613, %v3652, %v3654
    %v3675 = vsel %vm613, %v3654, %v3656
    %v3676 = vsel %vm613, %v3656, %v3658
    %v3677 = vsel %vm613, %v3658, %v3660
    %3695 = vrot.lane.b32.xlu0 %v3222, 90
    %v3696 = vpop.permute.xlu0 %3695
    %3697 = vrot.lane.b32.xlu0 %v3189, 90
    %v3698 = vpop.permute.xlu0 %3697
    %3699 = vrot.lane.b32.xlu0 %v3190, 90
    %v3700 = vpop.permute.xlu0 %3699
    %3701 = vrot.lane.b32.xlu0 %v3191, 90
    %v3702 = vpop.permute.xlu0 %3701
    %3703 = vrot.lane.b32.xlu0 %v3192, 90
    %v3704 = vpop.permute.xlu0 %3703
    %3705 = vrot.lane.b32.xlu0 %v3193, 90
    %v3706 = vpop.permute.xlu0 %3705
    %3707 = vrot.lane.b32.xlu0 %v3194, 90
    %v3708 = vpop.permute.xlu0 %3707
    %3709 = vrot.lane.b32.xlu0 %v3195, 90
    %v3710 = vpop.permute.xlu0 %3709
    %3711 = vrot.lane.b32.xlu0 %v3196, 90
    %v3712 = vpop.permute.xlu0 %3711
    %3713 = vrot.lane.b32.xlu0 %v3197, 90
    %v3714 = vpop.permute.xlu0 %3713
    %3715 = vrot.lane.b32.xlu0 %v3198, 90
    %v3716 = vpop.permute.xlu0 %3715
    %3717 = vrot.lane.b32.xlu0 %v3199, 90
    %v3718 = vpop.permute.xlu0 %3717
    %3719 = vrot.lane.b32.xlu0 %v3200, 90
    %v3720 = vpop.permute.xlu0 %3719
    %3721 = vrot.lane.b32.xlu0 %v3201, 90
    %v3722 = vpop.permute.xlu0 %3721
    %3723 = vrot.lane.b32.xlu0 %v3202, 90
    %v3724 = vpop.permute.xlu0 %3723
    %3725 = vrot.lane.b32.xlu0 %v3203, 90
    %v3726 = vpop.permute.xlu0 %3725
    %3727 = vrot.lane.b32.xlu0 %v3204, 90
    %v3728 = vpop.permute.xlu0 %3727
    %v3729 = vsel %vm684, %v649, %v3696
    %v3730 = vsel %vm684, %v3696, %v3698
    %v3731 = vsel %vm684, %v3698, %v3700
    %v3732 = vsel %vm684, %v3700, %v3702
    %v3733 = vsel %vm684, %v3702, %v3704
    %v3734 = vsel %vm684, %v3704, %v3706
    %v3735 = vsel %vm684, %v3706, %v3708
    %v3736 = vsel %vm684, %v3708, %v3710
    %v3737 = vsel %vm684, %v3710, %v3712
    %v3738 = vsel %vm684, %v3712, %v3714
    %v3739 = vsel %vm684, %v3714, %v3716
    %v3740 = vsel %vm684, %v3716, %v3718
    %v3741 = vsel %vm684, %v3718, %v3720
    %v3742 = vsel %vm684, %v3720, %v3722
    %v3743 = vsel %vm684, %v3722, %v3724
    %v3744 = vsel %vm684, %v3724, %v3726
    %v3745 = vsel %vm684, %v3726, %v3728
    %3764 = vrot.lane.b32.xlu0 %v3222, 76
    %v3765 = vpop.permute.xlu0 %3764
    %3766 = vrot.lane.b32.xlu0 %v3189, 76
    %v3767 = vpop.permute.xlu0 %3766
    %3768 = vrot.lane.b32.xlu0 %v3190, 76
    %v3769 = vpop.permute.xlu0 %3768
    %3770 = vrot.lane.b32.xlu0 %v3191, 76
    %v3771 = vpop.permute.xlu0 %3770
    %3772 = vrot.lane.b32.xlu0 %v3192, 76
    %v3773 = vpop.permute.xlu0 %3772
    %3774 = vrot.lane.b32.xlu0 %v3193, 76
    %v3775 = vpop.permute.xlu0 %3774
    %3776 = vrot.lane.b32.xlu0 %v3194, 76
    %v3777 = vpop.permute.xlu0 %3776
    %3778 = vrot.lane.b32.xlu0 %v3195, 76
    %v3779 = vpop.permute.xlu0 %3778
    %3780 = vrot.lane.b32.xlu0 %v3196, 76
    %v3781 = vpop.permute.xlu0 %3780
    %3782 = vrot.lane.b32.xlu0 %v3197, 76
    %v3783 = vpop.permute.xlu0 %3782
    %3784 = vrot.lane.b32.xlu0 %v3198, 76
    %v3785 = vpop.permute.xlu0 %3784
    %3786 = vrot.lane.b32.xlu0 %v3199, 76
    %v3787 = vpop.permute.xlu0 %3786
    %3788 = vrot.lane.b32.xlu0 %v3200, 76
    %v3789 = vpop.permute.xlu0 %3788
    %3790 = vrot.lane.b32.xlu0 %v3201, 76
    %v3791 = vpop.permute.xlu0 %3790
    %3792 = vrot.lane.b32.xlu0 %v3202, 76
    %v3793 = vpop.permute.xlu0 %3792
    %3794 = vrot.lane.b32.xlu0 %v3203, 76
    %v3795 = vpop.permute.xlu0 %3794
    %3796 = vrot.lane.b32.xlu0 %v3204, 76
    %v3797 = vpop.permute.xlu0 %3796
    %3798 = vrot.lane.b32.xlu0 %v3223, 76
    %v3799 = vpop.permute.xlu0 %3798
    %v3800 = vsel %vm756, %v3765, %v3767
    %v3801 = vsel %vm756, %v3767, %v3769
    %v3802 = vsel %vm756, %v3769, %v3771
    %v3803 = vsel %vm756, %v3771, %v3773
    %v3804 = vsel %vm756, %v3773, %v3775
    %v3805 = vsel %vm756, %v3775, %v3777
    %v3806 = vsel %vm756, %v3777, %v3779
    %v3807 = vsel %vm756, %v3779, %v3781
    %v3808 = vsel %vm756, %v3781, %v3783
    %v3809 = vsel %vm756, %v3783, %v3785
    %v3810 = vsel %vm756, %v3785, %v3787
    %v3811 = vsel %vm756, %v3787, %v3789
    %v3812 = vsel %vm756, %v3789, %v3791
    %v3813 = vsel %vm756, %v3791, %v3793
    %v3814 = vsel %vm756, %v3793, %v3795
    %v3815 = vsel %vm756, %v3795, %v3797
    %v3816 = vsel %vm756, %v3797, %v3799
    %3834 = vrot.lane.b32.xlu0 %v3222, 75
    %v3835 = vpop.permute.xlu0 %3834
    %3836 = vrot.lane.b32.xlu0 %v3189, 75
    %v3837 = vpop.permute.xlu0 %3836
    %3838 = vrot.lane.b32.xlu0 %v3190, 75
    %v3839 = vpop.permute.xlu0 %3838
    %3840 = vrot.lane.b32.xlu0 %v3191, 75
    %v3841 = vpop.permute.xlu0 %3840
    %3842 = vrot.lane.b32.xlu0 %v3192, 75
    %v3843 = vpop.permute.xlu0 %3842
    %3844 = vrot.lane.b32.xlu0 %v3193, 75
    %v3845 = vpop.permute.xlu0 %3844
    %3846 = vrot.lane.b32.xlu0 %v3194, 75
    %v3847 = vpop.permute.xlu0 %3846
    %3848 = vrot.lane.b32.xlu0 %v3195, 75
    %v3849 = vpop.permute.xlu0 %3848
    %3850 = vrot.lane.b32.xlu0 %v3196, 75
    %v3851 = vpop.permute.xlu0 %3850
    %3852 = vrot.lane.b32.xlu0 %v3197, 75
    %v3853 = vpop.permute.xlu0 %3852
    %3854 = vrot.lane.b32.xlu0 %v3198, 75
    %v3855 = vpop.permute.xlu0 %3854
    %3856 = vrot.lane.b32.xlu0 %v3199, 75
    %v3857 = vpop.permute.xlu0 %3856
    %3858 = vrot.lane.b32.xlu0 %v3200, 75
    %v3859 = vpop.permute.xlu0 %3858
    %3860 = vrot.lane.b32.xlu0 %v3201, 75
    %v3861 = vpop.permute.xlu0 %3860
    %3862 = vrot.lane.b32.xlu0 %v3202, 75
    %v3863 = vpop.permute.xlu0 %3862
    %3864 = vrot.lane.b32.xlu0 %v3203, 75
    %v3865 = vpop.permute.xlu0 %3864
    %3866 = vrot.lane.b32.xlu0 %v3204, 75
    %v3867 = vpop.permute.xlu0 %3866
    %3868 = vrot.lane.b32.xlu0 %v3223, 75
    %v3869 = vpop.permute.xlu0 %3868
    %v3870 = vsel %vm827, %v3835, %v3837
    %v3871 = vsel %vm827, %v3837, %v3839
    %v3872 = vsel %vm827, %v3839, %v3841
    %v3873 = vsel %vm827, %v3841, %v3843
    %v3874 = vsel %vm827, %v3843, %v3845
    %v3875 = vsel %vm827, %v3845, %v3847
    %v3876 = vsel %vm827, %v3847, %v3849
    %v3877 = vsel %vm827, %v3849, %v3851
    %v3878 = vsel %vm827, %v3851, %v3853
    %v3879 = vsel %vm827, %v3853, %v3855
    %v3880 = vsel %vm827, %v3855, %v3857
    %v3881 = vsel %vm827, %v3857, %v3859
    %v3882 = vsel %vm827, %v3859, %v3861
    %v3883 = vsel %vm827, %v3861, %v3863
    %v3884 = vsel %vm827, %v3863, %v3865
    %v3885 = vsel %vm827, %v3865, %v3867
    %v3886 = vsel %vm827, %v3867, %v3869
    %3904 = vrot.lane.b32.xlu0 %v3222, 74
    %v3905 = vpop.permute.xlu0 %3904
    %3906 = vrot.lane.b32.xlu0 %v3189, 74
    %v3907 = vpop.permute.xlu0 %3906
    %3908 = vrot.lane.b32.xlu0 %v3190, 74
    %v3909 = vpop.permute.xlu0 %3908
    %3910 = vrot.lane.b32.xlu0 %v3191, 74
    %v3911 = vpop.permute.xlu0 %3910
    %3912 = vrot.lane.b32.xlu0 %v3192, 74
    %v3913 = vpop.permute.xlu0 %3912
    %3914 = vrot.lane.b32.xlu0 %v3193, 74
    %v3915 = vpop.permute.xlu0 %3914
    %3916 = vrot.lane.b32.xlu0 %v3194, 74
    %v3917 = vpop.permute.xlu0 %3916
    %3918 = vrot.lane.b32.xlu0 %v3195, 74
    %v3919 = vpop.permute.xlu0 %3918
    %3920 = vrot.lane.b32.xlu0 %v3196, 74
    %v3921 = vpop.permute.xlu0 %3920
    %3922 = vrot.lane.b32.xlu0 %v3197, 74
    %v3923 = vpop.permute.xlu0 %3922
    %3924 = vrot.lane.b32.xlu0 %v3198, 74
    %v3925 = vpop.permute.xlu0 %3924
    %3926 = vrot.lane.b32.xlu0 %v3199, 74
    %v3927 = vpop.permute.xlu0 %3926
    %3928 = vrot.lane.b32.xlu0 %v3200, 74
    %v3929 = vpop.permute.xlu0 %3928
    %3930 = vrot.lane.b32.xlu0 %v3201, 74
    %v3931 = vpop.permute.xlu0 %3930
    %3932 = vrot.lane.b32.xlu0 %v3202, 74
    %v3933 = vpop.permute.xlu0 %3932
    %3934 = vrot.lane.b32.xlu0 %v3203, 74
    %v3935 = vpop.permute.xlu0 %3934
    %3936 = vrot.lane.b32.xlu0 %v3204, 74
    %v3937 = vpop.permute.xlu0 %3936
    %3938 = vrot.lane.b32.xlu0 %v3223, 74
    %v3939 = vpop.permute.xlu0 %3938
    %v3940 = vsel %vm898, %v3905, %v3907
    %v3941 = vsel %vm898, %v3907, %v3909
    %v3942 = vsel %vm898, %v3909, %v3911
    %v3943 = vsel %vm898, %v3911, %v3913
    %v3944 = vsel %vm898, %v3913, %v3915
    %v3945 = vsel %vm898, %v3915, %v3917
    %v3946 = vsel %vm898, %v3917, %v3919
    %v3947 = vsel %vm898, %v3919, %v3921
    %v3948 = vsel %vm898, %v3921, %v3923
    %v3949 = vsel %vm898, %v3923, %v3925
    %v3950 = vsel %vm898, %v3925, %v3927
    %v3951 = vsel %vm898, %v3927, %v3929
    %v3952 = vsel %vm898, %v3929, %v3931
    %v3953 = vsel %vm898, %v3931, %v3933
    %v3954 = vsel %vm898, %v3933, %v3935
    %v3955 = vsel %vm898, %v3935, %v3937
    %v3956 = vsel %vm898, %v3937, %v3939
    %3974 = vrot.lane.b32.xlu0 %v3222, 58
    %v3975 = vpop.permute.xlu0 %3974
    %3976 = vrot.lane.b32.xlu0 %v3189, 58
    %v3977 = vpop.permute.xlu0 %3976
    %3978 = vrot.lane.b32.xlu0 %v3190, 58
    %v3979 = vpop.permute.xlu0 %3978
    %3980 = vrot.lane.b32.xlu0 %v3191, 58
    %v3981 = vpop.permute.xlu0 %3980
    %3982 = vrot.lane.b32.xlu0 %v3192, 58
    %v3983 = vpop.permute.xlu0 %3982
    %3984 = vrot.lane.b32.xlu0 %v3193, 58
    %v3985 = vpop.permute.xlu0 %3984
    %3986 = vrot.lane.b32.xlu0 %v3194, 58
    %v3987 = vpop.permute.xlu0 %3986
    %3988 = vrot.lane.b32.xlu0 %v3195, 58
    %v3989 = vpop.permute.xlu0 %3988
    %3990 = vrot.lane.b32.xlu0 %v3196, 58
    %v3991 = vpop.permute.xlu0 %3990
    %3992 = vrot.lane.b32.xlu0 %v3197, 58
    %v3993 = vpop.permute.xlu0 %3992
    %3994 = vrot.lane.b32.xlu0 %v3198, 58
    %v3995 = vpop.permute.xlu0 %3994
    %3996 = vrot.lane.b32.xlu0 %v3199, 58
    %v3997 = vpop.permute.xlu0 %3996
    %3998 = vrot.lane.b32.xlu0 %v3200, 58
    %v3999 = vpop.permute.xlu0 %3998
    %4000 = vrot.lane.b32.xlu0 %v3201, 58
    %v4001 = vpop.permute.xlu0 %4000
    %4002 = vrot.lane.b32.xlu0 %v3202, 58
    %v4003 = vpop.permute.xlu0 %4002
    %4004 = vrot.lane.b32.xlu0 %v3203, 58
    %v4005 = vpop.permute.xlu0 %4004
    %4006 = vrot.lane.b32.xlu0 %v3204, 58
    %v4007 = vpop.permute.xlu0 %4006
    %4008 = vrot.lane.b32.xlu0 %v3223, 58
    %v4009 = vpop.permute.xlu0 %4008
    %v4010 = vsel %vm969, %v3975, %v3977
    %v4011 = vsel %vm969, %v3977, %v3979
    %v4012 = vsel %vm969, %v3979, %v3981
    %v4013 = vsel %vm969, %v3981, %v3983
    %v4014 = vsel %vm969, %v3983, %v3985
    %v4015 = vsel %vm969, %v3985, %v3987
    %v4016 = vsel %vm969, %v3987, %v3989
    %v4017 = vsel %vm969, %v3989, %v3991
    %v4018 = vsel %vm969, %v3991, %v3993
    %v4019 = vsel %vm969, %v3993, %v3995
    %v4020 = vsel %vm969, %v3995, %v3997
    %v4021 = vsel %vm969, %v3997, %v3999
    %v4022 = vsel %vm969, %v3999, %v4001
    %v4023 = vsel %vm969, %v4001, %v4003
    %v4024 = vsel %vm969, %v4003, %v4005
    %v4025 = vsel %vm969, %v4005, %v4007
    %v4026 = vsel %vm969, %v4007, %v4009
    %4044 = vrot.lane.b32.xlu0 %v3222, 57
    %v4045 = vpop.permute.xlu0 %4044
    %4046 = vrot.lane.b32.xlu0 %v3189, 57
    %v4047 = vpop.permute.xlu0 %4046
    %4048 = vrot.lane.b32.xlu0 %v3190, 57
    %v4049 = vpop.permute.xlu0 %4048
    %4050 = vrot.lane.b32.xlu0 %v3191, 57
    %v4051 = vpop.permute.xlu0 %4050
    %4052 = vrot.lane.b32.xlu0 %v3192, 57
    %v4053 = vpop.permute.xlu0 %4052
    %4054 = vrot.lane.b32.xlu0 %v3193, 57
    %v4055 = vpop.permute.xlu0 %4054
    %4056 = vrot.lane.b32.xlu0 %v3194, 57
    %v4057 = vpop.permute.xlu0 %4056
    %4058 = vrot.lane.b32.xlu0 %v3195, 57
    %v4059 = vpop.permute.xlu0 %4058
    %4060 = vrot.lane.b32.xlu0 %v3196, 57
    %v4061 = vpop.permute.xlu0 %4060
    %4062 = vrot.lane.b32.xlu0 %v3197, 57
    %v4063 = vpop.permute.xlu0 %4062
    %4064 = vrot.lane.b32.xlu0 %v3198, 57
    %v4065 = vpop.permute.xlu0 %4064
    %4066 = vrot.lane.b32.xlu0 %v3199, 57
    %v4067 = vpop.permute.xlu0 %4066
    %4068 = vrot.lane.b32.xlu0 %v3200, 57
    %v4069 = vpop.permute.xlu0 %4068
    %4070 = vrot.lane.b32.xlu0 %v3201, 57
    %v4071 = vpop.permute.xlu0 %4070
    %4072 = vrot.lane.b32.xlu0 %v3202, 57
    %v4073 = vpop.permute.xlu0 %4072
    %4074 = vrot.lane.b32.xlu0 %v3203, 57
    %v4075 = vpop.permute.xlu0 %4074
    %4076 = vrot.lane.b32.xlu0 %v3204, 57
    %v4077 = vpop.permute.xlu0 %4076
    %4078 = vrot.lane.b32.xlu0 %v3223, 57
    %v4079 = vpop.permute.xlu0 %4078
    %v4080 = vsel %vm1040, %v4045, %v4047
    %v4081 = vsel %vm1040, %v4047, %v4049
    %v4082 = vsel %vm1040, %v4049, %v4051
    %v4083 = vsel %vm1040, %v4051, %v4053
    %v4084 = vsel %vm1040, %v4053, %v4055
    %v4085 = vsel %vm1040, %v4055, %v4057
    %v4086 = vsel %vm1040, %v4057, %v4059
    %v4087 = vsel %vm1040, %v4059, %v4061
    %v4088 = vsel %vm1040, %v4061, %v4063
    %v4089 = vsel %vm1040, %v4063, %v4065
    %v4090 = vsel %vm1040, %v4065, %v4067
    %v4091 = vsel %vm1040, %v4067, %v4069
    %v4092 = vsel %vm1040, %v4069, %v4071
    %v4093 = vsel %vm1040, %v4071, %v4073
    %v4094 = vsel %vm1040, %v4073, %v4075
    %v4095 = vsel %vm1040, %v4075, %v4077
    %v4096 = vsel %vm1040, %v4077, %v4079
    %4114 = vrot.lane.b32.xlu0 %v3222, 56
    %v4115 = vpop.permute.xlu0 %4114
    %4116 = vrot.lane.b32.xlu0 %v3189, 56
    %v4117 = vpop.permute.xlu0 %4116
    %4118 = vrot.lane.b32.xlu0 %v3190, 56
    %v4119 = vpop.permute.xlu0 %4118
    %4120 = vrot.lane.b32.xlu0 %v3191, 56
    %v4121 = vpop.permute.xlu0 %4120
    %4122 = vrot.lane.b32.xlu0 %v3192, 56
    %v4123 = vpop.permute.xlu0 %4122
    %4124 = vrot.lane.b32.xlu0 %v3193, 56
    %v4125 = vpop.permute.xlu0 %4124
    %4126 = vrot.lane.b32.xlu0 %v3194, 56
    %v4127 = vpop.permute.xlu0 %4126
    %4128 = vrot.lane.b32.xlu0 %v3195, 56
    %v4129 = vpop.permute.xlu0 %4128
    %4130 = vrot.lane.b32.xlu0 %v3196, 56
    %v4131 = vpop.permute.xlu0 %4130
    %4132 = vrot.lane.b32.xlu0 %v3197, 56
    %v4133 = vpop.permute.xlu0 %4132
    %4134 = vrot.lane.b32.xlu0 %v3198, 56
    %v4135 = vpop.permute.xlu0 %4134
    %4136 = vrot.lane.b32.xlu0 %v3199, 56
    %v4137 = vpop.permute.xlu0 %4136
    %4138 = vrot.lane.b32.xlu0 %v3200, 56
    %v4139 = vpop.permute.xlu0 %4138
    %4140 = vrot.lane.b32.xlu0 %v3201, 56
    %v4141 = vpop.permute.xlu0 %4140
    %4142 = vrot.lane.b32.xlu0 %v3202, 56
    %v4143 = vpop.permute.xlu0 %4142
    %4144 = vrot.lane.b32.xlu0 %v3203, 56
    %v4145 = vpop.permute.xlu0 %4144
    %4146 = vrot.lane.b32.xlu0 %v3204, 56
    %v4147 = vpop.permute.xlu0 %4146
    %4148 = vrot.lane.b32.xlu0 %v3223, 56
    %v4149 = vpop.permute.xlu0 %4148
    %v4150 = vsel %vm1111, %v4115, %v4117
    %v4151 = vsel %vm1111, %v4117, %v4119
    %v4152 = vsel %vm1111, %v4119, %v4121
    %v4153 = vsel %vm1111, %v4121, %v4123
    %v4154 = vsel %vm1111, %v4123, %v4125
    %v4155 = vsel %vm1111, %v4125, %v4127
    %v4156 = vsel %vm1111, %v4127, %v4129
    %v4157 = vsel %vm1111, %v4129, %v4131
    %v4158 = vsel %vm1111, %v4131, %v4133
    %v4159 = vsel %vm1111, %v4133, %v4135
    %v4160 = vsel %vm1111, %v4135, %v4137
    %v4161 = vsel %vm1111, %v4137, %v4139
    %v4162 = vsel %vm1111, %v4139, %v4141
    %v4163 = vsel %vm1111, %v4141, %v4143
    %v4164 = vsel %vm1111, %v4143, %v4145
    %v4165 = vsel %vm1111, %v4145, %v4147
    %v4166 = vsel %vm1111, %v4147, %v4149
    %4184 = vrot.lane.b32.xlu0 %v3222, 40
    %v4185 = vpop.permute.xlu0 %4184
    %4186 = vrot.lane.b32.xlu0 %v3189, 40
    %v4187 = vpop.permute.xlu0 %4186
    %4188 = vrot.lane.b32.xlu0 %v3190, 40
    %v4189 = vpop.permute.xlu0 %4188
    %4190 = vrot.lane.b32.xlu0 %v3191, 40
    %v4191 = vpop.permute.xlu0 %4190
    %4192 = vrot.lane.b32.xlu0 %v3192, 40
    %v4193 = vpop.permute.xlu0 %4192
    %4194 = vrot.lane.b32.xlu0 %v3193, 40
    %v4195 = vpop.permute.xlu0 %4194
    %4196 = vrot.lane.b32.xlu0 %v3194, 40
    %v4197 = vpop.permute.xlu0 %4196
    %4198 = vrot.lane.b32.xlu0 %v3195, 40
    %v4199 = vpop.permute.xlu0 %4198
    %4200 = vrot.lane.b32.xlu0 %v3196, 40
    %v4201 = vpop.permute.xlu0 %4200
    %4202 = vrot.lane.b32.xlu0 %v3197, 40
    %v4203 = vpop.permute.xlu0 %4202
    %4204 = vrot.lane.b32.xlu0 %v3198, 40
    %v4205 = vpop.permute.xlu0 %4204
    %4206 = vrot.lane.b32.xlu0 %v3199, 40
    %v4207 = vpop.permute.xlu0 %4206
    %4208 = vrot.lane.b32.xlu0 %v3200, 40
    %v4209 = vpop.permute.xlu0 %4208
    %4210 = vrot.lane.b32.xlu0 %v3201, 40
    %v4211 = vpop.permute.xlu0 %4210
    %4212 = vrot.lane.b32.xlu0 %v3202, 40
    %v4213 = vpop.permute.xlu0 %4212
    %4214 = vrot.lane.b32.xlu0 %v3203, 40
    %v4215 = vpop.permute.xlu0 %4214
    %4216 = vrot.lane.b32.xlu0 %v3204, 40
    %v4217 = vpop.permute.xlu0 %4216
    %4218 = vrot.lane.b32.xlu0 %v3223, 40
    %v4219 = vpop.permute.xlu0 %4218
    %v4220 = vsel %vm1182, %v4185, %v4187
    %v4221 = vsel %vm1182, %v4187, %v4189
    %v4222 = vsel %vm1182, %v4189, %v4191
    %v4223 = vsel %vm1182, %v4191, %v4193
    %v4224 = vsel %vm1182, %v4193, %v4195
    %v4225 = vsel %vm1182, %v4195, %v4197
    %v4226 = vsel %vm1182, %v4197, %v4199
    %v4227 = vsel %vm1182, %v4199, %v4201
    %v4228 = vsel %vm1182, %v4201, %v4203
    %v4229 = vsel %vm1182, %v4203, %v4205
    %v4230 = vsel %vm1182, %v4205, %v4207
    %v4231 = vsel %vm1182, %v4207, %v4209
    %v4232 = vsel %vm1182, %v4209, %v4211
    %v4233 = vsel %vm1182, %v4211, %v4213
    %v4234 = vsel %vm1182, %v4213, %v4215
    %v4235 = vsel %vm1182, %v4215, %v4217
    %v4236 = vsel %vm1182, %v4217, %v4219
    %4254 = vrot.lane.b32.xlu0 %v3204, 127
    %v4255 = vpop.permute.xlu0 %4254
    %4256 = vrot.lane.b32.xlu0 %v3223, 127
    %v4257 = vpop.permute.xlu0 %4256
    %v4258 = vsel %vm191, %v3256, %v4255
    %v4259 = vsel %vm191, %v4255, %v4257
    %4260 = vrot.lane.b32.xlu0 %v3189, 113
    %v4261 = vpop.permute.xlu0 %4260
    %4262 = vrot.lane.b32.xlu0 %v3190, 113
    %v4263 = vpop.permute.xlu0 %4262
    %4264 = vrot.lane.b32.xlu0 %v3191, 113
    %v4265 = vpop.permute.xlu0 %4264
    %4266 = vrot.lane.b32.xlu0 %v3192, 113
    %v4267 = vpop.permute.xlu0 %4266
    %4268 = vrot.lane.b32.xlu0 %v3193, 113
    %v4269 = vpop.permute.xlu0 %4268
    %4270 = vrot.lane.b32.xlu0 %v3194, 113
    %v4271 = vpop.permute.xlu0 %4270
    %4272 = vrot.lane.b32.xlu0 %v3195, 113
    %v4273 = vpop.permute.xlu0 %4272
    %4274 = vrot.lane.b32.xlu0 %v3196, 113
    %v4275 = vpop.permute.xlu0 %4274
    %4276 = vrot.lane.b32.xlu0 %v3197, 113
    %v4277 = vpop.permute.xlu0 %4276
    %4278 = vrot.lane.b32.xlu0 %v3198, 113
    %v4279 = vpop.permute.xlu0 %4278
    %4280 = vrot.lane.b32.xlu0 %v3199, 113
    %v4281 = vpop.permute.xlu0 %4280
    %4282 = vrot.lane.b32.xlu0 %v3200, 113
    %v4283 = vpop.permute.xlu0 %4282
    %4284 = vrot.lane.b32.xlu0 %v3201, 113
    %v4285 = vpop.permute.xlu0 %4284
    %4286 = vrot.lane.b32.xlu0 %v3202, 113
    %v4287 = vpop.permute.xlu0 %4286
    %4288 = vrot.lane.b32.xlu0 %v3203, 113
    %v4289 = vpop.permute.xlu0 %4288
    %4290 = vrot.lane.b32.xlu0 %v3204, 113
    %v4291 = vpop.permute.xlu0 %4290
    %4292 = vrot.lane.b32.xlu0 %v3223, 113
    %v4293 = vpop.permute.xlu0 %4292
    %v4294 = vsel %vm1259, %v4261, %v4263
    %v4295 = vsel %vm1259, %v4263, %v4265
    %v4296 = vsel %vm1259, %v4265, %v4267
    %v4297 = vsel %vm1259, %v4267, %v4269
    %v4298 = vsel %vm1259, %v4269, %v4271
    %v4299 = vsel %vm1259, %v4271, %v4273
    %v4300 = vsel %vm1259, %v4273, %v4275
    %v4301 = vsel %vm1259, %v4275, %v4277
    %v4302 = vsel %vm1259, %v4277, %v4279
    %v4303 = vsel %vm1259, %v4279, %v4281
    %v4304 = vsel %vm1259, %v4281, %v4283
    %v4305 = vsel %vm1259, %v4283, %v4285
    %v4306 = vsel %vm1259, %v4285, %v4287
    %v4307 = vsel %vm1259, %v4287, %v4289
    %v4308 = vsel %vm1259, %v4289, %v4291
    %v4309 = vsel %vm1259, %v4291, %v4293
    %v4310 = vsel %vm1259, %v4293, %v1258
    %4311 = vrot.lane.b32.xlu0 %v3189, 112
    %v4312 = vpop.permute.xlu0 %4311
    %4313 = vrot.lane.b32.xlu0 %v3190, 112
    %v4314 = vpop.permute.xlu0 %4313
    %4315 = vrot.lane.b32.xlu0 %v3191, 112
    %v4316 = vpop.permute.xlu0 %4315
    %4317 = vrot.lane.b32.xlu0 %v3192, 112
    %v4318 = vpop.permute.xlu0 %4317
    %4319 = vrot.lane.b32.xlu0 %v3193, 112
    %v4320 = vpop.permute.xlu0 %4319
    %4321 = vrot.lane.b32.xlu0 %v3194, 112
    %v4322 = vpop.permute.xlu0 %4321
    %4323 = vrot.lane.b32.xlu0 %v3195, 112
    %v4324 = vpop.permute.xlu0 %4323
    %4325 = vrot.lane.b32.xlu0 %v3196, 112
    %v4326 = vpop.permute.xlu0 %4325
    %4327 = vrot.lane.b32.xlu0 %v3197, 112
    %v4328 = vpop.permute.xlu0 %4327
    %4329 = vrot.lane.b32.xlu0 %v3198, 112
    %v4330 = vpop.permute.xlu0 %4329
    %4331 = vrot.lane.b32.xlu0 %v3199, 112
    %v4332 = vpop.permute.xlu0 %4331
    %4333 = vrot.lane.b32.xlu0 %v3200, 112
    %v4334 = vpop.permute.xlu0 %4333
    %4335 = vrot.lane.b32.xlu0 %v3201, 112
    %v4336 = vpop.permute.xlu0 %4335
    %4337 = vrot.lane.b32.xlu0 %v3202, 112
    %v4338 = vpop.permute.xlu0 %4337
    %4339 = vrot.lane.b32.xlu0 %v3203, 112
    %v4340 = vpop.permute.xlu0 %4339
    %4341 = vrot.lane.b32.xlu0 %v3204, 112
    %v4342 = vpop.permute.xlu0 %4341
    %4343 = vrot.lane.b32.xlu0 %v3223, 112
    %v4344 = vpop.permute.xlu0 %4343
    %v4345 = vsel %vm1313, %v4312, %v4314
    %v4346 = vsel %vm1313, %v4314, %v4316
    %v4347 = vsel %vm1313, %v4316, %v4318
    %v4348 = vsel %vm1313, %v4318, %v4320
    %v4349 = vsel %vm1313, %v4320, %v4322
    %v4350 = vsel %vm1313, %v4322, %v4324
    %v4351 = vsel %vm1313, %v4324, %v4326
    %v4352 = vsel %vm1313, %v4326, %v4328
    %v4353 = vsel %vm1313, %v4328, %v4330
    %v4354 = vsel %vm1313, %v4330, %v4332
    %v4355 = vsel %vm1313, %v4332, %v4334
    %v4356 = vsel %vm1313, %v4334, %v4336
    %v4357 = vsel %vm1313, %v4336, %v4338
    %v4358 = vsel %vm1313, %v4338, %v4340
    %v4359 = vsel %vm1313, %v4340, %v4342
    %v4360 = vsel %vm1313, %v4342, %v4344
    %v4361 = vsel %vm1313, %v4344, %v1312
    %4362 = vrot.lane.b32.xlu0 %v3189, 111
    %v4363 = vpop.permute.xlu0 %4362
    %4364 = vrot.lane.b32.xlu0 %v3190, 111
    %v4365 = vpop.permute.xlu0 %4364
    %4366 = vrot.lane.b32.xlu0 %v3191, 111
    %v4367 = vpop.permute.xlu0 %4366
    %4368 = vrot.lane.b32.xlu0 %v3192, 111
    %v4369 = vpop.permute.xlu0 %4368
    %4370 = vrot.lane.b32.xlu0 %v3193, 111
    %v4371 = vpop.permute.xlu0 %4370
    %4372 = vrot.lane.b32.xlu0 %v3194, 111
    %v4373 = vpop.permute.xlu0 %4372
    %4374 = vrot.lane.b32.xlu0 %v3195, 111
    %v4375 = vpop.permute.xlu0 %4374
    %4376 = vrot.lane.b32.xlu0 %v3196, 111
    %v4377 = vpop.permute.xlu0 %4376
    %4378 = vrot.lane.b32.xlu0 %v3197, 111
    %v4379 = vpop.permute.xlu0 %4378
    %4380 = vrot.lane.b32.xlu0 %v3198, 111
    %v4381 = vpop.permute.xlu0 %4380
    %4382 = vrot.lane.b32.xlu0 %v3199, 111
    %v4383 = vpop.permute.xlu0 %4382
    %4384 = vrot.lane.b32.xlu0 %v3200, 111
    %v4385 = vpop.permute.xlu0 %4384
    %4386 = vrot.lane.b32.xlu0 %v3201, 111
    %v4387 = vpop.permute.xlu0 %4386
    %4388 = vrot.lane.b32.xlu0 %v3202, 111
    %v4389 = vpop.permute.xlu0 %4388
    %4390 = vrot.lane.b32.xlu0 %v3203, 111
    %v4391 = vpop.permute.xlu0 %4390
    %4392 = vrot.lane.b32.xlu0 %v3204, 111
    %v4393 = vpop.permute.xlu0 %4392
    %4394 = vrot.lane.b32.xlu0 %v3223, 111
    %v4395 = vpop.permute.xlu0 %4394
    %v4396 = vsel %vm1367, %v4363, %v4365
    %v4397 = vsel %vm1367, %v4365, %v4367
    %v4398 = vsel %vm1367, %v4367, %v4369
    %v4399 = vsel %vm1367, %v4369, %v4371
    %v4400 = vsel %vm1367, %v4371, %v4373
    %v4401 = vsel %vm1367, %v4373, %v4375
    %v4402 = vsel %vm1367, %v4375, %v4377
    %v4403 = vsel %vm1367, %v4377, %v4379
    %v4404 = vsel %vm1367, %v4379, %v4381
    %v4405 = vsel %vm1367, %v4381, %v4383
    %v4406 = vsel %vm1367, %v4383, %v4385
    %v4407 = vsel %vm1367, %v4385, %v4387
    %v4408 = vsel %vm1367, %v4387, %v4389
    %v4409 = vsel %vm1367, %v4389, %v4391
    %v4410 = vsel %vm1367, %v4391, %v4393
    %v4411 = vsel %vm1367, %v4393, %v4395
    %v4412 = vsel %vm1367, %v4395, %v1366
    %4413 = vrot.lane.b32.xlu0 %v3189, 95
    %v4414 = vpop.permute.xlu0 %4413
    %4415 = vrot.lane.b32.xlu0 %v3190, 95
    %v4416 = vpop.permute.xlu0 %4415
    %4417 = vrot.lane.b32.xlu0 %v3191, 95
    %v4418 = vpop.permute.xlu0 %4417
    %4419 = vrot.lane.b32.xlu0 %v3192, 95
    %v4420 = vpop.permute.xlu0 %4419
    %4421 = vrot.lane.b32.xlu0 %v3193, 95
    %v4422 = vpop.permute.xlu0 %4421
    %4423 = vrot.lane.b32.xlu0 %v3194, 95
    %v4424 = vpop.permute.xlu0 %4423
    %4425 = vrot.lane.b32.xlu0 %v3195, 95
    %v4426 = vpop.permute.xlu0 %4425
    %4427 = vrot.lane.b32.xlu0 %v3196, 95
    %v4428 = vpop.permute.xlu0 %4427
    %4429 = vrot.lane.b32.xlu0 %v3197, 95
    %v4430 = vpop.permute.xlu0 %4429
    %4431 = vrot.lane.b32.xlu0 %v3198, 95
    %v4432 = vpop.permute.xlu0 %4431
    %4433 = vrot.lane.b32.xlu0 %v3199, 95
    %v4434 = vpop.permute.xlu0 %4433
    %4435 = vrot.lane.b32.xlu0 %v3200, 95
    %v4436 = vpop.permute.xlu0 %4435
    %4437 = vrot.lane.b32.xlu0 %v3201, 95
    %v4438 = vpop.permute.xlu0 %4437
    %4439 = vrot.lane.b32.xlu0 %v3202, 95
    %v4440 = vpop.permute.xlu0 %4439
    %4441 = vrot.lane.b32.xlu0 %v3203, 95
    %v4442 = vpop.permute.xlu0 %4441
    %4443 = vrot.lane.b32.xlu0 %v3204, 95
    %v4444 = vpop.permute.xlu0 %4443
    %4445 = vrot.lane.b32.xlu0 %v3223, 95
    %v4446 = vpop.permute.xlu0 %4445
    %v4447 = vsel %vm1421, %v4414, %v4416
    %v4448 = vsel %vm1421, %v4416, %v4418
    %v4449 = vsel %vm1421, %v4418, %v4420
    %v4450 = vsel %vm1421, %v4420, %v4422
    %v4451 = vsel %vm1421, %v4422, %v4424
    %v4452 = vsel %vm1421, %v4424, %v4426
    %v4453 = vsel %vm1421, %v4426, %v4428
    %v4454 = vsel %vm1421, %v4428, %v4430
    %v4455 = vsel %vm1421, %v4430, %v4432
    %v4456 = vsel %vm1421, %v4432, %v4434
    %v4457 = vsel %vm1421, %v4434, %v4436
    %v4458 = vsel %vm1421, %v4436, %v4438
    %v4459 = vsel %vm1421, %v4438, %v4440
    %v4460 = vsel %vm1421, %v4440, %v4442
    %v4461 = vsel %vm1421, %v4442, %v4444
    %v4462 = vsel %vm1421, %v4444, %v4446
    %v4463 = vsel %vm1421, %v4446, %v1420
    %4464 = vrot.lane.b32.xlu0 %v3189, 94
    %v4465 = vpop.permute.xlu0 %4464
    %4466 = vrot.lane.b32.xlu0 %v3190, 94
    %v4467 = vpop.permute.xlu0 %4466
    %4468 = vrot.lane.b32.xlu0 %v3191, 94
    %v4469 = vpop.permute.xlu0 %4468
    %4470 = vrot.lane.b32.xlu0 %v3192, 94
    %v4471 = vpop.permute.xlu0 %4470
    %4472 = vrot.lane.b32.xlu0 %v3193, 94
    %v4473 = vpop.permute.xlu0 %4472
    %4474 = vrot.lane.b32.xlu0 %v3194, 94
    %v4475 = vpop.permute.xlu0 %4474
    %4476 = vrot.lane.b32.xlu0 %v3195, 94
    %v4477 = vpop.permute.xlu0 %4476
    %4478 = vrot.lane.b32.xlu0 %v3196, 94
    %v4479 = vpop.permute.xlu0 %4478
    %4480 = vrot.lane.b32.xlu0 %v3197, 94
    %v4481 = vpop.permute.xlu0 %4480
    %4482 = vrot.lane.b32.xlu0 %v3198, 94
    %v4483 = vpop.permute.xlu0 %4482
    %4484 = vrot.lane.b32.xlu0 %v3199, 94
    %v4485 = vpop.permute.xlu0 %4484
    %4486 = vrot.lane.b32.xlu0 %v3200, 94
    %v4487 = vpop.permute.xlu0 %4486
    %4488 = vrot.lane.b32.xlu0 %v3201, 94
    %v4489 = vpop.permute.xlu0 %4488
    %4490 = vrot.lane.b32.xlu0 %v3202, 94
    %v4491 = vpop.permute.xlu0 %4490
    %4492 = vrot.lane.b32.xlu0 %v3203, 94
    %v4493 = vpop.permute.xlu0 %4492
    %4494 = vrot.lane.b32.xlu0 %v3204, 94
    %v4495 = vpop.permute.xlu0 %4494
    %4496 = vrot.lane.b32.xlu0 %v3223, 94
    %v4497 = vpop.permute.xlu0 %4496
    %v4498 = vsel %vm1475, %v4465, %v4467
    %v4499 = vsel %vm1475, %v4467, %v4469
    %v4500 = vsel %vm1475, %v4469, %v4471
    %v4501 = vsel %vm1475, %v4471, %v4473
    %v4502 = vsel %vm1475, %v4473, %v4475
    %v4503 = vsel %vm1475, %v4475, %v4477
    %v4504 = vsel %vm1475, %v4477, %v4479
    %v4505 = vsel %vm1475, %v4479, %v4481
    %v4506 = vsel %vm1475, %v4481, %v4483
    %v4507 = vsel %vm1475, %v4483, %v4485
    %v4508 = vsel %vm1475, %v4485, %v4487
    %v4509 = vsel %vm1475, %v4487, %v4489
    %v4510 = vsel %vm1475, %v4489, %v4491
    %v4511 = vsel %vm1475, %v4491, %v4493
    %v4512 = vsel %vm1475, %v4493, %v4495
    %v4513 = vsel %vm1475, %v4495, %v4497
    %v4514 = vsel %vm1475, %v4497, %v1474
    %4515 = vrot.lane.b32.xlu0 %v3189, 93
    %v4516 = vpop.permute.xlu0 %4515
    %4517 = vrot.lane.b32.xlu0 %v3190, 93
    %v4518 = vpop.permute.xlu0 %4517
    %4519 = vrot.lane.b32.xlu0 %v3191, 93
    %v4520 = vpop.permute.xlu0 %4519
    %4521 = vrot.lane.b32.xlu0 %v3192, 93
    %v4522 = vpop.permute.xlu0 %4521
    %4523 = vrot.lane.b32.xlu0 %v3193, 93
    %v4524 = vpop.permute.xlu0 %4523
    %4525 = vrot.lane.b32.xlu0 %v3194, 93
    %v4526 = vpop.permute.xlu0 %4525
    %4527 = vrot.lane.b32.xlu0 %v3195, 93
    %v4528 = vpop.permute.xlu0 %4527
    %4529 = vrot.lane.b32.xlu0 %v3196, 93
    %v4530 = vpop.permute.xlu0 %4529
    %4531 = vrot.lane.b32.xlu0 %v3197, 93
    %v4532 = vpop.permute.xlu0 %4531
    %4533 = vrot.lane.b32.xlu0 %v3198, 93
    %v4534 = vpop.permute.xlu0 %4533
    %4535 = vrot.lane.b32.xlu0 %v3199, 93
    %v4536 = vpop.permute.xlu0 %4535
    %4537 = vrot.lane.b32.xlu0 %v3200, 93
    %v4538 = vpop.permute.xlu0 %4537
    %4539 = vrot.lane.b32.xlu0 %v3201, 93
    %v4540 = vpop.permute.xlu0 %4539
    %4541 = vrot.lane.b32.xlu0 %v3202, 93
    %v4542 = vpop.permute.xlu0 %4541
    %4543 = vrot.lane.b32.xlu0 %v3203, 93
    %v4544 = vpop.permute.xlu0 %4543
    %4545 = vrot.lane.b32.xlu0 %v3204, 93
    %v4546 = vpop.permute.xlu0 %4545
    %4547 = vrot.lane.b32.xlu0 %v3223, 93
    %v4548 = vpop.permute.xlu0 %4547
    %v4549 = vsel %vm1529, %v4516, %v4518
    %v4550 = vsel %vm1529, %v4518, %v4520
    %v4551 = vsel %vm1529, %v4520, %v4522
    %v4552 = vsel %vm1529, %v4522, %v4524
    %v4553 = vsel %vm1529, %v4524, %v4526
    %v4554 = vsel %vm1529, %v4526, %v4528
    %v4555 = vsel %vm1529, %v4528, %v4530
    %v4556 = vsel %vm1529, %v4530, %v4532
    %v4557 = vsel %vm1529, %v4532, %v4534
    %v4558 = vsel %vm1529, %v4534, %v4536
    %v4559 = vsel %vm1529, %v4536, %v4538
    %v4560 = vsel %vm1529, %v4538, %v4540
    %v4561 = vsel %vm1529, %v4540, %v4542
    %v4562 = vsel %vm1529, %v4542, %v4544
    %v4563 = vsel %vm1529, %v4544, %v4546
    %v4564 = vsel %vm1529, %v4546, %v4548
    %v4565 = vsel %vm1529, %v4548, %v1528
    %4566 = vrot.lane.b32.xlu0 %v3190, 77
    %v4567 = vpop.permute.xlu0 %4566
    %4568 = vrot.lane.b32.xlu0 %v3191, 77
    %v4569 = vpop.permute.xlu0 %4568
    %4570 = vrot.lane.b32.xlu0 %v3192, 77
    %v4571 = vpop.permute.xlu0 %4570
    %4572 = vrot.lane.b32.xlu0 %v3193, 77
    %v4573 = vpop.permute.xlu0 %4572
    %4574 = vrot.lane.b32.xlu0 %v3194, 77
    %v4575 = vpop.permute.xlu0 %4574
    %4576 = vrot.lane.b32.xlu0 %v3195, 77
    %v4577 = vpop.permute.xlu0 %4576
    %4578 = vrot.lane.b32.xlu0 %v3196, 77
    %v4579 = vpop.permute.xlu0 %4578
    %4580 = vrot.lane.b32.xlu0 %v3197, 77
    %v4581 = vpop.permute.xlu0 %4580
    %4582 = vrot.lane.b32.xlu0 %v3198, 77
    %v4583 = vpop.permute.xlu0 %4582
    %4584 = vrot.lane.b32.xlu0 %v3199, 77
    %v4585 = vpop.permute.xlu0 %4584
    %4586 = vrot.lane.b32.xlu0 %v3200, 77
    %v4587 = vpop.permute.xlu0 %4586
    %4588 = vrot.lane.b32.xlu0 %v3201, 77
    %v4589 = vpop.permute.xlu0 %4588
    %4590 = vrot.lane.b32.xlu0 %v3202, 77
    %v4591 = vpop.permute.xlu0 %4590
    %4592 = vrot.lane.b32.xlu0 %v3203, 77
    %v4593 = vpop.permute.xlu0 %4592
    %4594 = vrot.lane.b32.xlu0 %v3204, 77
    %v4595 = vpop.permute.xlu0 %4594
    %4596 = vrot.lane.b32.xlu0 %v3223, 77
    %v4597 = vpop.permute.xlu0 %4596
    %v4598 = vsel %vm1581, %v4567, %v4569
    %v4599 = vsel %vm1581, %v4569, %v4571
    %v4600 = vsel %vm1581, %v4571, %v4573
    %v4601 = vsel %vm1581, %v4573, %v4575
    %v4602 = vsel %vm1581, %v4575, %v4577
    %v4603 = vsel %vm1581, %v4577, %v4579
    %v4604 = vsel %vm1581, %v4579, %v4581
    %v4605 = vsel %vm1581, %v4581, %v4583
    %v4606 = vsel %vm1581, %v4583, %v4585
    %v4607 = vsel %vm1581, %v4585, %v4587
    %v4608 = vsel %vm1581, %v4587, %v4589
    %v4609 = vsel %vm1581, %v4589, %v4591
    %v4610 = vsel %vm1581, %v4591, %v4593
    %v4611 = vsel %vm1581, %v4593, %v4595
    %v4612 = vsel %vm1581, %v4595, %v4597
    %v4613 = vsel %vm1581, %v4597, %v1580
    %v4614 = vsel %vm756, %v3799, %v1599
    %v4615 = vsel %vm827, %v3869, %v1602
    %4616 = vrot.lane.b32.xlu0 %v3222, 39
    %v4617 = vpop.permute.xlu0 %4616
    %4618 = vrot.lane.b32.xlu0 %v3189, 39
    %v4619 = vpop.permute.xlu0 %4618
    %4620 = vrot.lane.b32.xlu0 %v3190, 39
    %v4621 = vpop.permute.xlu0 %4620
    %4622 = vrot.lane.b32.xlu0 %v3191, 39
    %v4623 = vpop.permute.xlu0 %4622
    %4624 = vrot.lane.b32.xlu0 %v3192, 39
    %v4625 = vpop.permute.xlu0 %4624
    %4626 = vrot.lane.b32.xlu0 %v3193, 39
    %v4627 = vpop.permute.xlu0 %4626
    %4628 = vrot.lane.b32.xlu0 %v3194, 39
    %v4629 = vpop.permute.xlu0 %4628
    %4630 = vrot.lane.b32.xlu0 %v3195, 39
    %v4631 = vpop.permute.xlu0 %4630
    %4632 = vrot.lane.b32.xlu0 %v3196, 39
    %v4633 = vpop.permute.xlu0 %4632
    %4634 = vrot.lane.b32.xlu0 %v3197, 39
    %v4635 = vpop.permute.xlu0 %4634
    %4636 = vrot.lane.b32.xlu0 %v3198, 39
    %v4637 = vpop.permute.xlu0 %4636
    %4638 = vrot.lane.b32.xlu0 %v3199, 39
    %v4639 = vpop.permute.xlu0 %4638
    %4640 = vrot.lane.b32.xlu0 %v3200, 39
    %v4641 = vpop.permute.xlu0 %4640
    %4642 = vrot.lane.b32.xlu0 %v3201, 39
    %v4643 = vpop.permute.xlu0 %4642
    %4644 = vrot.lane.b32.xlu0 %v3202, 39
    %v4645 = vpop.permute.xlu0 %4644
    %4646 = vrot.lane.b32.xlu0 %v3203, 39
    %v4647 = vpop.permute.xlu0 %4646
    %4648 = vrot.lane.b32.xlu0 %v3204, 39
    %v4649 = vpop.permute.xlu0 %4648
    %4650 = vrot.lane.b32.xlu0 %v3223, 39
    %v4651 = vpop.permute.xlu0 %4650
    %4652 = vrot.lane.b32.xlu0 %v3258, 39
    %v4653 = vpop.permute.xlu0 %4652
    %4654 = vrot.lane.b32.xlu0 %v3259, 39
    %v4655 = vpop.permute.xlu0 %4654
    %4656 = vrot.lane.b32.xlu0 %v3260, 39
    %v4657 = vpop.permute.xlu0 %4656
    %4658 = vrot.lane.b32.xlu0 %v3261, 39
    %v4659 = vpop.permute.xlu0 %4658
    %4660 = vrot.lane.b32.xlu0 %v3262, 39
    %v4661 = vpop.permute.xlu0 %4660
    %4662 = vrot.lane.b32.xlu0 %v3263, 39
    %v4663 = vpop.permute.xlu0 %4662
    %4664 = vrot.lane.b32.xlu0 %v3264, 39
    %v4665 = vpop.permute.xlu0 %4664
    %4666 = vrot.lane.b32.xlu0 %v3265, 39
    %v4667 = vpop.permute.xlu0 %4666
    %4668 = vrot.lane.b32.xlu0 %v3266, 39
    %v4669 = vpop.permute.xlu0 %4668
    %4670 = vrot.lane.b32.xlu0 %v3267, 39
    %v4671 = vpop.permute.xlu0 %4670
    %4672 = vrot.lane.b32.xlu0 %v3268, 39
    %v4673 = vpop.permute.xlu0 %4672
    %4674 = vrot.lane.b32.xlu0 %v3269, 39
    %v4675 = vpop.permute.xlu0 %4674
    %4676 = vrot.lane.b32.xlu0 %v3270, 39
    %v4677 = vpop.permute.xlu0 %4676
    %4678 = vrot.lane.b32.xlu0 %v3271, 39
    %v4679 = vpop.permute.xlu0 %4678
    %4680 = vrot.lane.b32.xlu0 %v3272, 39
    %v4681 = vpop.permute.xlu0 %4680
    %4682 = vrot.lane.b32.xlu0 %v4258, 39
    %v4683 = vpop.permute.xlu0 %4682
    %4684 = vrot.lane.b32.xlu0 %v4259, 39
    %v4685 = vpop.permute.xlu0 %4684
    %4686 = vrot.lane.b32.xlu0 %v4257, 39
    %v4687 = vpop.permute.xlu0 %4686
    %4688 = vrot.lane.b32.xlu0 %v4294, 39
    %v4689 = vpop.permute.xlu0 %4688
    %4690 = vrot.lane.b32.xlu0 %v4295, 39
    %v4691 = vpop.permute.xlu0 %4690
    %4692 = vrot.lane.b32.xlu0 %v4296, 39
    %v4693 = vpop.permute.xlu0 %4692
    %4694 = vrot.lane.b32.xlu0 %v4297, 39
    %v4695 = vpop.permute.xlu0 %4694
    %4696 = vrot.lane.b32.xlu0 %v4298, 39
    %v4697 = vpop.permute.xlu0 %4696
    %4698 = vrot.lane.b32.xlu0 %v4299, 39
    %v4699 = vpop.permute.xlu0 %4698
    %4700 = vrot.lane.b32.xlu0 %v4300, 39
    %v4701 = vpop.permute.xlu0 %4700
    %4702 = vrot.lane.b32.xlu0 %v4301, 39
    %v4703 = vpop.permute.xlu0 %4702
    %4704 = vrot.lane.b32.xlu0 %v4302, 39
    %v4705 = vpop.permute.xlu0 %4704
    %4706 = vrot.lane.b32.xlu0 %v4303, 39
    %v4707 = vpop.permute.xlu0 %4706
    %4708 = vrot.lane.b32.xlu0 %v4304, 39
    %v4709 = vpop.permute.xlu0 %4708
    %4710 = vrot.lane.b32.xlu0 %v4305, 39
    %v4711 = vpop.permute.xlu0 %4710
    %4712 = vrot.lane.b32.xlu0 %v4306, 39
    %v4713 = vpop.permute.xlu0 %4712
    %4714 = vrot.lane.b32.xlu0 %v4307, 39
    %v4715 = vpop.permute.xlu0 %4714
    %4716 = vrot.lane.b32.xlu0 %v4308, 39
    %v4717 = vpop.permute.xlu0 %4716
    %4718 = vrot.lane.b32.xlu0 %v4309, 39
    %v4719 = vpop.permute.xlu0 %4718
    %4720 = vrot.lane.b32.xlu0 %v4310, 39
    %v4721 = vpop.permute.xlu0 %4720
    %4722 = vrot.lane.b32.xlu0 %v4345, 39
    %v4723 = vpop.permute.xlu0 %4722
    %4724 = vrot.lane.b32.xlu0 %v4346, 39
    %v4725 = vpop.permute.xlu0 %4724
    %4726 = vrot.lane.b32.xlu0 %v4347, 39
    %v4727 = vpop.permute.xlu0 %4726
    %4728 = vrot.lane.b32.xlu0 %v4348, 39
    %v4729 = vpop.permute.xlu0 %4728
    %4730 = vrot.lane.b32.xlu0 %v4349, 39
    %v4731 = vpop.permute.xlu0 %4730
    %4732 = vrot.lane.b32.xlu0 %v4350, 39
    %v4733 = vpop.permute.xlu0 %4732
    %4734 = vrot.lane.b32.xlu0 %v4351, 39
    %v4735 = vpop.permute.xlu0 %4734
    %4736 = vrot.lane.b32.xlu0 %v4352, 39
    %v4737 = vpop.permute.xlu0 %4736
    %4738 = vrot.lane.b32.xlu0 %v4353, 39
    %v4739 = vpop.permute.xlu0 %4738
    %4740 = vrot.lane.b32.xlu0 %v4354, 39
    %v4741 = vpop.permute.xlu0 %4740
    %4742 = vrot.lane.b32.xlu0 %v4355, 39
    %v4743 = vpop.permute.xlu0 %4742
    %4744 = vrot.lane.b32.xlu0 %v4356, 39
    %v4745 = vpop.permute.xlu0 %4744
    %4746 = vrot.lane.b32.xlu0 %v4357, 39
    %v4747 = vpop.permute.xlu0 %4746
    %4748 = vrot.lane.b32.xlu0 %v4358, 39
    %v4749 = vpop.permute.xlu0 %4748
    %4750 = vrot.lane.b32.xlu0 %v4359, 39
    %v4751 = vpop.permute.xlu0 %4750
    %4752 = vrot.lane.b32.xlu0 %v4360, 39
    %v4753 = vpop.permute.xlu0 %4752
    %4754 = vrot.lane.b32.xlu0 %v4361, 39
    %v4755 = vpop.permute.xlu0 %4754
    %4756 = vrot.lane.b32.xlu0 %v4396, 39
    %v4757 = vpop.permute.xlu0 %4756
    %4758 = vrot.lane.b32.xlu0 %v4397, 39
    %v4759 = vpop.permute.xlu0 %4758
    %4760 = vrot.lane.b32.xlu0 %v4398, 39
    %v4761 = vpop.permute.xlu0 %4760
    %4762 = vrot.lane.b32.xlu0 %v4399, 39
    %v4763 = vpop.permute.xlu0 %4762
    %4764 = vrot.lane.b32.xlu0 %v4400, 39
    %v4765 = vpop.permute.xlu0 %4764
    %4766 = vrot.lane.b32.xlu0 %v4401, 39
    %v4767 = vpop.permute.xlu0 %4766
    %4768 = vrot.lane.b32.xlu0 %v4402, 39
    %v4769 = vpop.permute.xlu0 %4768
    %4770 = vrot.lane.b32.xlu0 %v4403, 39
    %v4771 = vpop.permute.xlu0 %4770
    %4772 = vrot.lane.b32.xlu0 %v4404, 39
    %v4773 = vpop.permute.xlu0 %4772
    %4774 = vrot.lane.b32.xlu0 %v4405, 39
    %v4775 = vpop.permute.xlu0 %4774
    %4776 = vrot.lane.b32.xlu0 %v4406, 39
    %v4777 = vpop.permute.xlu0 %4776
    %4778 = vrot.lane.b32.xlu0 %v4407, 39
    %v4779 = vpop.permute.xlu0 %4778
    %4780 = vrot.lane.b32.xlu0 %v4408, 39
    %v4781 = vpop.permute.xlu0 %4780
    %4782 = vrot.lane.b32.xlu0 %v4409, 39
    %v4783 = vpop.permute.xlu0 %4782
    %4784 = vrot.lane.b32.xlu0 %v4410, 39
    %v4785 = vpop.permute.xlu0 %4784
    %4786 = vrot.lane.b32.xlu0 %v4411, 39
    %v4787 = vpop.permute.xlu0 %4786
    %4788 = vrot.lane.b32.xlu0 %v4412, 39
    %v4789 = vpop.permute.xlu0 %4788
    %4790 = vrot.lane.b32.xlu0 %v4447, 39
    %v4791 = vpop.permute.xlu0 %4790
    %4792 = vrot.lane.b32.xlu0 %v4448, 39
    %v4793 = vpop.permute.xlu0 %4792
    %4794 = vrot.lane.b32.xlu0 %v4449, 39
    %v4795 = vpop.permute.xlu0 %4794
    %4796 = vrot.lane.b32.xlu0 %v4450, 39
    %v4797 = vpop.permute.xlu0 %4796
    %4798 = vrot.lane.b32.xlu0 %v4451, 39
    %v4799 = vpop.permute.xlu0 %4798
    %4800 = vrot.lane.b32.xlu0 %v4452, 39
    %v4801 = vpop.permute.xlu0 %4800
    %4802 = vrot.lane.b32.xlu0 %v4453, 39
    %v4803 = vpop.permute.xlu0 %4802
    %4804 = vrot.lane.b32.xlu0 %v4454, 39
    %v4805 = vpop.permute.xlu0 %4804
    %4806 = vrot.lane.b32.xlu0 %v4455, 39
    %v4807 = vpop.permute.xlu0 %4806
    %4808 = vrot.lane.b32.xlu0 %v4456, 39
    %v4809 = vpop.permute.xlu0 %4808
    %4810 = vrot.lane.b32.xlu0 %v4457, 39
    %v4811 = vpop.permute.xlu0 %4810
    %4812 = vrot.lane.b32.xlu0 %v4458, 39
    %v4813 = vpop.permute.xlu0 %4812
    %4814 = vrot.lane.b32.xlu0 %v4459, 39
    %v4815 = vpop.permute.xlu0 %4814
    %4816 = vrot.lane.b32.xlu0 %v4460, 39
    %v4817 = vpop.permute.xlu0 %4816
    %4818 = vrot.lane.b32.xlu0 %v4461, 39
    %v4819 = vpop.permute.xlu0 %4818
    %4820 = vrot.lane.b32.xlu0 %v4462, 39
    %v4821 = vpop.permute.xlu0 %4820
    %4822 = vrot.lane.b32.xlu0 %v4463, 39
    %v4823 = vpop.permute.xlu0 %4822
    %4824 = vrot.lane.b32.xlu0 %v4498, 39
    %v4825 = vpop.permute.xlu0 %4824
    %4826 = vrot.lane.b32.xlu0 %v4499, 39
    %v4827 = vpop.permute.xlu0 %4826
    %4828 = vrot.lane.b32.xlu0 %v4500, 39
    %v4829 = vpop.permute.xlu0 %4828
    %4830 = vrot.lane.b32.xlu0 %v4501, 39
    %v4831 = vpop.permute.xlu0 %4830
    %4832 = vrot.lane.b32.xlu0 %v4502, 39
    %v4833 = vpop.permute.xlu0 %4832
    %4834 = vrot.lane.b32.xlu0 %v4503, 39
    %v4835 = vpop.permute.xlu0 %4834
    %4836 = vrot.lane.b32.xlu0 %v4504, 39
    %v4837 = vpop.permute.xlu0 %4836
    %4838 = vrot.lane.b32.xlu0 %v4505, 39
    %v4839 = vpop.permute.xlu0 %4838
    %4840 = vrot.lane.b32.xlu0 %v4506, 39
    %v4841 = vpop.permute.xlu0 %4840
    %4842 = vrot.lane.b32.xlu0 %v4507, 39
    %v4843 = vpop.permute.xlu0 %4842
    %4844 = vrot.lane.b32.xlu0 %v4508, 39
    %v4845 = vpop.permute.xlu0 %4844
    %4846 = vrot.lane.b32.xlu0 %v4509, 39
    %v4847 = vpop.permute.xlu0 %4846
    %4848 = vrot.lane.b32.xlu0 %v4510, 39
    %v4849 = vpop.permute.xlu0 %4848
    %4850 = vrot.lane.b32.xlu0 %v4511, 39
    %v4851 = vpop.permute.xlu0 %4850
    %4852 = vrot.lane.b32.xlu0 %v4512, 39
    %v4853 = vpop.permute.xlu0 %4852
    %4854 = vrot.lane.b32.xlu0 %v4513, 39
    %v4855 = vpop.permute.xlu0 %4854
    %4856 = vrot.lane.b32.xlu0 %v4514, 39
    %v4857 = vpop.permute.xlu0 %4856
    %4858 = vrot.lane.b32.xlu0 %v4549, 39
    %v4859 = vpop.permute.xlu0 %4858
    %4860 = vrot.lane.b32.xlu0 %v4550, 39
    %v4861 = vpop.permute.xlu0 %4860
    %4862 = vrot.lane.b32.xlu0 %v4551, 39
    %v4863 = vpop.permute.xlu0 %4862
    %4864 = vrot.lane.b32.xlu0 %v4552, 39
    %v4865 = vpop.permute.xlu0 %4864
    %4866 = vrot.lane.b32.xlu0 %v4553, 39
    %v4867 = vpop.permute.xlu0 %4866
    %4868 = vrot.lane.b32.xlu0 %v4554, 39
    %v4869 = vpop.permute.xlu0 %4868
    %4870 = vrot.lane.b32.xlu0 %v4555, 39
    %v4871 = vpop.permute.xlu0 %4870
    %4872 = vrot.lane.b32.xlu0 %v4556, 39
    %v4873 = vpop.permute.xlu0 %4872
    %4874 = vrot.lane.b32.xlu0 %v4557, 39
    %v4875 = vpop.permute.xlu0 %4874
    %4876 = vrot.lane.b32.xlu0 %v4558, 39
    %v4877 = vpop.permute.xlu0 %4876
    %4878 = vrot.lane.b32.xlu0 %v4559, 39
    %v4879 = vpop.permute.xlu0 %4878
    %4880 = vrot.lane.b32.xlu0 %v4560, 39
    %v4881 = vpop.permute.xlu0 %4880
    %4882 = vrot.lane.b32.xlu0 %v4561, 39
    %v4883 = vpop.permute.xlu0 %4882
    %4884 = vrot.lane.b32.xlu0 %v4562, 39
    %v4885 = vpop.permute.xlu0 %4884
    %4886 = vrot.lane.b32.xlu0 %v4563, 39
    %v4887 = vpop.permute.xlu0 %4886
    %4888 = vrot.lane.b32.xlu0 %v4564, 39
    %v4889 = vpop.permute.xlu0 %4888
    %4890 = vrot.lane.b32.xlu0 %v4565, 39
    %v4891 = vpop.permute.xlu0 %4890
    %4892 = vrot.lane.b32.xlu0 %v4567, 39
    %v4893 = vpop.permute.xlu0 %4892
    %4894 = vrot.lane.b32.xlu0 %v4598, 39
    %v4895 = vpop.permute.xlu0 %4894
    %4896 = vrot.lane.b32.xlu0 %v4599, 39
    %v4897 = vpop.permute.xlu0 %4896
    %4898 = vrot.lane.b32.xlu0 %v4600, 39
    %v4899 = vpop.permute.xlu0 %4898
    %4900 = vrot.lane.b32.xlu0 %v4601, 39
    %v4901 = vpop.permute.xlu0 %4900
    %4902 = vrot.lane.b32.xlu0 %v4602, 39
    %v4903 = vpop.permute.xlu0 %4902
    %4904 = vrot.lane.b32.xlu0 %v4603, 39
    %v4905 = vpop.permute.xlu0 %4904
    %4906 = vrot.lane.b32.xlu0 %v4604, 39
    %v4907 = vpop.permute.xlu0 %4906
    %4908 = vrot.lane.b32.xlu0 %v4605, 39
    %v4909 = vpop.permute.xlu0 %4908
    %4910 = vrot.lane.b32.xlu0 %v4606, 39
    %v4911 = vpop.permute.xlu0 %4910
    %4912 = vrot.lane.b32.xlu0 %v4607, 39
    %v4913 = vpop.permute.xlu0 %4912
    %4914 = vrot.lane.b32.xlu0 %v4608, 39
    %v4915 = vpop.permute.xlu0 %4914
    %4916 = vrot.lane.b32.xlu0 %v4609, 39
    %v4917 = vpop.permute.xlu0 %4916
    %4918 = vrot.lane.b32.xlu0 %v4610, 39
    %v4919 = vpop.permute.xlu0 %4918
    %4920 = vrot.lane.b32.xlu0 %v4611, 39
    %v4921 = vpop.permute.xlu0 %4920
    %4922 = vrot.lane.b32.xlu0 %v4612, 39
    %v4923 = vpop.permute.xlu0 %4922
    %4924 = vrot.lane.b32.xlu0 %v4613, 39
    %v4925 = vpop.permute.xlu0 %4924
    %4926 = vrot.lane.b32.xlu0 %v3769, 39
    %v4927 = vpop.permute.xlu0 %4926
    %4928 = vrot.lane.b32.xlu0 %v3802, 39
    %v4929 = vpop.permute.xlu0 %4928
    %4930 = vrot.lane.b32.xlu0 %v3803, 39
    %v4931 = vpop.permute.xlu0 %4930
    %4932 = vrot.lane.b32.xlu0 %v3804, 39
    %v4933 = vpop.permute.xlu0 %4932
    %4934 = vrot.lane.b32.xlu0 %v3805, 39
    %v4935 = vpop.permute.xlu0 %4934
    %4936 = vrot.lane.b32.xlu0 %v3806, 39
    %v4937 = vpop.permute.xlu0 %4936
    %4938 = vrot.lane.b32.xlu0 %v3807, 39
    %v4939 = vpop.permute.xlu0 %4938
    %4940 = vrot.lane.b32.xlu0 %v3808, 39
    %v4941 = vpop.permute.xlu0 %4940
    %4942 = vrot.lane.b32.xlu0 %v3809, 39
    %v4943 = vpop.permute.xlu0 %4942
    %4944 = vrot.lane.b32.xlu0 %v3810, 39
    %v4945 = vpop.permute.xlu0 %4944
    %4946 = vrot.lane.b32.xlu0 %v3811, 39
    %v4947 = vpop.permute.xlu0 %4946
    %4948 = vrot.lane.b32.xlu0 %v3812, 39
    %v4949 = vpop.permute.xlu0 %4948
    %4950 = vrot.lane.b32.xlu0 %v3813, 39
    %v4951 = vpop.permute.xlu0 %4950
    %4952 = vrot.lane.b32.xlu0 %v3814, 39
    %v4953 = vpop.permute.xlu0 %4952
    %4954 = vrot.lane.b32.xlu0 %v3815, 39
    %v4955 = vpop.permute.xlu0 %4954
    %4956 = vrot.lane.b32.xlu0 %v3816, 39
    %v4957 = vpop.permute.xlu0 %4956
    %4958 = vrot.lane.b32.xlu0 %v4614, 39
    %v4959 = vpop.permute.xlu0 %4958
    %4960 = vrot.lane.b32.xlu0 %v3839, 39
    %v4961 = vpop.permute.xlu0 %4960
    %4962 = vrot.lane.b32.xlu0 %v3872, 39
    %v4963 = vpop.permute.xlu0 %4962
    %4964 = vrot.lane.b32.xlu0 %v3873, 39
    %v4965 = vpop.permute.xlu0 %4964
    %4966 = vrot.lane.b32.xlu0 %v3874, 39
    %v4967 = vpop.permute.xlu0 %4966
    %4968 = vrot.lane.b32.xlu0 %v3875, 39
    %v4969 = vpop.permute.xlu0 %4968
    %4970 = vrot.lane.b32.xlu0 %v3876, 39
    %v4971 = vpop.permute.xlu0 %4970
    %4972 = vrot.lane.b32.xlu0 %v3877, 39
    %v4973 = vpop.permute.xlu0 %4972
    %4974 = vrot.lane.b32.xlu0 %v3878, 39
    %v4975 = vpop.permute.xlu0 %4974
    %4976 = vrot.lane.b32.xlu0 %v3879, 39
    %v4977 = vpop.permute.xlu0 %4976
    %4978 = vrot.lane.b32.xlu0 %v3880, 39
    %v4979 = vpop.permute.xlu0 %4978
    %4980 = vrot.lane.b32.xlu0 %v3881, 39
    %v4981 = vpop.permute.xlu0 %4980
    %4982 = vrot.lane.b32.xlu0 %v3882, 39
    %v4983 = vpop.permute.xlu0 %4982
    %4984 = vrot.lane.b32.xlu0 %v3883, 39
    %v4985 = vpop.permute.xlu0 %4984
    %4986 = vrot.lane.b32.xlu0 %v3884, 39
    %v4987 = vpop.permute.xlu0 %4986
    %4988 = vrot.lane.b32.xlu0 %v3885, 39
    %v4989 = vpop.permute.xlu0 %4988
    %4990 = vrot.lane.b32.xlu0 %v3886, 39
    %v4991 = vpop.permute.xlu0 %4990
    %4992 = vrot.lane.b32.xlu0 %v4615, 39
    %v4993 = vpop.permute.xlu0 %4992
    %v4994 = vsel %vm2000, %v4617, %v4619
    %v4995 = vsel %vm2000, %v4619, %v4621
    %v4996 = vsel %vm2000, %v4621, %v4623
    %v4997 = vsel %vm2000, %v4623, %v4625
    %v4998 = vsel %vm2000, %v4625, %v4627
    %v4999 = vsel %vm2000, %v4627, %v4629
    %v5000 = vsel %vm2000, %v4629, %v4631
    %v5001 = vsel %vm2000, %v4631, %v4633
    %v5002 = vsel %vm2000, %v4633, %v4635
    %v5003 = vsel %vm2000, %v4635, %v4637
    %v5004 = vsel %vm2000, %v4637, %v4639
    %v5005 = vsel %vm2000, %v4639, %v4641
    %v5006 = vsel %vm2000, %v4641, %v4643
    %v5007 = vsel %vm2000, %v4643, %v4645
    %v5008 = vsel %vm2000, %v4645, %v4647
    %v5009 = vsel %vm2000, %v4647, %v4649
    %v5010 = vsel %vm2000, %v4649, %v4651
    %v5011 = vsel %vm2000, %v4653, %v4655
    %v5012 = vsel %vm2000, %v4655, %v4657
    %v5013 = vsel %vm2000, %v4657, %v4659
    %v5014 = vsel %vm2000, %v4659, %v4661
    %v5015 = vsel %vm2000, %v4661, %v4663
    %v5016 = vsel %vm2000, %v4663, %v4665
    %v5017 = vsel %vm2000, %v4665, %v4667
    %v5018 = vsel %vm2000, %v4667, %v4669
    %v5019 = vsel %vm2000, %v4669, %v4671
    %v5020 = vsel %vm2000, %v4671, %v4673
    %v5021 = vsel %vm2000, %v4673, %v4675
    %v5022 = vsel %vm2000, %v4675, %v4677
    %v5023 = vsel %vm2000, %v4677, %v4679
    %v5024 = vsel %vm2000, %v4679, %v4681
    %v5025 = vsel %vm2000, %v4681, %v4683
    %v5026 = vsel %vm2000, %v4683, %v4685
    %v5027 = vsel %vm2000, %v4685, %v4687
    %v5028 = vsel %vm2000, %v4689, %v4691
    %v5029 = vsel %vm2000, %v4691, %v4693
    %v5030 = vsel %vm2000, %v4693, %v4695
    %v5031 = vsel %vm2000, %v4695, %v4697
    %v5032 = vsel %vm2000, %v4697, %v4699
    %v5033 = vsel %vm2000, %v4699, %v4701
    %v5034 = vsel %vm2000, %v4701, %v4703
    %v5035 = vsel %vm2000, %v4703, %v4705
    %v5036 = vsel %vm2000, %v4705, %v4707
    %v5037 = vsel %vm2000, %v4707, %v4709
    %v5038 = vsel %vm2000, %v4709, %v4711
    %v5039 = vsel %vm2000, %v4711, %v4713
    %v5040 = vsel %vm2000, %v4713, %v4715
    %v5041 = vsel %vm2000, %v4715, %v4717
    %v5042 = vsel %vm2000, %v4717, %v4719
    %v5043 = vsel %vm2000, %v4719, %v4721
    %v5044 = vsel %vm2000, %v4721, %v1711
    %v5045 = vsel %vm2000, %v4723, %v4725
    %v5046 = vsel %vm2000, %v4725, %v4727
    %v5047 = vsel %vm2000, %v4727, %v4729
    %v5048 = vsel %vm2000, %v4729, %v4731
    %v5049 = vsel %vm2000, %v4731, %v4733
    %v5050 = vsel %vm2000, %v4733, %v4735
    %v5051 = vsel %vm2000, %v4735, %v4737
    %v5052 = vsel %vm2000, %v4737, %v4739
    %v5053 = vsel %vm2000, %v4739, %v4741
    %v5054 = vsel %vm2000, %v4741, %v4743
    %v5055 = vsel %vm2000, %v4743, %v4745
    %v5056 = vsel %vm2000, %v4745, %v4747
    %v5057 = vsel %vm2000, %v4747, %v4749
    %v5058 = vsel %vm2000, %v4749, %v4751
    %v5059 = vsel %vm2000, %v4751, %v4753
    %v5060 = vsel %vm2000, %v4753, %v4755
    %v5061 = vsel %vm2000, %v4755, %v1747
    %v5062 = vsel %vm2000, %v4757, %v4759
    %v5063 = vsel %vm2000, %v4759, %v4761
    %v5064 = vsel %vm2000, %v4761, %v4763
    %v5065 = vsel %vm2000, %v4763, %v4765
    %v5066 = vsel %vm2000, %v4765, %v4767
    %v5067 = vsel %vm2000, %v4767, %v4769
    %v5068 = vsel %vm2000, %v4769, %v4771
    %v5069 = vsel %vm2000, %v4771, %v4773
    %v5070 = vsel %vm2000, %v4773, %v4775
    %v5071 = vsel %vm2000, %v4775, %v4777
    %v5072 = vsel %vm2000, %v4777, %v4779
    %v5073 = vsel %vm2000, %v4779, %v4781
    %v5074 = vsel %vm2000, %v4781, %v4783
    %v5075 = vsel %vm2000, %v4783, %v4785
    %v5076 = vsel %vm2000, %v4785, %v4787
    %v5077 = vsel %vm2000, %v4787, %v4789
    %v5078 = vsel %vm2000, %v4789, %v1783
    %v5079 = vsel %vm2000, %v4791, %v4793
    %v5080 = vsel %vm2000, %v4793, %v4795
    %v5081 = vsel %vm2000, %v4795, %v4797
    %v5082 = vsel %vm2000, %v4797, %v4799
    %v5083 = vsel %vm2000, %v4799, %v4801
    %v5084 = vsel %vm2000, %v4801, %v4803
    %v5085 = vsel %vm2000, %v4803, %v4805
    %v5086 = vsel %vm2000, %v4805, %v4807
    %v5087 = vsel %vm2000, %v4807, %v4809
    %v5088 = vsel %vm2000, %v4809, %v4811
    %v5089 = vsel %vm2000, %v4811, %v4813
    %v5090 = vsel %vm2000, %v4813, %v4815
    %v5091 = vsel %vm2000, %v4815, %v4817
    %v5092 = vsel %vm2000, %v4817, %v4819
    %v5093 = vsel %vm2000, %v4819, %v4821
    %v5094 = vsel %vm2000, %v4821, %v4823
    %v5095 = vsel %vm2000, %v4823, %v1819
    %v5096 = vsel %vm2000, %v4825, %v4827
    %v5097 = vsel %vm2000, %v4827, %v4829
    %v5098 = vsel %vm2000, %v4829, %v4831
    %v5099 = vsel %vm2000, %v4831, %v4833
    %v5100 = vsel %vm2000, %v4833, %v4835
    %v5101 = vsel %vm2000, %v4835, %v4837
    %v5102 = vsel %vm2000, %v4837, %v4839
    %v5103 = vsel %vm2000, %v4839, %v4841
    %v5104 = vsel %vm2000, %v4841, %v4843
    %v5105 = vsel %vm2000, %v4843, %v4845
    %v5106 = vsel %vm2000, %v4845, %v4847
    %v5107 = vsel %vm2000, %v4847, %v4849
    %v5108 = vsel %vm2000, %v4849, %v4851
    %v5109 = vsel %vm2000, %v4851, %v4853
    %v5110 = vsel %vm2000, %v4853, %v4855
    %v5111 = vsel %vm2000, %v4855, %v4857
    %v5112 = vsel %vm2000, %v4857, %v1855
    %v5113 = vsel %vm2000, %v4859, %v4861
    %v5114 = vsel %vm2000, %v4861, %v4863
    %v5115 = vsel %vm2000, %v4863, %v4865
    %v5116 = vsel %vm2000, %v4865, %v4867
    %v5117 = vsel %vm2000, %v4867, %v4869
    %v5118 = vsel %vm2000, %v4869, %v4871
    %v5119 = vsel %vm2000, %v4871, %v4873
    %v5120 = vsel %vm2000, %v4873, %v4875
    %v5121 = vsel %vm2000, %v4875, %v4877
    %v5122 = vsel %vm2000, %v4877, %v4879
    %v5123 = vsel %vm2000, %v4879, %v4881
    %v5124 = vsel %vm2000, %v4881, %v4883
    %v5125 = vsel %vm2000, %v4883, %v4885
    %v5126 = vsel %vm2000, %v4885, %v4887
    %v5127 = vsel %vm2000, %v4887, %v4889
    %v5128 = vsel %vm2000, %v4889, %v4891
    %v5129 = vsel %vm2000, %v4891, %v1891
    %v5130 = vsel %vm2000, %v4893, %v4895
    %v5131 = vsel %vm2000, %v4895, %v4897
    %v5132 = vsel %vm2000, %v4897, %v4899
    %v5133 = vsel %vm2000, %v4899, %v4901
    %v5134 = vsel %vm2000, %v4901, %v4903
    %v5135 = vsel %vm2000, %v4903, %v4905
    %v5136 = vsel %vm2000, %v4905, %v4907
    %v5137 = vsel %vm2000, %v4907, %v4909
    %v5138 = vsel %vm2000, %v4909, %v4911
    %v5139 = vsel %vm2000, %v4911, %v4913
    %v5140 = vsel %vm2000, %v4913, %v4915
    %v5141 = vsel %vm2000, %v4915, %v4917
    %v5142 = vsel %vm2000, %v4917, %v4919
    %v5143 = vsel %vm2000, %v4919, %v4921
    %v5144 = vsel %vm2000, %v4921, %v4923
    %v5145 = vsel %vm2000, %v4923, %v4925
    %v5146 = vsel %vm2000, %v4925, %v1927
    %v5147 = vsel %vm2000, %v4927, %v4929
    %v5148 = vsel %vm2000, %v4929, %v4931
    %v5149 = vsel %vm2000, %v4931, %v4933
    %v5150 = vsel %vm2000, %v4933, %v4935
    %v5151 = vsel %vm2000, %v4935, %v4937
    %v5152 = vsel %vm2000, %v4937, %v4939
    %v5153 = vsel %vm2000, %v4939, %v4941
    %v5154 = vsel %vm2000, %v4941, %v4943
    %v5155 = vsel %vm2000, %v4943, %v4945
    %v5156 = vsel %vm2000, %v4945, %v4947
    %v5157 = vsel %vm2000, %v4947, %v4949
    %v5158 = vsel %vm2000, %v4949, %v4951
    %v5159 = vsel %vm2000, %v4951, %v4953
    %v5160 = vsel %vm2000, %v4953, %v4955
    %v5161 = vsel %vm2000, %v4955, %v4957
    %v5162 = vsel %vm2000, %v4957, %v4959
    %v5163 = vsel %vm2000, %v4959, %v1963
    %v5164 = vsel %vm2000, %v4961, %v4963
    %v5165 = vsel %vm2000, %v4963, %v4965
    %v5166 = vsel %vm2000, %v4965, %v4967
    %v5167 = vsel %vm2000, %v4967, %v4969
    %v5168 = vsel %vm2000, %v4969, %v4971
    %v5169 = vsel %vm2000, %v4971, %v4973
    %v5170 = vsel %vm2000, %v4973, %v4975
    %v5171 = vsel %vm2000, %v4975, %v4977
    %v5172 = vsel %vm2000, %v4977, %v4979
    %v5173 = vsel %vm2000, %v4979, %v4981
    %v5174 = vsel %vm2000, %v4981, %v4983
    %v5175 = vsel %vm2000, %v4983, %v4985
    %v5176 = vsel %vm2000, %v4985, %v4987
    %v5177 = vsel %vm2000, %v4987, %v4989
    %v5178 = vsel %vm2000, %v4989, %v4991
    %v5179 = vsel %vm2000, %v4991, %v4993
    %v5180 = vsel %vm2000, %v4993, %v1999
    %5369 = vset.pattern.permute.xlu0 0
    %5370 = vperm.xlu0 %5369, %v3137
    %v5371 = vpop.permute.xlu0 %5370
    %v5374 = vsel %vm2380, %v3136, 0
    %5376 = vmatpush.msra.mxu0 %v4220
    %5377 = vmatpush.msra.mxu0 %v4150
    %5378 = vmatpush.msra.mxu0 %v4080
    %5379 = vmatpush.msra.mxu0 %v4010
    %5380 = vmatpush.msra.mxu0 %v3940
    %5381 = vmatpush.msra.mxu0 %v3870
    %5382 = vmatpush.msra.mxu0 %v3800
    %5383 = vmatpush.msra.mxu0 %v3729
    %5384 = vmatpush.msra.mxu0 %v3661
    %5385 = vmatpush.msra.mxu0 %v3593
    %5386 = vmatpush.msra.mxu0 %v3525
    %5387 = vmatpush.msra.mxu0 %v3457
    %5388 = vmatpush.msra.mxu0 %v3389
    %5389 = vmatpush.msra.mxu0 %v3322
    %5390 = vmatpush.msra.mxu0 %v3257
    %5391 = vmatpush.msra.mxu0 0.0
    %5392 = vmatmul.f32.gmra.mxu0 %v3135
    %v5393 = vpop.f32.mrf.mxu0
    %v5394 = vadd.f32 %v5371, %v5393
    %5395 = vdwg.mxu0
    %5396 = vmatpush.msra.mxu0 0.0
    %5397 = vmatpush.msra.mxu0 0.0
    %5398 = vmatpush.msra.mxu0 0.0
    %5399 = vmatpush.msra.mxu0 0.0
    %5400 = vmatpush.msra.mxu0 0.0
    %5401 = vmatpush.msra.mxu0 %v5164
    %5402 = vmatpush.msra.mxu0 %v5147
    %5403 = vmatpush.msra.mxu0 %v5130
    %5404 = vmatpush.msra.mxu0 %v5113
    %5405 = vmatpush.msra.mxu0 %v5096
    %5406 = vmatpush.msra.mxu0 %v5079
    %5407 = vmatpush.msra.mxu0 %v5062
    %5408 = vmatpush.msra.mxu0 %v5045
    %5409 = vmatpush.msra.mxu0 %v5028
    %5410 = vmatpush.msra.mxu0 %v5011
    %5411 = vmatpush.msra.mxu0 %v4994
    %5412 = vmatmul.f32.gmra.mxu0 %v5374
    %v5413 = vpop.f32.mrf.mxu0
    %v5414 = vadd.f32 %v5394, %v5413
    %5415 = vdwg.mxu0
    %5416 = vmatpush.msra.mxu0 %v4221
    %5417 = vmatpush.msra.mxu0 %v4151
    %5418 = vmatpush.msra.mxu0 %v4081
    %5419 = vmatpush.msra.mxu0 %v4011
    %5420 = vmatpush.msra.mxu0 %v3941
    %5421 = vmatpush.msra.mxu0 %v3871
    %5422 = vmatpush.msra.mxu0 %v3801
    %5423 = vmatpush.msra.mxu0 %v3730
    %5424 = vmatpush.msra.mxu0 %v3662
    %5425 = vmatpush.msra.mxu0 %v3594
    %5426 = vmatpush.msra.mxu0 %v3526
    %5427 = vmatpush.msra.mxu0 %v3458
    %5428 = vmatpush.msra.mxu0 %v3390
    %5429 = vmatpush.msra.mxu0 %v3323
    %5430 = vmatpush.msra.mxu0 %v3258
    %5431 = vmatpush.msra.mxu0 %v3222
    %5432 = vmatmul.f32.gmra.mxu0 %v3135
    %v5433 = vpop.f32.mrf.mxu0
    %v5434 = vadd.f32 %v5371, %v5433
    %5435 = vdwg.mxu0
    %5436 = vmatpush.msra.mxu0 0.0
    %5437 = vmatpush.msra.mxu0 0.0
    %5438 = vmatpush.msra.mxu0 0.0
    %5439 = vmatpush.msra.mxu0 0.0
    %5440 = vmatpush.msra.mxu0 0.0
    %5441 = vmatpush.msra.mxu0 %v5165
    %5442 = vmatpush.msra.mxu0 %v5148
    %5443 = vmatpush.msra.mxu0 %v5131
    %5444 = vmatpush.msra.mxu0 %v5114
    %5445 = vmatpush.msra.mxu0 %v5097
    %5446 = vmatpush.msra.mxu0 %v5080
    %5447 = vmatpush.msra.mxu0 %v5063
    %5448 = vmatpush.msra.mxu0 %v5046
    %5449 = vmatpush.msra.mxu0 %v5029
    %5450 = vmatpush.msra.mxu0 %v5012
    %5451 = vmatpush.msra.mxu0 %v4995
    %5452 = vmatmul.f32.gmra.mxu0 %v5374
    %v5453 = vpop.f32.mrf.mxu0
    %v5454 = vadd.f32 %v5434, %v5453
    %5455 = vdwg.mxu0
    %5456 = vmatpush.msra.mxu0 %v4222
    %5457 = vmatpush.msra.mxu0 %v4152
    %5458 = vmatpush.msra.mxu0 %v4082
    %5459 = vmatpush.msra.mxu0 %v4012
    %5460 = vmatpush.msra.mxu0 %v3942
    %5461 = vmatpush.msra.mxu0 %v3872
    %5462 = vmatpush.msra.mxu0 %v3802
    %5463 = vmatpush.msra.mxu0 %v3731
    %5464 = vmatpush.msra.mxu0 %v3663
    %5465 = vmatpush.msra.mxu0 %v3595
    %5466 = vmatpush.msra.mxu0 %v3527
    %5467 = vmatpush.msra.mxu0 %v3459
    %5468 = vmatpush.msra.mxu0 %v3391
    %5469 = vmatpush.msra.mxu0 %v3324
    %5470 = vmatpush.msra.mxu0 %v3259
    %5471 = vmatpush.msra.mxu0 %v3189
    %5472 = vmatmul.f32.gmra.mxu0 %v3135
    %v5473 = vpop.f32.mrf.mxu0
    %v5474 = vadd.f32 %v5371, %v5473
    %5475 = vdwg.mxu0
    %5476 = vmatpush.msra.mxu0 0.0
    %5477 = vmatpush.msra.mxu0 0.0
    %5478 = vmatpush.msra.mxu0 0.0
    %5479 = vmatpush.msra.mxu0 0.0
    %5480 = vmatpush.msra.mxu0 0.0
    %5481 = vmatpush.msra.mxu0 %v5166
    %5482 = vmatpush.msra.mxu0 %v5149
    %5483 = vmatpush.msra.mxu0 %v5132
    %5484 = vmatpush.msra.mxu0 %v5115
    %5485 = vmatpush.msra.mxu0 %v5098
    %5486 = vmatpush.msra.mxu0 %v5081
    %5487 = vmatpush.msra.mxu0 %v5064
    %5488 = vmatpush.msra.mxu0 %v5047
    %5489 = vmatpush.msra.mxu0 %v5030
    %5490 = vmatpush.msra.mxu0 %v5013
    %5491 = vmatpush.msra.mxu0 %v4996
    %5492 = vmatmul.f32.gmra.mxu0 %v5374
    %v5493 = vpop.f32.mrf.mxu0
    %v5494 = vadd.f32 %v5474, %v5493
    %5495 = vdwg.mxu0
    %5496 = vmatpush.msra.mxu0 %v4223
    %5497 = vmatpush.msra.mxu0 %v4153
    %5498 = vmatpush.msra.mxu0 %v4083
    %5499 = vmatpush.msra.mxu0 %v4013
    %5500 = vmatpush.msra.mxu0 %v3943
    %5501 = vmatpush.msra.mxu0 %v3873
    %5502 = vmatpush.msra.mxu0 %v3803
    %5503 = vmatpush.msra.mxu0 %v3732
    %5504 = vmatpush.msra.mxu0 %v3664
    %5505 = vmatpush.msra.mxu0 %v3596
    %5506 = vmatpush.msra.mxu0 %v3528
    %5507 = vmatpush.msra.mxu0 %v3460
    %5508 = vmatpush.msra.mxu0 %v3392
    %5509 = vmatpush.msra.mxu0 %v3325
    %5510 = vmatpush.msra.mxu0 %v3260
    %5511 = vmatpush.msra.mxu0 %v3190
    %5512 = vmatmul.f32.gmra.mxu0 %v3135
    %v5513 = vpop.f32.mrf.mxu0
    %v5514 = vadd.f32 %v5371, %v5513
    %5515 = vdwg.mxu0
    %5516 = vmatpush.msra.mxu0 0.0
    %5517 = vmatpush.msra.mxu0 0.0
    %5518 = vmatpush.msra.mxu0 0.0
    %5519 = vmatpush.msra.mxu0 0.0
    %5520 = vmatpush.msra.mxu0 0.0
    %5521 = vmatpush.msra.mxu0 %v5167
    %5522 = vmatpush.msra.mxu0 %v5150
    %5523 = vmatpush.msra.mxu0 %v5133
    %5524 = vmatpush.msra.mxu0 %v5116
    %5525 = vmatpush.msra.mxu0 %v5099
    %5526 = vmatpush.msra.mxu0 %v5082
    %5527 = vmatpush.msra.mxu0 %v5065
    %5528 = vmatpush.msra.mxu0 %v5048
    %5529 = vmatpush.msra.mxu0 %v5031
    %5530 = vmatpush.msra.mxu0 %v5014
    %5531 = vmatpush.msra.mxu0 %v4997
    %5532 = vmatmul.f32.gmra.mxu0 %v5374
    %v5533 = vpop.f32.mrf.mxu0
    %v5534 = vadd.f32 %v5514, %v5533
    %5535 = vdwg.mxu0
    %5536 = vmatpush.msra.mxu0 %v4224
    %5537 = vmatpush.msra.mxu0 %v4154
    %5538 = vmatpush.msra.mxu0 %v4084
    %5539 = vmatpush.msra.mxu0 %v4014
    %5540 = vmatpush.msra.mxu0 %v3944
    %5541 = vmatpush.msra.mxu0 %v3874
    %5542 = vmatpush.msra.mxu0 %v3804
    %5543 = vmatpush.msra.mxu0 %v3733
    %5544 = vmatpush.msra.mxu0 %v3665
    %5545 = vmatpush.msra.mxu0 %v3597
    %5546 = vmatpush.msra.mxu0 %v3529
    %5547 = vmatpush.msra.mxu0 %v3461
    %5548 = vmatpush.msra.mxu0 %v3393
    %5549 = vmatpush.msra.mxu0 %v3326
    %5550 = vmatpush.msra.mxu0 %v3261
    %5551 = vmatpush.msra.mxu0 %v3191
    %5552 = vmatmul.f32.gmra.mxu0 %v3135
    %v5553 = vpop.f32.mrf.mxu0
    %v5554 = vadd.f32 %v5371, %v5553
    %5555 = vdwg.mxu0
    %5556 = vmatpush.msra.mxu0 0.0
    %5557 = vmatpush.msra.mxu0 0.0
    %5558 = vmatpush.msra.mxu0 0.0
    %5559 = vmatpush.msra.mxu0 0.0
    %5560 = vmatpush.msra.mxu0 0.0
    %5561 = vmatpush.msra.mxu0 %v5168
    %5562 = vmatpush.msra.mxu0 %v5151
    %5563 = vmatpush.msra.mxu0 %v5134
    %5564 = vmatpush.msra.mxu0 %v5117
    %5565 = vmatpush.msra.mxu0 %v5100
    %5566 = vmatpush.msra.mxu0 %v5083
    %5567 = vmatpush.msra.mxu0 %v5066
    %5568 = vmatpush.msra.mxu0 %v5049
    %5569 = vmatpush.msra.mxu0 %v5032
    %5570 = vmatpush.msra.mxu0 %v5015
    %5571 = vmatpush.msra.mxu0 %v4998
    %5572 = vmatmul.f32.gmra.mxu0 %v5374
    %v5573 = vpop.f32.mrf.mxu0
    %v5574 = vadd.f32 %v5554, %v5573
    %5575 = vdwg.mxu0
    %5576 = vmatpush.msra.mxu0 %v4225
    %5577 = vmatpush.msra.mxu0 %v4155
    %5578 = vmatpush.msra.mxu0 %v4085
    %5579 = vmatpush.msra.mxu0 %v4015
    %5580 = vmatpush.msra.mxu0 %v3945
    %5581 = vmatpush.msra.mxu0 %v3875
    %5582 = vmatpush.msra.mxu0 %v3805
    %5583 = vmatpush.msra.mxu0 %v3734
    %5584 = vmatpush.msra.mxu0 %v3666
    %5585 = vmatpush.msra.mxu0 %v3598
    %5586 = vmatpush.msra.mxu0 %v3530
    %5587 = vmatpush.msra.mxu0 %v3462
    %5588 = vmatpush.msra.mxu0 %v3394
    %5589 = vmatpush.msra.mxu0 %v3327
    %5590 = vmatpush.msra.mxu0 %v3262
    %5591 = vmatpush.msra.mxu0 %v3192
    %5592 = vmatmul.f32.gmra.mxu0 %v3135
    %v5593 = vpop.f32.mrf.mxu0
    %v5594 = vadd.f32 %v5371, %v5593
    %5595 = vdwg.mxu0
    %5596 = vmatpush.msra.mxu0 0.0
    %5597 = vmatpush.msra.mxu0 0.0
    %5598 = vmatpush.msra.mxu0 0.0
    %5599 = vmatpush.msra.mxu0 0.0
    %5600 = vmatpush.msra.mxu0 0.0
    %5601 = vmatpush.msra.mxu0 %v5169
    %5602 = vmatpush.msra.mxu0 %v5152
    %5603 = vmatpush.msra.mxu0 %v5135
    %5604 = vmatpush.msra.mxu0 %v5118
    %5605 = vmatpush.msra.mxu0 %v5101
    %5606 = vmatpush.msra.mxu0 %v5084
    %5607 = vmatpush.msra.mxu0 %v5067
    %5608 = vmatpush.msra.mxu0 %v5050
    %5609 = vmatpush.msra.mxu0 %v5033
    %5610 = vmatpush.msra.mxu0 %v5016
    %5611 = vmatpush.msra.mxu0 %v4999
    %5612 = vmatmul.f32.gmra.mxu0 %v5374
    %v5613 = vpop.f32.mrf.mxu0
    %v5614 = vadd.f32 %v5594, %v5613
    %5615 = vdwg.mxu0
    %5616 = vmatpush.msra.mxu0 %v4226
    %5617 = vmatpush.msra.mxu0 %v4156
    %5618 = vmatpush.msra.mxu0 %v4086
    %5619 = vmatpush.msra.mxu0 %v4016
    %5620 = vmatpush.msra.mxu0 %v3946
    %5621 = vmatpush.msra.mxu0 %v3876
    %5622 = vmatpush.msra.mxu0 %v3806
    %5623 = vmatpush.msra.mxu0 %v3735
    %5624 = vmatpush.msra.mxu0 %v3667
    %5625 = vmatpush.msra.mxu0 %v3599
    %5626 = vmatpush.msra.mxu0 %v3531
    %5627 = vmatpush.msra.mxu0 %v3463
    %5628 = vmatpush.msra.mxu0 %v3395
    %5629 = vmatpush.msra.mxu0 %v3328
    %5630 = vmatpush.msra.mxu0 %v3263
    %5631 = vmatpush.msra.mxu0 %v3193
    %5632 = vmatmul.f32.gmra.mxu0 %v3135
    %v5633 = vpop.f32.mrf.mxu0
    %v5634 = vadd.f32 %v5371, %v5633
    %5635 = vdwg.mxu0
    %5636 = vmatpush.msra.mxu0 0.0
    %5637 = vmatpush.msra.mxu0 0.0
    %5638 = vmatpush.msra.mxu0 0.0
    %5639 = vmatpush.msra.mxu0 0.0
    %5640 = vmatpush.msra.mxu0 0.0
    %5641 = vmatpush.msra.mxu0 %v5170
    %5642 = vmatpush.msra.mxu0 %v5153
    %5643 = vmatpush.msra.mxu0 %v5136
    %5644 = vmatpush.msra.mxu0 %v5119
    %5645 = vmatpush.msra.mxu0 %v5102
    %5646 = vmatpush.msra.mxu0 %v5085
    %5647 = vmatpush.msra.mxu0 %v5068
    %5648 = vmatpush.msra.mxu0 %v5051
    %5649 = vmatpush.msra.mxu0 %v5034
    %5650 = vmatpush.msra.mxu0 %v5017
    %5651 = vmatpush.msra.mxu0 %v5000
    %5652 = vmatmul.f32.gmra.mxu0 %v5374
    %v5653 = vpop.f32.mrf.mxu0
    %v5654 = vadd.f32 %v5634, %v5653
    %5655 = vdwg.mxu0
    %5656 = vmatpush.msra.mxu0 %v4227
    %5657 = vmatpush.msra.mxu0 %v4157
    %5658 = vmatpush.msra.mxu0 %v4087
    %5659 = vmatpush.msra.mxu0 %v4017
    %5660 = vmatpush.msra.mxu0 %v3947
    %5661 = vmatpush.msra.mxu0 %v3877
    %5662 = vmatpush.msra.mxu0 %v3807
    %5663 = vmatpush.msra.mxu0 %v3736
    %5664 = vmatpush.msra.mxu0 %v3668
    %5665 = vmatpush.msra.mxu0 %v3600
    %5666 = vmatpush.msra.mxu0 %v3532
    %5667 = vmatpush.msra.mxu0 %v3464
    %5668 = vmatpush.msra.mxu0 %v3396
    %5669 = vmatpush.msra.mxu0 %v3329
    %5670 = vmatpush.msra.mxu0 %v3264
    %5671 = vmatpush.msra.mxu0 %v3194
    %5672 = vmatmul.f32.gmra.mxu0 %v3135
    %v5673 = vpop.f32.mrf.mxu0
    %v5674 = vadd.f32 %v5371, %v5673
    %5675 = vdwg.mxu0
    %5676 = vmatpush.msra.mxu0 0.0
    %5677 = vmatpush.msra.mxu0 0.0
    %5678 = vmatpush.msra.mxu0 0.0
    %5679 = vmatpush.msra.mxu0 0.0
    %5680 = vmatpush.msra.mxu0 0.0
    %5681 = vmatpush.msra.mxu0 %v5171
    %5682 = vmatpush.msra.mxu0 %v5154
    %5683 = vmatpush.msra.mxu0 %v5137
    %5684 = vmatpush.msra.mxu0 %v5120
    %5685 = vmatpush.msra.mxu0 %v5103
    %5686 = vmatpush.msra.mxu0 %v5086
    %5687 = vmatpush.msra.mxu0 %v5069
    %5688 = vmatpush.msra.mxu0 %v5052
    %5689 = vmatpush.msra.mxu0 %v5035
    %5690 = vmatpush.msra.mxu0 %v5018
    %5691 = vmatpush.msra.mxu0 %v5001
    %5692 = vmatmul.f32.gmra.mxu0 %v5374
    %v5693 = vpop.f32.mrf.mxu0
    %v5694 = vadd.f32 %v5674, %v5693
    %5695 = vdwg.mxu0
    %5696 = vmatpush.msra.mxu0 %v4228
    %5697 = vmatpush.msra.mxu0 %v4158
    %5698 = vmatpush.msra.mxu0 %v4088
    %5699 = vmatpush.msra.mxu0 %v4018
    %5700 = vmatpush.msra.mxu0 %v3948
    %5701 = vmatpush.msra.mxu0 %v3878
    %5702 = vmatpush.msra.mxu0 %v3808
    %5703 = vmatpush.msra.mxu0 %v3737
    %5704 = vmatpush.msra.mxu0 %v3669
    %5705 = vmatpush.msra.mxu0 %v3601
    %5706 = vmatpush.msra.mxu0 %v3533
    %5707 = vmatpush.msra.mxu0 %v3465
    %5708 = vmatpush.msra.mxu0 %v3397
    %5709 = vmatpush.msra.mxu0 %v3330
    %5710 = vmatpush.msra.mxu0 %v3265
    %5711 = vmatpush.msra.mxu0 %v3195
    %5712 = vmatmul.f32.gmra.mxu0 %v3135
    %v5713 = vpop.f32.mrf.mxu0
    %v5714 = vadd.f32 %v5371, %v5713
    %5715 = vdwg.mxu0
    %5716 = vmatpush.msra.mxu0 0.0
    %5717 = vmatpush.msra.mxu0 0.0
    %5718 = vmatpush.msra.mxu0 0.0
    %5719 = vmatpush.msra.mxu0 0.0
    %5720 = vmatpush.msra.mxu0 0.0
    %5721 = vmatpush.msra.mxu0 %v5172
    %5722 = vmatpush.msra.mxu0 %v5155
    %5723 = vmatpush.msra.mxu0 %v5138
    %5724 = vmatpush.msra.mxu0 %v5121
    %5725 = vmatpush.msra.mxu0 %v5104
    %5726 = vmatpush.msra.mxu0 %v5087
    %5727 = vmatpush.msra.mxu0 %v5070
    %5728 = vmatpush.msra.mxu0 %v5053
    %5729 = vmatpush.msra.mxu0 %v5036
    %5730 = vmatpush.msra.mxu0 %v5019
    %5731 = vmatpush.msra.mxu0 %v5002
    %5732 = vmatmul.f32.gmra.mxu0 %v5374
    %v5733 = vpop.f32.mrf.mxu0
    %v5734 = vadd.f32 %v5714, %v5733
    %5735 = vdwg.mxu0
    %5736 = vmatpush.msra.mxu0 %v4229
    %5737 = vmatpush.msra.mxu0 %v4159
    %5738 = vmatpush.msra.mxu0 %v4089
    %5739 = vmatpush.msra.mxu0 %v4019
    %5740 = vmatpush.msra.mxu0 %v3949
    %5741 = vmatpush.msra.mxu0 %v3879
    %5742 = vmatpush.msra.mxu0 %v3809
    %5743 = vmatpush.msra.mxu0 %v3738
    %5744 = vmatpush.msra.mxu0 %v3670
    %5745 = vmatpush.msra.mxu0 %v3602
    %5746 = vmatpush.msra.mxu0 %v3534
    %5747 = vmatpush.msra.mxu0 %v3466
    %5748 = vmatpush.msra.mxu0 %v3398
    %5749 = vmatpush.msra.mxu0 %v3331
    %5750 = vmatpush.msra.mxu0 %v3266
    %5751 = vmatpush.msra.mxu0 %v3196
    %5752 = vmatmul.f32.gmra.mxu0 %v3135
    %v5753 = vpop.f32.mrf.mxu0
    %v5754 = vadd.f32 %v5371, %v5753
    %5755 = vdwg.mxu0
    %5756 = vmatpush.msra.mxu0 0.0
    %5757 = vmatpush.msra.mxu0 0.0
    %5758 = vmatpush.msra.mxu0 0.0
    %5759 = vmatpush.msra.mxu0 0.0
    %5760 = vmatpush.msra.mxu0 0.0
    %5761 = vmatpush.msra.mxu0 %v5173
    %5762 = vmatpush.msra.mxu0 %v5156
    %5763 = vmatpush.msra.mxu0 %v5139
    %5764 = vmatpush.msra.mxu0 %v5122
    %5765 = vmatpush.msra.mxu0 %v5105
    %5766 = vmatpush.msra.mxu0 %v5088
    %5767 = vmatpush.msra.mxu0 %v5071
    %5768 = vmatpush.msra.mxu0 %v5054
    %5769 = vmatpush.msra.mxu0 %v5037
    %5770 = vmatpush.msra.mxu0 %v5020
    %5771 = vmatpush.msra.mxu0 %v5003
    %5772 = vmatmul.f32.gmra.mxu0 %v5374
    %v5773 = vpop.f32.mrf.mxu0
    %v5774 = vadd.f32 %v5754, %v5773
    %5775 = vdwg.mxu0
    %5776 = vmatpush.msra.mxu0 %v4230
    %5777 = vmatpush.msra.mxu0 %v4160
    %5778 = vmatpush.msra.mxu0 %v4090
    %5779 = vmatpush.msra.mxu0 %v4020
    %5780 = vmatpush.msra.mxu0 %v3950
    %5781 = vmatpush.msra.mxu0 %v3880
    %5782 = vmatpush.msra.mxu0 %v3810
    %5783 = vmatpush.msra.mxu0 %v3739
    %5784 = vmatpush.msra.mxu0 %v3671
    %5785 = vmatpush.msra.mxu0 %v3603
    %5786 = vmatpush.msra.mxu0 %v3535
    %5787 = vmatpush.msra.mxu0 %v3467
    %5788 = vmatpush.msra.mxu0 %v3399
    %5789 = vmatpush.msra.mxu0 %v3332
    %5790 = vmatpush.msra.mxu0 %v3267
    %5791 = vmatpush.msra.mxu0 %v3197
    %5792 = vmatmul.f32.gmra.mxu0 %v3135
    %v5793 = vpop.f32.mrf.mxu0
    %v5794 = vadd.f32 %v5371, %v5793
    %5795 = vdwg.mxu0
    %5796 = vmatpush.msra.mxu0 0.0
    %5797 = vmatpush.msra.mxu0 0.0
    %5798 = vmatpush.msra.mxu0 0.0
    %5799 = vmatpush.msra.mxu0 0.0
    %5800 = vmatpush.msra.mxu0 0.0
    %5801 = vmatpush.msra.mxu0 %v5174
    %5802 = vmatpush.msra.mxu0 %v5157
    %5803 = vmatpush.msra.mxu0 %v5140
    %5804 = vmatpush.msra.mxu0 %v5123
    %5805 = vmatpush.msra.mxu0 %v5106
    %5806 = vmatpush.msra.mxu0 %v5089
    %5807 = vmatpush.msra.mxu0 %v5072
    %5808 = vmatpush.msra.mxu0 %v5055
    %5809 = vmatpush.msra.mxu0 %v5038
    %5810 = vmatpush.msra.mxu0 %v5021
    %5811 = vmatpush.msra.mxu0 %v5004
    %5812 = vmatmul.f32.gmra.mxu0 %v5374
    %v5813 = vpop.f32.mrf.mxu0
    %v5814 = vadd.f32 %v5794, %v5813
    %5815 = vdwg.mxu0
    %5816 = vmatpush.msra.mxu0 %v4231
    %5817 = vmatpush.msra.mxu0 %v4161
    %5818 = vmatpush.msra.mxu0 %v4091
    %5819 = vmatpush.msra.mxu0 %v4021
    %5820 = vmatpush.msra.mxu0 %v3951
    %5821 = vmatpush.msra.mxu0 %v3881
    %5822 = vmatpush.msra.mxu0 %v3811
    %5823 = vmatpush.msra.mxu0 %v3740
    %5824 = vmatpush.msra.mxu0 %v3672
    %5825 = vmatpush.msra.mxu0 %v3604
    %5826 = vmatpush.msra.mxu0 %v3536
    %5827 = vmatpush.msra.mxu0 %v3468
    %5828 = vmatpush.msra.mxu0 %v3400
    %5829 = vmatpush.msra.mxu0 %v3333
    %5830 = vmatpush.msra.mxu0 %v3268
    %5831 = vmatpush.msra.mxu0 %v3198
    %5832 = vmatmul.f32.gmra.mxu0 %v3135
    %v5833 = vpop.f32.mrf.mxu0
    %v5834 = vadd.f32 %v5371, %v5833
    %5835 = vdwg.mxu0
    %5836 = vmatpush.msra.mxu0 0.0
    %5837 = vmatpush.msra.mxu0 0.0
    %5838 = vmatpush.msra.mxu0 0.0
    %5839 = vmatpush.msra.mxu0 0.0
    %5840 = vmatpush.msra.mxu0 0.0
    %5841 = vmatpush.msra.mxu0 %v5175
    %5842 = vmatpush.msra.mxu0 %v5158
    %5843 = vmatpush.msra.mxu0 %v5141
    %5844 = vmatpush.msra.mxu0 %v5124
    %5845 = vmatpush.msra.mxu0 %v5107
    %5846 = vmatpush.msra.mxu0 %v5090
    %5847 = vmatpush.msra.mxu0 %v5073
    %5848 = vmatpush.msra.mxu0 %v5056
    %5849 = vmatpush.msra.mxu0 %v5039
    %5850 = vmatpush.msra.mxu0 %v5022
    %5851 = vmatpush.msra.mxu0 %v5005
    %5852 = vmatmul.f32.gmra.mxu0 %v5374
    %v5853 = vpop.f32.mrf.mxu0
    %v5854 = vadd.f32 %v5834, %v5853
    %5855 = vdwg.mxu0
    %5856 = vmatpush.msra.mxu0 %v4232
    %5857 = vmatpush.msra.mxu0 %v4162
    %5858 = vmatpush.msra.mxu0 %v4092
    %5859 = vmatpush.msra.mxu0 %v4022
    %5860 = vmatpush.msra.mxu0 %v3952
    %5861 = vmatpush.msra.mxu0 %v3882
    %5862 = vmatpush.msra.mxu0 %v3812
    %5863 = vmatpush.msra.mxu0 %v3741
    %5864 = vmatpush.msra.mxu0 %v3673
    %5865 = vmatpush.msra.mxu0 %v3605
    %5866 = vmatpush.msra.mxu0 %v3537
    %5867 = vmatpush.msra.mxu0 %v3469
    %5868 = vmatpush.msra.mxu0 %v3401
    %5869 = vmatpush.msra.mxu0 %v3334
    %5870 = vmatpush.msra.mxu0 %v3269
    %5871 = vmatpush.msra.mxu0 %v3199
    %5872 = vmatmul.f32.gmra.mxu0 %v3135
    %v5873 = vpop.f32.mrf.mxu0
    %v5874 = vadd.f32 %v5371, %v5873
    %5875 = vdwg.mxu0
    %5876 = vmatpush.msra.mxu0 0.0
    %5877 = vmatpush.msra.mxu0 0.0
    %5878 = vmatpush.msra.mxu0 0.0
    %5879 = vmatpush.msra.mxu0 0.0
    %5880 = vmatpush.msra.mxu0 0.0
    %5881 = vmatpush.msra.mxu0 %v5176
    %5882 = vmatpush.msra.mxu0 %v5159
    %5883 = vmatpush.msra.mxu0 %v5142
    %5884 = vmatpush.msra.mxu0 %v5125
    %5885 = vmatpush.msra.mxu0 %v5108
    %5886 = vmatpush.msra.mxu0 %v5091
    %5887 = vmatpush.msra.mxu0 %v5074
    %5888 = vmatpush.msra.mxu0 %v5057
    %5889 = vmatpush.msra.mxu0 %v5040
    %5890 = vmatpush.msra.mxu0 %v5023
    %5891 = vmatpush.msra.mxu0 %v5006
    %5892 = vmatmul.f32.gmra.mxu0 %v5374
    %v5893 = vpop.f32.mrf.mxu0
    %v5894 = vadd.f32 %v5874, %v5893
    %5895 = vdwg.mxu0
    %5896 = vmatpush.msra.mxu0 %v4233
    %5897 = vmatpush.msra.mxu0 %v4163
    %5898 = vmatpush.msra.mxu0 %v4093
    %5899 = vmatpush.msra.mxu0 %v4023
    %5900 = vmatpush.msra.mxu0 %v3953
    %5901 = vmatpush.msra.mxu0 %v3883
    %5902 = vmatpush.msra.mxu0 %v3813
    %5903 = vmatpush.msra.mxu0 %v3742
    %5904 = vmatpush.msra.mxu0 %v3674
    %5905 = vmatpush.msra.mxu0 %v3606
    %5906 = vmatpush.msra.mxu0 %v3538
    %5907 = vmatpush.msra.mxu0 %v3470
    %5908 = vmatpush.msra.mxu0 %v3402
    %5909 = vmatpush.msra.mxu0 %v3335
    %5910 = vmatpush.msra.mxu0 %v3270
    %5911 = vmatpush.msra.mxu0 %v3200
    %5912 = vmatmul.f32.gmra.mxu0 %v3135
    %v5913 = vpop.f32.mrf.mxu0
    %v5914 = vadd.f32 %v5371, %v5913
    %5915 = vdwg.mxu0
    %5916 = vmatpush.msra.mxu0 0.0
    %5917 = vmatpush.msra.mxu0 0.0
    %5918 = vmatpush.msra.mxu0 0.0
    %5919 = vmatpush.msra.mxu0 0.0
    %5920 = vmatpush.msra.mxu0 0.0
    %5921 = vmatpush.msra.mxu0 %v5177
    %5922 = vmatpush.msra.mxu0 %v5160
    %5923 = vmatpush.msra.mxu0 %v5143
    %5924 = vmatpush.msra.mxu0 %v5126
    %5925 = vmatpush.msra.mxu0 %v5109
    %5926 = vmatpush.msra.mxu0 %v5092
    %5927 = vmatpush.msra.mxu0 %v5075
    %5928 = vmatpush.msra.mxu0 %v5058
    %5929 = vmatpush.msra.mxu0 %v5041
    %5930 = vmatpush.msra.mxu0 %v5024
    %5931 = vmatpush.msra.mxu0 %v5007
    %5932 = vmatmul.f32.gmra.mxu0 %v5374
    %v5933 = vpop.f32.mrf.mxu0
    %v5934 = vadd.f32 %v5914, %v5933
    %5935 = vdwg.mxu0
    %5936 = vmatpush.msra.mxu0 %v4234
    %5937 = vmatpush.msra.mxu0 %v4164
    %5938 = vmatpush.msra.mxu0 %v4094
    %5939 = vmatpush.msra.mxu0 %v4024
    %5940 = vmatpush.msra.mxu0 %v3954
    %5941 = vmatpush.msra.mxu0 %v3884
    %5942 = vmatpush.msra.mxu0 %v3814
    %5943 = vmatpush.msra.mxu0 %v3743
    %5944 = vmatpush.msra.mxu0 %v3675
    %5945 = vmatpush.msra.mxu0 %v3607
    %5946 = vmatpush.msra.mxu0 %v3539
    %5947 = vmatpush.msra.mxu0 %v3471
    %5948 = vmatpush.msra.mxu0 %v3403
    %5949 = vmatpush.msra.mxu0 %v3336
    %5950 = vmatpush.msra.mxu0 %v3271
    %5951 = vmatpush.msra.mxu0 %v3201
    %5952 = vmatmul.f32.gmra.mxu0 %v3135
    %v5953 = vpop.f32.mrf.mxu0
    %v5954 = vadd.f32 %v5371, %v5953
    %5955 = vdwg.mxu0
    %5956 = vmatpush.msra.mxu0 0.0
    %5957 = vmatpush.msra.mxu0 0.0
    %5958 = vmatpush.msra.mxu0 0.0
    %5959 = vmatpush.msra.mxu0 0.0
    %5960 = vmatpush.msra.mxu0 0.0
    %5961 = vmatpush.msra.mxu0 %v5178
    %5962 = vmatpush.msra.mxu0 %v5161
    %5963 = vmatpush.msra.mxu0 %v5144
    %5964 = vmatpush.msra.mxu0 %v5127
    %5965 = vmatpush.msra.mxu0 %v5110
    %5966 = vmatpush.msra.mxu0 %v5093
    %5967 = vmatpush.msra.mxu0 %v5076
    %5968 = vmatpush.msra.mxu0 %v5059
    %5969 = vmatpush.msra.mxu0 %v5042
    %5970 = vmatpush.msra.mxu0 %v5025
    %5971 = vmatpush.msra.mxu0 %v5008
    %5972 = vmatmul.f32.gmra.mxu0 %v5374
    %v5973 = vpop.f32.mrf.mxu0
    %v5974 = vadd.f32 %v5954, %v5973
    %5975 = vdwg.mxu0
    %5976 = vmatpush.msra.mxu0 %v4235
    %5977 = vmatpush.msra.mxu0 %v4165
    %5978 = vmatpush.msra.mxu0 %v4095
    %5979 = vmatpush.msra.mxu0 %v4025
    %5980 = vmatpush.msra.mxu0 %v3955
    %5981 = vmatpush.msra.mxu0 %v3885
    %5982 = vmatpush.msra.mxu0 %v3815
    %5983 = vmatpush.msra.mxu0 %v3744
    %5984 = vmatpush.msra.mxu0 %v3676
    %5985 = vmatpush.msra.mxu0 %v3608
    %5986 = vmatpush.msra.mxu0 %v3540
    %5987 = vmatpush.msra.mxu0 %v3472
    %5988 = vmatpush.msra.mxu0 %v3404
    %5989 = vmatpush.msra.mxu0 %v3337
    %5990 = vmatpush.msra.mxu0 %v3272
    %5991 = vmatpush.msra.mxu0 %v3202
    %5992 = vmatmul.f32.gmra.mxu0 %v3135
    %v5993 = vpop.f32.mrf.mxu0
    %v5994 = vadd.f32 %v5371, %v5993
    %5995 = vdwg.mxu0
    %5996 = vmatpush.msra.mxu0 0.0
    %5997 = vmatpush.msra.mxu0 0.0
    %5998 = vmatpush.msra.mxu0 0.0
    %5999 = vmatpush.msra.mxu0 0.0
    %6000 = vmatpush.msra.mxu0 0.0
    %6001 = vmatpush.msra.mxu0 %v5179
    %6002 = vmatpush.msra.mxu0 %v5162
    %6003 = vmatpush.msra.mxu0 %v5145
    %6004 = vmatpush.msra.mxu0 %v5128
    %6005 = vmatpush.msra.mxu0 %v5111
    %6006 = vmatpush.msra.mxu0 %v5094
    %6007 = vmatpush.msra.mxu0 %v5077
    %6008 = vmatpush.msra.mxu0 %v5060
    %6009 = vmatpush.msra.mxu0 %v5043
    %6010 = vmatpush.msra.mxu0 %v5026
    %6011 = vmatpush.msra.mxu0 %v5009
    %6012 = vmatmul.f32.gmra.mxu0 %v5374
    %v6013 = vpop.f32.mrf.mxu0
    %v6014 = vadd.f32 %v5994, %v6013
    %6015 = vdwg.mxu0
    %6016 = vmatpush.msra.mxu0 %v4236
    %6017 = vmatpush.msra.mxu0 %v4166
    %6018 = vmatpush.msra.mxu0 %v4096
    %6019 = vmatpush.msra.mxu0 %v4026
    %6020 = vmatpush.msra.mxu0 %v3956
    %6021 = vmatpush.msra.mxu0 %v3886
    %6022 = vmatpush.msra.mxu0 %v3816
    %6023 = vmatpush.msra.mxu0 %v3745
    %6024 = vmatpush.msra.mxu0 %v3677
    %6025 = vmatpush.msra.mxu0 %v3609
    %6026 = vmatpush.msra.mxu0 %v3541
    %6027 = vmatpush.msra.mxu0 %v3473
    %6028 = vmatpush.msra.mxu0 %v3405
    %6029 = vmatpush.msra.mxu0 %v3321
    %6030 = vmatpush.msra.mxu0 %v3256
    %6031 = vmatpush.msra.mxu0 %v3203
    %6032 = vmatmul.f32.gmra.mxu0 %v3135
    %v6033 = vpop.f32.mrf.mxu0
    %v6034 = vadd.f32 %v5371, %v6033
    %6035 = vdwg.mxu0
    %6036 = vmatpush.msra.mxu0 0.0
    %6037 = vmatpush.msra.mxu0 0.0
    %6038 = vmatpush.msra.mxu0 0.0
    %6039 = vmatpush.msra.mxu0 0.0
    %6040 = vmatpush.msra.mxu0 0.0
    %6041 = vmatpush.msra.mxu0 %v5180
    %6042 = vmatpush.msra.mxu0 %v5163
    %6043 = vmatpush.msra.mxu0 %v5146
    %6044 = vmatpush.msra.mxu0 %v5129
    %6045 = vmatpush.msra.mxu0 %v5112
    %6046 = vmatpush.msra.mxu0 %v5095
    %6047 = vmatpush.msra.mxu0 %v5078
    %6048 = vmatpush.msra.mxu0 %v5061
    %6049 = vmatpush.msra.mxu0 %v5044
    %6050 = vmatpush.msra.mxu0 %v5027
    %6051 = vmatpush.msra.mxu0 %v5010
    %6052 = vmatmul.f32.gmra.mxu0 %v5374
    %v6053 = vpop.f32.mrf.mxu0
    %v6054 = vadd.f32 %v6034, %v6053
    %6055 = vdwg.mxu0
    %v6056 = vmax.f32 %v5414, 0.0
    %v6057 = vmax.f32 %v5454, 0.0
    %v6058 = vmax.f32 %v5494, 0.0
    %v6059 = vmax.f32 %v5534, 0.0
    %v6060 = vmax.f32 %v5574, 0.0
    %v6061 = vmax.f32 %v5614, 0.0
    %v6062 = vmax.f32 %v5654, 0.0
    %v6063 = vmax.f32 %v5694, 0.0
    %v6064 = vmax.f32 %v5734, 0.0
    %v6065 = vmax.f32 %v5774, 0.0
    %v6066 = vmax.f32 %v5814, 0.0
    %v6067 = vmax.f32 %v5854, 0.0
    %v6068 = vmax.f32 %v5894, 0.0
    %v6069 = vmax.f32 %v5934, 0.0
    %v6070 = vmax.f32 %v5974, 0.0
    %v6071 = vmax.f32 %v6014, 0.0
    %v6072 = vmax.f32 %v6054, 0.0
    %v6073 = vmul.f32 %v6056, %v3084
    %v6074 = vmul.f32 %v6057, %v3085
    %v6075 = vmul.f32 %v6058, %v3086
    %v6076 = vmul.f32 %v6059, %v3087
    %v6077 = vmul.f32 %v6060, %v3088
    %v6078 = vmul.f32 %v6061, %v3089
    %v6079 = vmul.f32 %v6062, %v3090
    %v6080 = vmul.f32 %v6063, %v3091
    %v6081 = vmul.f32 %v6064, %v3092
    %v6082 = vmul.f32 %v6065, %v3093
    %v6083 = vmul.f32 %v6066, %v3094
    %v6084 = vmul.f32 %v6067, %v3095
    %v6085 = vmul.f32 %v6068, %v3096
    %v6086 = vmul.f32 %v6069, %v3097
    %v6087 = vmul.f32 %v6070, %v3098
    %v6088 = vmul.f32 %v6071, %v3099
    %v6089 = vmul.f32 %v6072, %v3100
    %v6090 = vld [vmem:[%s6] sm:$0xff]
    %v6091 = vld [vmem:[%s6 + $0x8] sm:$0xff]
    %v6092 = vld [vmem:[%s7] sm:$0xff]
    %6110 = vrot.lane.b32.xlu0 %v6073, 71
    %v6111 = vpop.permute.xlu0 %6110
    %6112 = vrot.lane.b32.xlu0 %v6074, 71
    %v6113 = vpop.permute.xlu0 %6112
    %6114 = vrot.lane.b32.xlu0 %v6075, 71
    %v6115 = vpop.permute.xlu0 %6114
    %6116 = vrot.lane.b32.xlu0 %v6076, 71
    %v6117 = vpop.permute.xlu0 %6116
    %6118 = vrot.lane.b32.xlu0 %v6077, 71
    %v6119 = vpop.permute.xlu0 %6118
    %6120 = vrot.lane.b32.xlu0 %v6078, 71
    %v6121 = vpop.permute.xlu0 %6120
    %6122 = vrot.lane.b32.xlu0 %v6079, 71
    %v6123 = vpop.permute.xlu0 %6122
    %6124 = vrot.lane.b32.xlu0 %v6080, 71
    %v6125 = vpop.permute.xlu0 %6124
    %6126 = vrot.lane.b32.xlu0 %v6081, 71
    %v6127 = vpop.permute.xlu0 %6126
    %6128 = vrot.lane.b32.xlu0 %v6082, 71
    %v6129 = vpop.permute.xlu0 %6128
    %6130 = vrot.lane.b32.xlu0 %v6083, 71
    %v6131 = vpop.permute.xlu0 %6130
    %6132 = vrot.lane.b32.xlu0 %v6084, 71
    %v6133 = vpop.permute.xlu0 %6132
    %6134 = vrot.lane.b32.xlu0 %v6085, 71
    %v6135 = vpop.permute.xlu0 %6134
    %6136 = vrot.lane.b32.xlu0 %v6086, 71
    %v6137 = vpop.permute.xlu0 %6136
    %6138 = vrot.lane.b32.xlu0 %v6087, 71
    %v6139 = vpop.permute.xlu0 %6138
    %6140 = vrot.lane.b32.xlu0 %v6088, 71
    %v6141 = vpop.permute.xlu0 %6140
    %6142 = vrot.lane.b32.xlu0 %v6089, 71
    %v6143 = vpop.permute.xlu0 %6142
    %v6144 = vsel %vm118, %v6111, %v6113
    %v6145 = vsel %vm118, %v6113, %v6115
    %v6146 = vsel %vm118, %v6115, %v6117
    %v6147 = vsel %vm118, %v6117, %v6119
    %v6148 = vsel %vm118, %v6119, %v6121
    %v6149 = vsel %vm118, %v6121, %v6123
    %v6150 = vsel %vm118, %v6123, %v6125
    %v6151 = vsel %vm118, %v6125, %v6127
    %v6152 = vsel %vm118, %v6127, %v6129
    %v6153 = vsel %vm118, %v6129, %v6131
    %v6154 = vsel %vm118, %v6131, %v6133
    %v6155 = vsel %vm118, %v6133, %v6135
    %v6156 = vsel %vm118, %v6135, %v6137
    %v6157 = vsel %vm118, %v6137, %v6139
    %v6158 = vsel %vm118, %v6139, %v6141
    %v6159 = vsel %vm118, %v6141, %v6143
    %v6177 = vsel %vm118, 0.0, %v6111
    %v6178 = vsel %vm153, %v6143, 0.0
    %6180 = vrot.lane.b32.xlu0 %v6177, 127
    %v6181 = vpop.permute.xlu0 %6180
    %6182 = vrot.lane.b32.xlu0 %v6144, 127
    %v6183 = vpop.permute.xlu0 %6182
    %6184 = vrot.lane.b32.xlu0 %v6145, 127
    %v6185 = vpop.permute.xlu0 %6184
    %6186 = vrot.lane.b32.xlu0 %v6146, 127
    %v6187 = vpop.permute.xlu0 %6186
    %6188 = vrot.lane.b32.xlu0 %v6147, 127
    %v6189 = vpop.permute.xlu0 %6188
    %6190 = vrot.lane.b32.xlu0 %v6148, 127
    %v6191 = vpop.permute.xlu0 %6190
    %6192 = vrot.lane.b32.xlu0 %v6149, 127
    %v6193 = vpop.permute.xlu0 %6192
    %6194 = vrot.lane.b32.xlu0 %v6150, 127
    %v6195 = vpop.permute.xlu0 %6194
    %6196 = vrot.lane.b32.xlu0 %v6151, 127
    %v6197 = vpop.permute.xlu0 %6196
    %6198 = vrot.lane.b32.xlu0 %v6152, 127
    %v6199 = vpop.permute.xlu0 %6198
    %6200 = vrot.lane.b32.xlu0 %v6153, 127
    %v6201 = vpop.permute.xlu0 %6200
    %6202 = vrot.lane.b32.xlu0 %v6154, 127
    %v6203 = vpop.permute.xlu0 %6202
    %6204 = vrot.lane.b32.xlu0 %v6155, 127
    %v6205 = vpop.permute.xlu0 %6204
    %6206 = vrot.lane.b32.xlu0 %v6156, 127
    %v6207 = vpop.permute.xlu0 %6206
    %6208 = vrot.lane.b32.xlu0 %v6157, 127
    %v6209 = vpop.permute.xlu0 %6208
    %6210 = vrot.lane.b32.xlu0 %v6158, 127
    %v6211 = vpop.permute.xlu0 %6210
    %v6212 = vsel %vm191, %v158, %v6181
    %v6213 = vsel %vm191, %v6181, %v6183
    %v6214 = vsel %vm191, %v6183, %v6185
    %v6215 = vsel %vm191, %v6185, %v6187
    %v6216 = vsel %vm191, %v6187, %v6189
    %v6217 = vsel %vm191, %v6189, %v6191
    %v6218 = vsel %vm191, %v6191, %v6193
    %v6219 = vsel %vm191, %v6193, %v6195
    %v6220 = vsel %vm191, %v6195, %v6197
    %v6221 = vsel %vm191, %v6197, %v6199
    %v6222 = vsel %vm191, %v6199, %v6201
    %v6223 = vsel %vm191, %v6201, %v6203
    %v6224 = vsel %vm191, %v6203, %v6205
    %v6225 = vsel %vm191, %v6205, %v6207
    %v6226 = vsel %vm191, %v6207, %v6209
    %v6227 = vsel %vm191, %v6209, %v6211
    %6245 = vrot.lane.b32.xlu0 %v6177, 126
    %v6246 = vpop.permute.xlu0 %6245
    %6247 = vrot.lane.b32.xlu0 %v6144, 126
    %v6248 = vpop.permute.xlu0 %6247
    %6249 = vrot.lane.b32.xlu0 %v6145, 126
    %v6250 = vpop.permute.xlu0 %6249
    %6251 = vrot.lane.b32.xlu0 %v6146, 126
    %v6252 = vpop.permute.xlu0 %6251
    %6253 = vrot.lane.b32.xlu0 %v6147, 126
    %v6254 = vpop.permute.xlu0 %6253
    %6255 = vrot.lane.b32.xlu0 %v6148, 126
    %v6256 = vpop.permute.xlu0 %6255
    %6257 = vrot.lane.b32.xlu0 %v6149, 126
    %v6258 = vpop.permute.xlu0 %6257
    %6259 = vrot.lane.b32.xlu0 %v6150, 126
    %v6260 = vpop.permute.xlu0 %6259
    %6261 = vrot.lane.b32.xlu0 %v6151, 126
    %v6262 = vpop.permute.xlu0 %6261
    %6263 = vrot.lane.b32.xlu0 %v6152, 126
    %v6264 = vpop.permute.xlu0 %6263
    %6265 = vrot.lane.b32.xlu0 %v6153, 126
    %v6266 = vpop.permute.xlu0 %6265
    %6267 = vrot.lane.b32.xlu0 %v6154, 126
    %v6268 = vpop.permute.xlu0 %6267
    %6269 = vrot.lane.b32.xlu0 %v6155, 126
    %v6270 = vpop.permute.xlu0 %6269
    %6271 = vrot.lane.b32.xlu0 %v6156, 126
    %v6272 = vpop.permute.xlu0 %6271
    %6273 = vrot.lane.b32.xlu0 %v6157, 126
    %v6274 = vpop.permute.xlu0 %6273
    %6275 = vrot.lane.b32.xlu0 %v6158, 126
    %v6276 = vpop.permute.xlu0 %6275
    %v6277 = vsel %vm259, %v226, %v6246
    %v6278 = vsel %vm259, %v6246, %v6248
    %v6279 = vsel %vm259, %v6248, %v6250
    %v6280 = vsel %vm259, %v6250, %v6252
    %v6281 = vsel %vm259, %v6252, %v6254
    %v6282 = vsel %vm259, %v6254, %v6256
    %v6283 = vsel %vm259, %v6256, %v6258
    %v6284 = vsel %vm259, %v6258, %v6260
    %v6285 = vsel %vm259, %v6260, %v6262
    %v6286 = vsel %vm259, %v6262, %v6264
    %v6287 = vsel %vm259, %v6264, %v6266
    %v6288 = vsel %vm259, %v6266, %v6268
    %v6289 = vsel %vm259, %v6268, %v6270
    %v6290 = vsel %vm259, %v6270, %v6272
    %v6291 = vsel %vm259, %v6272, %v6274
    %v6292 = vsel %vm259, %v6274, %v6276
    %6310 = vrot.lane.b32.xlu0 %v6177, 110
    %v6311 = vpop.permute.xlu0 %6310
    %6312 = vrot.lane.b32.xlu0 %v6144, 110
    %v6313 = vpop.permute.xlu0 %6312
    %6314 = vrot.lane.b32.xlu0 %v6145, 110
    %v6315 = vpop.permute.xlu0 %6314
    %6316 = vrot.lane.b32.xlu0 %v6146, 110
    %v6317 = vpop.permute.xlu0 %6316
    %6318 = vrot.lane.b32.xlu0 %v6147, 110
    %v6319 = vpop.permute.xlu0 %6318
    %6320 = vrot.lane.b32.xlu0 %v6148, 110
    %v6321 = vpop.permute.xlu0 %6320
    %6322 = vrot.lane.b32.xlu0 %v6149, 110
    %v6323 = vpop.permute.xlu0 %6322
    %6324 = vrot.lane.b32.xlu0 %v6150, 110
    %v6325 = vpop.permute.xlu0 %6324
    %6326 = vrot.lane.b32.xlu0 %v6151, 110
    %v6327 = vpop.permute.xlu0 %6326
    %6328 = vrot.lane.b32.xlu0 %v6152, 110
    %v6329 = vpop.permute.xlu0 %6328
    %6330 = vrot.lane.b32.xlu0 %v6153, 110
    %v6331 = vpop.permute.xlu0 %6330
    %6332 = vrot.lane.b32.xlu0 %v6154, 110
    %v6333 = vpop.permute.xlu0 %6332
    %6334 = vrot.lane.b32.xlu0 %v6155, 110
    %v6335 = vpop.permute.xlu0 %6334
    %6336 = vrot.lane.b32.xlu0 %v6156, 110
    %v6337 = vpop.permute.xlu0 %6336
    %6338 = vrot.lane.b32.xlu0 %v6157, 110
    %v6339 = vpop.permute.xlu0 %6338
    %6340 = vrot.lane.b32.xlu0 %v6158, 110
    %v6341 = vpop.permute.xlu0 %6340
    %6342 = vrot.lane.b32.xlu0 %v6159, 110
    %v6343 = vpop.permute.xlu0 %6342
    %v6344 = vsel %vm329, %v294, %v6311
    %v6345 = vsel %vm329, %v6311, %v6313
    %v6346 = vsel %vm329, %v6313, %v6315
    %v6347 = vsel %vm329, %v6315, %v6317
    %v6348 = vsel %vm329, %v6317, %v6319
    %v6349 = vsel %vm329, %v6319, %v6321
    %v6350 = vsel %vm329, %v6321, %v6323
    %v6351 = vsel %vm329, %v6323, %v6325
    %v6352 = vsel %vm329, %v6325, %v6327
    %v6353 = vsel %vm329, %v6327, %v6329
    %v6354 = vsel %vm329, %v6329, %v6331
    %v6355 = vsel %vm329, %v6331, %v6333
    %v6356 = vsel %vm329, %v6333, %v6335
    %v6357 = vsel %vm329, %v6335, %v6337
    %v6358 = vsel %vm329, %v6337, %v6339
    %v6359 = vsel %vm329, %v6339, %v6341
    %v6360 = vsel %vm329, %v6341, %v6343
    %6378 = vrot.lane.b32.xlu0 %v6177, 109
    %v6379 = vpop.permute.xlu0 %6378
    %6380 = vrot.lane.b32.xlu0 %v6144, 109
    %v6381 = vpop.permute.xlu0 %6380
    %6382 = vrot.lane.b32.xlu0 %v6145, 109
    %v6383 = vpop.permute.xlu0 %6382
    %6384 = vrot.lane.b32.xlu0 %v6146, 109
    %v6385 = vpop.permute.xlu0 %6384
    %6386 = vrot.lane.b32.xlu0 %v6147, 109
    %v6387 = vpop.permute.xlu0 %6386
    %6388 = vrot.lane.b32.xlu0 %v6148, 109
    %v6389 = vpop.permute.xlu0 %6388
    %6390 = vrot.lane.b32.xlu0 %v6149, 109
    %v6391 = vpop.permute.xlu0 %6390
    %6392 = vrot.lane.b32.xlu0 %v6150, 109
    %v6393 = vpop.permute.xlu0 %6392
    %6394 = vrot.lane.b32.xlu0 %v6151, 109
    %v6395 = vpop.permute.xlu0 %6394
    %6396 = vrot.lane.b32.xlu0 %v6152, 109
    %v6397 = vpop.permute.xlu0 %6396
    %6398 = vrot.lane.b32.xlu0 %v6153, 109
    %v6399 = vpop.permute.xlu0 %6398
    %6400 = vrot.lane.b32.xlu0 %v6154, 109
    %v6401 = vpop.permute.xlu0 %6400
    %6402 = vrot.lane.b32.xlu0 %v6155, 109
    %v6403 = vpop.permute.xlu0 %6402
    %6404 = vrot.lane.b32.xlu0 %v6156, 109
    %v6405 = vpop.permute.xlu0 %6404
    %6406 = vrot.lane.b32.xlu0 %v6157, 109
    %v6407 = vpop.permute.xlu0 %6406
    %6408 = vrot.lane.b32.xlu0 %v6158, 109
    %v6409 = vpop.permute.xlu0 %6408
    %6410 = vrot.lane.b32.xlu0 %v6159, 109
    %v6411 = vpop.permute.xlu0 %6410
    %v6412 = vsel %vm400, %v365, %v6379
    %v6413 = vsel %vm400, %v6379, %v6381
    %v6414 = vsel %vm400, %v6381, %v6383
    %v6415 = vsel %vm400, %v6383, %v6385
    %v6416 = vsel %vm400, %v6385, %v6387
    %v6417 = vsel %vm400, %v6387, %v6389
    %v6418 = vsel %vm400, %v6389, %v6391
    %v6419 = vsel %vm400, %v6391, %v6393
    %v6420 = vsel %vm400, %v6393, %v6395
    %v6421 = vsel %vm400, %v6395, %v6397
    %v6422 = vsel %vm400, %v6397, %v6399
    %v6423 = vsel %vm400, %v6399, %v6401
    %v6424 = vsel %vm400, %v6401, %v6403
    %v6425 = vsel %vm400, %v6403, %v6405
    %v6426 = vsel %vm400, %v6405, %v6407
    %v6427 = vsel %vm400, %v6407, %v6409
    %v6428 = vsel %vm400, %v6409, %v6411
    %6446 = vrot.lane.b32.xlu0 %v6177, 108
    %v6447 = vpop.permute.xlu0 %6446
    %6448 = vrot.lane.b32.xlu0 %v6144, 108
    %v6449 = vpop.permute.xlu0 %6448
    %6450 = vrot.lane.b32.xlu0 %v6145, 108
    %v6451 = vpop.permute.xlu0 %6450
    %6452 = vrot.lane.b32.xlu0 %v6146, 108
    %v6453 = vpop.permute.xlu0 %6452
    %6454 = vrot.lane.b32.xlu0 %v6147, 108
    %v6455 = vpop.permute.xlu0 %6454
    %6456 = vrot.lane.b32.xlu0 %v6148, 108
    %v6457 = vpop.permute.xlu0 %6456
    %6458 = vrot.lane.b32.xlu0 %v6149, 108
    %v6459 = vpop.permute.xlu0 %6458
    %6460 = vrot.lane.b32.xlu0 %v6150, 108
    %v6461 = vpop.permute.xlu0 %6460
    %6462 = vrot.lane.b32.xlu0 %v6151, 108
    %v6463 = vpop.permute.xlu0 %6462
    %6464 = vrot.lane.b32.xlu0 %v6152, 108
    %v6465 = vpop.permute.xlu0 %6464
    %6466 = vrot.lane.b32.xlu0 %v6153, 108
    %v6467 = vpop.permute.xlu0 %6466
    %6468 = vrot.lane.b32.xlu0 %v6154, 108
    %v6469 = vpop.permute.xlu0 %6468
    %6470 = vrot.lane.b32.xlu0 %v6155, 108
    %v6471 = vpop.permute.xlu0 %6470
    %6472 = vrot.lane.b32.xlu0 %v6156, 108
    %v6473 = vpop.permute.xlu0 %6472
    %6474 = vrot.lane.b32.xlu0 %v6157, 108
    %v6475 = vpop.permute.xlu0 %6474
    %6476 = vrot.lane.b32.xlu0 %v6158, 108
    %v6477 = vpop.permute.xlu0 %6476
    %6478 = vrot.lane.b32.xlu0 %v6159, 108
    %v6479 = vpop.permute.xlu0 %6478
    %v6480 = vsel %vm471, %v436, %v6447
    %v6481 = vsel %vm471, %v6447, %v6449
    %v6482 = vsel %vm471, %v6449, %v6451
    %v6483 = vsel %vm471, %v6451, %v6453
    %v6484 = vsel %vm471, %v6453, %v6455
    %v6485 = vsel %vm471, %v6455, %v6457
    %v6486 = vsel %vm471, %v6457, %v6459
    %v6487 = vsel %vm471, %v6459, %v6461
    %v6488 = vsel %vm471, %v6461, %v6463
    %v6489 = vsel %vm471, %v6463, %v6465
    %v6490 = vsel %vm471, %v6465, %v6467
    %v6491 = vsel %vm471, %v6467, %v6469
    %v6492 = vsel %vm471, %v6469, %v6471
    %v6493 = vsel %vm471, %v6471, %v6473
    %v6494 = vsel %vm471, %v6473, %v6475
    %v6495 = vsel %vm471, %v6475, %v6477
    %v6496 = vsel %vm471, %v6477, %v6479
    %6514 = vrot.lane.b32.xlu0 %v6177, 92
    %v6515 = vpop.permute.xlu0 %6514
    %6516 = vrot.lane.b32.xlu0 %v6144, 92
    %v6517 = vpop.permute.xlu0 %6516
    %6518 = vrot.lane.b32.xlu0 %v6145, 92
    %v6519 = vpop.permute.xlu0 %6518
    %6520 = vrot.lane.b32.xlu0 %v6146, 92
    %v6521 = vpop.permute.xlu0 %6520
    %6522 = vrot.lane.b32.xlu0 %v6147, 92
    %v6523 = vpop.permute.xlu0 %6522
    %6524 = vrot.lane.b32.xlu0 %v6148, 92
    %v6525 = vpop.permute.xlu0 %6524
    %6526 = vrot.lane.b32.xlu0 %v6149, 92
    %v6527 = vpop.permute.xlu0 %6526
    %6528 = vrot.lane.b32.xlu0 %v6150, 92
    %v6529 = vpop.permute.xlu0 %6528
    %6530 = vrot.lane.b32.xlu0 %v6151, 92
    %v6531 = vpop.permute.xlu0 %6530
    %6532 = vrot.lane.b32.xlu0 %v6152, 92
    %v6533 = vpop.permute.xlu0 %6532
    %6534 = vrot.lane.b32.xlu0 %v6153, 92
    %v6535 = vpop.permute.xlu0 %6534
    %6536 = vrot.lane.b32.xlu0 %v6154, 92
    %v6537 = vpop.permute.xlu0 %6536
    %6538 = vrot.lane.b32.xlu0 %v6155, 92
    %v6539 = vpop.permute.xlu0 %6538
    %6540 = vrot.lane.b32.xlu0 %v6156, 92
    %v6541 = vpop.permute.xlu0 %6540
    %6542 = vrot.lane.b32.xlu0 %v6157, 92
    %v6543 = vpop.permute.xlu0 %6542
    %6544 = vrot.lane.b32.xlu0 %v6158, 92
    %v6545 = vpop.permute.xlu0 %6544
    %6546 = vrot.lane.b32.xlu0 %v6159, 92
    %v6547 = vpop.permute.xlu0 %6546
    %v6548 = vsel %vm542, %v507, %v6515
    %v6549 = vsel %vm542, %v6515, %v6517
    %v6550 = vsel %vm542, %v6517, %v6519
    %v6551 = vsel %vm542, %v6519, %v6521
    %v6552 = vsel %vm542, %v6521, %v6523
    %v6553 = vsel %vm542, %v6523, %v6525
    %v6554 = vsel %vm542, %v6525, %v6527
    %v6555 = vsel %vm542, %v6527, %v6529
    %v6556 = vsel %vm542, %v6529, %v6531
    %v6557 = vsel %vm542, %v6531, %v6533
    %v6558 = vsel %vm542, %v6533, %v6535
    %v6559 = vsel %vm542, %v6535, %v6537
    %v6560 = vsel %vm542, %v6537, %v6539
    %v6561 = vsel %vm542, %v6539, %v6541
    %v6562 = vsel %vm542, %v6541, %v6543
    %v6563 = vsel %vm542, %v6543, %v6545
    %v6564 = vsel %vm542, %v6545, %v6547
    %6582 = vrot.lane.b32.xlu0 %v6177, 91
    %v6583 = vpop.permute.xlu0 %6582
    %6584 = vrot.lane.b32.xlu0 %v6144, 91
    %v6585 = vpop.permute.xlu0 %6584
    %6586 = vrot.lane.b32.xlu0 %v6145, 91
    %v6587 = vpop.permute.xlu0 %6586
    %6588 = vrot.lane.b32.xlu0 %v6146, 91
    %v6589 = vpop.permute.xlu0 %6588
    %6590 = vrot.lane.b32.xlu0 %v6147, 91
    %v6591 = vpop.permute.xlu0 %6590
    %6592 = vrot.lane.b32.xlu0 %v6148, 91
    %v6593 = vpop.permute.xlu0 %6592
    %6594 = vrot.lane.b32.xlu0 %v6149, 91
    %v6595 = vpop.permute.xlu0 %6594
    %6596 = vrot.lane.b32.xlu0 %v6150, 91
    %v6597 = vpop.permute.xlu0 %6596
    %6598 = vrot.lane.b32.xlu0 %v6151, 91
    %v6599 = vpop.permute.xlu0 %6598
    %6600 = vrot.lane.b32.xlu0 %v6152, 91
    %v6601 = vpop.permute.xlu0 %6600
    %6602 = vrot.lane.b32.xlu0 %v6153, 91
    %v6603 = vpop.permute.xlu0 %6602
    %6604 = vrot.lane.b32.xlu0 %v6154, 91
    %v6605 = vpop.permute.xlu0 %6604
    %6606 = vrot.lane.b32.xlu0 %v6155, 91
    %v6607 = vpop.permute.xlu0 %6606
    %6608 = vrot.lane.b32.xlu0 %v6156, 91
    %v6609 = vpop.permute.xlu0 %6608
    %6610 = vrot.lane.b32.xlu0 %v6157, 91
    %v6611 = vpop.permute.xlu0 %6610
    %6612 = vrot.lane.b32.xlu0 %v6158, 91
    %v6613 = vpop.permute.xlu0 %6612
    %6614 = vrot.lane.b32.xlu0 %v6159, 91
    %v6615 = vpop.permute.xlu0 %6614
    %v6616 = vsel %vm613, %v578, %v6583
    %v6617 = vsel %vm613, %v6583, %v6585
    %v6618 = vsel %vm613, %v6585, %v6587
    %v6619 = vsel %vm613, %v6587, %v6589
    %v6620 = vsel %vm613, %v6589, %v6591
    %v6621 = vsel %vm613, %v6591, %v6593
    %v6622 = vsel %vm613, %v6593, %v6595
    %v6623 = vsel %vm613, %v6595, %v6597
    %v6624 = vsel %vm613, %v6597, %v6599
    %v6625 = vsel %vm613, %v6599, %v6601
    %v6626 = vsel %vm613, %v6601, %v6603
    %v6627 = vsel %vm613, %v6603, %v6605
    %v6628 = vsel %vm613, %v6605, %v6607
    %v6629 = vsel %vm613, %v6607, %v6609
    %v6630 = vsel %vm613, %v6609, %v6611
    %v6631 = vsel %vm613, %v6611, %v6613
    %v6632 = vsel %vm613, %v6613, %v6615
    %6650 = vrot.lane.b32.xlu0 %v6177, 90
    %v6651 = vpop.permute.xlu0 %6650
    %6652 = vrot.lane.b32.xlu0 %v6144, 90
    %v6653 = vpop.permute.xlu0 %6652
    %6654 = vrot.lane.b32.xlu0 %v6145, 90
    %v6655 = vpop.permute.xlu0 %6654
    %6656 = vrot.lane.b32.xlu0 %v6146, 90
    %v6657 = vpop.permute.xlu0 %6656
    %6658 = vrot.lane.b32.xlu0 %v6147, 90
    %v6659 = vpop.permute.xlu0 %6658
    %6660 = vrot.lane.b32.xlu0 %v6148, 90
    %v6661 = vpop.permute.xlu0 %6660
    %6662 = vrot.lane.b32.xlu0 %v6149, 90
    %v6663 = vpop.permute.xlu0 %6662
    %6664 = vrot.lane.b32.xlu0 %v6150, 90
    %v6665 = vpop.permute.xlu0 %6664
    %6666 = vrot.lane.b32.xlu0 %v6151, 90
    %v6667 = vpop.permute.xlu0 %6666
    %6668 = vrot.lane.b32.xlu0 %v6152, 90
    %v6669 = vpop.permute.xlu0 %6668
    %6670 = vrot.lane.b32.xlu0 %v6153, 90
    %v6671 = vpop.permute.xlu0 %6670
    %6672 = vrot.lane.b32.xlu0 %v6154, 90
    %v6673 = vpop.permute.xlu0 %6672
    %6674 = vrot.lane.b32.xlu0 %v6155, 90
    %v6675 = vpop.permute.xlu0 %6674
    %6676 = vrot.lane.b32.xlu0 %v6156, 90
    %v6677 = vpop.permute.xlu0 %6676
    %6678 = vrot.lane.b32.xlu0 %v6157, 90
    %v6679 = vpop.permute.xlu0 %6678
    %6680 = vrot.lane.b32.xlu0 %v6158, 90
    %v6681 = vpop.permute.xlu0 %6680
    %6682 = vrot.lane.b32.xlu0 %v6159, 90
    %v6683 = vpop.permute.xlu0 %6682
    %v6684 = vsel %vm684, %v649, %v6651
    %v6685 = vsel %vm684, %v6651, %v6653
    %v6686 = vsel %vm684, %v6653, %v6655
    %v6687 = vsel %vm684, %v6655, %v6657
    %v6688 = vsel %vm684, %v6657, %v6659
    %v6689 = vsel %vm684, %v6659, %v6661
    %v6690 = vsel %vm684, %v6661, %v6663
    %v6691 = vsel %vm684, %v6663, %v6665
    %v6692 = vsel %vm684, %v6665, %v6667
    %v6693 = vsel %vm684, %v6667, %v6669
    %v6694 = vsel %vm684, %v6669, %v6671
    %v6695 = vsel %vm684, %v6671, %v6673
    %v6696 = vsel %vm684, %v6673, %v6675
    %v6697 = vsel %vm684, %v6675, %v6677
    %v6698 = vsel %vm684, %v6677, %v6679
    %v6699 = vsel %vm684, %v6679, %v6681
    %v6700 = vsel %vm684, %v6681, %v6683
    %6719 = vrot.lane.b32.xlu0 %v6177, 76
    %v6720 = vpop.permute.xlu0 %6719
    %6721 = vrot.lane.b32.xlu0 %v6144, 76
    %v6722 = vpop.permute.xlu0 %6721
    %6723 = vrot.lane.b32.xlu0 %v6145, 76
    %v6724 = vpop.permute.xlu0 %6723
    %6725 = vrot.lane.b32.xlu0 %v6146, 76
    %v6726 = vpop.permute.xlu0 %6725
    %6727 = vrot.lane.b32.xlu0 %v6147, 76
    %v6728 = vpop.permute.xlu0 %6727
    %6729 = vrot.lane.b32.xlu0 %v6148, 76
    %v6730 = vpop.permute.xlu0 %6729
    %6731 = vrot.lane.b32.xlu0 %v6149, 76
    %v6732 = vpop.permute.xlu0 %6731
    %6733 = vrot.lane.b32.xlu0 %v6150, 76
    %v6734 = vpop.permute.xlu0 %6733
    %6735 = vrot.lane.b32.xlu0 %v6151, 76
    %v6736 = vpop.permute.xlu0 %6735
    %6737 = vrot.lane.b32.xlu0 %v6152, 76
    %v6738 = vpop.permute.xlu0 %6737
    %6739 = vrot.lane.b32.xlu0 %v6153, 76
    %v6740 = vpop.permute.xlu0 %6739
    %6741 = vrot.lane.b32.xlu0 %v6154, 76
    %v6742 = vpop.permute.xlu0 %6741
    %6743 = vrot.lane.b32.xlu0 %v6155, 76
    %v6744 = vpop.permute.xlu0 %6743
    %6745 = vrot.lane.b32.xlu0 %v6156, 76
    %v6746 = vpop.permute.xlu0 %6745
    %6747 = vrot.lane.b32.xlu0 %v6157, 76
    %v6748 = vpop.permute.xlu0 %6747
    %6749 = vrot.lane.b32.xlu0 %v6158, 76
    %v6750 = vpop.permute.xlu0 %6749
    %6751 = vrot.lane.b32.xlu0 %v6159, 76
    %v6752 = vpop.permute.xlu0 %6751
    %6753 = vrot.lane.b32.xlu0 %v6178, 76
    %v6754 = vpop.permute.xlu0 %6753
    %v6755 = vsel %vm756, %v6720, %v6722
    %v6756 = vsel %vm756, %v6722, %v6724
    %v6757 = vsel %vm756, %v6724, %v6726
    %v6758 = vsel %vm756, %v6726, %v6728
    %v6759 = vsel %vm756, %v6728, %v6730
    %v6760 = vsel %vm756, %v6730, %v6732
    %v6761 = vsel %vm756, %v6732, %v6734
    %v6762 = vsel %vm756, %v6734, %v6736
    %v6763 = vsel %vm756, %v6736, %v6738
    %v6764 = vsel %vm756, %v6738, %v6740
    %v6765 = vsel %vm756, %v6740, %v6742
    %v6766 = vsel %vm756, %v6742, %v6744
    %v6767 = vsel %vm756, %v6744, %v6746
    %v6768 = vsel %vm756, %v6746, %v6748
    %v6769 = vsel %vm756, %v6748, %v6750
    %v6770 = vsel %vm756, %v6750, %v6752
    %v6771 = vsel %vm756, %v6752, %v6754
    %6789 = vrot.lane.b32.xlu0 %v6177, 75
    %v6790 = vpop.permute.xlu0 %6789
    %6791 = vrot.lane.b32.xlu0 %v6144, 75
    %v6792 = vpop.permute.xlu0 %6791
    %6793 = vrot.lane.b32.xlu0 %v6145, 75
    %v6794 = vpop.permute.xlu0 %6793
    %6795 = vrot.lane.b32.xlu0 %v6146, 75
    %v6796 = vpop.permute.xlu0 %6795
    %6797 = vrot.lane.b32.xlu0 %v6147, 75
    %v6798 = vpop.permute.xlu0 %6797
    %6799 = vrot.lane.b32.xlu0 %v6148, 75
    %v6800 = vpop.permute.xlu0 %6799
    %6801 = vrot.lane.b32.xlu0 %v6149, 75
    %v6802 = vpop.permute.xlu0 %6801
    %6803 = vrot.lane.b32.xlu0 %v6150, 75
    %v6804 = vpop.permute.xlu0 %6803
    %6805 = vrot.lane.b32.xlu0 %v6151, 75
    %v6806 = vpop.permute.xlu0 %6805
    %6807 = vrot.lane.b32.xlu0 %v6152, 75
    %v6808 = vpop.permute.xlu0 %6807
    %6809 = vrot.lane.b32.xlu0 %v6153, 75
    %v6810 = vpop.permute.xlu0 %6809
    %6811 = vrot.lane.b32.xlu0 %v6154, 75
    %v6812 = vpop.permute.xlu0 %6811
    %6813 = vrot.lane.b32.xlu0 %v6155, 75
    %v6814 = vpop.permute.xlu0 %6813
    %6815 = vrot.lane.b32.xlu0 %v6156, 75
    %v6816 = vpop.permute.xlu0 %6815
    %6817 = vrot.lane.b32.xlu0 %v6157, 75
    %v6818 = vpop.permute.xlu0 %6817
    %6819 = vrot.lane.b32.xlu0 %v6158, 75
    %v6820 = vpop.permute.xlu0 %6819
    %6821 = vrot.lane.b32.xlu0 %v6159, 75
    %v6822 = vpop.permute.xlu0 %6821
    %6823 = vrot.lane.b32.xlu0 %v6178, 75
    %v6824 = vpop.permute.xlu0 %6823
    %v6825 = vsel %vm827, %v6790, %v6792
    %v6826 = vsel %vm827, %v6792, %v6794
    %v6827 = vsel %vm827, %v6794, %v6796
    %v6828 = vsel %vm827, %v6796, %v6798
    %v6829 = vsel %vm827, %v6798, %v6800
    %v6830 = vsel %vm827, %v6800, %v6802
    %v6831 = vsel %vm827, %v6802, %v6804
    %v6832 = vsel %vm827, %v6804, %v6806
    %v6833 = vsel %vm827, %v6806, %v6808
    %v6834 = vsel %vm827, %v6808, %v6810
    %v6835 = vsel %vm827, %v6810, %v6812
    %v6836 = vsel %vm827, %v6812, %v6814
    %v6837 = vsel %vm827, %v6814, %v6816
    %v6838 = vsel %vm827, %v6816, %v6818
    %v6839 = vsel %vm827, %v6818, %v6820
    %v6840 = vsel %vm827, %v6820, %v6822
    %v6841 = vsel %vm827, %v6822, %v6824
    %6859 = vrot.lane.b32.xlu0 %v6177, 74
    %v6860 = vpop.permute.xlu0 %6859
    %6861 = vrot.lane.b32.xlu0 %v6144, 74
    %v6862 = vpop.permute.xlu0 %6861
    %6863 = vrot.lane.b32.xlu0 %v6145, 74
    %v6864 = vpop.permute.xlu0 %6863
    %6865 = vrot.lane.b32.xlu0 %v6146, 74
    %v6866 = vpop.permute.xlu0 %6865
    %6867 = vrot.lane.b32.xlu0 %v6147, 74
    %v6868 = vpop.permute.xlu0 %6867
    %6869 = vrot.lane.b32.xlu0 %v6148, 74
    %v6870 = vpop.permute.xlu0 %6869
    %6871 = vrot.lane.b32.xlu0 %v6149, 74
    %v6872 = vpop.permute.xlu0 %6871
    %6873 = vrot.lane.b32.xlu0 %v6150, 74
    %v6874 = vpop.permute.xlu0 %6873
    %6875 = vrot.lane.b32.xlu0 %v6151, 74
    %v6876 = vpop.permute.xlu0 %6875
    %6877 = vrot.lane.b32.xlu0 %v6152, 74
    %v6878 = vpop.permute.xlu0 %6877
    %6879 = vrot.lane.b32.xlu0 %v6153, 74
    %v6880 = vpop.permute.xlu0 %6879
    %6881 = vrot.lane.b32.xlu0 %v6154, 74
    %v6882 = vpop.permute.xlu0 %6881
    %6883 = vrot.lane.b32.xlu0 %v6155, 74
    %v6884 = vpop.permute.xlu0 %6883
    %6885 = vrot.lane.b32.xlu0 %v6156, 74
    %v6886 = vpop.permute.xlu0 %6885
    %6887 = vrot.lane.b32.xlu0 %v6157, 74
    %v6888 = vpop.permute.xlu0 %6887
    %6889 = vrot.lane.b32.xlu0 %v6158, 74
    %v6890 = vpop.permute.xlu0 %6889
    %6891 = vrot.lane.b32.xlu0 %v6159, 74
    %v6892 = vpop.permute.xlu0 %6891
    %6893 = vrot.lane.b32.xlu0 %v6178, 74
    %v6894 = vpop.permute.xlu0 %6893
    %v6895 = vsel %vm898, %v6860, %v6862
    %v6896 = vsel %vm898, %v6862, %v6864
    %v6897 = vsel %vm898, %v6864, %v6866
    %v6898 = vsel %vm898, %v6866, %v6868
    %v6899 = vsel %vm898, %v6868, %v6870
    %v6900 = vsel %vm898, %v6870, %v6872
    %v6901 = vsel %vm898, %v6872, %v6874
    %v6902 = vsel %vm898, %v6874, %v6876
    %v6903 = vsel %vm898, %v6876, %v6878
    %v6904 = vsel %vm898, %v6878, %v6880
    %v6905 = vsel %vm898, %v6880, %v6882
    %v6906 = vsel %vm898, %v6882, %v6884
    %v6907 = vsel %vm898, %v6884, %v6886
    %v6908 = vsel %vm898, %v6886, %v6888
    %v6909 = vsel %vm898, %v6888, %v6890
    %v6910 = vsel %vm898, %v6890, %v6892
    %v6911 = vsel %vm898, %v6892, %v6894
    %6929 = vrot.lane.b32.xlu0 %v6177, 58
    %v6930 = vpop.permute.xlu0 %6929
    %6931 = vrot.lane.b32.xlu0 %v6144, 58
    %v6932 = vpop.permute.xlu0 %6931
    %6933 = vrot.lane.b32.xlu0 %v6145, 58
    %v6934 = vpop.permute.xlu0 %6933
    %6935 = vrot.lane.b32.xlu0 %v6146, 58
    %v6936 = vpop.permute.xlu0 %6935
    %6937 = vrot.lane.b32.xlu0 %v6147, 58
    %v6938 = vpop.permute.xlu0 %6937
    %6939 = vrot.lane.b32.xlu0 %v6148, 58
    %v6940 = vpop.permute.xlu0 %6939
    %6941 = vrot.lane.b32.xlu0 %v6149, 58
    %v6942 = vpop.permute.xlu0 %6941
    %6943 = vrot.lane.b32.xlu0 %v6150, 58
    %v6944 = vpop.permute.xlu0 %6943
    %6945 = vrot.lane.b32.xlu0 %v6151, 58
    %v6946 = vpop.permute.xlu0 %6945
    %6947 = vrot.lane.b32.xlu0 %v6152, 58
    %v6948 = vpop.permute.xlu0 %6947
    %6949 = vrot.lane.b32.xlu0 %v6153, 58
    %v6950 = vpop.permute.xlu0 %6949
    %6951 = vrot.lane.b32.xlu0 %v6154, 58
    %v6952 = vpop.permute.xlu0 %6951
    %6953 = vrot.lane.b32.xlu0 %v6155, 58
    %v6954 = vpop.permute.xlu0 %6953
    %6955 = vrot.lane.b32.xlu0 %v6156, 58
    %v6956 = vpop.permute.xlu0 %6955
    %6957 = vrot.lane.b32.xlu0 %v6157, 58
    %v6958 = vpop.permute.xlu0 %6957
    %6959 = vrot.lane.b32.xlu0 %v6158, 58
    %v6960 = vpop.permute.xlu0 %6959
    %6961 = vrot.lane.b32.xlu0 %v6159, 58
    %v6962 = vpop.permute.xlu0 %6961
    %6963 = vrot.lane.b32.xlu0 %v6178, 58
    %v6964 = vpop.permute.xlu0 %6963
    %v6965 = vsel %vm969, %v6930, %v6932
    %v6966 = vsel %vm969, %v6932, %v6934
    %v6967 = vsel %vm969, %v6934, %v6936
    %v6968 = vsel %vm969, %v6936, %v6938
    %v6969 = vsel %vm969, %v6938, %v6940
    %v6970 = vsel %vm969, %v6940, %v6942
    %v6971 = vsel %vm969, %v6942, %v6944
    %v6972 = vsel %vm969, %v6944, %v6946
    %v6973 = vsel %vm969, %v6946, %v6948
    %v6974 = vsel %vm969, %v6948, %v6950
    %v6975 = vsel %vm969, %v6950, %v6952
    %v6976 = vsel %vm969, %v6952, %v6954
    %v6977 = vsel %vm969, %v6954, %v6956
    %v6978 = vsel %vm969, %v6956, %v6958
    %v6979 = vsel %vm969, %v6958, %v6960
    %v6980 = vsel %vm969, %v6960, %v6962
    %v6981 = vsel %vm969, %v6962, %v6964
    %6999 = vrot.lane.b32.xlu0 %v6177, 57
    %v7000 = vpop.permute.xlu0 %6999
    %7001 = vrot.lane.b32.xlu0 %v6144, 57
    %v7002 = vpop.permute.xlu0 %7001
    %7003 = vrot.lane.b32.xlu0 %v6145, 57
    %v7004 = vpop.permute.xlu0 %7003
    %7005 = vrot.lane.b32.xlu0 %v6146, 57
    %v7006 = vpop.permute.xlu0 %7005
    %7007 = vrot.lane.b32.xlu0 %v6147, 57
    %v7008 = vpop.permute.xlu0 %7007
    %7009 = vrot.lane.b32.xlu0 %v6148, 57
    %v7010 = vpop.permute.xlu0 %7009
    %7011 = vrot.lane.b32.xlu0 %v6149, 57
    %v7012 = vpop.permute.xlu0 %7011
    %7013 = vrot.lane.b32.xlu0 %v6150, 57
    %v7014 = vpop.permute.xlu0 %7013
    %7015 = vrot.lane.b32.xlu0 %v6151, 57
    %v7016 = vpop.permute.xlu0 %7015
    %7017 = vrot.lane.b32.xlu0 %v6152, 57
    %v7018 = vpop.permute.xlu0 %7017
    %7019 = vrot.lane.b32.xlu0 %v6153, 57
    %v7020 = vpop.permute.xlu0 %7019
    %7021 = vrot.lane.b32.xlu0 %v6154, 57
    %v7022 = vpop.permute.xlu0 %7021
    %7023 = vrot.lane.b32.xlu0 %v6155, 57
    %v7024 = vpop.permute.xlu0 %7023
    %7025 = vrot.lane.b32.xlu0 %v6156, 57
    %v7026 = vpop.permute.xlu0 %7025
    %7027 = vrot.lane.b32.xlu0 %v6157, 57
    %v7028 = vpop.permute.xlu0 %7027
    %7029 = vrot.lane.b32.xlu0 %v6158, 57
    %v7030 = vpop.permute.xlu0 %7029
    %7031 = vrot.lane.b32.xlu0 %v6159, 57
    %v7032 = vpop.permute.xlu0 %7031
    %7033 = vrot.lane.b32.xlu0 %v6178, 57
    %v7034 = vpop.permute.xlu0 %7033
    %v7035 = vsel %vm1040, %v7000, %v7002
    %v7036 = vsel %vm1040, %v7002, %v7004
    %v7037 = vsel %vm1040, %v7004, %v7006
    %v7038 = vsel %vm1040, %v7006, %v7008
    %v7039 = vsel %vm1040, %v7008, %v7010
    %v7040 = vsel %vm1040, %v7010, %v7012
    %v7041 = vsel %vm1040, %v7012, %v7014
    %v7042 = vsel %vm1040, %v7014, %v7016
    %v7043 = vsel %vm1040, %v7016, %v7018
    %v7044 = vsel %vm1040, %v7018, %v7020
    %v7045 = vsel %vm1040, %v7020, %v7022
    %v7046 = vsel %vm1040, %v7022, %v7024
    %v7047 = vsel %vm1040, %v7024, %v7026
    %v7048 = vsel %vm1040, %v7026, %v7028
    %v7049 = vsel %vm1040, %v7028, %v7030
    %v7050 = vsel %vm1040, %v7030, %v7032
    %v7051 = vsel %vm1040, %v7032, %v7034
    %7069 = vrot.lane.b32.xlu0 %v6177, 56
    %v7070 = vpop.permute.xlu0 %7069
    %7071 = vrot.lane.b32.xlu0 %v6144, 56
    %v7072 = vpop.permute.xlu0 %7071
    %7073 = vrot.lane.b32.xlu0 %v6145, 56
    %v7074 = vpop.permute.xlu0 %7073
    %7075 = vrot.lane.b32.xlu0 %v6146, 56
    %v7076 = vpop.permute.xlu0 %7075
    %7077 = vrot.lane.b32.xlu0 %v6147, 56
    %v7078 = vpop.permute.xlu0 %7077
    %7079 = vrot.lane.b32.xlu0 %v6148, 56
    %v7080 = vpop.permute.xlu0 %7079
    %7081 = vrot.lane.b32.xlu0 %v6149, 56
    %v7082 = vpop.permute.xlu0 %7081
    %7083 = vrot.lane.b32.xlu0 %v6150, 56
    %v7084 = vpop.permute.xlu0 %7083
    %7085 = vrot.lane.b32.xlu0 %v6151, 56
    %v7086 = vpop.permute.xlu0 %7085
    %7087 = vrot.lane.b32.xlu0 %v6152, 56
    %v7088 = vpop.permute.xlu0 %7087
    %7089 = vrot.lane.b32.xlu0 %v6153, 56
    %v7090 = vpop.permute.xlu0 %7089
    %7091 = vrot.lane.b32.xlu0 %v6154, 56
    %v7092 = vpop.permute.xlu0 %7091
    %7093 = vrot.lane.b32.xlu0 %v6155, 56
    %v7094 = vpop.permute.xlu0 %7093
    %7095 = vrot.lane.b32.xlu0 %v6156, 56
    %v7096 = vpop.permute.xlu0 %7095
    %7097 = vrot.lane.b32.xlu0 %v6157, 56
    %v7098 = vpop.permute.xlu0 %7097
    %7099 = vrot.lane.b32.xlu0 %v6158, 56
    %v7100 = vpop.permute.xlu0 %7099
    %7101 = vrot.lane.b32.xlu0 %v6159, 56
    %v7102 = vpop.permute.xlu0 %7101
    %7103 = vrot.lane.b32.xlu0 %v6178, 56
    %v7104 = vpop.permute.xlu0 %7103
    %v7105 = vsel %vm1111, %v7070, %v7072
    %v7106 = vsel %vm1111, %v7072, %v7074
    %v7107 = vsel %vm1111, %v7074, %v7076
    %v7108 = vsel %vm1111, %v7076, %v7078
    %v7109 = vsel %vm1111, %v7078, %v7080
    %v7110 = vsel %vm1111, %v7080, %v7082
    %v7111 = vsel %vm1111, %v7082, %v7084
    %v7112 = vsel %vm1111, %v7084, %v7086
    %v7113 = vsel %vm1111, %v7086, %v7088
    %v7114 = vsel %vm1111, %v7088, %v7090
    %v7115 = vsel %vm1111, %v7090, %v7092
    %v7116 = vsel %vm1111, %v7092, %v7094
    %v7117 = vsel %vm1111, %v7094, %v7096
    %v7118 = vsel %vm1111, %v7096, %v7098
    %v7119 = vsel %vm1111, %v7098, %v7100
    %v7120 = vsel %vm1111, %v7100, %v7102
    %v7121 = vsel %vm1111, %v7102, %v7104
    %7139 = vrot.lane.b32.xlu0 %v6177, 40
    %v7140 = vpop.permute.xlu0 %7139
    %7141 = vrot.lane.b32.xlu0 %v6144, 40
    %v7142 = vpop.permute.xlu0 %7141
    %7143 = vrot.lane.b32.xlu0 %v6145, 40
    %v7144 = vpop.permute.xlu0 %7143
    %7145 = vrot.lane.b32.xlu0 %v6146, 40
    %v7146 = vpop.permute.xlu0 %7145
    %7147 = vrot.lane.b32.xlu0 %v6147, 40
    %v7148 = vpop.permute.xlu0 %7147
    %7149 = vrot.lane.b32.xlu0 %v6148, 40
    %v7150 = vpop.permute.xlu0 %7149
    %7151 = vrot.lane.b32.xlu0 %v6149, 40
    %v7152 = vpop.permute.xlu0 %7151
    %7153 = vrot.lane.b32.xlu0 %v6150, 40
    %v7154 = vpop.permute.xlu0 %7153
    %7155 = vrot.lane.b32.xlu0 %v6151, 40
    %v7156 = vpop.permute.xlu0 %7155
    %7157 = vrot.lane.b32.xlu0 %v6152, 40
    %v7158 = vpop.permute.xlu0 %7157
    %7159 = vrot.lane.b32.xlu0 %v6153, 40
    %v7160 = vpop.permute.xlu0 %7159
    %7161 = vrot.lane.b32.xlu0 %v6154, 40
    %v7162 = vpop.permute.xlu0 %7161
    %7163 = vrot.lane.b32.xlu0 %v6155, 40
    %v7164 = vpop.permute.xlu0 %7163
    %7165 = vrot.lane.b32.xlu0 %v6156, 40
    %v7166 = vpop.permute.xlu0 %7165
    %7167 = vrot.lane.b32.xlu0 %v6157, 40
    %v7168 = vpop.permute.xlu0 %7167
    %7169 = vrot.lane.b32.xlu0 %v6158, 40
    %v7170 = vpop.permute.xlu0 %7169
    %7171 = vrot.lane.b32.xlu0 %v6159, 40
    %v7172 = vpop.permute.xlu0 %7171
    %7173 = vrot.lane.b32.xlu0 %v6178, 40
    %v7174 = vpop.permute.xlu0 %7173
    %v7175 = vsel %vm1182, %v7140, %v7142
    %v7176 = vsel %vm1182, %v7142, %v7144
    %v7177 = vsel %vm1182, %v7144, %v7146
    %v7178 = vsel %vm1182, %v7146, %v7148
    %v7179 = vsel %vm1182, %v7148, %v7150
    %v7180 = vsel %vm1182, %v7150, %v7152
    %v7181 = vsel %vm1182, %v7152, %v7154
    %v7182 = vsel %vm1182, %v7154, %v7156
    %v7183 = vsel %vm1182, %v7156, %v7158
    %v7184 = vsel %vm1182, %v7158, %v7160
    %v7185 = vsel %vm1182, %v7160, %v7162
    %v7186 = vsel %vm1182, %v7162, %v7164
    %v7187 = vsel %vm1182, %v7164, %v7166
    %v7188 = vsel %vm1182, %v7166, %v7168
    %v7189 = vsel %vm1182, %v7168, %v7170
    %v7190 = vsel %vm1182, %v7170, %v7172
    %v7191 = vsel %vm1182, %v7172, %v7174
    %7209 = vrot.lane.b32.xlu0 %v6159, 127
    %v7210 = vpop.permute.xlu0 %7209
    %7211 = vrot.lane.b32.xlu0 %v6178, 127
    %v7212 = vpop.permute.xlu0 %7211
    %v7213 = vsel %vm191, %v6211, %v7210
    %v7214 = vsel %vm191, %v7210, %v7212
    %7215 = vrot.lane.b32.xlu0 %v6144, 113
    %v7216 = vpop.permute.xlu0 %7215
    %7217 = vrot.lane.b32.xlu0 %v6145, 113
    %v7218 = vpop.permute.xlu0 %7217
    %7219 = vrot.lane.b32.xlu0 %v6146, 113
    %v7220 = vpop.permute.xlu0 %7219
    %7221 = vrot.lane.b32.xlu0 %v6147, 113
    %v7222 = vpop.permute.xlu0 %7221
    %7223 = vrot.lane.b32.xlu0 %v6148, 113
    %v7224 = vpop.permute.xlu0 %7223
    %7225 = vrot.lane.b32.xlu0 %v6149, 113
    %v7226 = vpop.permute.xlu0 %7225
    %7227 = vrot.lane.b32.xlu0 %v6150, 113
    %v7228 = vpop.permute.xlu0 %7227
    %7229 = vrot.lane.b32.xlu0 %v6151, 113
    %v7230 = vpop.permute.xlu0 %7229
    %7231 = vrot.lane.b32.xlu0 %v6152, 113
    %v7232 = vpop.permute.xlu0 %7231
    %7233 = vrot.lane.b32.xlu0 %v6153, 113
    %v7234 = vpop.permute.xlu0 %7233
    %7235 = vrot.lane.b32.xlu0 %v6154, 113
    %v7236 = vpop.permute.xlu0 %7235
    %7237 = vrot.lane.b32.xlu0 %v6155, 113
    %v7238 = vpop.permute.xlu0 %7237
    %7239 = vrot.lane.b32.xlu0 %v6156, 113
    %v7240 = vpop.permute.xlu0 %7239
    %7241 = vrot.lane.b32.xlu0 %v6157, 113
    %v7242 = vpop.permute.xlu0 %7241
    %7243 = vrot.lane.b32.xlu0 %v6158, 113
    %v7244 = vpop.permute.xlu0 %7243
    %7245 = vrot.lane.b32.xlu0 %v6159, 113
    %v7246 = vpop.permute.xlu0 %7245
    %7247 = vrot.lane.b32.xlu0 %v6178, 113
    %v7248 = vpop.permute.xlu0 %7247
    %v7249 = vsel %vm1259, %v7216, %v7218
    %v7250 = vsel %vm1259, %v7218, %v7220
    %v7251 = vsel %vm1259, %v7220, %v7222
    %v7252 = vsel %vm1259, %v7222, %v7224
    %v7253 = vsel %vm1259, %v7224, %v7226
    %v7254 = vsel %vm1259, %v7226, %v7228
    %v7255 = vsel %vm1259, %v7228, %v7230
    %v7256 = vsel %vm1259, %v7230, %v7232
    %v7257 = vsel %vm1259, %v7232, %v7234
    %v7258 = vsel %vm1259, %v7234, %v7236
    %v7259 = vsel %vm1259, %v7236, %v7238
    %v7260 = vsel %vm1259, %v7238, %v7240
    %v7261 = vsel %vm1259, %v7240, %v7242
    %v7262 = vsel %vm1259, %v7242, %v7244
    %v7263 = vsel %vm1259, %v7244, %v7246
    %v7264 = vsel %vm1259, %v7246, %v7248
    %v7265 = vsel %vm1259, %v7248, %v1258
    %7266 = vrot.lane.b32.xlu0 %v6144, 112
    %v7267 = vpop.permute.xlu0 %7266
    %7268 = vrot.lane.b32.xlu0 %v6145, 112
    %v7269 = vpop.permute.xlu0 %7268
    %7270 = vrot.lane.b32.xlu0 %v6146, 112
    %v7271 = vpop.permute.xlu0 %7270
    %7272 = vrot.lane.b32.xlu0 %v6147, 112
    %v7273 = vpop.permute.xlu0 %7272
    %7274 = vrot.lane.b32.xlu0 %v6148, 112
    %v7275 = vpop.permute.xlu0 %7274
    %7276 = vrot.lane.b32.xlu0 %v6149, 112
    %v7277 = vpop.permute.xlu0 %7276
    %7278 = vrot.lane.b32.xlu0 %v6150, 112
    %v7279 = vpop.permute.xlu0 %7278
    %7280 = vrot.lane.b32.xlu0 %v6151, 112
    %v7281 = vpop.permute.xlu0 %7280
    %7282 = vrot.lane.b32.xlu0 %v6152, 112
    %v7283 = vpop.permute.xlu0 %7282
    %7284 = vrot.lane.b32.xlu0 %v6153, 112
    %v7285 = vpop.permute.xlu0 %7284
    %7286 = vrot.lane.b32.xlu0 %v6154, 112
    %v7287 = vpop.permute.xlu0 %7286
    %7288 = vrot.lane.b32.xlu0 %v6155, 112
    %v7289 = vpop.permute.xlu0 %7288
    %7290 = vrot.lane.b32.xlu0 %v6156, 112
    %v7291 = vpop.permute.xlu0 %7290
    %7292 = vrot.lane.b32.xlu0 %v6157, 112
    %v7293 = vpop.permute.xlu0 %7292
    %7294 = vrot.lane.b32.xlu0 %v6158, 112
    %v7295 = vpop.permute.xlu0 %7294
    %7296 = vrot.lane.b32.xlu0 %v6159, 112
    %v7297 = vpop.permute.xlu0 %7296
    %7298 = vrot.lane.b32.xlu0 %v6178, 112
    %v7299 = vpop.permute.xlu0 %7298
    %v7300 = vsel %vm1313, %v7267, %v7269
    %v7301 = vsel %vm1313, %v7269, %v7271
    %v7302 = vsel %vm1313, %v7271, %v7273
    %v7303 = vsel %vm1313, %v7273, %v7275
    %v7304 = vsel %vm1313, %v7275, %v7277
    %v7305 = vsel %vm1313, %v7277, %v7279
    %v7306 = vsel %vm1313, %v7279, %v7281
    %v7307 = vsel %vm1313, %v7281, %v7283
    %v7308 = vsel %vm1313, %v7283, %v7285
    %v7309 = vsel %vm1313, %v7285, %v7287
    %v7310 = vsel %vm1313, %v7287, %v7289
    %v7311 = vsel %vm1313, %v7289, %v7291
    %v7312 = vsel %vm1313, %v7291, %v7293
    %v7313 = vsel %vm1313, %v7293, %v7295
    %v7314 = vsel %vm1313, %v7295, %v7297
    %v7315 = vsel %vm1313, %v7297, %v7299
    %v7316 = vsel %vm1313, %v7299, %v1312
    %7317 = vrot.lane.b32.xlu0 %v6144, 111
    %v7318 = vpop.permute.xlu0 %7317
    %7319 = vrot.lane.b32.xlu0 %v6145, 111
    %v7320 = vpop.permute.xlu0 %7319
    %7321 = vrot.lane.b32.xlu0 %v6146, 111
    %v7322 = vpop.permute.xlu0 %7321
    %7323 = vrot.lane.b32.xlu0 %v6147, 111
    %v7324 = vpop.permute.xlu0 %7323
    %7325 = vrot.lane.b32.xlu0 %v6148, 111
    %v7326 = vpop.permute.xlu0 %7325
    %7327 = vrot.lane.b32.xlu0 %v6149, 111
    %v7328 = vpop.permute.xlu0 %7327
    %7329 = vrot.lane.b32.xlu0 %v6150, 111
    %v7330 = vpop.permute.xlu0 %7329
    %7331 = vrot.lane.b32.xlu0 %v6151, 111
    %v7332 = vpop.permute.xlu0 %7331
    %7333 = vrot.lane.b32.xlu0 %v6152, 111
    %v7334 = vpop.permute.xlu0 %7333
    %7335 = vrot.lane.b32.xlu0 %v6153, 111
    %v7336 = vpop.permute.xlu0 %7335
    %7337 = vrot.lane.b32.xlu0 %v6154, 111
    %v7338 = vpop.permute.xlu0 %7337
    %7339 = vrot.lane.b32.xlu0 %v6155, 111
    %v7340 = vpop.permute.xlu0 %7339
    %7341 = vrot.lane.b32.xlu0 %v6156, 111
    %v7342 = vpop.permute.xlu0 %7341
    %7343 = vrot.lane.b32.xlu0 %v6157, 111
    %v7344 = vpop.permute.xlu0 %7343
    %7345 = vrot.lane.b32.xlu0 %v6158, 111
    %v7346 = vpop.permute.xlu0 %7345
    %7347 = vrot.lane.b32.xlu0 %v6159, 111
    %v7348 = vpop.permute.xlu0 %7347
    %7349 = vrot.lane.b32.xlu0 %v6178, 111
    %v7350 = vpop.permute.xlu0 %7349
    %v7351 = vsel %vm1367, %v7318, %v7320
    %v7352 = vsel %vm1367, %v7320, %v7322
    %v7353 = vsel %vm1367, %v7322, %v7324
    %v7354 = vsel %vm1367, %v7324, %v7326
    %v7355 = vsel %vm1367, %v7326, %v7328
    %v7356 = vsel %vm1367, %v7328, %v7330
    %v7357 = vsel %vm1367, %v7330, %v7332
    %v7358 = vsel %vm1367, %v7332, %v7334
    %v7359 = vsel %vm1367, %v7334, %v7336
    %v7360 = vsel %vm1367, %v7336, %v7338
    %v7361 = vsel %vm1367, %v7338, %v7340
    %v7362 = vsel %vm1367, %v7340, %v7342
    %v7363 = vsel %vm1367, %v7342, %v7344
    %v7364 = vsel %vm1367, %v7344, %v7346
    %v7365 = vsel %vm1367, %v7346, %v7348
    %v7366 = vsel %vm1367, %v7348, %v7350
    %v7367 = vsel %vm1367, %v7350, %v1366
    %7368 = vrot.lane.b32.xlu0 %v6144, 95
    %v7369 = vpop.permute.xlu0 %7368
    %7370 = vrot.lane.b32.xlu0 %v6145, 95
    %v7371 = vpop.permute.xlu0 %7370
    %7372 = vrot.lane.b32.xlu0 %v6146, 95
    %v7373 = vpop.permute.xlu0 %7372
    %7374 = vrot.lane.b32.xlu0 %v6147, 95
    %v7375 = vpop.permute.xlu0 %7374
    %7376 = vrot.lane.b32.xlu0 %v6148, 95
    %v7377 = vpop.permute.xlu0 %7376
    %7378 = vrot.lane.b32.xlu0 %v6149, 95
    %v7379 = vpop.permute.xlu0 %7378
    %7380 = vrot.lane.b32.xlu0 %v6150, 95
    %v7381 = vpop.permute.xlu0 %7380
    %7382 = vrot.lane.b32.xlu0 %v6151, 95
    %v7383 = vpop.permute.xlu0 %7382
    %7384 = vrot.lane.b32.xlu0 %v6152, 95
    %v7385 = vpop.permute.xlu0 %7384
    %7386 = vrot.lane.b32.xlu0 %v6153, 95
    %v7387 = vpop.permute.xlu0 %7386
    %7388 = vrot.lane.b32.xlu0 %v6154, 95
    %v7389 = vpop.permute.xlu0 %7388
    %7390 = vrot.lane.b32.xlu0 %v6155, 95
    %v7391 = vpop.permute.xlu0 %7390
    %7392 = vrot.lane.b32.xlu0 %v6156, 95
    %v7393 = vpop.permute.xlu0 %7392
    %7394 = vrot.lane.b32.xlu0 %v6157, 95
    %v7395 = vpop.permute.xlu0 %7394
    %7396 = vrot.lane.b32.xlu0 %v6158, 95
    %v7397 = vpop.permute.xlu0 %7396
    %7398 = vrot.lane.b32.xlu0 %v6159, 95
    %v7399 = vpop.permute.xlu0 %7398
    %7400 = vrot.lane.b32.xlu0 %v6178, 95
    %v7401 = vpop.permute.xlu0 %7400
    %v7402 = vsel %vm1421, %v7369, %v7371
    %v7403 = vsel %vm1421, %v7371, %v7373
    %v7404 = vsel %vm1421, %v7373, %v7375
    %v7405 = vsel %vm1421, %v7375, %v7377
    %v7406 = vsel %vm1421, %v7377, %v7379
    %v7407 = vsel %vm1421, %v7379, %v7381
    %v7408 = vsel %vm1421, %v7381, %v7383
    %v7409 = vsel %vm1421, %v7383, %v7385
    %v7410 = vsel %vm1421, %v7385, %v7387
    %v7411 = vsel %vm1421, %v7387, %v7389
    %v7412 = vsel %vm1421, %v7389, %v7391
    %v7413 = vsel %vm1421, %v7391, %v7393
    %v7414 = vsel %vm1421, %v7393, %v7395
    %v7415 = vsel %vm1421, %v7395, %v7397
    %v7416 = vsel %vm1421, %v7397, %v7399
    %v7417 = vsel %vm1421, %v7399, %v7401
    %v7418 = vsel %vm1421, %v7401, %v1420
    %7419 = vrot.lane.b32.xlu0 %v6144, 94
    %v7420 = vpop.permute.xlu0 %7419
    %7421 = vrot.lane.b32.xlu0 %v6145, 94
    %v7422 = vpop.permute.xlu0 %7421
    %7423 = vrot.lane.b32.xlu0 %v6146, 94
    %v7424 = vpop.permute.xlu0 %7423
    %7425 = vrot.lane.b32.xlu0 %v6147, 94
    %v7426 = vpop.permute.xlu0 %7425
    %7427 = vrot.lane.b32.xlu0 %v6148, 94
    %v7428 = vpop.permute.xlu0 %7427
    %7429 = vrot.lane.b32.xlu0 %v6149, 94
    %v7430 = vpop.permute.xlu0 %7429
    %7431 = vrot.lane.b32.xlu0 %v6150, 94
    %v7432 = vpop.permute.xlu0 %7431
    %7433 = vrot.lane.b32.xlu0 %v6151, 94
    %v7434 = vpop.permute.xlu0 %7433
    %7435 = vrot.lane.b32.xlu0 %v6152, 94
    %v7436 = vpop.permute.xlu0 %7435
    %7437 = vrot.lane.b32.xlu0 %v6153, 94
    %v7438 = vpop.permute.xlu0 %7437
    %7439 = vrot.lane.b32.xlu0 %v6154, 94
    %v7440 = vpop.permute.xlu0 %7439
    %7441 = vrot.lane.b32.xlu0 %v6155, 94
    %v7442 = vpop.permute.xlu0 %7441
    %7443 = vrot.lane.b32.xlu0 %v6156, 94
    %v7444 = vpop.permute.xlu0 %7443
    %7445 = vrot.lane.b32.xlu0 %v6157, 94
    %v7446 = vpop.permute.xlu0 %7445
    %7447 = vrot.lane.b32.xlu0 %v6158, 94
    %v7448 = vpop.permute.xlu0 %7447
    %7449 = vrot.lane.b32.xlu0 %v6159, 94
    %v7450 = vpop.permute.xlu0 %7449
    %7451 = vrot.lane.b32.xlu0 %v6178, 94
    %v7452 = vpop.permute.xlu0 %7451
    %v7453 = vsel %vm1475, %v7420, %v7422
    %v7454 = vsel %vm1475, %v7422, %v7424
    %v7455 = vsel %vm1475, %v7424, %v7426
    %v7456 = vsel %vm1475, %v7426, %v7428
    %v7457 = vsel %vm1475, %v7428, %v7430
    %v7458 = vsel %vm1475, %v7430, %v7432
    %v7459 = vsel %vm1475, %v7432, %v7434
    %v7460 = vsel %vm1475, %v7434, %v7436
    %v7461 = vsel %vm1475, %v7436, %v7438
    %v7462 = vsel %vm1475, %v7438, %v7440
    %v7463 = vsel %vm1475, %v7440, %v7442
    %v7464 = vsel %vm1475, %v7442, %v7444
    %v7465 = vsel %vm1475, %v7444, %v7446
    %v7466 = vsel %vm1475, %v7446, %v7448
    %v7467 = vsel %vm1475, %v7448, %v7450
    %v7468 = vsel %vm1475, %v7450, %v7452
    %v7469 = vsel %vm1475, %v7452, %v1474
    %7470 = vrot.lane.b32.xlu0 %v6144, 93
    %v7471 = vpop.permute.xlu0 %7470
    %7472 = vrot.lane.b32.xlu0 %v6145, 93
    %v7473 = vpop.permute.xlu0 %7472
    %7474 = vrot.lane.b32.xlu0 %v6146, 93
    %v7475 = vpop.permute.xlu0 %7474
    %7476 = vrot.lane.b32.xlu0 %v6147, 93
    %v7477 = vpop.permute.xlu0 %7476
    %7478 = vrot.lane.b32.xlu0 %v6148, 93
    %v7479 = vpop.permute.xlu0 %7478
    %7480 = vrot.lane.b32.xlu0 %v6149, 93
    %v7481 = vpop.permute.xlu0 %7480
    %7482 = vrot.lane.b32.xlu0 %v6150, 93
    %v7483 = vpop.permute.xlu0 %7482
    %7484 = vrot.lane.b32.xlu0 %v6151, 93
    %v7485 = vpop.permute.xlu0 %7484
    %7486 = vrot.lane.b32.xlu0 %v6152, 93
    %v7487 = vpop.permute.xlu0 %7486
    %7488 = vrot.lane.b32.xlu0 %v6153, 93
    %v7489 = vpop.permute.xlu0 %7488
    %7490 = vrot.lane.b32.xlu0 %v6154, 93
    %v7491 = vpop.permute.xlu0 %7490
    %7492 = vrot.lane.b32.xlu0 %v6155, 93
    %v7493 = vpop.permute.xlu0 %7492
    %7494 = vrot.lane.b32.xlu0 %v6156, 93
    %v7495 = vpop.permute.xlu0 %7494
    %7496 = vrot.lane.b32.xlu0 %v6157, 93
    %v7497 = vpop.permute.xlu0 %7496
    %7498 = vrot.lane.b32.xlu0 %v6158, 93
    %v7499 = vpop.permute.xlu0 %7498
    %7500 = vrot.lane.b32.xlu0 %v6159, 93
    %v7501 = vpop.permute.xlu0 %7500
    %7502 = vrot.lane.b32.xlu0 %v6178, 93
    %v7503 = vpop.permute.xlu0 %7502
    %v7504 = vsel %vm1529, %v7471, %v7473
    %v7505 = vsel %vm1529, %v7473, %v7475
    %v7506 = vsel %vm1529, %v7475, %v7477
    %v7507 = vsel %vm1529, %v7477, %v7479
    %v7508 = vsel %vm1529, %v7479, %v7481
    %v7509 = vsel %vm1529, %v7481, %v7483
    %v7510 = vsel %vm1529, %v7483, %v7485
    %v7511 = vsel %vm1529, %v7485, %v7487
    %v7512 = vsel %vm1529, %v7487, %v7489
    %v7513 = vsel %vm1529, %v7489, %v7491
    %v7514 = vsel %vm1529, %v7491, %v7493
    %v7515 = vsel %vm1529, %v7493, %v7495
    %v7516 = vsel %vm1529, %v7495, %v7497
    %v7517 = vsel %vm1529, %v7497, %v7499
    %v7518 = vsel %vm1529, %v7499, %v7501
    %v7519 = vsel %vm1529, %v7501, %v7503
    %v7520 = vsel %vm1529, %v7503, %v1528
    %7521 = vrot.lane.b32.xlu0 %v6145, 77
    %v7522 = vpop.permute.xlu0 %7521
    %7523 = vrot.lane.b32.xlu0 %v6146, 77
    %v7524 = vpop.permute.xlu0 %7523
    %7525 = vrot.lane.b32.xlu0 %v6147, 77
    %v7526 = vpop.permute.xlu0 %7525
    %7527 = vrot.lane.b32.xlu0 %v6148, 77
    %v7528 = vpop.permute.xlu0 %7527
    %7529 = vrot.lane.b32.xlu0 %v6149, 77
    %v7530 = vpop.permute.xlu0 %7529
    %7531 = vrot.lane.b32.xlu0 %v6150, 77
    %v7532 = vpop.permute.xlu0 %7531
    %7533 = vrot.lane.b32.xlu0 %v6151, 77
    %v7534 = vpop.permute.xlu0 %7533
    %7535 = vrot.lane.b32.xlu0 %v6152, 77
    %v7536 = vpop.permute.xlu0 %7535
    %7537 = vrot.lane.b32.xlu0 %v6153, 77
    %v7538 = vpop.permute.xlu0 %7537
    %7539 = vrot.lane.b32.xlu0 %v6154, 77
    %v7540 = vpop.permute.xlu0 %7539
    %7541 = vrot.lane.b32.xlu0 %v6155, 77
    %v7542 = vpop.permute.xlu0 %7541
    %7543 = vrot.lane.b32.xlu0 %v6156, 77
    %v7544 = vpop.permute.xlu0 %7543
    %7545 = vrot.lane.b32.xlu0 %v6157, 77
    %v7546 = vpop.permute.xlu0 %7545
    %7547 = vrot.lane.b32.xlu0 %v6158, 77
    %v7548 = vpop.permute.xlu0 %7547
    %7549 = vrot.lane.b32.xlu0 %v6159, 77
    %v7550 = vpop.permute.xlu0 %7549
    %7551 = vrot.lane.b32.xlu0 %v6178, 77
    %v7552 = vpop.permute.xlu0 %7551
    %v7553 = vsel %vm1581, %v7522, %v7524
    %v7554 = vsel %vm1581, %v7524, %v7526
    %v7555 = vsel %vm1581, %v7526, %v7528
    %v7556 = vsel %vm1581, %v7528, %v7530
    %v7557 = vsel %vm1581, %v7530, %v7532
    %v7558 = vsel %vm1581, %v7532, %v7534
    %v7559 = vsel %vm1581, %v7534, %v7536
    %v7560 = vsel %vm1581, %v7536, %v7538
    %v7561 = vsel %vm1581, %v7538, %v7540
    %v7562 = vsel %vm1581, %v7540, %v7542
    %v7563 = vsel %vm1581, %v7542, %v7544
    %v7564 = vsel %vm1581, %v7544, %v7546
    %v7565 = vsel %vm1581, %v7546, %v7548
    %v7566 = vsel %vm1581, %v7548, %v7550
    %v7567 = vsel %vm1581, %v7550, %v7552
    %v7568 = vsel %vm1581, %v7552, %v1580
    %v7569 = vsel %vm756, %v6754, %v1599
    %v7570 = vsel %vm827, %v6824, %v1602
    %7571 = vrot.lane.b32.xlu0 %v6177, 39
    %v7572 = vpop.permute.xlu0 %7571
    %7573 = vrot.lane.b32.xlu0 %v6144, 39
    %v7574 = vpop.permute.xlu0 %7573
    %7575 = vrot.lane.b32.xlu0 %v6145, 39
    %v7576 = vpop.permute.xlu0 %7575
    %7577 = vrot.lane.b32.xlu0 %v6146, 39
    %v7578 = vpop.permute.xlu0 %7577
    %7579 = vrot.lane.b32.xlu0 %v6147, 39
    %v7580 = vpop.permute.xlu0 %7579
    %7581 = vrot.lane.b32.xlu0 %v6148, 39
    %v7582 = vpop.permute.xlu0 %7581
    %7583 = vrot.lane.b32.xlu0 %v6149, 39
    %v7584 = vpop.permute.xlu0 %7583
    %7585 = vrot.lane.b32.xlu0 %v6150, 39
    %v7586 = vpop.permute.xlu0 %7585
    %7587 = vrot.lane.b32.xlu0 %v6151, 39
    %v7588 = vpop.permute.xlu0 %7587
    %7589 = vrot.lane.b32.xlu0 %v6152, 39
    %v7590 = vpop.permute.xlu0 %7589
    %7591 = vrot.lane.b32.xlu0 %v6153, 39
    %v7592 = vpop.permute.xlu0 %7591
    %7593 = vrot.lane.b32.xlu0 %v6154, 39
    %v7594 = vpop.permute.xlu0 %7593
    %7595 = vrot.lane.b32.xlu0 %v6155, 39
    %v7596 = vpop.permute.xlu0 %7595
    %7597 = vrot.lane.b32.xlu0 %v6156, 39
    %v7598 = vpop.permute.xlu0 %7597
    %7599 = vrot.lane.b32.xlu0 %v6157, 39
    %v7600 = vpop.permute.xlu0 %7599
    %7601 = vrot.lane.b32.xlu0 %v6158, 39
    %v7602 = vpop.permute.xlu0 %7601
    %7603 = vrot.lane.b32.xlu0 %v6159, 39
    %v7604 = vpop.permute.xlu0 %7603
    %7605 = vrot.lane.b32.xlu0 %v6178, 39
    %v7606 = vpop.permute.xlu0 %7605
    %7607 = vrot.lane.b32.xlu0 %v6213, 39
    %v7608 = vpop.permute.xlu0 %7607
    %7609 = vrot.lane.b32.xlu0 %v6214, 39
    %v7610 = vpop.permute.xlu0 %7609
    %7611 = vrot.lane.b32.xlu0 %v6215, 39
    %v7612 = vpop.permute.xlu0 %7611
    %7613 = vrot.lane.b32.xlu0 %v6216, 39
    %v7614 = vpop.permute.xlu0 %7613
    %7615 = vrot.lane.b32.xlu0 %v6217, 39
    %v7616 = vpop.permute.xlu0 %7615
    %7617 = vrot.lane.b32.xlu0 %v6218, 39
    %v7618 = vpop.permute.xlu0 %7617
    %7619 = vrot.lane.b32.xlu0 %v6219, 39
    %v7620 = vpop.permute.xlu0 %7619
    %7621 = vrot.lane.b32.xlu0 %v6220, 39
    %v7622 = vpop.permute.xlu0 %7621
    %7623 = vrot.lane.b32.xlu0 %v6221, 39
    %v7624 = vpop.permute.xlu0 %7623
    %7625 = vrot.lane.b32.xlu0 %v6222, 39
    %v7626 = vpop.permute.xlu0 %7625
    %7627 = vrot.lane.b32.xlu0 %v6223, 39
    %v7628 = vpop.permute.xlu0 %7627
    %7629 = vrot.lane.b32.xlu0 %v6224, 39
    %v7630 = vpop.permute.xlu0 %7629
    %7631 = vrot.lane.b32.xlu0 %v6225, 39
    %v7632 = vpop.permute.xlu0 %7631
    %7633 = vrot.lane.b32.xlu0 %v6226, 39
    %v7634 = vpop.permute.xlu0 %7633
    %7635 = vrot.lane.b32.xlu0 %v6227, 39
    %v7636 = vpop.permute.xlu0 %7635
    %7637 = vrot.lane.b32.xlu0 %v7213, 39
    %v7638 = vpop.permute.xlu0 %7637
    %7639 = vrot.lane.b32.xlu0 %v7214, 39
    %v7640 = vpop.permute.xlu0 %7639
    %7641 = vrot.lane.b32.xlu0 %v7212, 39
    %v7642 = vpop.permute.xlu0 %7641
    %7643 = vrot.lane.b32.xlu0 %v7249, 39
    %v7644 = vpop.permute.xlu0 %7643
    %7645 = vrot.lane.b32.xlu0 %v7250, 39
    %v7646 = vpop.permute.xlu0 %7645
    %7647 = vrot.lane.b32.xlu0 %v7251, 39
    %v7648 = vpop.permute.xlu0 %7647
    %7649 = vrot.lane.b32.xlu0 %v7252, 39
    %v7650 = vpop.permute.xlu0 %7649
    %7651 = vrot.lane.b32.xlu0 %v7253, 39
    %v7652 = vpop.permute.xlu0 %7651
    %7653 = vrot.lane.b32.xlu0 %v7254, 39
    %v7654 = vpop.permute.xlu0 %7653
    %7655 = vrot.lane.b32.xlu0 %v7255, 39
    %v7656 = vpop.permute.xlu0 %7655
    %7657 = vrot.lane.b32.xlu0 %v7256, 39
    %v7658 = vpop.permute.xlu0 %7657
    %7659 = vrot.lane.b32.xlu0 %v7257, 39
    %v7660 = vpop.permute.xlu0 %7659
    %7661 = vrot.lane.b32.xlu0 %v7258, 39
    %v7662 = vpop.permute.xlu0 %7661
    %7663 = vrot.lane.b32.xlu0 %v7259, 39
    %v7664 = vpop.permute.xlu0 %7663
    %7665 = vrot.lane.b32.xlu0 %v7260, 39
    %v7666 = vpop.permute.xlu0 %7665
    %7667 = vrot.lane.b32.xlu0 %v7261, 39
    %v7668 = vpop.permute.xlu0 %7667
    %7669 = vrot.lane.b32.xlu0 %v7262, 39
    %v7670 = vpop.permute.xlu0 %7669
    %7671 = vrot.lane.b32.xlu0 %v7263, 39
    %v7672 = vpop.permute.xlu0 %7671
    %7673 = vrot.lane.b32.xlu0 %v7264, 39
    %v7674 = vpop.permute.xlu0 %7673
    %7675 = vrot.lane.b32.xlu0 %v7265, 39
    %v7676 = vpop.permute.xlu0 %7675
    %7677 = vrot.lane.b32.xlu0 %v7300, 39
    %v7678 = vpop.permute.xlu0 %7677
    %7679 = vrot.lane.b32.xlu0 %v7301, 39
    %v7680 = vpop.permute.xlu0 %7679
    %7681 = vrot.lane.b32.xlu0 %v7302, 39
    %v7682 = vpop.permute.xlu0 %7681
    %7683 = vrot.lane.b32.xlu0 %v7303, 39
    %v7684 = vpop.permute.xlu0 %7683
    %7685 = vrot.lane.b32.xlu0 %v7304, 39
    %v7686 = vpop.permute.xlu0 %7685
    %7687 = vrot.lane.b32.xlu0 %v7305, 39
    %v7688 = vpop.permute.xlu0 %7687
    %7689 = vrot.lane.b32.xlu0 %v7306, 39
    %v7690 = vpop.permute.xlu0 %7689
    %7691 = vrot.lane.b32.xlu0 %v7307, 39
    %v7692 = vpop.permute.xlu0 %7691
    %7693 = vrot.lane.b32.xlu0 %v7308, 39
    %v7694 = vpop.permute.xlu0 %7693
    %7695 = vrot.lane.b32.xlu0 %v7309, 39
    %v7696 = vpop.permute.xlu0 %7695
    %7697 = vrot.lane.b32.xlu0 %v7310, 39
    %v7698 = vpop.permute.xlu0 %7697
    %7699 = vrot.lane.b32.xlu0 %v7311, 39
    %v7700 = vpop.permute.xlu0 %7699
    %7701 = vrot.lane.b32.xlu0 %v7312, 39
    %v7702 = vpop.permute.xlu0 %7701
    %7703 = vrot.lane.b32.xlu0 %v7313, 39
    %v7704 = vpop.permute.xlu0 %7703
    %7705 = vrot.lane.b32.xlu0 %v7314, 39
    %v7706 = vpop.permute.xlu0 %7705
    %7707 = vrot.lane.b32.xlu0 %v7315, 39
    %v7708 = vpop.permute.xlu0 %7707
    %7709 = vrot.lane.b32.xlu0 %v7316, 39
    %v7710 = vpop.permute.xlu0 %7709
    %7711 = vrot.lane.b32.xlu0 %v7351, 39
    %v7712 = vpop.permute.xlu0 %7711
    %7713 = vrot.lane.b32.xlu0 %v7352, 39
    %v7714 = vpop.permute.xlu0 %7713
    %7715 = vrot.lane.b32.xlu0 %v7353, 39
    %v7716 = vpop.permute.xlu0 %7715
    %7717 = vrot.lane.b32.xlu0 %v7354, 39
    %v7718 = vpop.permute.xlu0 %7717
    %7719 = vrot.lane.b32.xlu0 %v7355, 39
    %v7720 = vpop.permute.xlu0 %7719
    %7721 = vrot.lane.b32.xlu0 %v7356, 39
    %v7722 = vpop.permute.xlu0 %7721
    %7723 = vrot.lane.b32.xlu0 %v7357, 39
    %v7724 = vpop.permute.xlu0 %7723
    %7725 = vrot.lane.b32.xlu0 %v7358, 39
    %v7726 = vpop.permute.xlu0 %7725
    %7727 = vrot.lane.b32.xlu0 %v7359, 39
    %v7728 = vpop.permute.xlu0 %7727
    %7729 = vrot.lane.b32.xlu0 %v7360, 39
    %v7730 = vpop.permute.xlu0 %7729
    %7731 = vrot.lane.b32.xlu0 %v7361, 39
    %v7732 = vpop.permute.xlu0 %7731
    %7733 = vrot.lane.b32.xlu0 %v7362, 39
    %v7734 = vpop.permute.xlu0 %7733
    %7735 = vrot.lane.b32.xlu0 %v7363, 39
    %v7736 = vpop.permute.xlu0 %7735
    %7737 = vrot.lane.b32.xlu0 %v7364, 39
    %v7738 = vpop.permute.xlu0 %7737
    %7739 = vrot.lane.b32.xlu0 %v7365, 39
    %v7740 = vpop.permute.xlu0 %7739
    %7741 = vrot.lane.b32.xlu0 %v7366, 39
    %v7742 = vpop.permute.xlu0 %7741
    %7743 = vrot.lane.b32.xlu0 %v7367, 39
    %v7744 = vpop.permute.xlu0 %7743
    %7745 = vrot.lane.b32.xlu0 %v7402, 39
    %v7746 = vpop.permute.xlu0 %7745
    %7747 = vrot.lane.b32.xlu0 %v7403, 39
    %v7748 = vpop.permute.xlu0 %7747
    %7749 = vrot.lane.b32.xlu0 %v7404, 39
    %v7750 = vpop.permute.xlu0 %7749
    %7751 = vrot.lane.b32.xlu0 %v7405, 39
    %v7752 = vpop.permute.xlu0 %7751
    %7753 = vrot.lane.b32.xlu0 %v7406, 39
    %v7754 = vpop.permute.xlu0 %7753
    %7755 = vrot.lane.b32.xlu0 %v7407, 39
    %v7756 = vpop.permute.xlu0 %7755
    %7757 = vrot.lane.b32.xlu0 %v7408, 39
    %v7758 = vpop.permute.xlu0 %7757
    %7759 = vrot.lane.b32.xlu0 %v7409, 39
    %v7760 = vpop.permute.xlu0 %7759
    %7761 = vrot.lane.b32.xlu0 %v7410, 39
    %v7762 = vpop.permute.xlu0 %7761
    %7763 = vrot.lane.b32.xlu0 %v7411, 39
    %v7764 = vpop.permute.xlu0 %7763
    %7765 = vrot.lane.b32.xlu0 %v7412, 39
    %v7766 = vpop.permute.xlu0 %7765
    %7767 = vrot.lane.b32.xlu0 %v7413, 39
    %v7768 = vpop.permute.xlu0 %7767
    %7769 = vrot.lane.b32.xlu0 %v7414, 39
    %v7770 = vpop.permute.xlu0 %7769
    %7771 = vrot.lane.b32.xlu0 %v7415, 39
    %v7772 = vpop.permute.xlu0 %7771
    %7773 = vrot.lane.b32.xlu0 %v7416, 39
    %v7774 = vpop.permute.xlu0 %7773
    %7775 = vrot.lane.b32.xlu0 %v7417, 39
    %v7776 = vpop.permute.xlu0 %7775
    %7777 = vrot.lane.b32.xlu0 %v7418, 39
    %v7778 = vpop.permute.xlu0 %7777
    %7779 = vrot.lane.b32.xlu0 %v7453, 39
    %v7780 = vpop.permute.xlu0 %7779
    %7781 = vrot.lane.b32.xlu0 %v7454, 39
    %v7782 = vpop.permute.xlu0 %7781
    %7783 = vrot.lane.b32.xlu0 %v7455, 39
    %v7784 = vpop.permute.xlu0 %7783
    %7785 = vrot.lane.b32.xlu0 %v7456, 39
    %v7786 = vpop.permute.xlu0 %7785
    %7787 = vrot.lane.b32.xlu0 %v7457, 39
    %v7788 = vpop.permute.xlu0 %7787
    %7789 = vrot.lane.b32.xlu0 %v7458, 39
    %v7790 = vpop.permute.xlu0 %7789
    %7791 = vrot.lane.b32.xlu0 %v7459, 39
    %v7792 = vpop.permute.xlu0 %7791
    %7793 = vrot.lane.b32.xlu0 %v7460, 39
    %v7794 = vpop.permute.xlu0 %7793
    %7795 = vrot.lane.b32.xlu0 %v7461, 39
    %v7796 = vpop.permute.xlu0 %7795
    %7797 = vrot.lane.b32.xlu0 %v7462, 39
    %v7798 = vpop.permute.xlu0 %7797
    %7799 = vrot.lane.b32.xlu0 %v7463, 39
    %v7800 = vpop.permute.xlu0 %7799
    %7801 = vrot.lane.b32.xlu0 %v7464, 39
    %v7802 = vpop.permute.xlu0 %7801
    %7803 = vrot.lane.b32.xlu0 %v7465, 39
    %v7804 = vpop.permute.xlu0 %7803
    %7805 = vrot.lane.b32.xlu0 %v7466, 39
    %v7806 = vpop.permute.xlu0 %7805
    %7807 = vrot.lane.b32.xlu0 %v7467, 39
    %v7808 = vpop.permute.xlu0 %7807
    %7809 = vrot.lane.b32.xlu0 %v7468, 39
    %v7810 = vpop.permute.xlu0 %7809
    %7811 = vrot.lane.b32.xlu0 %v7469, 39
    %v7812 = vpop.permute.xlu0 %7811
    %7813 = vrot.lane.b32.xlu0 %v7504, 39
    %v7814 = vpop.permute.xlu0 %7813
    %7815 = vrot.lane.b32.xlu0 %v7505, 39
    %v7816 = vpop.permute.xlu0 %7815
    %7817 = vrot.lane.b32.xlu0 %v7506, 39
    %v7818 = vpop.permute.xlu0 %7817
    %7819 = vrot.lane.b32.xlu0 %v7507, 39
    %v7820 = vpop.permute.xlu0 %7819
    %7821 = vrot.lane.b32.xlu0 %v7508, 39
    %v7822 = vpop.permute.xlu0 %7821
    %7823 = vrot.lane.b32.xlu0 %v7509, 39
    %v7824 = vpop.permute.xlu0 %7823
    %7825 = vrot.lane.b32.xlu0 %v7510, 39
    %v7826 = vpop.permute.xlu0 %7825
    %7827 = vrot.lane.b32.xlu0 %v7511, 39
    %v7828 = vpop.permute.xlu0 %7827
    %7829 = vrot.lane.b32.xlu0 %v7512, 39
    %v7830 = vpop.permute.xlu0 %7829
    %7831 = vrot.lane.b32.xlu0 %v7513, 39
    %v7832 = vpop.permute.xlu0 %7831
    %7833 = vrot.lane.b32.xlu0 %v7514, 39
    %v7834 = vpop.permute.xlu0 %7833
    %7835 = vrot.lane.b32.xlu0 %v7515, 39
    %v7836 = vpop.permute.xlu0 %7835
    %7837 = vrot.lane.b32.xlu0 %v7516, 39
    %v7838 = vpop.permute.xlu0 %7837
    %7839 = vrot.lane.b32.xlu0 %v7517, 39
    %v7840 = vpop.permute.xlu0 %7839
    %7841 = vrot.lane.b32.xlu0 %v7518, 39
    %v7842 = vpop.permute.xlu0 %7841
    %7843 = vrot.lane.b32.xlu0 %v7519, 39
    %v7844 = vpop.permute.xlu0 %7843
    %7845 = vrot.lane.b32.xlu0 %v7520, 39
    %v7846 = vpop.permute.xlu0 %7845
    %7847 = vrot.lane.b32.xlu0 %v7522, 39
    %v7848 = vpop.permute.xlu0 %7847
    %7849 = vrot.lane.b32.xlu0 %v7553, 39
    %v7850 = vpop.permute.xlu0 %7849
    %7851 = vrot.lane.b32.xlu0 %v7554, 39
    %v7852 = vpop.permute.xlu0 %7851
    %7853 = vrot.lane.b32.xlu0 %v7555, 39
    %v7854 = vpop.permute.xlu0 %7853
    %7855 = vrot.lane.b32.xlu0 %v7556, 39
    %v7856 = vpop.permute.xlu0 %7855
    %7857 = vrot.lane.b32.xlu0 %v7557, 39
    %v7858 = vpop.permute.xlu0 %7857
    %7859 = vrot.lane.b32.xlu0 %v7558, 39
    %v7860 = vpop.permute.xlu0 %7859
    %7861 = vrot.lane.b32.xlu0 %v7559, 39
    %v7862 = vpop.permute.xlu0 %7861
    %7863 = vrot.lane.b32.xlu0 %v7560, 39
    %v7864 = vpop.permute.xlu0 %7863
    %7865 = vrot.lane.b32.xlu0 %v7561, 39
    %v7866 = vpop.permute.xlu0 %7865
    %7867 = vrot.lane.b32.xlu0 %v7562, 39
    %v7868 = vpop.permute.xlu0 %7867
    %7869 = vrot.lane.b32.xlu0 %v7563, 39
    %v7870 = vpop.permute.xlu0 %7869
    %7871 = vrot.lane.b32.xlu0 %v7564, 39
    %v7872 = vpop.permute.xlu0 %7871
    %7873 = vrot.lane.b32.xlu0 %v7565, 39
    %v7874 = vpop.permute.xlu0 %7873
    %7875 = vrot.lane.b32.xlu0 %v7566, 39
    %v7876 = vpop.permute.xlu0 %7875
    %7877 = vrot.lane.b32.xlu0 %v7567, 39
    %v7878 = vpop.permute.xlu0 %7877
    %7879 = vrot.lane.b32.xlu0 %v7568, 39
    %v7880 = vpop.permute.xlu0 %7879
    %7881 = vrot.lane.b32.xlu0 %v6724, 39
    %v7882 = vpop.permute.xlu0 %7881
    %7883 = vrot.lane.b32.xlu0 %v6757, 39
    %v7884 = vpop.permute.xlu0 %7883
    %7885 = vrot.lane.b32.xlu0 %v6758, 39
    %v7886 = vpop.permute.xlu0 %7885
    %7887 = vrot.lane.b32.xlu0 %v6759, 39
    %v7888 = vpop.permute.xlu0 %7887
    %7889 = vrot.lane.b32.xlu0 %v6760, 39
    %v7890 = vpop.permute.xlu0 %7889
    %7891 = vrot.lane.b32.xlu0 %v6761, 39
    %v7892 = vpop.permute.xlu0 %7891
    %7893 = vrot.lane.b32.xlu0 %v6762, 39
    %v7894 = vpop.permute.xlu0 %7893
    %7895 = vrot.lane.b32.xlu0 %v6763, 39
    %v7896 = vpop.permute.xlu0 %7895
    %7897 = vrot.lane.b32.xlu0 %v6764, 39
    %v7898 = vpop.permute.xlu0 %7897
    %7899 = vrot.lane.b32.xlu0 %v6765, 39
    %v7900 = vpop.permute.xlu0 %7899
    %7901 = vrot.lane.b32.xlu0 %v6766, 39
    %v7902 = vpop.permute.xlu0 %7901
    %7903 = vrot.lane.b32.xlu0 %v6767, 39
    %v7904 = vpop.permute.xlu0 %7903
    %7905 = vrot.lane.b32.xlu0 %v6768, 39
    %v7906 = vpop.permute.xlu0 %7905
    %7907 = vrot.lane.b32.xlu0 %v6769, 39
    %v7908 = vpop.permute.xlu0 %7907
    %7909 = vrot.lane.b32.xlu0 %v6770, 39
    %v7910 = vpop.permute.xlu0 %7909
    %7911 = vrot.lane.b32.xlu0 %v6771, 39
    %v7912 = vpop.permute.xlu0 %7911
    %7913 = vrot.lane.b32.xlu0 %v7569, 39
    %v7914 = vpop.permute.xlu0 %7913
    %7915 = vrot.lane.b32.xlu0 %v6794, 39
    %v7916 = vpop.permute.xlu0 %7915
    %7917 = vrot.lane.b32.xlu0 %v6827, 39
    %v7918 = vpop.permute.xlu0 %7917
    %7919 = vrot.lane.b32.xlu0 %v6828, 39
    %v7920 = vpop.permute.xlu0 %7919
    %7921 = vrot.lane.b32.xlu0 %v6829, 39
    %v7922 = vpop.permute.xlu0 %7921
    %7923 = vrot.lane.b32.xlu0 %v6830, 39
    %v7924 = vpop.permute.xlu0 %7923
    %7925 = vrot.lane.b32.xlu0 %v6831, 39
    %v7926 = vpop.permute.xlu0 %7925
    %7927 = vrot.lane.b32.xlu0 %v6832, 39
    %v7928 = vpop.permute.xlu0 %7927
    %7929 = vrot.lane.b32.xlu0 %v6833, 39
    %v7930 = vpop.permute.xlu0 %7929
    %7931 = vrot.lane.b32.xlu0 %v6834, 39
    %v7932 = vpop.permute.xlu0 %7931
    %7933 = vrot.lane.b32.xlu0 %v6835, 39
    %v7934 = vpop.permute.xlu0 %7933
    %7935 = vrot.lane.b32.xlu0 %v6836, 39
    %v7936 = vpop.permute.xlu0 %7935
    %7937 = vrot.lane.b32.xlu0 %v6837, 39
    %v7938 = vpop.permute.xlu0 %7937
    %7939 = vrot.lane.b32.xlu0 %v6838, 39
    %v7940 = vpop.permute.xlu0 %7939
    %7941 = vrot.lane.b32.xlu0 %v6839, 39
    %v7942 = vpop.permute.xlu0 %7941
    %7943 = vrot.lane.b32.xlu0 %v6840, 39
    %v7944 = vpop.permute.xlu0 %7943
    %7945 = vrot.lane.b32.xlu0 %v6841, 39
    %v7946 = vpop.permute.xlu0 %7945
    %7947 = vrot.lane.b32.xlu0 %v7570, 39
    %v7948 = vpop.permute.xlu0 %7947
    %v7949 = vsel %vm2000, %v7572, %v7574
    %v7950 = vsel %vm2000, %v7574, %v7576
    %v7951 = vsel %vm2000, %v7576, %v7578
    %v7952 = vsel %vm2000, %v7578, %v7580
    %v7953 = vsel %vm2000, %v7580, %v7582
    %v7954 = vsel %vm2000, %v7582, %v7584
    %v7955 = vsel %vm2000, %v7584, %v7586
    %v7956 = vsel %vm2000, %v7586, %v7588
    %v7957 = vsel %vm2000, %v7588, %v7590
    %v7958 = vsel %vm2000, %v7590, %v7592
    %v7959 = vsel %vm2000, %v7592, %v7594
    %v7960 = vsel %vm2000, %v7594, %v7596
    %v7961 = vsel %vm2000, %v7596, %v7598
    %v7962 = vsel %vm2000, %v7598, %v7600
    %v7963 = vsel %vm2000, %v7600, %v7602
    %v7964 = vsel %vm2000, %v7602, %v7604
    %v7965 = vsel %vm2000, %v7604, %v7606
    %v7966 = vsel %vm2000, %v7608, %v7610
    %v7967 = vsel %vm2000, %v7610, %v7612
    %v7968 = vsel %vm2000, %v7612, %v7614
    %v7969 = vsel %vm2000, %v7614, %v7616
    %v7970 = vsel %vm2000, %v7616, %v7618
    %v7971 = vsel %vm2000, %v7618, %v7620
    %v7972 = vsel %vm2000, %v7620, %v7622
    %v7973 = vsel %vm2000, %v7622, %v7624
    %v7974 = vsel %vm2000, %v7624, %v7626
    %v7975 = vsel %vm2000, %v7626, %v7628
    %v7976 = vsel %vm2000, %v7628, %v7630
    %v7977 = vsel %vm2000, %v7630, %v7632
    %v7978 = vsel %vm2000, %v7632, %v7634
    %v7979 = vsel %vm2000, %v7634, %v7636
    %v7980 = vsel %vm2000, %v7636, %v7638
    %v7981 = vsel %vm2000, %v7638, %v7640
    %v7982 = vsel %vm2000, %v7640, %v7642
    %v7983 = vsel %vm2000, %v7644, %v7646
    %v7984 = vsel %vm2000, %v7646, %v7648
    %v7985 = vsel %vm2000, %v7648, %v7650
    %v7986 = vsel %vm2000, %v7650, %v7652
    %v7987 = vsel %vm2000, %v7652, %v7654
    %v7988 = vsel %vm2000, %v7654, %v7656
    %v7989 = vsel %vm2000, %v7656, %v7658
    %v7990 = vsel %vm2000, %v7658, %v7660
    %v7991 = vsel %vm2000, %v7660, %v7662
    %v7992 = vsel %vm2000, %v7662, %v7664
    %v7993 = vsel %vm2000, %v7664, %v7666
    %v7994 = vsel %vm2000, %v7666, %v7668
    %v7995 = vsel %vm2000, %v7668, %v7670
    %v7996 = vsel %vm2000, %v7670, %v7672
    %v7997 = vsel %vm2000, %v7672, %v7674
    %v7998 = vsel %vm2000, %v7674, %v7676
    %v7999 = vsel %vm2000, %v7676, %v1711
    %v8000 = vsel %vm2000, %v7678, %v7680
    %v8001 = vsel %vm2000, %v7680, %v7682
    %v8002 = vsel %vm2000, %v7682, %v7684
    %v8003 = vsel %vm2000, %v7684, %v7686
    %v8004 = vsel %vm2000, %v7686, %v7688
    %v8005 = vsel %vm2000, %v7688, %v7690
    %v8006 = vsel %vm2000, %v7690, %v7692
    %v8007 = vsel %vm2000, %v7692, %v7694
    %v8008 = vsel %vm2000, %v7694, %v7696
    %v8009 = vsel %vm2000, %v7696, %v7698
    %v8010 = vsel %vm2000, %v7698, %v7700
    %v8011 = vsel %vm2000, %v7700, %v7702
    %v8012 = vsel %vm2000, %v7702, %v7704
    %v8013 = vsel %vm2000, %v7704, %v7706
    %v8014 = vsel %vm2000, %v7706, %v7708
    %v8015 = vsel %vm2000, %v7708, %v7710
    %v8016 = vsel %vm2000, %v7710, %v1747
    %v8017 = vsel %vm2000, %v7712, %v7714
    %v8018 = vsel %vm2000, %v7714, %v7716
    %v8019 = vsel %vm2000, %v7716, %v7718
    %v8020 = vsel %vm2000, %v7718, %v7720
    %v8021 = vsel %vm2000, %v7720, %v7722
    %v8022 = vsel %vm2000, %v7722, %v7724
    %v8023 = vsel %vm2000, %v7724, %v7726
    %v8024 = vsel %vm2000, %v7726, %v7728
    %v8025 = vsel %vm2000, %v7728, %v7730
    %v8026 = vsel %vm2000, %v7730, %v7732
    %v8027 = vsel %vm2000, %v7732, %v7734
    %v8028 = vsel %vm2000, %v7734, %v7736
    %v8029 = vsel %vm2000, %v7736, %v7738
    %v8030 = vsel %vm2000, %v7738, %v7740
    %v8031 = vsel %vm2000, %v7740, %v7742
    %v8032 = vsel %vm2000, %v7742, %v7744
    %v8033 = vsel %vm2000, %v7744, %v1783
    %v8034 = vsel %vm2000, %v7746, %v7748
    %v8035 = vsel %vm2000, %v7748, %v7750
    %v8036 = vsel %vm2000, %v7750, %v7752
    %v8037 = vsel %vm2000, %v7752, %v7754
    %v8038 = vsel %vm2000, %v7754, %v7756
    %v8039 = vsel %vm2000, %v7756, %v7758
    %v8040 = vsel %vm2000, %v7758, %v7760
    %v8041 = vsel %vm2000, %v7760, %v7762
    %v8042 = vsel %vm2000, %v7762, %v7764
    %v8043 = vsel %vm2000, %v7764, %v7766
    %v8044 = vsel %vm2000, %v7766, %v7768
    %v8045 = vsel %vm2000, %v7768, %v7770
    %v8046 = vsel %vm2000, %v7770, %v7772
    %v8047 = vsel %vm2000, %v7772, %v7774
    %v8048 = vsel %vm2000, %v7774, %v7776
    %v8049 = vsel %vm2000, %v7776, %v7778
    %v8050 = vsel %vm2000, %v7778, %v1819
    %v8051 = vsel %vm2000, %v7780, %v7782
    %v8052 = vsel %vm2000, %v7782, %v7784
    %v8053 = vsel %vm2000, %v7784, %v7786
    %v8054 = vsel %vm2000, %v7786, %v7788
    %v8055 = vsel %vm2000, %v7788, %v7790
    %v8056 = vsel %vm2000, %v7790, %v7792
    %v8057 = vsel %vm2000, %v7792, %v7794
    %v8058 = vsel %vm2000, %v7794, %v7796
    %v8059 = vsel %vm2000, %v7796, %v7798
    %v8060 = vsel %vm2000, %v7798, %v7800
    %v8061 = vsel %vm2000, %v7800, %v7802
    %v8062 = vsel %vm2000, %v7802, %v7804
    %v8063 = vsel %vm2000, %v7804, %v7806
    %v8064 = vsel %vm2000, %v7806, %v7808
    %v8065 = vsel %vm2000, %v7808, %v7810
    %v8066 = vsel %vm2000, %v7810, %v7812
    %v8067 = vsel %vm2000, %v7812, %v1855
    %v8068 = vsel %vm2000, %v7814, %v7816
    %v8069 = vsel %vm2000, %v7816, %v7818
    %v8070 = vsel %vm2000, %v7818, %v7820
    %v8071 = vsel %vm2000, %v7820, %v7822
    %v8072 = vsel %vm2000, %v7822, %v7824
    %v8073 = vsel %vm2000, %v7824, %v7826
    %v8074 = vsel %vm2000, %v7826, %v7828
    %v8075 = vsel %vm2000, %v7828, %v7830
    %v8076 = vsel %vm2000, %v7830, %v7832
    %v8077 = vsel %vm2000, %v7832, %v7834
    %v8078 = vsel %vm2000, %v7834, %v7836
    %v8079 = vsel %vm2000, %v7836, %v7838
    %v8080 = vsel %vm2000, %v7838, %v7840
    %v8081 = vsel %vm2000, %v7840, %v7842
    %v8082 = vsel %vm2000, %v7842, %v7844
    %v8083 = vsel %vm2000, %v7844, %v7846
    %v8084 = vsel %vm2000, %v7846, %v1891
    %v8085 = vsel %vm2000, %v7848, %v7850
    %v8086 = vsel %vm2000, %v7850, %v7852
    %v8087 = vsel %vm2000, %v7852, %v7854
    %v8088 = vsel %vm2000, %v7854, %v7856
    %v8089 = vsel %vm2000, %v7856, %v7858
    %v8090 = vsel %vm2000, %v7858, %v7860
    %v8091 = vsel %vm2000, %v7860, %v7862
    %v8092 = vsel %vm2000, %v7862, %v7864
    %v8093 = vsel %vm2000, %v7864, %v7866
    %v8094 = vsel %vm2000, %v7866, %v7868
    %v8095 = vsel %vm2000, %v7868, %v7870
    %v8096 = vsel %vm2000, %v7870, %v7872
    %v8097 = vsel %vm2000, %v7872, %v7874
    %v8098 = vsel %vm2000, %v7874, %v7876
    %v8099 = vsel %vm2000, %v7876, %v7878
    %v8100 = vsel %vm2000, %v7878, %v7880
    %v8101 = vsel %vm2000, %v7880, %v1927
    %v8102 = vsel %vm2000, %v7882, %v7884
    %v8103 = vsel %vm2000, %v7884, %v7886
    %v8104 = vsel %vm2000, %v7886, %v7888
    %v8105 = vsel %vm2000, %v7888, %v7890
    %v8106 = vsel %vm2000, %v7890, %v7892
    %v8107 = vsel %vm2000, %v7892, %v7894
    %v8108 = vsel %vm2000, %v7894, %v7896
    %v8109 = vsel %vm2000, %v7896, %v7898
    %v8110 = vsel %vm2000, %v7898, %v7900
    %v8111 = vsel %vm2000, %v7900, %v7902
    %v8112 = vsel %vm2000, %v7902, %v7904
    %v8113 = vsel %vm2000, %v7904, %v7906
    %v8114 = vsel %vm2000, %v7906, %v7908
    %v8115 = vsel %vm2000, %v7908, %v7910
    %v8116 = vsel %vm2000, %v7910, %v7912
    %v8117 = vsel %vm2000, %v7912, %v7914
    %v8118 = vsel %vm2000, %v7914, %v1963
    %v8119 = vsel %vm2000, %v7916, %v7918
    %v8120 = vsel %vm2000, %v7918, %v7920
    %v8121 = vsel %vm2000, %v7920, %v7922
    %v8122 = vsel %vm2000, %v7922, %v7924
    %v8123 = vsel %vm2000, %v7924, %v7926
    %v8124 = vsel %vm2000, %v7926, %v7928
    %v8125 = vsel %vm2000, %v7928, %v7930
    %v8126 = vsel %vm2000, %v7930, %v7932
    %v8127 = vsel %vm2000, %v7932, %v7934
    %v8128 = vsel %vm2000, %v7934, %v7936
    %v8129 = vsel %vm2000, %v7936, %v7938
    %v8130 = vsel %vm2000, %v7938, %v7940
    %v8131 = vsel %vm2000, %v7940, %v7942
    %v8132 = vsel %vm2000, %v7942, %v7944
    %v8133 = vsel %vm2000, %v7944, %v7946
    %v8134 = vsel %vm2000, %v7946, %v7948
    %v8135 = vsel %vm2000, %v7948, %v1999
    %8324 = vset.pattern.permute.xlu0 0
    %8325 = vperm.xlu0 %8324, %v6092
    %v8326 = vpop.permute.xlu0 %8325
    %v8329 = vsel %vm2380, %v6091, 0
    %8331 = vmatpush.msra.mxu0 %v7175
    %8332 = vmatpush.msra.mxu0 %v7105
    %8333 = vmatpush.msra.mxu0 %v7035
    %8334 = vmatpush.msra.mxu0 %v6965
    %8335 = vmatpush.msra.mxu0 %v6895
    %8336 = vmatpush.msra.mxu0 %v6825
    %8337 = vmatpush.msra.mxu0 %v6755
    %8338 = vmatpush.msra.mxu0 %v6684
    %8339 = vmatpush.msra.mxu0 %v6616
    %8340 = vmatpush.msra.mxu0 %v6548
    %8341 = vmatpush.msra.mxu0 %v6480
    %8342 = vmatpush.msra.mxu0 %v6412
    %8343 = vmatpush.msra.mxu0 %v6344
    %8344 = vmatpush.msra.mxu0 %v6277
    %8345 = vmatpush.msra.mxu0 %v6212
    %8346 = vmatpush.msra.mxu0 0.0
    %8347 = vmatmul.f32.gmra.mxu0 %v6090
    %v8348 = vpop.f32.mrf.mxu0
    %v8349 = vadd.f32 %v8326, %v8348
    %8350 = vdwg.mxu0
    %8351 = vmatpush.msra.mxu0 0.0
    %8352 = vmatpush.msra.mxu0 0.0
    %8353 = vmatpush.msra.mxu0 0.0
    %8354 = vmatpush.msra.mxu0 0.0
    %8355 = vmatpush.msra.mxu0 0.0
    %8356 = vmatpush.msra.mxu0 %v8119
    %8357 = vmatpush.msra.mxu0 %v8102
    %8358 = vmatpush.msra.mxu0 %v8085
    %8359 = vmatpush.msra.mxu0 %v8068
    %8360 = vmatpush.msra.mxu0 %v8051
    %8361 = vmatpush.msra.mxu0 %v8034
    %8362 = vmatpush.msra.mxu0 %v8017
    %8363 = vmatpush.msra.mxu0 %v8000
    %8364 = vmatpush.msra.mxu0 %v7983
    %8365 = vmatpush.msra.mxu0 %v7966
    %8366 = vmatpush.msra.mxu0 %v7949
    %8367 = vmatmul.f32.gmra.mxu0 %v8329
    %v8368 = vpop.f32.mrf.mxu0
    %v8369 = vadd.f32 %v8349, %v8368
    %8370 = vdwg.mxu0
    %8371 = vmatpush.msra.mxu0 %v7176
    %8372 = vmatpush.msra.mxu0 %v7106
    %8373 = vmatpush.msra.mxu0 %v7036
    %8374 = vmatpush.msra.mxu0 %v6966
    %8375 = vmatpush.msra.mxu0 %v6896
    %8376 = vmatpush.msra.mxu0 %v6826
    %8377 = vmatpush.msra.mxu0 %v6756
    %8378 = vmatpush.msra.mxu0 %v6685
    %8379 = vmatpush.msra.mxu0 %v6617
    %8380 = vmatpush.msra.mxu0 %v6549
    %8381 = vmatpush.msra.mxu0 %v6481
    %8382 = vmatpush.msra.mxu0 %v6413
    %8383 = vmatpush.msra.mxu0 %v6345
    %8384 = vmatpush.msra.mxu0 %v6278
    %8385 = vmatpush.msra.mxu0 %v6213
    %8386 = vmatpush.msra.mxu0 %v6177
    %8387 = vmatmul.f32.gmra.mxu0 %v6090
    %v8388 = vpop.f32.mrf.mxu0
    %v8389 = vadd.f32 %v8326, %v8388
    %8390 = vdwg.mxu0
    %8391 = vmatpush.msra.mxu0 0.0
    %8392 = vmatpush.msra.mxu0 0.0
    %8393 = vmatpush.msra.mxu0 0.0
    %8394 = vmatpush.msra.mxu0 0.0
    %8395 = vmatpush.msra.mxu0 0.0
    %8396 = vmatpush.msra.mxu0 %v8120
    %8397 = vmatpush.msra.mxu0 %v8103
    %8398 = vmatpush.msra.mxu0 %v8086
    %8399 = vmatpush.msra.mxu0 %v8069
    %8400 = vmatpush.msra.mxu0 %v8052
    %8401 = vmatpush.msra.mxu0 %v8035
    %8402 = vmatpush.msra.mxu0 %v8018
    %8403 = vmatpush.msra.mxu0 %v8001
    %8404 = vmatpush.msra.mxu0 %v7984
    %8405 = vmatpush.msra.mxu0 %v7967
    %8406 = vmatpush.msra.mxu0 %v7950
    %8407 = vmatmul.f32.gmra.mxu0 %v8329
    %v8408 = vpop.f32.mrf.mxu0
    %v8409 = vadd.f32 %v8389, %v8408
    %8410 = vdwg.mxu0
    %8411 = vmatpush.msra.mxu0 %v7177
    %8412 = vmatpush.msra.mxu0 %v7107
    %8413 = vmatpush.msra.mxu0 %v7037
    %8414 = vmatpush.msra.mxu0 %v6967
    %8415 = vmatpush.msra.mxu0 %v6897
    %8416 = vmatpush.msra.mxu0 %v6827
    %8417 = vmatpush.msra.mxu0 %v6757
    %8418 = vmatpush.msra.mxu0 %v6686
    %8419 = vmatpush.msra.mxu0 %v6618
    %8420 = vmatpush.msra.mxu0 %v6550
    %8421 = vmatpush.msra.mxu0 %v6482
    %8422 = vmatpush.msra.mxu0 %v6414
    %8423 = vmatpush.msra.mxu0 %v6346
    %8424 = vmatpush.msra.mxu0 %v6279
    %8425 = vmatpush.msra.mxu0 %v6214
    %8426 = vmatpush.msra.mxu0 %v6144
    %8427 = vmatmul.f32.gmra.mxu0 %v6090
    %v8428 = vpop.f32.mrf.mxu0
    %v8429 = vadd.f32 %v8326, %v8428
    %8430 = vdwg.mxu0
    %8431 = vmatpush.msra.mxu0 0.0
    %8432 = vmatpush.msra.mxu0 0.0
    %8433 = vmatpush.msra.mxu0 0.0
    %8434 = vmatpush.msra.mxu0 0.0
    %8435 = vmatpush.msra.mxu0 0.0
    %8436 = vmatpush.msra.mxu0 %v8121
    %8437 = vmatpush.msra.mxu0 %v8104
    %8438 = vmatpush.msra.mxu0 %v8087
    %8439 = vmatpush.msra.mxu0 %v8070
    %8440 = vmatpush.msra.mxu0 %v8053
    %8441 = vmatpush.msra.mxu0 %v8036
    %8442 = vmatpush.msra.mxu0 %v8019
    %8443 = vmatpush.msra.mxu0 %v8002
    %8444 = vmatpush.msra.mxu0 %v7985
    %8445 = vmatpush.msra.mxu0 %v7968
    %8446 = vmatpush.msra.mxu0 %v7951
    %8447 = vmatmul.f32.gmra.mxu0 %v8329
    %v8448 = vpop.f32.mrf.mxu0
    %v8449 = vadd.f32 %v8429, %v8448
    %8450 = vdwg.mxu0
    %8451 = vmatpush.msra.mxu0 %v7178
    %8452 = vmatpush.msra.mxu0 %v7108
    %8453 = vmatpush.msra.mxu0 %v7038
    %8454 = vmatpush.msra.mxu0 %v6968
    %8455 = vmatpush.msra.mxu0 %v6898
    %8456 = vmatpush.msra.mxu0 %v6828
    %8457 = vmatpush.msra.mxu0 %v6758
    %8458 = vmatpush.msra.mxu0 %v6687
    %8459 = vmatpush.msra.mxu0 %v6619
    %8460 = vmatpush.msra.mxu0 %v6551
    %8461 = vmatpush.msra.mxu0 %v6483
    %8462 = vmatpush.msra.mxu0 %v6415
    %8463 = vmatpush.msra.mxu0 %v6347
    %8464 = vmatpush.msra.mxu0 %v6280
    %8465 = vmatpush.msra.mxu0 %v6215
    %8466 = vmatpush.msra.mxu0 %v6145
    %8467 = vmatmul.f32.gmra.mxu0 %v6090
    %v8468 = vpop.f32.mrf.mxu0
    %v8469 = vadd.f32 %v8326, %v8468
    %8470 = vdwg.mxu0
    %8471 = vmatpush.msra.mxu0 0.0
    %8472 = vmatpush.msra.mxu0 0.0
    %8473 = vmatpush.msra.mxu0 0.0
    %8474 = vmatpush.msra.mxu0 0.0
    %8475 = vmatpush.msra.mxu0 0.0
    %8476 = vmatpush.msra.mxu0 %v8122
    %8477 = vmatpush.msra.mxu0 %v8105
    %8478 = vmatpush.msra.mxu0 %v8088
    %8479 = vmatpush.msra.mxu0 %v8071
    %8480 = vmatpush.msra.mxu0 %v8054
    %8481 = vmatpush.msra.mxu0 %v8037
    %8482 = vmatpush.msra.mxu0 %v8020
    %8483 = vmatpush.msra.mxu0 %v8003
    %8484 = vmatpush.msra.mxu0 %v7986
    %8485 = vmatpush.msra.mxu0 %v7969
    %8486 = vmatpush.msra.mxu0 %v7952
    %8487 = vmatmul.f32.gmra.mxu0 %v8329
    %v8488 = vpop.f32.mrf.mxu0
    %v8489 = vadd.f32 %v8469, %v8488
    %8490 = vdwg.mxu0
    %8491 = vmatpush.msra.mxu0 %v7179
    %8492 = vmatpush.msra.mxu0 %v7109
    %8493 = vmatpush.msra.mxu0 %v7039
    %8494 = vmatpush.msra.mxu0 %v6969
    %8495 = vmatpush.msra.mxu0 %v6899
    %8496 = vmatpush.msra.mxu0 %v6829
    %8497 = vmatpush.msra.mxu0 %v6759
    %8498 = vmatpush.msra.mxu0 %v6688
    %8499 = vmatpush.msra.mxu0 %v6620
    %8500 = vmatpush.msra.mxu0 %v6552
    %8501 = vmatpush.msra.mxu0 %v6484
    %8502 = vmatpush.msra.mxu0 %v6416
    %8503 = vmatpush.msra.mxu0 %v6348
    %8504 = vmatpush.msra.mxu0 %v6281
    %8505 = vmatpush.msra.mxu0 %v6216
    %8506 = vmatpush.msra.mxu0 %v6146
    %8507 = vmatmul.f32.gmra.mxu0 %v6090
    %v8508 = vpop.f32.mrf.mxu0
    %v8509 = vadd.f32 %v8326, %v8508
    %8510 = vdwg.mxu0
    %8511 = vmatpush.msra.mxu0 0.0
    %8512 = vmatpush.msra.mxu0 0.0
    %8513 = vmatpush.msra.mxu0 0.0
    %8514 = vmatpush.msra.mxu0 0.0
    %8515 = vmatpush.msra.mxu0 0.0
    %8516 = vmatpush.msra.mxu0 %v8123
    %8517 = vmatpush.msra.mxu0 %v8106
    %8518 = vmatpush.msra.mxu0 %v8089
    %8519 = vmatpush.msra.mxu0 %v8072
    %8520 = vmatpush.msra.mxu0 %v8055
    %8521 = vmatpush.msra.mxu0 %v8038
    %8522 = vmatpush.msra.mxu0 %v8021
    %8523 = vmatpush.msra.mxu0 %v8004
    %8524 = vmatpush.msra.mxu0 %v7987
    %8525 = vmatpush.msra.mxu0 %v7970
    %8526 = vmatpush.msra.mxu0 %v7953
    %8527 = vmatmul.f32.gmra.mxu0 %v8329
    %v8528 = vpop.f32.mrf.mxu0
    %v8529 = vadd.f32 %v8509, %v8528
    %8530 = vdwg.mxu0
    %8531 = vmatpush.msra.mxu0 %v7180
    %8532 = vmatpush.msra.mxu0 %v7110
    %8533 = vmatpush.msra.mxu0 %v7040
    %8534 = vmatpush.msra.mxu0 %v6970
    %8535 = vmatpush.msra.mxu0 %v6900
    %8536 = vmatpush.msra.mxu0 %v6830
    %8537 = vmatpush.msra.mxu0 %v6760
    %8538 = vmatpush.msra.mxu0 %v6689
    %8539 = vmatpush.msra.mxu0 %v6621
    %8540 = vmatpush.msra.mxu0 %v6553
    %8541 = vmatpush.msra.mxu0 %v6485
    %8542 = vmatpush.msra.mxu0 %v6417
    %8543 = vmatpush.msra.mxu0 %v6349
    %8544 = vmatpush.msra.mxu0 %v6282
    %8545 = vmatpush.msra.mxu0 %v6217
    %8546 = vmatpush.msra.mxu0 %v6147
    %8547 = vmatmul.f32.gmra.mxu0 %v6090
    %v8548 = vpop.f32.mrf.mxu0
    %v8549 = vadd.f32 %v8326, %v8548
    %8550 = vdwg.mxu0
    %8551 = vmatpush.msra.mxu0 0.0
    %8552 = vmatpush.msra.mxu0 0.0
    %8553 = vmatpush.msra.mxu0 0.0
    %8554 = vmatpush.msra.mxu0 0.0
    %8555 = vmatpush.msra.mxu0 0.0
    %8556 = vmatpush.msra.mxu0 %v8124
    %8557 = vmatpush.msra.mxu0 %v8107
    %8558 = vmatpush.msra.mxu0 %v8090
    %8559 = vmatpush.msra.mxu0 %v8073
    %8560 = vmatpush.msra.mxu0 %v8056
    %8561 = vmatpush.msra.mxu0 %v8039
    %8562 = vmatpush.msra.mxu0 %v8022
    %8563 = vmatpush.msra.mxu0 %v8005
    %8564 = vmatpush.msra.mxu0 %v7988
    %8565 = vmatpush.msra.mxu0 %v7971
    %8566 = vmatpush.msra.mxu0 %v7954
    %8567 = vmatmul.f32.gmra.mxu0 %v8329
    %v8568 = vpop.f32.mrf.mxu0
    %v8569 = vadd.f32 %v8549, %v8568
    %8570 = vdwg.mxu0
    %8571 = vmatpush.msra.mxu0 %v7181
    %8572 = vmatpush.msra.mxu0 %v7111
    %8573 = vmatpush.msra.mxu0 %v7041
    %8574 = vmatpush.msra.mxu0 %v6971
    %8575 = vmatpush.msra.mxu0 %v6901
    %8576 = vmatpush.msra.mxu0 %v6831
    %8577 = vmatpush.msra.mxu0 %v6761
    %8578 = vmatpush.msra.mxu0 %v6690
    %8579 = vmatpush.msra.mxu0 %v6622
    %8580 = vmatpush.msra.mxu0 %v6554
    %8581 = vmatpush.msra.mxu0 %v6486
    %8582 = vmatpush.msra.mxu0 %v6418
    %8583 = vmatpush.msra.mxu0 %v6350
    %8584 = vmatpush.msra.mxu0 %v6283
    %8585 = vmatpush.msra.mxu0 %v6218
    %8586 = vmatpush.msra.mxu0 %v6148
    %8587 = vmatmul.f32.gmra.mxu0 %v6090
    %v8588 = vpop.f32.mrf.mxu0
    %v8589 = vadd.f32 %v8326, %v8588
    %8590 = vdwg.mxu0
    %8591 = vmatpush.msra.mxu0 0.0
    %8592 = vmatpush.msra.mxu0 0.0
    %8593 = vmatpush.msra.mxu0 0.0
    %8594 = vmatpush.msra.mxu0 0.0
    %8595 = vmatpush.msra.mxu0 0.0
    %8596 = vmatpush.msra.mxu0 %v8125
    %8597 = vmatpush.msra.mxu0 %v8108
    %8598 = vmatpush.msra.mxu0 %v8091
    %8599 = vmatpush.msra.mxu0 %v8074
    %8600 = vmatpush.msra.mxu0 %v8057
    %8601 = vmatpush.msra.mxu0 %v8040
    %8602 = vmatpush.msra.mxu0 %v8023
    %8603 = vmatpush.msra.mxu0 %v8006
    %8604 = vmatpush.msra.mxu0 %v7989
    %8605 = vmatpush.msra.mxu0 %v7972
    %8606 = vmatpush.msra.mxu0 %v7955
    %8607 = vmatmul.f32.gmra.mxu0 %v8329
    %v8608 = vpop.f32.mrf.mxu0
    %v8609 = vadd.f32 %v8589, %v8608
    %8610 = vdwg.mxu0
    %8611 = vmatpush.msra.mxu0 %v7182
    %8612 = vmatpush.msra.mxu0 %v7112
    %8613 = vmatpush.msra.mxu0 %v7042
    %8614 = vmatpush.msra.mxu0 %v6972
    %8615 = vmatpush.msra.mxu0 %v6902
    %8616 = vmatpush.msra.mxu0 %v6832
    %8617 = vmatpush.msra.mxu0 %v6762
    %8618 = vmatpush.msra.mxu0 %v6691
    %8619 = vmatpush.msra.mxu0 %v6623
    %8620 = vmatpush.msra.mxu0 %v6555
    %8621 = vmatpush.msra.mxu0 %v6487
    %8622 = vmatpush.msra.mxu0 %v6419
    %8623 = vmatpush.msra.mxu0 %v6351
    %8624 = vmatpush.msra.mxu0 %v6284
    %8625 = vmatpush.msra.mxu0 %v6219
    %8626 = vmatpush.msra.mxu0 %v6149
    %8627 = vmatmul.f32.gmra.mxu0 %v6090
    %v8628 = vpop.f32.mrf.mxu0
    %v8629 = vadd.f32 %v8326, %v8628
    %8630 = vdwg.mxu0
    %8631 = vmatpush.msra.mxu0 0.0
    %8632 = vmatpush.msra.mxu0 0.0
    %8633 = vmatpush.msra.mxu0 0.0
    %8634 = vmatpush.msra.mxu0 0.0
    %8635 = vmatpush.msra.mxu0 0.0
    %8636 = vmatpush.msra.mxu0 %v8126
    %8637 = vmatpush.msra.mxu0 %v8109
    %8638 = vmatpush.msra.mxu0 %v8092
    %8639 = vmatpush.msra.mxu0 %v8075
    %8640 = vmatpush.msra.mxu0 %v8058
    %8641 = vmatpush.msra.mxu0 %v8041
    %8642 = vmatpush.msra.mxu0 %v8024
    %8643 = vmatpush.msra.mxu0 %v8007
    %8644 = vmatpush.msra.mxu0 %v7990
    %8645 = vmatpush.msra.mxu0 %v7973
    %8646 = vmatpush.msra.mxu0 %v7956
    %8647 = vmatmul.f32.gmra.mxu0 %v8329
    %v8648 = vpop.f32.mrf.mxu0
    %v8649 = vadd.f32 %v8629, %v8648
    %8650 = vdwg.mxu0
    %8651 = vmatpush.msra.mxu0 %v7183
    %8652 = vmatpush.msra.mxu0 %v7113
    %8653 = vmatpush.msra.mxu0 %v7043
    %8654 = vmatpush.msra.mxu0 %v6973
    %8655 = vmatpush.msra.mxu0 %v6903
    %8656 = vmatpush.msra.mxu0 %v6833
    %8657 = vmatpush.msra.mxu0 %v6763
    %8658 = vmatpush.msra.mxu0 %v6692
    %8659 = vmatpush.msra.mxu0 %v6624
    %8660 = vmatpush.msra.mxu0 %v6556
    %8661 = vmatpush.msra.mxu0 %v6488
    %8662 = vmatpush.msra.mxu0 %v6420
    %8663 = vmatpush.msra.mxu0 %v6352
    %8664 = vmatpush.msra.mxu0 %v6285
    %8665 = vmatpush.msra.mxu0 %v6220
    %8666 = vmatpush.msra.mxu0 %v6150
    %8667 = vmatmul.f32.gmra.mxu0 %v6090
    %v8668 = vpop.f32.mrf.mxu0
    %v8669 = vadd.f32 %v8326, %v8668
    %8670 = vdwg.mxu0
    %8671 = vmatpush.msra.mxu0 0.0
    %8672 = vmatpush.msra.mxu0 0.0
    %8673 = vmatpush.msra.mxu0 0.0
    %8674 = vmatpush.msra.mxu0 0.0
    %8675 = vmatpush.msra.mxu0 0.0
    %8676 = vmatpush.msra.mxu0 %v8127
    %8677 = vmatpush.msra.mxu0 %v8110
    %8678 = vmatpush.msra.mxu0 %v8093
    %8679 = vmatpush.msra.mxu0 %v8076
    %8680 = vmatpush.msra.mxu0 %v8059
    %8681 = vmatpush.msra.mxu0 %v8042
    %8682 = vmatpush.msra.mxu0 %v8025
    %8683 = vmatpush.msra.mxu0 %v8008
    %8684 = vmatpush.msra.mxu0 %v7991
    %8685 = vmatpush.msra.mxu0 %v7974
    %8686 = vmatpush.msra.mxu0 %v7957
    %8687 = vmatmul.f32.gmra.mxu0 %v8329
    %v8688 = vpop.f32.mrf.mxu0
    %v8689 = vadd.f32 %v8669, %v8688
    %8690 = vdwg.mxu0
    %8691 = vmatpush.msra.mxu0 %v7184
    %8692 = vmatpush.msra.mxu0 %v7114
    %8693 = vmatpush.msra.mxu0 %v7044
    %8694 = vmatpush.msra.mxu0 %v6974
    %8695 = vmatpush.msra.mxu0 %v6904
    %8696 = vmatpush.msra.mxu0 %v6834
    %8697 = vmatpush.msra.mxu0 %v6764
    %8698 = vmatpush.msra.mxu0 %v6693
    %8699 = vmatpush.msra.mxu0 %v6625
    %8700 = vmatpush.msra.mxu0 %v6557
    %8701 = vmatpush.msra.mxu0 %v6489
    %8702 = vmatpush.msra.mxu0 %v6421
    %8703 = vmatpush.msra.mxu0 %v6353
    %8704 = vmatpush.msra.mxu0 %v6286
    %8705 = vmatpush.msra.mxu0 %v6221
    %8706 = vmatpush.msra.mxu0 %v6151
    %8707 = vmatmul.f32.gmra.mxu0 %v6090
    %v8708 = vpop.f32.mrf.mxu0
    %v8709 = vadd.f32 %v8326, %v8708
    %8710 = vdwg.mxu0
    %8711 = vmatpush.msra.mxu0 0.0
    %8712 = vmatpush.msra.mxu0 0.0
    %8713 = vmatpush.msra.mxu0 0.0
    %8714 = vmatpush.msra.mxu0 0.0
    %8715 = vmatpush.msra.mxu0 0.0
    %8716 = vmatpush.msra.mxu0 %v8128
    %8717 = vmatpush.msra.mxu0 %v8111
    %8718 = vmatpush.msra.mxu0 %v8094
    %8719 = vmatpush.msra.mxu0 %v8077
    %8720 = vmatpush.msra.mxu0 %v8060
    %8721 = vmatpush.msra.mxu0 %v8043
    %8722 = vmatpush.msra.mxu0 %v8026
    %8723 = vmatpush.msra.mxu0 %v8009
    %8724 = vmatpush.msra.mxu0 %v7992
    %8725 = vmatpush.msra.mxu0 %v7975
    %8726 = vmatpush.msra.mxu0 %v7958
    %8727 = vmatmul.f32.gmra.mxu0 %v8329
    %v8728 = vpop.f32.mrf.mxu0
    %v8729 = vadd.f32 %v8709, %v8728
    %8730 = vdwg.mxu0
    %8731 = vmatpush.msra.mxu0 %v7185
    %8732 = vmatpush.msra.mxu0 %v7115
    %8733 = vmatpush.msra.mxu0 %v7045
    %8734 = vmatpush.msra.mxu0 %v6975
    %8735 = vmatpush.msra.mxu0 %v6905
    %8736 = vmatpush.msra.mxu0 %v6835
    %8737 = vmatpush.msra.mxu0 %v6765
    %8738 = vmatpush.msra.mxu0 %v6694
    %8739 = vmatpush.msra.mxu0 %v6626
    %8740 = vmatpush.msra.mxu0 %v6558
    %8741 = vmatpush.msra.mxu0 %v6490
    %8742 = vmatpush.msra.mxu0 %v6422
    %8743 = vmatpush.msra.mxu0 %v6354
    %8744 = vmatpush.msra.mxu0 %v6287
    %8745 = vmatpush.msra.mxu0 %v6222
    %8746 = vmatpush.msra.mxu0 %v6152
    %8747 = vmatmul.f32.gmra.mxu0 %v6090
    %v8748 = vpop.f32.mrf.mxu0
    %v8749 = vadd.f32 %v8326, %v8748
    %8750 = vdwg.mxu0
    %8751 = vmatpush.msra.mxu0 0.0
    %8752 = vmatpush.msra.mxu0 0.0
    %8753 = vmatpush.msra.mxu0 0.0
    %8754 = vmatpush.msra.mxu0 0.0
    %8755 = vmatpush.msra.mxu0 0.0
    %8756 = vmatpush.msra.mxu0 %v8129
    %8757 = vmatpush.msra.mxu0 %v8112
    %8758 = vmatpush.msra.mxu0 %v8095
    %8759 = vmatpush.msra.mxu0 %v8078
    %8760 = vmatpush.msra.mxu0 %v8061
    %8761 = vmatpush.msra.mxu0 %v8044
    %8762 = vmatpush.msra.mxu0 %v8027
    %8763 = vmatpush.msra.mxu0 %v8010
    %8764 = vmatpush.msra.mxu0 %v7993
    %8765 = vmatpush.msra.mxu0 %v7976
    %8766 = vmatpush.msra.mxu0 %v7959
    %8767 = vmatmul.f32.gmra.mxu0 %v8329
    %v8768 = vpop.f32.mrf.mxu0
    %v8769 = vadd.f32 %v8749, %v8768
    %8770 = vdwg.mxu0
    %8771 = vmatpush.msra.mxu0 %v7186
    %8772 = vmatpush.msra.mxu0 %v7116
    %8773 = vmatpush.msra.mxu0 %v7046
    %8774 = vmatpush.msra.mxu0 %v6976
    %8775 = vmatpush.msra.mxu0 %v6906
    %8776 = vmatpush.msra.mxu0 %v6836
    %8777 = vmatpush.msra.mxu0 %v6766
    %8778 = vmatpush.msra.mxu0 %v6695
    %8779 = vmatpush.msra.mxu0 %v6627
    %8780 = vmatpush.msra.mxu0 %v6559
    %8781 = vmatpush.msra.mxu0 %v6491
    %8782 = vmatpush.msra.mxu0 %v6423
    %8783 = vmatpush.msra.mxu0 %v6355
    %8784 = vmatpush.msra.mxu0 %v6288
    %8785 = vmatpush.msra.mxu0 %v6223
    %8786 = vmatpush.msra.mxu0 %v6153
    %8787 = vmatmul.f32.gmra.mxu0 %v6090
    %v8788 = vpop.f32.mrf.mxu0
    %v8789 = vadd.f32 %v8326, %v8788
    %8790 = vdwg.mxu0
    %8791 = vmatpush.msra.mxu0 0.0
    %8792 = vmatpush.msra.mxu0 0.0
    %8793 = vmatpush.msra.mxu0 0.0
    %8794 = vmatpush.msra.mxu0 0.0
    %8795 = vmatpush.msra.mxu0 0.0
    %8796 = vmatpush.msra.mxu0 %v8130
    %8797 = vmatpush.msra.mxu0 %v8113
    %8798 = vmatpush.msra.mxu0 %v8096
    %8799 = vmatpush.msra.mxu0 %v8079
    %8800 = vmatpush.msra.mxu0 %v8062
    %8801 = vmatpush.msra.mxu0 %v8045
    %8802 = vmatpush.msra.mxu0 %v8028
    %8803 = vmatpush.msra.mxu0 %v8011
    %8804 = vmatpush.msra.mxu0 %v7994
    %8805 = vmatpush.msra.mxu0 %v7977
    %8806 = vmatpush.msra.mxu0 %v7960
    %8807 = vmatmul.f32.gmra.mxu0 %v8329
    %v8808 = vpop.f32.mrf.mxu0
    %v8809 = vadd.f32 %v8789, %v8808
    %8810 = vdwg.mxu0
    %8811 = vmatpush.msra.mxu0 %v7187
    %8812 = vmatpush.msra.mxu0 %v7117
    %8813 = vmatpush.msra.mxu0 %v7047
    %8814 = vmatpush.msra.mxu0 %v6977
    %8815 = vmatpush.msra.mxu0 %v6907
    %8816 = vmatpush.msra.mxu0 %v6837
    %8817 = vmatpush.msra.mxu0 %v6767
    %8818 = vmatpush.msra.mxu0 %v6696
    %8819 = vmatpush.msra.mxu0 %v6628
    %8820 = vmatpush.msra.mxu0 %v6560
    %8821 = vmatpush.msra.mxu0 %v6492
    %8822 = vmatpush.msra.mxu0 %v6424
    %8823 = vmatpush.msra.mxu0 %v6356
    %8824 = vmatpush.msra.mxu0 %v6289
    %8825 = vmatpush.msra.mxu0 %v6224
    %8826 = vmatpush.msra.mxu0 %v6154
    %8827 = vmatmul.f32.gmra.mxu0 %v6090
    %v8828 = vpop.f32.mrf.mxu0
    %v8829 = vadd.f32 %v8326, %v8828
    %8830 = vdwg.mxu0
    %8831 = vmatpush.msra.mxu0 0.0
    %8832 = vmatpush.msra.mxu0 0.0
    %8833 = vmatpush.msra.mxu0 0.0
    %8834 = vmatpush.msra.mxu0 0.0
    %8835 = vmatpush.msra.mxu0 0.0
    %8836 = vmatpush.msra.mxu0 %v8131
    %8837 = vmatpush.msra.mxu0 %v8114
    %8838 = vmatpush.msra.mxu0 %v8097
    %8839 = vmatpush.msra.mxu0 %v8080
    %8840 = vmatpush.msra.mxu0 %v8063
    %8841 = vmatpush.msra.mxu0 %v8046
    %8842 = vmatpush.msra.mxu0 %v8029
    %8843 = vmatpush.msra.mxu0 %v8012
    %8844 = vmatpush.msra.mxu0 %v7995
    %8845 = vmatpush.msra.mxu0 %v7978
    %8846 = vmatpush.msra.mxu0 %v7961
    %8847 = vmatmul.f32.gmra.mxu0 %v8329
    %v8848 = vpop.f32.mrf.mxu0
    %v8849 = vadd.f32 %v8829, %v8848
    %8850 = vdwg.mxu0
    %8851 = vmatpush.msra.mxu0 %v7188
    %8852 = vmatpush.msra.mxu0 %v7118
    %8853 = vmatpush.msra.mxu0 %v7048
    %8854 = vmatpush.msra.mxu0 %v6978
    %8855 = vmatpush.msra.mxu0 %v6908
    %8856 = vmatpush.msra.mxu0 %v6838
    %8857 = vmatpush.msra.mxu0 %v6768
    %8858 = vmatpush.msra.mxu0 %v6697
    %8859 = vmatpush.msra.mxu0 %v6629
    %8860 = vmatpush.msra.mxu0 %v6561
    %8861 = vmatpush.msra.mxu0 %v6493
    %8862 = vmatpush.msra.mxu0 %v6425
    %8863 = vmatpush.msra.mxu0 %v6357
    %8864 = vmatpush.msra.mxu0 %v6290
    %8865 = vmatpush.msra.mxu0 %v6225
    %8866 = vmatpush.msra.mxu0 %v6155
    %8867 = vmatmul.f32.gmra.mxu0 %v6090
    %v8868 = vpop.f32.mrf.mxu0
    %v8869 = vadd.f32 %v8326, %v8868
    %8870 = vdwg.mxu0
    %8871 = vmatpush.msra.mxu0 0.0
    %8872 = vmatpush.msra.mxu0 0.0
    %8873 = vmatpush.msra.mxu0 0.0
    %8874 = vmatpush.msra.mxu0 0.0
    %8875 = vmatpush.msra.mxu0 0.0
    %8876 = vmatpush.msra.mxu0 %v8132
    %8877 = vmatpush.msra.mxu0 %v8115
    %8878 = vmatpush.msra.mxu0 %v8098
    %8879 = vmatpush.msra.mxu0 %v8081
    %8880 = vmatpush.msra.mxu0 %v8064
    %8881 = vmatpush.msra.mxu0 %v8047
    %8882 = vmatpush.msra.mxu0 %v8030
    %8883 = vmatpush.msra.mxu0 %v8013
    %8884 = vmatpush.msra.mxu0 %v7996
    %8885 = vmatpush.msra.mxu0 %v7979
    %8886 = vmatpush.msra.mxu0 %v7962
    %8887 = vmatmul.f32.gmra.mxu0 %v8329
    %v8888 = vpop.f32.mrf.mxu0
    %v8889 = vadd.f32 %v8869, %v8888
    %8890 = vdwg.mxu0
    %8891 = vmatpush.msra.mxu0 %v7189
    %8892 = vmatpush.msra.mxu0 %v7119
    %8893 = vmatpush.msra.mxu0 %v7049
    %8894 = vmatpush.msra.mxu0 %v6979
    %8895 = vmatpush.msra.mxu0 %v6909
    %8896 = vmatpush.msra.mxu0 %v6839
    %8897 = vmatpush.msra.mxu0 %v6769
    %8898 = vmatpush.msra.mxu0 %v6698
    %8899 = vmatpush.msra.mxu0 %v6630
    %8900 = vmatpush.msra.mxu0 %v6562
    %8901 = vmatpush.msra.mxu0 %v6494
    %8902 = vmatpush.msra.mxu0 %v6426
    %8903 = vmatpush.msra.mxu0 %v6358
    %8904 = vmatpush.msra.mxu0 %v6291
    %8905 = vmatpush.msra.mxu0 %v6226
    %8906 = vmatpush.msra.mxu0 %v6156
    %8907 = vmatmul.f32.gmra.mxu0 %v6090
    %v8908 = vpop.f32.mrf.mxu0
    %v8909 = vadd.f32 %v8326, %v8908
    %8910 = vdwg.mxu0
    %8911 = vmatpush.msra.mxu0 0.0
    %8912 = vmatpush.msra.mxu0 0.0
    %8913 = vmatpush.msra.mxu0 0.0
    %8914 = vmatpush.msra.mxu0 0.0
    %8915 = vmatpush.msra.mxu0 0.0
    %8916 = vmatpush.msra.mxu0 %v8133
    %8917 = vmatpush.msra.mxu0 %v8116
    %8918 = vmatpush.msra.mxu0 %v8099
    %8919 = vmatpush.msra.mxu0 %v8082
    %8920 = vmatpush.msra.mxu0 %v8065
    %8921 = vmatpush.msra.mxu0 %v8048
    %8922 = vmatpush.msra.mxu0 %v8031
    %8923 = vmatpush.msra.mxu0 %v8014
    %8924 = vmatpush.msra.mxu0 %v7997
    %8925 = vmatpush.msra.mxu0 %v7980
    %8926 = vmatpush.msra.mxu0 %v7963
    %8927 = vmatmul.f32.gmra.mxu0 %v8329
    %v8928 = vpop.f32.mrf.mxu0
    %v8929 = vadd.f32 %v8909, %v8928
    %8930 = vdwg.mxu0
    %8931 = vmatpush.msra.mxu0 %v7190
    %8932 = vmatpush.msra.mxu0 %v7120
    %8933 = vmatpush.msra.mxu0 %v7050
    %8934 = vmatpush.msra.mxu0 %v6980
    %8935 = vmatpush.msra.mxu0 %v6910
    %8936 = vmatpush.msra.mxu0 %v6840
    %8937 = vmatpush.msra.mxu0 %v6770
    %8938 = vmatpush.msra.mxu0 %v6699
    %8939 = vmatpush.msra.mxu0 %v6631
    %8940 = vmatpush.msra.mxu0 %v6563
    %8941 = vmatpush.msra.mxu0 %v6495
    %8942 = vmatpush.msra.mxu0 %v6427
    %8943 = vmatpush.msra.mxu0 %v6359
    %8944 = vmatpush.msra.mxu0 %v6292
    %8945 = vmatpush.msra.mxu0 %v6227
    %8946 = vmatpush.msra.mxu0 %v6157
    %8947 = vmatmul.f32.gmra.mxu0 %v6090
    %v8948 = vpop.f32.mrf.mxu0
    %v8949 = vadd.f32 %v8326, %v8948
    %8950 = vdwg.mxu0
    %8951 = vmatpush.msra.mxu0 0.0
    %8952 = vmatpush.msra.mxu0 0.0
    %8953 = vmatpush.msra.mxu0 0.0
    %8954 = vmatpush.msra.mxu0 0.0
    %8955 = vmatpush.msra.mxu0 0.0
    %8956 = vmatpush.msra.mxu0 %v8134
    %8957 = vmatpush.msra.mxu0 %v8117
    %8958 = vmatpush.msra.mxu0 %v8100
    %8959 = vmatpush.msra.mxu0 %v8083
    %8960 = vmatpush.msra.mxu0 %v8066
    %8961 = vmatpush.msra.mxu0 %v8049
    %8962 = vmatpush.msra.mxu0 %v8032
    %8963 = vmatpush.msra.mxu0 %v8015
    %8964 = vmatpush.msra.mxu0 %v7998
    %8965 = vmatpush.msra.mxu0 %v7981
    %8966 = vmatpush.msra.mxu0 %v7964
    %8967 = vmatmul.f32.gmra.mxu0 %v8329
    %v8968 = vpop.f32.mrf.mxu0
    %v8969 = vadd.f32 %v8949, %v8968
    %8970 = vdwg.mxu0
    %8971 = vmatpush.msra.mxu0 %v7191
    %8972 = vmatpush.msra.mxu0 %v7121
    %8973 = vmatpush.msra.mxu0 %v7051
    %8974 = vmatpush.msra.mxu0 %v6981
    %8975 = vmatpush.msra.mxu0 %v6911
    %8976 = vmatpush.msra.mxu0 %v6841
    %8977 = vmatpush.msra.mxu0 %v6771
    %8978 = vmatpush.msra.mxu0 %v6700
    %8979 = vmatpush.msra.mxu0 %v6632
    %8980 = vmatpush.msra.mxu0 %v6564
    %8981 = vmatpush.msra.mxu0 %v6496
    %8982 = vmatpush.msra.mxu0 %v6428
    %8983 = vmatpush.msra.mxu0 %v6360
    %8984 = vmatpush.msra.mxu0 %v6276
    %8985 = vmatpush.msra.mxu0 %v6211
    %8986 = vmatpush.msra.mxu0 %v6158
    %8987 = vmatmul.f32.gmra.mxu0 %v6090
    %v8988 = vpop.f32.mrf.mxu0
    %v8989 = vadd.f32 %v8326, %v8988
    %8990 = vdwg.mxu0
    %8991 = vmatpush.msra.mxu0 0.0
    %8992 = vmatpush.msra.mxu0 0.0
    %8993 = vmatpush.msra.mxu0 0.0
    %8994 = vmatpush.msra.mxu0 0.0
    %8995 = vmatpush.msra.mxu0 0.0
    %8996 = vmatpush.msra.mxu0 %v8135
    %8997 = vmatpush.msra.mxu0 %v8118
    %8998 = vmatpush.msra.mxu0 %v8101
    %8999 = vmatpush.msra.mxu0 %v8084
    %9000 = vmatpush.msra.mxu0 %v8067
    %9001 = vmatpush.msra.mxu0 %v8050
    %9002 = vmatpush.msra.mxu0 %v8033
    %9003 = vmatpush.msra.mxu0 %v8016
    %9004 = vmatpush.msra.mxu0 %v7999
    %9005 = vmatpush.msra.mxu0 %v7982
    %9006 = vmatpush.msra.mxu0 %v7965
    %9007 = vmatmul.f32.gmra.mxu0 %v8329
    %v9008 = vpop.f32.mrf.mxu0
    %v9009 = vadd.f32 %v8989, %v9008
    %9010 = vdwg.mxu0
    %v9011 = vmax.f32 %v8369, 0.0
    %v9012 = vmax.f32 %v8409, 0.0
    %v9013 = vmax.f32 %v8449, 0.0
    %v9014 = vmax.f32 %v8489, 0.0
    %v9015 = vmax.f32 %v8529, 0.0
    %v9016 = vmax.f32 %v8569, 0.0
    %v9017 = vmax.f32 %v8609, 0.0
    %v9018 = vmax.f32 %v8649, 0.0
    %v9019 = vmax.f32 %v8689, 0.0
    %v9020 = vmax.f32 %v8729, 0.0
    %v9021 = vmax.f32 %v8769, 0.0
    %v9022 = vmax.f32 %v8809, 0.0
    %v9023 = vmax.f32 %v8849, 0.0
    %v9024 = vmax.f32 %v8889, 0.0
    %v9025 = vmax.f32 %v8929, 0.0
    %v9026 = vmax.f32 %v8969, 0.0
    %v9027 = vmax.f32 %v9009, 0.0
    %v9028 = vmul.f32 %v9011, %v3084
    %v9029 = vmul.f32 %v9012, %v3085
    %v9030 = vmul.f32 %v9013, %v3086
    %v9031 = vmul.f32 %v9014, %v3087
    %v9032 = vmul.f32 %v9015, %v3088
    %v9033 = vmul.f32 %v9016, %v3089
    %v9034 = vmul.f32 %v9017, %v3090
    %v9035 = vmul.f32 %v9018, %v3091
    %v9036 = vmul.f32 %v9019, %v3092
    %v9037 = vmul.f32 %v9020, %v3093
    %v9038 = vmul.f32 %v9021, %v3094
    %v9039 = vmul.f32 %v9022, %v3095
    %v9040 = vmul.f32 %v9023, %v3096
    %v9041 = vmul.f32 %v9024, %v3097
    %v9042 = vmul.f32 %v9025, %v3098
    %v9043 = vmul.f32 %v9026, %v3099
    %v9044 = vmul.f32 %v9027, %v3100
    %v9045 = vld [vmem:[%s8] sm:$0x1]
    %v9046 = vld [vmem:[#allocation2] sm:$0x1]
    %9048 = vset.pattern.permute.xlu0 0
    %9049 = vperm.xlu0 %9048, %v9046
    %v9050 = vpop.permute.xlu0 %9049
    %v9052 = vperm.slane %v9050, 0
    %vm9053 = vcmask 64512
    %v9055 = vsel %vm9053, %v9045, 0
    %9057 = vmatpush.msra.mxu0 0.0
    %9058 = vmatpush.msra.mxu0 0.0
    %9059 = vmatpush.msra.mxu0 0.0
    %9060 = vmatpush.msra.mxu0 0.0
    %9061 = vmatpush.msra.mxu0 0.0
    %9062 = vmatpush.msra.mxu0 0.0
    %9063 = vmatpush.msra.mxu0 0.0
    %9064 = vmatpush.msra.mxu0 0.0
    %9065 = vmatpush.msra.mxu0 0.0
    %9066 = vmatpush.msra.mxu0 0.0
    %9067 = vmatpush.msra.mxu0 0.0
    %9068 = vmatpush.msra.mxu0 0.0
    %9069 = vmatpush.msra.mxu0 0.0
    %9070 = vmatpush.msra.mxu0 0.0
    %9071 = vmatpush.msra.mxu0 0.0
    %9072 = vmatpush.msra.mxu0 %v9028
    %9073 = vmatmul.f32.gmra.mxu0 %v9055
    %v9074 = vpop.f32.mrf.mxu0
    %v9075 = vadd.f32 %v9052, %v9074
    %9076 = vdwg.mxu0
    %9077 = vmatpush.msra.mxu0 0.0
    %9078 = vmatpush.msra.mxu0 0.0
    %9079 = vmatpush.msra.mxu0 0.0
    %9080 = vmatpush.msra.mxu0 0.0
    %9081 = vmatpush.msra.mxu0 0.0
    %9082 = vmatpush.msra.mxu0 0.0
    %9083 = vmatpush.msra.mxu0 0.0
    %9084 = vmatpush.msra.mxu0 0.0
    %9085 = vmatpush.msra.mxu0 0.0
    %9086 = vmatpush.msra.mxu0 0.0
    %9087 = vmatpush.msra.mxu0 0.0
    %9088 = vmatpush.msra.mxu0 0.0
    %9089 = vmatpush.msra.mxu0 0.0
    %9090 = vmatpush.msra.mxu0 0.0
    %9091 = vmatpush.msra.mxu0 0.0
    %9092 = vmatpush.msra.mxu0 %v9029
    %9093 = vmatmul.f32.gmra.mxu0 %v9055
    %v9094 = vpop.f32.mrf.mxu0
    %v9095 = vadd.f32 %v9052, %v9094
    %9096 = vdwg.mxu0
    %9097 = vmatpush.msra.mxu0 0.0
    %9098 = vmatpush.msra.mxu0 0.0
    %9099 = vmatpush.msra.mxu0 0.0
    %9100 = vmatpush.msra.mxu0 0.0
    %9101 = vmatpush.msra.mxu0 0.0
    %9102 = vmatpush.msra.mxu0 0.0
    %9103 = vmatpush.msra.mxu0 0.0
    %9104 = vmatpush.msra.mxu0 0.0
    %9105 = vmatpush.msra.mxu0 0.0
    %9106 = vmatpush.msra.mxu0 0.0
    %9107 = vmatpush.msra.mxu0 0.0
    %9108 = vmatpush.msra.mxu0 0.0
    %9109 = vmatpush.msra.mxu0 0.0
    %9110 = vmatpush.msra.mxu0 0.0
    %9111 = vmatpush.msra.mxu0 0.0
    %9112 = vmatpush.msra.mxu0 %v9030
    %9113 = vmatmul.f32.gmra.mxu0 %v9055
    %v9114 = vpop.f32.mrf.mxu0
    %v9115 = vadd.f32 %v9052, %v9114
    %9116 = vdwg.mxu0
    %9117 = vmatpush.msra.mxu0 0.0
    %9118 = vmatpush.msra.mxu0 0.0
    %9119 = vmatpush.msra.mxu0 0.0
    %9120 = vmatpush.msra.mxu0 0.0
    %9121 = vmatpush.msra.mxu0 0.0
    %9122 = vmatpush.msra.mxu0 0.0
    %9123 = vmatpush.msra.mxu0 0.0
    %9124 = vmatpush.msra.mxu0 0.0
    %9125 = vmatpush.msra.mxu0 0.0
    %9126 = vmatpush.msra.mxu0 0.0
    %9127 = vmatpush.msra.mxu0 0.0
    %9128 = vmatpush.msra.mxu0 0.0
    %9129 = vmatpush.msra.mxu0 0.0
    %9130 = vmatpush.msra.mxu0 0.0
    %9131 = vmatpush.msra.mxu0 0.0
    %9132 = vmatpush.msra.mxu0 %v9031
    %9133 = vmatmul.f32.gmra.mxu0 %v9055
    %v9134 = vpop.f32.mrf.mxu0
    %v9135 = vadd.f32 %v9052, %v9134
    %9136 = vdwg.mxu0
    %9137 = vmatpush.msra.mxu0 0.0
    %9138 = vmatpush.msra.mxu0 0.0
    %9139 = vmatpush.msra.mxu0 0.0
    %9140 = vmatpush.msra.mxu0 0.0
    %9141 = vmatpush.msra.mxu0 0.0
    %9142 = vmatpush.msra.mxu0 0.0
    %9143 = vmatpush.msra.mxu0 0.0
    %9144 = vmatpush.msra.mxu0 0.0
    %9145 = vmatpush.msra.mxu0 0.0
    %9146 = vmatpush.msra.mxu0 0.0
    %9147 = vmatpush.msra.mxu0 0.0
    %9148 = vmatpush.msra.mxu0 0.0
    %9149 = vmatpush.msra.mxu0 0.0
    %9150 = vmatpush.msra.mxu0 0.0
    %9151 = vmatpush.msra.mxu0 0.0
    %9152 = vmatpush.msra.mxu0 %v9032
    %9153 = vmatmul.f32.gmra.mxu0 %v9055
    %v9154 = vpop.f32.mrf.mxu0
    %v9155 = vadd.f32 %v9052, %v9154
    %9156 = vdwg.mxu0
    %9157 = vmatpush.msra.mxu0 0.0
    %9158 = vmatpush.msra.mxu0 0.0
    %9159 = vmatpush.msra.mxu0 0.0
    %9160 = vmatpush.msra.mxu0 0.0
    %9161 = vmatpush.msra.mxu0 0.0
    %9162 = vmatpush.msra.mxu0 0.0
    %9163 = vmatpush.msra.mxu0 0.0
    %9164 = vmatpush.msra.mxu0 0.0
    %9165 = vmatpush.msra.mxu0 0.0
    %9166 = vmatpush.msra.mxu0 0.0
    %9167 = vmatpush.msra.mxu0 0.0
    %9168 = vmatpush.msra.mxu0 0.0
    %9169 = vmatpush.msra.mxu0 0.0
    %9170 = vmatpush.msra.mxu0 0.0
    %9171 = vmatpush.msra.mxu0 0.0
    %9172 = vmatpush.msra.mxu0 %v9033
    %9173 = vmatmul.f32.gmra.mxu0 %v9055
    %v9174 = vpop.f32.mrf.mxu0
    %v9175 = vadd.f32 %v9052, %v9174
    %9176 = vdwg.mxu0
    %9177 = vmatpush.msra.mxu0 0.0
    %9178 = vmatpush.msra.mxu0 0.0
    %9179 = vmatpush.msra.mxu0 0.0
    %9180 = vmatpush.msra.mxu0 0.0
    %9181 = vmatpush.msra.mxu0 0.0
    %9182 = vmatpush.msra.mxu0 0.0
    %9183 = vmatpush.msra.mxu0 0.0
    %9184 = vmatpush.msra.mxu0 0.0
    %9185 = vmatpush.msra.mxu0 0.0
    %9186 = vmatpush.msra.mxu0 0.0
    %9187 = vmatpush.msra.mxu0 0.0
    %9188 = vmatpush.msra.mxu0 0.0
    %9189 = vmatpush.msra.mxu0 0.0
    %9190 = vmatpush.msra.mxu0 0.0
    %9191 = vmatpush.msra.mxu0 0.0
    %9192 = vmatpush.msra.mxu0 %v9034
    %9193 = vmatmul.f32.gmra.mxu0 %v9055
    %v9194 = vpop.f32.mrf.mxu0
    %v9195 = vadd.f32 %v9052, %v9194
    %9196 = vdwg.mxu0
    %9197 = vmatpush.msra.mxu0 0.0
    %9198 = vmatpush.msra.mxu0 0.0
    %9199 = vmatpush.msra.mxu0 0.0
    %9200 = vmatpush.msra.mxu0 0.0
    %9201 = vmatpush.msra.mxu0 0.0
    %9202 = vmatpush.msra.mxu0 0.0
    %9203 = vmatpush.msra.mxu0 0.0
    %9204 = vmatpush.msra.mxu0 0.0
    %9205 = vmatpush.msra.mxu0 0.0
    %9206 = vmatpush.msra.mxu0 0.0
    %9207 = vmatpush.msra.mxu0 0.0
    %9208 = vmatpush.msra.mxu0 0.0
    %9209 = vmatpush.msra.mxu0 0.0
    %9210 = vmatpush.msra.mxu0 0.0
    %9211 = vmatpush.msra.mxu0 0.0
    %9212 = vmatpush.msra.mxu0 %v9035
    %9213 = vmatmul.f32.gmra.mxu0 %v9055
    %v9214 = vpop.f32.mrf.mxu0
    %v9215 = vadd.f32 %v9052, %v9214
    %9216 = vdwg.mxu0
    %9217 = vmatpush.msra.mxu0 0.0
    %9218 = vmatpush.msra.mxu0 0.0
    %9219 = vmatpush.msra.mxu0 0.0
    %9220 = vmatpush.msra.mxu0 0.0
    %9221 = vmatpush.msra.mxu0 0.0
    %9222 = vmatpush.msra.mxu0 0.0
    %9223 = vmatpush.msra.mxu0 0.0
    %9224 = vmatpush.msra.mxu0 0.0
    %9225 = vmatpush.msra.mxu0 0.0
    %9226 = vmatpush.msra.mxu0 0.0
    %9227 = vmatpush.msra.mxu0 0.0
    %9228 = vmatpush.msra.mxu0 0.0
    %9229 = vmatpush.msra.mxu0 0.0
    %9230 = vmatpush.msra.mxu0 0.0
    %9231 = vmatpush.msra.mxu0 0.0
    %9232 = vmatpush.msra.mxu0 %v9036
    %9233 = vmatmul.f32.gmra.mxu0 %v9055
    %v9234 = vpop.f32.mrf.mxu0
    %v9235 = vadd.f32 %v9052, %v9234
    %9236 = vdwg.mxu0
    %9237 = vmatpush.msra.mxu0 0.0
    %9238 = vmatpush.msra.mxu0 0.0
    %9239 = vmatpush.msra.mxu0 0.0
    %9240 = vmatpush.msra.mxu0 0.0
    %9241 = vmatpush.msra.mxu0 0.0
    %9242 = vmatpush.msra.mxu0 0.0
    %9243 = vmatpush.msra.mxu0 0.0
    %9244 = vmatpush.msra.mxu0 0.0
    %9245 = vmatpush.msra.mxu0 0.0
    %9246 = vmatpush.msra.mxu0 0.0
    %9247 = vmatpush.msra.mxu0 0.0
    %9248 = vmatpush.msra.mxu0 0.0
    %9249 = vmatpush.msra.mxu0 0.0
    %9250 = vmatpush.msra.mxu0 0.0
    %9251 = vmatpush.msra.mxu0 0.0
    %9252 = vmatpush.msra.mxu0 %v9037
    %9253 = vmatmul.f32.gmra.mxu0 %v9055
    %v9254 = vpop.f32.mrf.mxu0
    %v9255 = vadd.f32 %v9052, %v9254
    %9256 = vdwg.mxu0
    %9257 = vmatpush.msra.mxu0 0.0
    %9258 = vmatpush.msra.mxu0 0.0
    %9259 = vmatpush.msra.mxu0 0.0
    %9260 = vmatpush.msra.mxu0 0.0
    %9261 = vmatpush.msra.mxu0 0.0
    %9262 = vmatpush.msra.mxu0 0.0
    %9263 = vmatpush.msra.mxu0 0.0
    %9264 = vmatpush.msra.mxu0 0.0
    %9265 = vmatpush.msra.mxu0 0.0
    %9266 = vmatpush.msra.mxu0 0.0
    %9267 = vmatpush.msra.mxu0 0.0
    %9268 = vmatpush.msra.mxu0 0.0
    %9269 = vmatpush.msra.mxu0 0.0
    %9270 = vmatpush.msra.mxu0 0.0
    %9271 = vmatpush.msra.mxu0 0.0
    %9272 = vmatpush.msra.mxu0 %v9038
    %9273 = vmatmul.f32.gmra.mxu0 %v9055
    %v9274 = vpop.f32.mrf.mxu0
    %v9275 = vadd.f32 %v9052, %v9274
    %9276 = vdwg.mxu0
    %9277 = vmatpush.msra.mxu0 0.0
    %9278 = vmatpush.msra.mxu0 0.0
    %9279 = vmatpush.msra.mxu0 0.0
    %9280 = vmatpush.msra.mxu0 0.0
    %9281 = vmatpush.msra.mxu0 0.0
    %9282 = vmatpush.msra.mxu0 0.0
    %9283 = vmatpush.msra.mxu0 0.0
    %9284 = vmatpush.msra.mxu0 0.0
    %9285 = vmatpush.msra.mxu0 0.0
    %9286 = vmatpush.msra.mxu0 0.0
    %9287 = vmatpush.msra.mxu0 0.0
    %9288 = vmatpush.msra.mxu0 0.0
    %9289 = vmatpush.msra.mxu0 0.0
    %9290 = vmatpush.msra.mxu0 0.0
    %9291 = vmatpush.msra.mxu0 0.0
    %9292 = vmatpush.msra.mxu0 %v9039
    %9293 = vmatmul.f32.gmra.mxu0 %v9055
    %v9294 = vpop.f32.mrf.mxu0
    %v9295 = vadd.f32 %v9052, %v9294
    %9296 = vdwg.mxu0
    %9297 = vmatpush.msra.mxu0 0.0
    %9298 = vmatpush.msra.mxu0 0.0
    %9299 = vmatpush.msra.mxu0 0.0
    %9300 = vmatpush.msra.mxu0 0.0
    %9301 = vmatpush.msra.mxu0 0.0
    %9302 = vmatpush.msra.mxu0 0.0
    %9303 = vmatpush.msra.mxu0 0.0
    %9304 = vmatpush.msra.mxu0 0.0
    %9305 = vmatpush.msra.mxu0 0.0
    %9306 = vmatpush.msra.mxu0 0.0
    %9307 = vmatpush.msra.mxu0 0.0
    %9308 = vmatpush.msra.mxu0 0.0
    %9309 = vmatpush.msra.mxu0 0.0
    %9310 = vmatpush.msra.mxu0 0.0
    %9311 = vmatpush.msra.mxu0 0.0
    %9312 = vmatpush.msra.mxu0 %v9040
    %9313 = vmatmul.f32.gmra.mxu0 %v9055
    %v9314 = vpop.f32.mrf.mxu0
    %v9315 = vadd.f32 %v9052, %v9314
    %9316 = vdwg.mxu0
    %9317 = vmatpush.msra.mxu0 0.0
    %9318 = vmatpush.msra.mxu0 0.0
    %9319 = vmatpush.msra.mxu0 0.0
    %9320 = vmatpush.msra.mxu0 0.0
    %9321 = vmatpush.msra.mxu0 0.0
    %9322 = vmatpush.msra.mxu0 0.0
    %9323 = vmatpush.msra.mxu0 0.0
    %9324 = vmatpush.msra.mxu0 0.0
    %9325 = vmatpush.msra.mxu0 0.0
    %9326 = vmatpush.msra.mxu0 0.0
    %9327 = vmatpush.msra.mxu0 0.0
    %9328 = vmatpush.msra.mxu0 0.0
    %9329 = vmatpush.msra.mxu0 0.0
    %9330 = vmatpush.msra.mxu0 0.0
    %9331 = vmatpush.msra.mxu0 0.0
    %9332 = vmatpush.msra.mxu0 %v9041
    %9333 = vmatmul.f32.gmra.mxu0 %v9055
    %v9334 = vpop.f32.mrf.mxu0
    %v9335 = vadd.f32 %v9052, %v9334
    %9336 = vdwg.mxu0
    %9337 = vmatpush.msra.mxu0 0.0
    %9338 = vmatpush.msra.mxu0 0.0
    %9339 = vmatpush.msra.mxu0 0.0
    %9340 = vmatpush.msra.mxu0 0.0
    %9341 = vmatpush.msra.mxu0 0.0
    %9342 = vmatpush.msra.mxu0 0.0
    %9343 = vmatpush.msra.mxu0 0.0
    %9344 = vmatpush.msra.mxu0 0.0
    %9345 = vmatpush.msra.mxu0 0.0
    %9346 = vmatpush.msra.mxu0 0.0
    %9347 = vmatpush.msra.mxu0 0.0
    %9348 = vmatpush.msra.mxu0 0.0
    %9349 = vmatpush.msra.mxu0 0.0
    %9350 = vmatpush.msra.mxu0 0.0
    %9351 = vmatpush.msra.mxu0 0.0
    %9352 = vmatpush.msra.mxu0 %v9042
    %9353 = vmatmul.f32.gmra.mxu0 %v9055
    %v9354 = vpop.f32.mrf.mxu0
    %v9355 = vadd.f32 %v9052, %v9354
    %9356 = vdwg.mxu0
    %9357 = vmatpush.msra.mxu0 0.0
    %9358 = vmatpush.msra.mxu0 0.0
    %9359 = vmatpush.msra.mxu0 0.0
    %9360 = vmatpush.msra.mxu0 0.0
    %9361 = vmatpush.msra.mxu0 0.0
    %9362 = vmatpush.msra.mxu0 0.0
    %9363 = vmatpush.msra.mxu0 0.0
    %9364 = vmatpush.msra.mxu0 0.0
    %9365 = vmatpush.msra.mxu0 0.0
    %9366 = vmatpush.msra.mxu0 0.0
    %9367 = vmatpush.msra.mxu0 0.0
    %9368 = vmatpush.msra.mxu0 0.0
    %9369 = vmatpush.msra.mxu0 0.0
    %9370 = vmatpush.msra.mxu0 0.0
    %9371 = vmatpush.msra.mxu0 0.0
    %9372 = vmatpush.msra.mxu0 %v9043
    %9373 = vmatmul.f32.gmra.mxu0 %v9055
    %v9374 = vpop.f32.mrf.mxu0
    %v9375 = vadd.f32 %v9052, %v9374
    %9376 = vdwg.mxu0
    %9377 = vmatpush.msra.mxu0 0.0
    %9378 = vmatpush.msra.mxu0 0.0
    %9379 = vmatpush.msra.mxu0 0.0
    %9380 = vmatpush.msra.mxu0 0.0
    %9381 = vmatpush.msra.mxu0 0.0
    %9382 = vmatpush.msra.mxu0 0.0
    %9383 = vmatpush.msra.mxu0 0.0
    %9384 = vmatpush.msra.mxu0 0.0
    %9385 = vmatpush.msra.mxu0 0.0
    %9386 = vmatpush.msra.mxu0 0.0
    %9387 = vmatpush.msra.mxu0 0.0
    %9388 = vmatpush.msra.mxu0 0.0
    %9389 = vmatpush.msra.mxu0 0.0
    %9390 = vmatpush.msra.mxu0 0.0
    %9391 = vmatpush.msra.mxu0 0.0
    %9392 = vmatpush.msra.mxu0 %v9044
    %9393 = vmatmul.f32.gmra.mxu0 %v9055
    %v9394 = vpop.f32.mrf.mxu0
    %v9395 = vadd.f32 %v9052, %v9394
    %9396 = vdwg.mxu0
    %v9397 = vmax.f32 %v9075, 0.0
    %v9398 = vmax.f32 %v9095, 0.0
    %v9399 = vmax.f32 %v9115, 0.0
    %v9400 = vmax.f32 %v9135, 0.0
    %v9401 = vmax.f32 %v9155, 0.0
    %v9402 = vmax.f32 %v9175, 0.0
    %v9403 = vmax.f32 %v9195, 0.0
    %v9404 = vmax.f32 %v9215, 0.0
    %v9405 = vmax.f32 %v9235, 0.0
    %v9406 = vmax.f32 %v9255, 0.0
    %v9407 = vmax.f32 %v9275, 0.0
    %v9408 = vmax.f32 %v9295, 0.0
    %v9409 = vmax.f32 %v9315, 0.0
    %v9410 = vmax.f32 %v9335, 0.0
    %v9411 = vmax.f32 %v9355, 0.0
    %v9412 = vmax.f32 %v9375, 0.0
    %v9413 = vmax.f32 %v9395, 0.0
    %v9414 = vld [vmem:[%s10] sm:$0xff]
    %v9415 = vld [vmem:[%s10 + $0x8] sm:$0xff]
    %v9416 = vld [vmem:[%s10 + $0x10] sm:$0xff]
    %v9417 = vld [vmem:[%s10 + $0x18] sm:$0xff]
    %v9418 = vld [vmem:[%s10 + $0x20] sm:$0xff]
    %v9419 = vld [vmem:[%s10 + $0x28] sm:$0xff]
    %v9420 = vld [vmem:[%s10 + $0x30] sm:$0xff]
    %v9421 = vld [vmem:[%s10 + $0x38] sm:$0xff]
    %v9422 = vld [vmem:[%s10 + $0x40] sm:$0xff]
    %v9423 = vld [vmem:[%s10 + $0x48] sm:$0xff]
    %v9424 = vld [vmem:[%s10 + $0x50] sm:$0xff]
    %v9425 = vld [vmem:[%s10 + $0x58] sm:$0xff]
    %v9426 = vld [vmem:[%s10 + $0x60] sm:$0xff]
    %v9427 = vld [vmem:[%s10 + $0x68] sm:$0xff]
    %v9428 = vld [vmem:[%s10 + $0x70] sm:$0xff]
    %v9429 = vld [vmem:[%s10 + $0x78] sm:$0xff]
    %v9430 = vld [vmem:[%s10 + $0x80] sm:$0xff]
    %v9431 = vld [vmem:[%s10 + $0x88] sm:$0xff]
    %v9432 = vld [vmem:[%s10 + $0x90] sm:$0xff]
    %v9433 = vld [vmem:[%s10 + $0x98] sm:$0xff]
    %v9434 = vld [vmem:[%s10 + $0xa0] sm:$0xff]
    %v9435 = vld [vmem:[%s10 + $0xa8] sm:$0xff]
    %v9436 = vld [vmem:[%s10 + $0xb0] sm:$0xff]
    %v9437 = vld [vmem:[%s10 + $0xb8] sm:$0xff]
    %v9438 = vld [vmem:[%s10 + $0xc0] sm:$0xff]
    %v9439 = vld [vmem:[%s10 + $0xc8] sm:$0xff]
    %v9440 = vld [vmem:[%s10 + $0xd0] sm:$0xff]
    %v9441 = vld [vmem:[%s10 + $0xd8] sm:$0xff]
    %v9442 = vld [vmem:[%s10 + $0xe0] sm:$0xff]
    %v9443 = vld [vmem:[%s10 + $0xe8] sm:$0xff]
    %v9444 = vld [vmem:[%s10 + $0xf0] sm:$0xff]
    %v9445 = vld [vmem:[%s10 + $0xf8] sm:$0xff]
    %v9446 = vld [vmem:[%s10 + $0x100] sm:$0xff]
    %v9447 = vld [vmem:[%s10 + $0x108] sm:$0xff]
    %v9448 = vld [vmem:[%s10 + $0x110] sm:$0xff]
    %v9449 = vld [vmem:[%s10 + $0x118] sm:$0xff]
    %v9450 = vld [vmem:[%s10 + $0x120] sm:$0xff]
    %v9451 = vld [vmem:[%s10 + $0x128] sm:$0xff]
    %v9452 = vld [vmem:[%s10 + $0x130] sm:$0xff]
    %v9453 = vld [vmem:[%s10 + $0x138] sm:$0xff]
    %v9454 = vld [vmem:[%s10 + $0x140] sm:$0xff]
    %v9455 = vld [vmem:[%s10 + $0x148] sm:$0xff]
    %v9456 = vld [vmem:[%s10 + $0x150] sm:$0xff]
    %v9457 = vld [vmem:[%s10 + $0x158] sm:$0xff]
    %v9458 = vld [vmem:[%s10 + $0x160] sm:$0xff]
    %v9459 = vld [vmem:[%s10 + $0x168] sm:$0xff]
    %v9460 = vld [vmem:[%s10 + $0x170] sm:$0xff]
    %v9461 = vld [vmem:[%s10 + $0x178] sm:$0xff]
    %v9462 = vld [vmem:[%s10 + $0x180] sm:$0xff]
    %v9463 = vld [vmem:[%s10 + $0x188] sm:$0xff]
    %v9464 = vld [vmem:[%s10 + $0x190] sm:$0xff]
    %v9465 = vld [vmem:[%s10 + $0x198] sm:$0xff]
    %v9466 = vld [vmem:[%s10 + $0x1a0] sm:$0xff]
    %v9467 = vld [vmem:[%s10 + $0x1a8] sm:$0xff]
    %v9468 = vld [vmem:[%s10 + $0x1b0] sm:$0xff]
    %v9469 = vld [vmem:[%s10 + $0x1b8] sm:$0xff]
    %v9470 = vld [vmem:[%s10 + $0x1c0] sm:$0xff]
    %v9471 = vld [vmem:[%s10 + $0x1c8] sm:$0xff]
    %v9472 = vld [vmem:[%s10 + $0x1d0] sm:$0xff]
    %v9473 = vld [vmem:[%s10 + $0x1d8] sm:$0xff]
    %v9474 = vld [vmem:[%s10 + $0x1e0] sm:$0xff]
    %v9475 = vld [vmem:[%s10 + $0x1e8] sm:$0xff]
    %v9476 = vld [vmem:[%s10 + $0x1f0] sm:$0xff]
    %v9477 = vld [vmem:[%s10 + $0x1f8] sm:$0xff]
    %v9478 = vld [vmem:[%s10 + $0x200] sm:$0xff]
    %v9479 = vld [vmem:[%s10 + $0x208] sm:$0xff]
    %v9480 = vld [vmem:[%s10 + $0x210] sm:$0xff]
    %v9481 = vld [vmem:[%s10 + $0x218] sm:$0xff]
    %v9482 = vld [vmem:[%s10 + $0x220] sm:$0xff]
    %v9483 = vld [vmem:[%s10 + $0x228] sm:$0xff]
    %v9484 = vld [vmem:[%s10 + $0x230] sm:$0xff]
    %v9485 = vld [vmem:[%s10 + $0x238] sm:$0xff]
    %v9486 = vld [vmem:[%s10 + $0x240] sm:$0xff]
    %v9487 = vld [vmem:[%s10 + $0x248] sm:$0xff]
    %v9488 = vld [vmem:[%s10 + $0x250] sm:$0xff]
    %v9489 = vld [vmem:[%s10 + $0x258] sm:$0xff]
    %v9490 = vld [vmem:[%s10 + $0x260] sm:$0xff]
    %v9491 = vld [vmem:[%s10 + $0x268] sm:$0xff]
    %v9492 = vld [vmem:[%s10 + $0x270] sm:$0xff]
    %v9493 = vld [vmem:[%s10 + $0x278] sm:$0xff]
    %v9494 = vld [vmem:[%s10 + $0x280] sm:$0xff]
    %v9495 = vld [vmem:[%s10 + $0x288] sm:$0xff]
    %v9496 = vld [vmem:[%s10 + $0x290] sm:$0xff]
    %v9497 = vld [vmem:[%s10 + $0x298] sm:$0xff]
    %v9498 = vld [vmem:[%s10 + $0x2a0] sm:$0xff]
    %v9499 = vld [vmem:[%s10 + $0x2a8] sm:$0xff]
    %v9500 = vld [vmem:[%s10 + $0x2b0] sm:$0xff]
    %v9501 = vld [vmem:[%s10 + $0x2b8] sm:$0xff]
    %v9502 = vld [vmem:[%s10 + $0x2c0] sm:$0xff]
    %v9503 = vld [vmem:[%s10 + $0x2c8] sm:$0xff]
    %v9504 = vld [vmem:[%s10 + $0x2d0] sm:$0xff]
    %v9505 = vld [vmem:[%s10 + $0x2d8] sm:$0xff]
    %v9506 = vld [vmem:[%s10 + $0x2e0] sm:$0xff]
    %v9507 = vld [vmem:[%s10 + $0x2e8] sm:$0xff]
    %v9508 = vld [vmem:[%s10 + $0x2f0] sm:$0xff]
    %v9509 = vld [vmem:[%s10 + $0x2f8] sm:$0xff]
    %v9510 = vld [vmem:[%s10 + $0x300] sm:$0xff]
    %v9511 = vld [vmem:[%s10 + $0x308] sm:$0xff]
    %v9512 = vld [vmem:[%s10 + $0x310] sm:$0xff]
    %v9513 = vld [vmem:[%s10 + $0x318] sm:$0xff]
    %v9514 = vld [vmem:[%s10 + $0x320] sm:$0xff]
    %v9515 = vld [vmem:[%s10 + $0x328] sm:$0xff]
    %v9516 = vld [vmem:[%s10 + $0x330] sm:$0xff]
    %v9517 = vld [vmem:[%s10 + $0x338] sm:$0xff]
    %v9518 = vld [vmem:[%s10 + $0x340] sm:$0xff]
    %v9519 = vld [vmem:[%s10 + $0x348] sm:$0xff]
    %v9520 = vld [vmem:[%s10 + $0x350] sm:$0xff]
    %v9521 = vld [vmem:[%s10 + $0x358] sm:$0xff]
    %v9522 = vld [vmem:[%s10 + $0x360] sm:$0xff]
    %v9523 = vld [vmem:[%s10 + $0x368] sm:$0xff]
    %v9524 = vld [vmem:[%s10 + $0x370] sm:$0xff]
    %v9525 = vld [vmem:[%s10 + $0x378] sm:$0xff]
    %v9526 = vld [vmem:[%s10 + $0x380] sm:$0xff]
    %v9527 = vld [vmem:[%s10 + $0x388] sm:$0xff]
    %v9528 = vld [vmem:[%s10 + $0x390] sm:$0xff]
    %v9529 = vld [vmem:[%s10 + $0x398] sm:$0xff]
    %v9530 = vld [vmem:[%s10 + $0x3a0] sm:$0xff]
    %v9531 = vld [vmem:[%s10 + $0x3a8] sm:$0xff]
    %v9532 = vld [vmem:[%s10 + $0x3b0] sm:$0xff]
    %v9533 = vld [vmem:[%s10 + $0x3b8] sm:$0xff]
    %v9534 = vld [vmem:[%s10 + $0x3c0] sm:$0xff]
    %v9535 = vld [vmem:[%s10 + $0x3c8] sm:$0xff]
    %v9536 = vld [vmem:[%s10 + $0x3d0] sm:$0xff]
    %v9537 = vld [vmem:[%s10 + $0x3d8] sm:$0xff]
    %v9538 = vld [vmem:[%s10 + $0x3e0] sm:$0xff]
    %v9539 = vld [vmem:[%s10 + $0x3e8] sm:$0xff]
    %v9540 = vld [vmem:[%s10 + $0x3f0] sm:$0xff]
    %v9541 = vld [vmem:[%s10 + $0x3f8] sm:$0xff]
    %v9542 = vld [vmem:[%s10 + $0x400] sm:$0xff]
    %v9543 = vld [vmem:[%s10 + $0x408] sm:$0xff]
    %v9544 = vld [vmem:[%s10 + $0x410] sm:$0xff]
    %v9545 = vld [vmem:[%s10 + $0x418] sm:$0xff]
    %v9546 = vld [vmem:[%s10 + $0x420] sm:$0xff]
    %v9547 = vld [vmem:[%s10 + $0x428] sm:$0xff]
    %v9548 = vld [vmem:[%s10 + $0x430] sm:$0xff]
    %v9549 = vld [vmem:[%s11] sm:$0x1]
    %v9551 = vsel %vm1111, %v9405, 0
    %9553 = vmatpush.msra.mxu0 %v9429
    %9554 = vmatpush.msra.mxu0 %v9428
    %9555 = vmatpush.msra.mxu0 %v9427
    %9556 = vmatpush.msra.mxu0 %v9426
    %9557 = vmatpush.msra.mxu0 %v9425
    %9558 = vmatpush.msra.mxu0 %v9424
    %9559 = vmatpush.msra.mxu0 %v9423
    %9560 = vmatpush.msra.mxu0 %v9422
    %9561 = vmatpush.msra.mxu0 %v9421
    %9562 = vmatpush.msra.mxu0 %v9420
    %9563 = vmatpush.msra.mxu0 %v9419
    %9564 = vmatpush.msra.mxu0 %v9418
    %9565 = vmatpush.msra.mxu0 %v9417
    %9566 = vmatpush.msra.mxu0 %v9416
    %9567 = vmatpush.msra.mxu0 %v9415
    %9568 = vmatpush.msra.mxu0 %v9414
    %9569 = vmatmul.f32.gmra.mxu0 %v9397
    %v9570 = vpop.f32.mrf.mxu0
    %v9571 = vadd.f32 %v9549, %v9570
    %9572 = vdwg.mxu0
    %9573 = vmatpush.msra.mxu0 %v9445
    %9574 = vmatpush.msra.mxu0 %v9444
    %9575 = vmatpush.msra.mxu0 %v9443
    %9576 = vmatpush.msra.mxu0 %v9442
    %9577 = vmatpush.msra.mxu0 %v9441
    %9578 = vmatpush.msra.mxu0 %v9440
    %9579 = vmatpush.msra.mxu0 %v9439
    %9580 = vmatpush.msra.mxu0 %v9438
    %9581 = vmatpush.msra.mxu0 %v9437
    %9582 = vmatpush.msra.mxu0 %v9436
    %9583 = vmatpush.msra.mxu0 %v9435
    %9584 = vmatpush.msra.mxu0 %v9434
    %9585 = vmatpush.msra.mxu0 %v9433
    %9586 = vmatpush.msra.mxu0 %v9432
    %9587 = vmatpush.msra.mxu0 %v9431
    %9588 = vmatpush.msra.mxu0 %v9430
    %9589 = vmatmul.f32.gmra.mxu0 %v9398
    %v9590 = vpop.f32.mrf.mxu0
    %v9591 = vadd.f32 %v9571, %v9590
    %9592 = vdwg.mxu0
    %9593 = vmatpush.msra.mxu0 %v9461
    %9594 = vmatpush.msra.mxu0 %v9460
    %9595 = vmatpush.msra.mxu0 %v9459
    %9596 = vmatpush.msra.mxu0 %v9458
    %9597 = vmatpush.msra.mxu0 %v9457
    %9598 = vmatpush.msra.mxu0 %v9456
    %9599 = vmatpush.msra.mxu0 %v9455
    %9600 = vmatpush.msra.mxu0 %v9454
    %9601 = vmatpush.msra.mxu0 %v9453
    %9602 = vmatpush.msra.mxu0 %v9452
    %9603 = vmatpush.msra.mxu0 %v9451
    %9604 = vmatpush.msra.mxu0 %v9450
    %9605 = vmatpush.msra.mxu0 %v9449
    %9606 = vmatpush.msra.mxu0 %v9448
    %9607 = vmatpush.msra.mxu0 %v9447
    %9608 = vmatpush.msra.mxu0 %v9446
    %9609 = vmatmul.f32.gmra.mxu0 %v9399
    %v9610 = vpop.f32.mrf.mxu0
    %v9611 = vadd.f32 %v9591, %v9610
    %9612 = vdwg.mxu0
    %9613 = vmatpush.msra.mxu0 %v9477
    %9614 = vmatpush.msra.mxu0 %v9476
    %9615 = vmatpush.msra.mxu0 %v9475
    %9616 = vmatpush.msra.mxu0 %v9474
    %9617 = vmatpush.msra.mxu0 %v9473
    %9618 = vmatpush.msra.mxu0 %v9472
    %9619 = vmatpush.msra.mxu0 %v9471
    %9620 = vmatpush.msra.mxu0 %v9470
    %9621 = vmatpush.msra.mxu0 %v9469
    %9622 = vmatpush.msra.mxu0 %v9468
    %9623 = vmatpush.msra.mxu0 %v9467
    %9624 = vmatpush.msra.mxu0 %v9466
    %9625 = vmatpush.msra.mxu0 %v9465
    %9626 = vmatpush.msra.mxu0 %v9464
    %9627 = vmatpush.msra.mxu0 %v9463
    %9628 = vmatpush.msra.mxu0 %v9462
    %9629 = vmatmul.f32.gmra.mxu0 %v9400
    %v9630 = vpop.f32.mrf.mxu0
    %v9631 = vadd.f32 %v9611, %v9630
    %9632 = vdwg.mxu0
    %9633 = vmatpush.msra.mxu0 %v9493
    %9634 = vmatpush.msra.mxu0 %v9492
    %9635 = vmatpush.msra.mxu0 %v9491
    %9636 = vmatpush.msra.mxu0 %v9490
    %9637 = vmatpush.msra.mxu0 %v9489
    %9638 = vmatpush.msra.mxu0 %v9488
    %9639 = vmatpush.msra.mxu0 %v9487
    %9640 = vmatpush.msra.mxu0 %v9486
    %9641 = vmatpush.msra.mxu0 %v9485
    %9642 = vmatpush.msra.mxu0 %v9484
    %9643 = vmatpush.msra.mxu0 %v9483
    %9644 = vmatpush.msra.mxu0 %v9482
    %9645 = vmatpush.msra.mxu0 %v9481
    %9646 = vmatpush.msra.mxu0 %v9480
    %9647 = vmatpush.msra.mxu0 %v9479
    %9648 = vmatpush.msra.mxu0 %v9478
    %9649 = vmatmul.f32.gmra.mxu0 %v9401
    %v9650 = vpop.f32.mrf.mxu0
    %v9651 = vadd.f32 %v9631, %v9650
    %9652 = vdwg.mxu0
    %9653 = vmatpush.msra.mxu0 %v9509
    %9654 = vmatpush.msra.mxu0 %v9508
    %9655 = vmatpush.msra.mxu0 %v9507
    %9656 = vmatpush.msra.mxu0 %v9506
    %9657 = vmatpush.msra.mxu0 %v9505
    %9658 = vmatpush.msra.mxu0 %v9504
    %9659 = vmatpush.msra.mxu0 %v9503
    %9660 = vmatpush.msra.mxu0 %v9502
    %9661 = vmatpush.msra.mxu0 %v9501
    %9662 = vmatpush.msra.mxu0 %v9500
    %9663 = vmatpush.msra.mxu0 %v9499
    %9664 = vmatpush.msra.mxu0 %v9498
    %9665 = vmatpush.msra.mxu0 %v9497
    %9666 = vmatpush.msra.mxu0 %v9496
    %9667 = vmatpush.msra.mxu0 %v9495
    %9668 = vmatpush.msra.mxu0 %v9494
    %9669 = vmatmul.f32.gmra.mxu0 %v9402
    %v9670 = vpop.f32.mrf.mxu0
    %v9671 = vadd.f32 %v9651, %v9670
    %9672 = vdwg.mxu0
    %9673 = vmatpush.msra.mxu0 %v9525
    %9674 = vmatpush.msra.mxu0 %v9524
    %9675 = vmatpush.msra.mxu0 %v9523
    %9676 = vmatpush.msra.mxu0 %v9522
    %9677 = vmatpush.msra.mxu0 %v9521
    %9678 = vmatpush.msra.mxu0 %v9520
    %9679 = vmatpush.msra.mxu0 %v9519
    %9680 = vmatpush.msra.mxu0 %v9518
    %9681 = vmatpush.msra.mxu0 %v9517
    %9682 = vmatpush.msra.mxu0 %v9516
    %9683 = vmatpush.msra.mxu0 %v9515
    %9684 = vmatpush.msra.mxu0 %v9514
    %9685 = vmatpush.msra.mxu0 %v9513
    %9686 = vmatpush.msra.mxu0 %v9512
    %9687 = vmatpush.msra.mxu0 %v9511
    %9688 = vmatpush.msra.mxu0 %v9510
    %9689 = vmatmul.f32.gmra.mxu0 %v9403
    %v9690 = vpop.f32.mrf.mxu0
    %v9691 = vadd.f32 %v9671, %v9690
    %9692 = vdwg.mxu0
    %9693 = vmatpush.msra.mxu0 %v9541
    %9694 = vmatpush.msra.mxu0 %v9540
    %9695 = vmatpush.msra.mxu0 %v9539
    %9696 = vmatpush.msra.mxu0 %v9538
    %9697 = vmatpush.msra.mxu0 %v9537
    %9698 = vmatpush.msra.mxu0 %v9536
    %9699 = vmatpush.msra.mxu0 %v9535
    %9700 = vmatpush.msra.mxu0 %v9534
    %9701 = vmatpush.msra.mxu0 %v9533
    %9702 = vmatpush.msra.mxu0 %v9532
    %9703 = vmatpush.msra.mxu0 %v9531
    %9704 = vmatpush.msra.mxu0 %v9530
    %9705 = vmatpush.msra.mxu0 %v9529
    %9706 = vmatpush.msra.mxu0 %v9528
    %9707 = vmatpush.msra.mxu0 %v9527
    %9708 = vmatpush.msra.mxu0 %v9526
    %9709 = vmatmul.f32.gmra.mxu0 %v9404
    %v9710 = vpop.f32.mrf.mxu0
    %v9711 = vadd.f32 %v9691, %v9710
    %9712 = vdwg.mxu0
    %9713 = vmatpush.msra.mxu0 0.0
    %9714 = vmatpush.msra.mxu0 0.0
    %9715 = vmatpush.msra.mxu0 0.0
    %9716 = vmatpush.msra.mxu0 0.0
    %9717 = vmatpush.msra.mxu0 0.0
    %9718 = vmatpush.msra.mxu0 0.0
    %9719 = vmatpush.msra.mxu0 0.0
    %9720 = vmatpush.msra.mxu0 0.0
    %9721 = vmatpush.msra.mxu0 0.0
    %9722 = vmatpush.msra.mxu0 %v9548
    %9723 = vmatpush.msra.mxu0 %v9547
    %9724 = vmatpush.msra.mxu0 %v9546
    %9725 = vmatpush.msra.mxu0 %v9545
    %9726 = vmatpush.msra.mxu0 %v9544
    %9727 = vmatpush.msra.mxu0 %v9543
    %9728 = vmatpush.msra.mxu0 %v9542
    %9729 = vmatmul.f32.gmra.mxu0 %v9551
    %v9730 = vpop.f32.mrf.mxu0
    %v9731 = vadd.f32 %v9711, %v9730
    %9732 = vdwg.mxu0
    %9741 = vrot.lane.b32.xlu0 %v9405, 72
    %v9742 = vpop.permute.xlu0 %9741
    %9743 = vrot.lane.b32.xlu0 %v9406, 72
    %v9744 = vpop.permute.xlu0 %9743
    %9745 = vrot.lane.b32.xlu0 %v9407, 72
    %v9746 = vpop.permute.xlu0 %9745
    %9747 = vrot.lane.b32.xlu0 %v9408, 72
    %v9748 = vpop.permute.xlu0 %9747
    %9749 = vrot.lane.b32.xlu0 %v9409, 72
    %v9750 = vpop.permute.xlu0 %9749
    %9751 = vrot.lane.b32.xlu0 %v9410, 72
    %v9752 = vpop.permute.xlu0 %9751
    %9753 = vrot.lane.b32.xlu0 %v9411, 72
    %v9754 = vpop.permute.xlu0 %9753
    %9755 = vrot.lane.b32.xlu0 %v9412, 72
    %v9756 = vpop.permute.xlu0 %9755
    %9757 = vrot.lane.b32.xlu0 %v9413, 72
    %v9758 = vpop.permute.xlu0 %9757
    %vm9759 = vcmask 588800
    %v9760 = vsel %vm9759, %v9742, %v9744
    %v9761 = vsel %vm9759, %v9744, %v9746
    %v9762 = vsel %vm9759, %v9746, %v9748
    %v9763 = vsel %vm9759, %v9748, %v9750
    %v9764 = vsel %vm9759, %v9750, %v9752
    %v9765 = vsel %vm9759, %v9752, %v9754
    %v9766 = vsel %vm9759, %v9754, %v9756
    %v9767 = vsel %vm9759, %v9756, %v9758
    %v9776 = vsel %vm1111, %v9758, 0
    %9778 = vmatpush.msra.mxu0 %v9429
    %9779 = vmatpush.msra.mxu0 %v9428
    %9780 = vmatpush.msra.mxu0 %v9427
    %9781 = vmatpush.msra.mxu0 %v9426
    %9782 = vmatpush.msra.mxu0 %v9425
    %9783 = vmatpush.msra.mxu0 %v9424
    %9784 = vmatpush.msra.mxu0 %v9423
    %9785 = vmatpush.msra.mxu0 %v9422
    %9786 = vmatpush.msra.mxu0 %v9421
    %9787 = vmatpush.msra.mxu0 %v9420
    %9788 = vmatpush.msra.mxu0 %v9419
    %9789 = vmatpush.msra.mxu0 %v9418
    %9790 = vmatpush.msra.mxu0 %v9417
    %9791 = vmatpush.msra.mxu0 %v9416
    %9792 = vmatpush.msra.mxu0 %v9415
    %9793 = vmatpush.msra.mxu0 %v9414
    %9794 = vmatmul.f32.gmra.mxu0 %v9760
    %v9795 = vpop.f32.mrf.mxu0
    %v9796 = vadd.f32 %v9549, %v9795
    %9797 = vdwg.mxu0
    %9798 = vmatpush.msra.mxu0 %v9445
    %9799 = vmatpush.msra.mxu0 %v9444
    %9800 = vmatpush.msra.mxu0 %v9443
    %9801 = vmatpush.msra.mxu0 %v9442
    %9802 = vmatpush.msra.mxu0 %v9441
    %9803 = vmatpush.msra.mxu0 %v9440
    %9804 = vmatpush.msra.mxu0 %v9439
    %9805 = vmatpush.msra.mxu0 %v9438
    %9806 = vmatpush.msra.mxu0 %v9437
    %9807 = vmatpush.msra.mxu0 %v9436
    %9808 = vmatpush.msra.mxu0 %v9435
    %9809 = vmatpush.msra.mxu0 %v9434
    %9810 = vmatpush.msra.mxu0 %v9433
    %9811 = vmatpush.msra.mxu0 %v9432
    %9812 = vmatpush.msra.mxu0 %v9431
    %9813 = vmatpush.msra.mxu0 %v9430
    %9814 = vmatmul.f32.gmra.mxu0 %v9761
    %v9815 = vpop.f32.mrf.mxu0
    %v9816 = vadd.f32 %v9796, %v9815
    %9817 = vdwg.mxu0
    %9818 = vmatpush.msra.mxu0 %v9461
    %9819 = vmatpush.msra.mxu0 %v9460
    %9820 = vmatpush.msra.mxu0 %v9459
    %9821 = vmatpush.msra.mxu0 %v9458
    %9822 = vmatpush.msra.mxu0 %v9457
    %9823 = vmatpush.msra.mxu0 %v9456
    %9824 = vmatpush.msra.mxu0 %v9455
    %9825 = vmatpush.msra.mxu0 %v9454
    %9826 = vmatpush.msra.mxu0 %v9453
    %9827 = vmatpush.msra.mxu0 %v9452
    %9828 = vmatpush.msra.mxu0 %v9451
    %9829 = vmatpush.msra.mxu0 %v9450
    %9830 = vmatpush.msra.mxu0 %v9449
    %9831 = vmatpush.msra.mxu0 %v9448
    %9832 = vmatpush.msra.mxu0 %v9447
    %9833 = vmatpush.msra.mxu0 %v9446
    %9834 = vmatmul.f32.gmra.mxu0 %v9762
    %v9835 = vpop.f32.mrf.mxu0
    %v9836 = vadd.f32 %v9816, %v9835
    %9837 = vdwg.mxu0
    %9838 = vmatpush.msra.mxu0 %v9477
    %9839 = vmatpush.msra.mxu0 %v9476
    %9840 = vmatpush.msra.mxu0 %v9475
    %9841 = vmatpush.msra.mxu0 %v9474
    %9842 = vmatpush.msra.mxu0 %v9473
    %9843 = vmatpush.msra.mxu0 %v9472
    %9844 = vmatpush.msra.mxu0 %v9471
    %9845 = vmatpush.msra.mxu0 %v9470
    %9846 = vmatpush.msra.mxu0 %v9469
    %9847 = vmatpush.msra.mxu0 %v9468
    %9848 = vmatpush.msra.mxu0 %v9467
    %9849 = vmatpush.msra.mxu0 %v9466
    %9850 = vmatpush.msra.mxu0 %v9465
    %9851 = vmatpush.msra.mxu0 %v9464
    %9852 = vmatpush.msra.mxu0 %v9463
    %9853 = vmatpush.msra.mxu0 %v9462
    %9854 = vmatmul.f32.gmra.mxu0 %v9763
    %v9855 = vpop.f32.mrf.mxu0
    %v9856 = vadd.f32 %v9836, %v9855
    %9857 = vdwg.mxu0
    %9858 = vmatpush.msra.mxu0 %v9493
    %9859 = vmatpush.msra.mxu0 %v9492
    %9860 = vmatpush.msra.mxu0 %v9491
    %9861 = vmatpush.msra.mxu0 %v9490
    %9862 = vmatpush.msra.mxu0 %v9489
    %9863 = vmatpush.msra.mxu0 %v9488
    %9864 = vmatpush.msra.mxu0 %v9487
    %9865 = vmatpush.msra.mxu0 %v9486
    %9866 = vmatpush.msra.mxu0 %v9485
    %9867 = vmatpush.msra.mxu0 %v9484
    %9868 = vmatpush.msra.mxu0 %v9483
    %9869 = vmatpush.msra.mxu0 %v9482
    %9870 = vmatpush.msra.mxu0 %v9481
    %9871 = vmatpush.msra.mxu0 %v9480
    %9872 = vmatpush.msra.mxu0 %v9479
    %9873 = vmatpush.msra.mxu0 %v9478
    %9874 = vmatmul.f32.gmra.mxu0 %v9764
    %v9875 = vpop.f32.mrf.mxu0
    %v9876 = vadd.f32 %v9856, %v9875
    %9877 = vdwg.mxu0
    %9878 = vmatpush.msra.mxu0 %v9509
    %9879 = vmatpush.msra.mxu0 %v9508
    %9880 = vmatpush.msra.mxu0 %v9507
    %9881 = vmatpush.msra.mxu0 %v9506
    %9882 = vmatpush.msra.mxu0 %v9505
    %9883 = vmatpush.msra.mxu0 %v9504
    %9884 = vmatpush.msra.mxu0 %v9503
    %9885 = vmatpush.msra.mxu0 %v9502
    %9886 = vmatpush.msra.mxu0 %v9501
    %9887 = vmatpush.msra.mxu0 %v9500
    %9888 = vmatpush.msra.mxu0 %v9499
    %9889 = vmatpush.msra.mxu0 %v9498
    %9890 = vmatpush.msra.mxu0 %v9497
    %9891 = vmatpush.msra.mxu0 %v9496
    %9892 = vmatpush.msra.mxu0 %v9495
    %9893 = vmatpush.msra.mxu0 %v9494
    %9894 = vmatmul.f32.gmra.mxu0 %v9765
    %v9895 = vpop.f32.mrf.mxu0
    %v9896 = vadd.f32 %v9876, %v9895
    %9897 = vdwg.mxu0
    %9898 = vmatpush.msra.mxu0 %v9525
    %9899 = vmatpush.msra.mxu0 %v9524
    %9900 = vmatpush.msra.mxu0 %v9523
    %9901 = vmatpush.msra.mxu0 %v9522
    %9902 = vmatpush.msra.mxu0 %v9521
    %9903 = vmatpush.msra.mxu0 %v9520
    %9904 = vmatpush.msra.mxu0 %v9519
    %9905 = vmatpush.msra.mxu0 %v9518
    %9906 = vmatpush.msra.mxu0 %v9517
    %9907 = vmatpush.msra.mxu0 %v9516
    %9908 = vmatpush.msra.mxu0 %v9515
    %9909 = vmatpush.msra.mxu0 %v9514
    %9910 = vmatpush.msra.mxu0 %v9513
    %9911 = vmatpush.msra.mxu0 %v9512
    %9912 = vmatpush.msra.mxu0 %v9511
    %9913 = vmatpush.msra.mxu0 %v9510
    %9914 = vmatmul.f32.gmra.mxu0 %v9766
    %v9915 = vpop.f32.mrf.mxu0
    %v9916 = vadd.f32 %v9896, %v9915
    %9917 = vdwg.mxu0
    %9918 = vmatpush.msra.mxu0 %v9541
    %9919 = vmatpush.msra.mxu0 %v9540
    %9920 = vmatpush.msra.mxu0 %v9539
    %9921 = vmatpush.msra.mxu0 %v9538
    %9922 = vmatpush.msra.mxu0 %v9537
    %9923 = vmatpush.msra.mxu0 %v9536
    %9924 = vmatpush.msra.mxu0 %v9535
    %9925 = vmatpush.msra.mxu0 %v9534
    %9926 = vmatpush.msra.mxu0 %v9533
    %9927 = vmatpush.msra.mxu0 %v9532
    %9928 = vmatpush.msra.mxu0 %v9531
    %9929 = vmatpush.msra.mxu0 %v9530
    %9930 = vmatpush.msra.mxu0 %v9529
    %9931 = vmatpush.msra.mxu0 %v9528
    %9932 = vmatpush.msra.mxu0 %v9527
    %9933 = vmatpush.msra.mxu0 %v9526
    %9934 = vmatmul.f32.gmra.mxu0 %v9767
    %v9935 = vpop.f32.mrf.mxu0
    %v9936 = vadd.f32 %v9916, %v9935
    %9937 = vdwg.mxu0
    %9938 = vmatpush.msra.mxu0 0.0
    %9939 = vmatpush.msra.mxu0 0.0
    %9940 = vmatpush.msra.mxu0 0.0
    %9941 = vmatpush.msra.mxu0 0.0
    %9942 = vmatpush.msra.mxu0 0.0
    %9943 = vmatpush.msra.mxu0 0.0
    %9944 = vmatpush.msra.mxu0 0.0
    %9945 = vmatpush.msra.mxu0 0.0
    %9946 = vmatpush.msra.mxu0 0.0
    %9947 = vmatpush.msra.mxu0 %v9548
    %9948 = vmatpush.msra.mxu0 %v9547
    %9949 = vmatpush.msra.mxu0 %v9546
    %9950 = vmatpush.msra.mxu0 %v9545
    %9951 = vmatpush.msra.mxu0 %v9544
    %9952 = vmatpush.msra.mxu0 %v9543
    %9953 = vmatpush.msra.mxu0 %v9542
    %9954 = vmatmul.f32.gmra.mxu0 %v9776
    %v9955 = vpop.f32.mrf.mxu0
    %v9956 = vadd.f32 %v9936, %v9955
    %9957 = vdwg.mxu0
    %v9959 = vrot.slane %v9956, 7
    %vm9961 = vcmask 1040384
    %v9962 = vsel %vm9961, %v9731, %v9959
    %vm9963 = vcmask 140288
    %9964 = vst.msk [vmem:[#allocation3] sm:$0x3] %vm9963, %v9962
    // Predicated region
    $region50: #{forward.1} parent=1 // pred_check
      _
    $region51: #{forward.1} parent=1 // pred_check_branch
      %9966 = sbr.rel (0) target = $region53
    $region52: #{forward.1} parent=1 // pred_region
      %9968 = vsyncadd [#allocation4], 0
      %s9970 = sshll.u32 [#allocation3], 4
      %s9971 = int_to_ptr.vmem [resolvable:$true] %s9970
      %s9972 = sshll.u32 %s12, 4
      %s9973 = int_to_ptr.hbm [resolvable:$true] %s9972
      %9975 = dma.vmem_to_hbm [thread:$0]  %s9971, 32, %s9973, [#allocation4]
    $region53: #{forward.1} parent=1 // pred_fallthru
      _
    // Predicated region
    $region54: #{forward.1} parent=1 // pred_check
      _
    $region55: #{forward.1} parent=1 // pred_check_branch
      %9977 = sbr.rel (0) target = $region57
    $region56: #{forward.1} parent=1 // pred_region
      %9979 = dma.done [#allocation4], 32
    $region57: #{forward.1} parent=1 // pred_fallthru
      _
    %9980 = vsyncpa [#allocation4], 1

</llo_original>
